<compile_context>
chip_gen: v5e
topology: v5e:2x2
jax: 0.10.0
libtpu: 0.0.40
codegen_flags: <defaults>
</compile_context>

<pallas_src>
import functools
import math

import jax
import jax.numpy as jnp
from jax.experimental import pallas as pl
from jax.experimental.pallas import tpu as pltpu

LN_EPS = 1e-5       # PyTorch TransformerEncoderLayer default layer_norm_eps
NEG_BIG = -1e30     # additive mask value (exp() underflows to exactly 0)


def _layernorm(x, g, b):
    mu = jnp.mean(x, axis=-1, keepdims=True)
    var = jnp.mean((x - mu) ** 2, axis=-1, keepdims=True)
    return (x - mu) * jax.lax.rsqrt(var + LN_EPS) * g + b


def _softmax(x, approx):
    m = jnp.max(x, axis=-1, keepdims=True)
    e = jnp.exp(x - m)
    return e * pl.reciprocal(jnp.sum(e, axis=-1, keepdims=True), approx=approx)


def encoder_kernel(lens_ref, seq_ref, stru_ref,
                   w_seq_ref, w_stru_ref, b_in_ref,
                   wq_ref, bq_ref, wk_ref, bk_ref, wv_ref, bv_ref,
                   wo_ref, bo_ref, ln1_g_ref, ln1_b_ref,
                   w1_ref, b1_ref, w2_ref, b2_ref,
                   ln2_g_ref, ln2_b_ref,
                   out_ref, *, max_len, max_len_p, grp, matmul_dtype,
                   approx_recip):
    bt = lens_ref.shape[0]              # sequences in this block
    n = seq_ref.shape[0]                # bt * max_len_p rows
    hid = wo_ref.shape[-1]
    gr = grp * max_len_p                # rows per attention group
    ng = n // gr
    cd = matmul_dtype

    def mm(x, w):                       # weights already in matmul dtype
        return jnp.dot(x.astype(cd), w, preferred_element_type=jnp.float32)

    # ---- input projection split over [seq|stru] (no concat) + ReLU ----
    h = mm(seq_ref[...], w_seq_ref[...]) + mm(stru_ref[...], w_stru_ref[...]) \
        + b_in_ref[...]
    h = jnp.maximum(h, 0.0)             # Dropout is identity in eval mode

    # ---- static additive attention mask (built once, reused by both layers):
    #  * block-diagonal when `grp` sequences share one lane-dense matmul
    #  * key-padding for positions added by the max_len -> max_len_p padding
    bias = None
    if grp > 1 or max_len_p > max_len:
        coli = jax.lax.broadcasted_iota(jnp.int32, (gr, gr), 1)
        if grp > 1:
            # grp > 1 guarantees max_len_p is a power of two -> shift/and only
            shift = max_len_p.bit_length() - 1
            rowi = jax.lax.broadcasted_iota(jnp.int32, (gr, gr), 0)
            valid = (rowi >> shift) == (coli >> shift)
            if max_len_p > max_len:
                valid = jnp.logical_and(valid,
                                        (coli & (max_len_p - 1)) < max_len)
        else:                            # gr == max_len_p: key padding only
            valid = coli < max_len
        bias = jnp.where(valid, 0.0, NEG_BIG).astype(jnp.float32)

    num_layers = wq_ref.shape[0]
    for l in range(num_layers):         # static unroll over the 2 layers
        # ---------------- single-head self-attention ----------------
        # 1/sqrt(hid) is folded into wq/bq in the wrapper -> no score scaling
        q = (mm(h, wq_ref[l]) + bq_ref[l]).reshape(ng, gr, hid)
        k = (mm(h, wk_ref[l]) + bk_ref[l]).reshape(ng, gr, hid)
        v = (mm(h, wv_ref[l]) + bv_ref[l]).reshape(ng, gr, hid)
        scores = jnp.einsum("gqd,gkd->gqk", q.astype(cd), k.astype(cd),
                            preferred_element_type=jnp.float32)
        if bias is not None:
            scores = scores + bias
        attn = _softmax(scores, approx_recip)
        a = jnp.einsum("gqk,gkd->gqd", attn.astype(cd), v.astype(cd),
                       preferred_element_type=jnp.float32).reshape(n, hid)
        a = mm(a, wo_ref[l]) + bo_ref[l]
        h = _layernorm(h + a, ln1_g_ref[l], ln1_b_ref[l])   # post-LN

        # ---------------- feed-forward (relu) ----------------
        ff = jnp.maximum(mm(h, w1_ref[l]) + b1_ref[l], 0.0)
        ff = mm(ff, w2_ref[l]) + b2_ref[l]
        h = _layernorm(h + ff, ln2_g_ref[l], ln2_b_ref[l])

    # ---- length masking + mean pooling (mask broadcast over lanes) ----
    h3 = h.reshape(bt, max_len_p, hid)
    pos = jax.lax.broadcasted_iota(jnp.int32, (bt, max_len_p, 1), 1)
    lens_i = lens_ref[...]                                   # (bt, 1) int32
    inv_len = pl.reciprocal(lens_i.astype(jnp.float32),
                            approx=approx_recip).reshape(bt, 1, 1)
    keep = jnp.where(pos < lens_i.reshape(bt, 1, 1), inv_len, 0.0)
    out_ref[...] = jnp.sum(h3 * keep, axis=1)


def _round_up(x, m):
    return ((x + m - 1) // m) * m


def _vmem_capacity_bytes():
    try:
        return int(pltpu.get_tpu_info().vmem_capacity_bytes)
    except Exception:
        return 64 * 1024 * 1024          # v7x per-TC size: safe on every gen


@functools.partial(jax.jit, static_argnames=("matmul_dtype",
                                             "single_buffer_weights",
                                             "approx_recip"))
def model_forward(seq_embs, stru_embs, lens, params, *,
                  matmul_dtype=jnp.float32, single_buffer_weights=True,
                  approx_recip=False):
    """Pallas forward pass.

    Precondition (same as the PyTorch module): all lens >= 1.
    Both seq_embs and stru_embs must be provided (torch.cat branch).
    """
    bsz, max_len, seq_dim = seq_embs.shape
    stru_dim = stru_embs.shape[-1]
    hid = params["w_in"].shape[1]

    # ---------------- tile geometry ----------------
    max_len_p = _round_up(max_len, 8)            # sublane-aligned positions
    bsz8 = _round_up(bsz, 8)

    # Group `grp` sequences into one lane-dense (grp*L, grp*L) attention matmul.
    if max_len_p <= 64 and 128 % max_len_p == 0:
        grp = max(1, min(128 // max_len_p, bsz8))
    else:
        grp = 1
    bt_unit = (8 * grp) // math.gcd(8, grp)      # lcm(8, grp)

    # Per-step row target ~256-512 (85%+ of HBM roofline, feeds 256-wide MXU),
    # scaled down when hid makes the activation footprint large.
    target_rows = int(min(512, max(128, (8 * 1024 * 1024) // (48 * hid))))
    bt = bt_unit * max(1, -(-target_rows // (bt_unit * max_len_p)))
    bsz_up = _round_up(bsz8, bt_unit)
    if bsz_up >= 2 * bt_unit:                    # keep >=2 grid steps (v7x 2 TCs)
        bt = min(bt, (bsz_up // (2 * bt_unit)) * bt_unit)
    bt = min(bt, bsz_up)
    bsz_p = _round_up(bsz, bt)
    rows = bt * max_len_p

    # ---------------- pad + flatten inputs ----------------
    pad_b, pad_l = bsz_p - bsz, max_len_p - max_len
    if pad_b or pad_l:
        seq_embs = jnp.pad(seq_embs, ((0, pad_b), (0, pad_l), (0, 0)))
        stru_embs = jnp.pad(stru_embs, ((0, pad_b), (0, pad_l), (0, 0)))
    if pad_b:
        lens = jnp.concatenate([lens, jnp.ones((pad_b,), lens.dtype)])
    lens2d = lens.reshape(bsz_p, 1).astype(jnp.int32)
    seq2d = seq_embs.reshape(bsz_p * max_len_p, seq_dim)
    stru2d = stru_embs.reshape(bsz_p * max_len_p, stru_dim)

    # ---------------- weight prep: split / pre-scale / pre-cast ----------------
    wd = matmul_dtype
    scale = 1.0 / float(hid) ** 0.5
    wqkv, bqkv = params["wqkv"], params["bqkv"]
    weights = [
        params["w_in"][:seq_dim].astype(wd),            # w_seq
        params["w_in"][seq_dim:].astype(wd),            # w_stru
        params["b_in"],                                  # b_in  (f32)
        (wqkv[:, :, :hid] * scale).astype(wd),           # wq (scale folded)
        bqkv[:, :, :hid] * scale,                        # bq
        wqkv[:, :, hid:2 * hid].astype(wd),              # wk
        bqkv[:, :, hid:2 * hid],                         # bk
        wqkv[:, :, 2 * hid:].astype(wd),                 # wv
        bqkv[:, :, 2 * hid:],                            # bv
        params["wo"].astype(wd), params["bo"],
        params["ln1_g"], params["ln1_b"],
        params["w1"].astype(wd), params["b1"],
        params["w2"].astype(wd), params["b2"],
        params["ln2_g"], params["ln2_b"],
    ]

    # Grid-invariant weights: fetched once; single-buffered to halve their VMEM.
    def weight_spec(arr):
        idx = lambda b, _n=arr.ndim: (0,) * _n
        if single_buffer_weights:
            return pl.BlockSpec(arr.shape, idx, pipeline_mode=pl.Buffered(1))
        return pl.BlockSpec(arr.shape, idx)

    # ---------------- VMEM budget from actual footprint ----------------
    def nbytes(a):
        return int(a.size) * a.dtype.itemsize
    weight_bytes = sum(nbytes(w) for w in weights)
    gr = grp * max_len_p
    io_bytes = rows * (seq_dim + stru_dim) * 4 + bt * 4 + bt * hid * 4
    act_bytes = rows * hid * 4 * 8 + rows * 4 * hid * 4 \
        + (rows // gr) * gr * gr * 4 * 2
    need = weight_bytes * (1 if single_buffer_weights else 2) \
        + 2 * io_bytes + act_bytes
    vmem_limit = int(min(max(int(need * 1.4), 32 * 1024 * 1024),
                         int(_vmem_capacity_bytes() * 0.9)))

    grid_spec = pltpu.PrefetchScalarGridSpec(
        num_scalar_prefetch=0,
        grid=(bsz_p // bt,),
        in_specs=[
            pl.BlockSpec((bt, 1), lambda b: (b, 0)),             # lens
            pl.BlockSpec((rows, seq_dim), lambda b: (b, 0)),     # seq block
            pl.BlockSpec((rows, stru_dim), lambda b: (b, 0)),    # stru block
        ] + [weight_spec(w) for w in weights],
        out_specs=pl.BlockSpec((bt, hid), lambda b: (b, 0)),     # (Bt, hid)
    )

    kernel = functools.partial(
        encoder_kernel, max_len=max_len, max_len_p=max_len_p, grp=grp,
        matmul_dtype=matmul_dtype, approx_recip=approx_recip)

    out = pl.pallas_call(
        kernel,
        out_shape=jax.ShapeDtypeStruct((bsz_p, hid), jnp.float32),
        grid_spec=grid_spec,
        compiler_params=pltpu.CompilerParams(
            dimension_semantics=("parallel",),   # batch blocks -> megacore/TCs
            vmem_limit_bytes=vmem_limit),
    )(lens2d, seq2d, stru2d, *weights)
    return out[:bsz]


def reference_forward(seq_embs, stru_embs, lens, params):
    """Plain-JAX reference of the same math, for correctness checking."""
    embs = jnp.concatenate([seq_embs, stru_embs], axis=-1)
    bsz, max_len, _ = embs.shape
    hid = params["w_in"].shape[1]
    h = jnp.maximum(embs @ params["w_in"] + params["b_in"], 0.0)
    scale = 1.0 / jnp.sqrt(jnp.float32(hid))
    for l in range(params["wqkv"].shape[0]):
        qkv = h @ params["wqkv"][l] + params["bqkv"][l]
        q, k, v = qkv[..., :hid], qkv[..., hid:2 * hid], qkv[..., 2 * hid:]
        scores = jnp.einsum("bqd,bkd->bqk", q, k) * scale
        attn = jax.nn.softmax(scores, axis=-1)
        a = jnp.einsum("bqk,bkd->bqd", attn, v) @ params["wo"][l] + params["bo"][l]
        h = _layernorm(h + a, params["ln1_g"][l], params["ln1_b"][l])
        ff = jnp.maximum(h @ params["w1"][l] + params["b1"][l], 0.0)
        ff = ff @ params["w2"][l] + params["b2"][l]
        h = _layernorm(h + ff, params["ln2_g"][l], params["ln2_b"][l])
    pos = jnp.arange(max_len)[None, :, None]
    h = jnp.where(pos < lens[:, None, None], h, 0.0)
    return jnp.sum(h, axis=1) / lens[:, None].astype(jnp.float32)


def init_params(key, in_dim, hid, num_layers=2):
    ks = jax.random.split(key, 8)
    s = 0.1
    return {
        "w_in": s * jax.random.normal(ks[0], (in_dim, hid), jnp.float32),
        "b_in": s * jax.random.normal(ks[1], (1, hid), jnp.float32),
        "wqkv": s * jax.random.normal(ks[2], (num_layers, hid, 3 * hid), jnp.float32),
        "bqkv": s * jax.random.normal(ks[3], (num_layers, 1, 3 * hid), jnp.float32),
        "wo":   s * jax.random.normal(ks[4], (num_layers, hid, hid), jnp.float32),
        "bo":   s * jax.random.normal(ks[5], (num_layers, 1, hid), jnp.float32),
        "ln1_g": jnp.ones((num_layers, 1, hid), jnp.float32),
        "ln1_b": jnp.zeros((num_layers, 1, hid), jnp.float32),
        "w1":   s * jax.random.normal(ks[6], (num_layers, hid, 4 * hid), jnp.float32),
        "b1":   jnp.zeros((num_layers, 1, 4 * hid), jnp.float32),
        "w2":   s * jax.random.normal(ks[7], (num_layers, 4 * hid, hid), jnp.float32),
        "b2":   jnp.zeros((num_layers, 1, hid), jnp.float32),
        "ln2_g": jnp.ones((num_layers, 1, hid), jnp.float32),
        "ln2_b": jnp.zeros((num_layers, 1, hid), jnp.float32),
    }


if __name__ == "__main__":
    key = jax.random.PRNGKey(0)
    bsz, max_len = 2, 8
    seq_dim, stru_dim, hid = 16, 16, 32
    in_dim = seq_dim + stru_dim

    k0, k1, k2 = jax.random.split(key, 3)
    seq_embs = jax.random.normal(k0, (bsz, max_len, seq_dim), jnp.float32)
    stru_embs = jax.random.normal(k1, (bsz, max_len, stru_dim), jnp.float32)
    lens = jnp.array([5, 8], dtype=jnp.int32)
    params = init_params(k2, in_dim, hid)

    single_buf = True
    try:
        out = jax.block_until_ready(model_forward(seq_embs, stru_embs, lens, params))
    except Exception:
        # Fallback for Pallas versions that reject pl.Buffered(1) resident weights.
        single_buf = False
        out = jax.block_until_ready(
            model_forward(seq_embs, stru_embs, lens, params,
                          single_buffer_weights=False))
    assert out.shape == (bsz, hid), out.shape

    ref = reference_forward(seq_embs, stru_embs, lens, params)
    err = float(jnp.max(jnp.abs(out - ref)))
    assert jnp.allclose(out, ref, atol=1e-3, rtol=1e-3), err

    # bf16 MXU-operand + approx-reciprocal fast path (recommended on v5e/v6e/v7x;
    # v5e's MXU is bf16-native too). Elementwise math stays f32.
    out_bf16 = jax.block_until_ready(
        model_forward(seq_embs, stru_embs, lens, params,
                      matmul_dtype=jnp.bfloat16, approx_recip=True,
                      single_buffer_weights=single_buf))
    assert bool(jnp.all(jnp.isfinite(out_bf16)))
    assert jnp.allclose(out_bf16, ref, atol=1e-1, rtol=1e-1)

    print("KERNEL_OK")
</pallas_src>

<mosaic_0001>
module attributes {stable_mosaic.version = 11 : i64} {
  func.func @encoder_kernel(%arg0: i32, %arg1: memref<8x1xi32, #tpu.memory_space<vmem>>, %arg2: memref<64x16xf32, #tpu.memory_space<vmem>>, %arg3: memref<64x16xf32, #tpu.memory_space<vmem>>, %arg4: memref<16x32xf32, #tpu.memory_space<vmem>>, %arg5: memref<16x32xf32, #tpu.memory_space<vmem>>, %arg6: memref<1x32xf32, #tpu.memory_space<vmem>>, %arg7: memref<2x32x32xf32, #tpu.memory_space<vmem>>, %arg8: memref<2x1x32xf32, #tpu.memory_space<vmem>>, %arg9: memref<2x32x32xf32, #tpu.memory_space<vmem>>, %arg10: memref<2x1x32xf32, #tpu.memory_space<vmem>>, %arg11: memref<2x32x32xf32, #tpu.memory_space<vmem>>, %arg12: memref<2x1x32xf32, #tpu.memory_space<vmem>>, %arg13: memref<2x32x32xf32, #tpu.memory_space<vmem>>, %arg14: memref<2x1x32xf32, #tpu.memory_space<vmem>>, %arg15: memref<2x1x32xf32, #tpu.memory_space<vmem>>, %arg16: memref<2x1x32xf32, #tpu.memory_space<vmem>>, %arg17: memref<2x32x128xf32, #tpu.memory_space<vmem>>, %arg18: memref<2x1x128xf32, #tpu.memory_space<vmem>>, %arg19: memref<2x128x32xf32, #tpu.memory_space<vmem>>, %arg20: memref<2x1x32xf32, #tpu.memory_space<vmem>>, %arg21: memref<2x1x32xf32, #tpu.memory_space<vmem>>, %arg22: memref<2x1x32xf32, #tpu.memory_space<vmem>>, %arg23: memref<8x32xf32, #tpu.memory_space<vmem>>) attributes {dimension_semantics = [#tpu.dimension_semantics<parallel>], iteration_bounds = array<i64: 1>, scalar_prefetch = 0 : i64, scratch_operands = 0 : i64, tpu.core_type = #tpu.core_type<tc>, window_params = [{transform_indices = @transform_0, window_bounds = array<i64: 8, 1>}, {transform_indices = @transform_1, window_bounds = array<i64: 64, 16>}, {transform_indices = @transform_2, window_bounds = array<i64: 64, 16>}, {pipeline_mode = #tpu.pipeline_mode<synchronous>, transform_indices = @transform_3, window_bounds = array<i64: 16, 32>}, {pipeline_mode = #tpu.pipeline_mode<synchronous>, transform_indices = @transform_4, window_bounds = array<i64: 16, 32>}, {pipeline_mode = #tpu.pipeline_mode<synchronous>, transform_indices = @transform_5, window_bounds = array<i64: 1, 32>}, {pipeline_mode = #tpu.pipeline_mode<synchronous>, transform_indices = @transform_6, window_bounds = array<i64: 2, 32, 32>}, {pipeline_mode = #tpu.pipeline_mode<synchronous>, transform_indices = @transform_7, window_bounds = array<i64: 2, 1, 32>}, {pipeline_mode = #tpu.pipeline_mode<synchronous>, transform_indices = @transform_8, window_bounds = array<i64: 2, 32, 32>}, {pipeline_mode = #tpu.pipeline_mode<synchronous>, transform_indices = @transform_9, window_bounds = array<i64: 2, 1, 32>}, {pipeline_mode = #tpu.pipeline_mode<synchronous>, transform_indices = @transform_10, window_bounds = array<i64: 2, 32, 32>}, {pipeline_mode = #tpu.pipeline_mode<synchronous>, transform_indices = @transform_11, window_bounds = array<i64: 2, 1, 32>}, {pipeline_mode = #tpu.pipeline_mode<synchronous>, transform_indices = @transform_12, window_bounds = array<i64: 2, 32, 32>}, {pipeline_mode = #tpu.pipeline_mode<synchronous>, transform_indices = @transform_13, window_bounds = array<i64: 2, 1, 32>}, {pipeline_mode = #tpu.pipeline_mode<synchronous>, transform_indices = @transform_14, window_bounds = array<i64: 2, 1, 32>}, {pipeline_mode = #tpu.pipeline_mode<synchronous>, transform_indices = @transform_15, window_bounds = array<i64: 2, 1, 32>}, {pipeline_mode = #tpu.pipeline_mode<synchronous>, transform_indices = @transform_16, window_bounds = array<i64: 2, 32, 128>}, {pipeline_mode = #tpu.pipeline_mode<synchronous>, transform_indices = @transform_17, window_bounds = array<i64: 2, 1, 128>}, {pipeline_mode = #tpu.pipeline_mode<synchronous>, transform_indices = @transform_18, window_bounds = array<i64: 2, 128, 32>}, {pipeline_mode = #tpu.pipeline_mode<synchronous>, transform_indices = @transform_19, window_bounds = array<i64: 2, 1, 32>}, {pipeline_mode = #tpu.pipeline_mode<synchronous>, transform_indices = @transform_20, window_bounds = array<i64: 2, 1, 32>}, {pipeline_mode = #tpu.pipeline_mode<synchronous>, transform_indices = @transform_21, window_bounds = array<i64: 2, 1, 32>}, {transform_indices = @transform_22, window_bounds = array<i64: 8, 32>}]} {
    %c0 = arith.constant 0 : index
    %c0_0 = arith.constant 0 : index
    %0 = vector.load %arg2[%c0, %c0_0] : memref<64x16xf32, #tpu.memory_space<vmem>>, vector<64x16xf32>
    %c0_1 = arith.constant 0 : index
    %c0_2 = arith.constant 0 : index
    %1 = vector.load %arg4[%c0_1, %c0_2] : memref<16x32xf32, #tpu.memory_space<vmem>>, vector<16x32xf32>
    %cst = arith.constant dense<0.000000e+00> : vector<64x32xf32>
    %2 = tpu.matmul %0, %1, %cst {dimension_numbers = #tpu.dot_dimension_numbers<[1], [0], [0], [1], [0, 0, 1, 1], [], []>} : vector<64x16xf32>, vector<16x32xf32>, vector<64x32xf32> -> vector<64x32xf32>
    %c0_3 = arith.constant 0 : index
    %c0_4 = arith.constant 0 : index
    %3 = vector.load %arg3[%c0_3, %c0_4] : memref<64x16xf32, #tpu.memory_space<vmem>>, vector<64x16xf32>
    %c0_5 = arith.constant 0 : index
    %c0_6 = arith.constant 0 : index
    %4 = vector.load %arg5[%c0_5, %c0_6] : memref<16x32xf32, #tpu.memory_space<vmem>>, vector<16x32xf32>
    %cst_7 = arith.constant dense<0.000000e+00> : vector<64x32xf32>
    %5 = tpu.matmul %3, %4, %cst_7 {dimension_numbers = #tpu.dot_dimension_numbers<[1], [0], [0], [1], [0, 0, 1, 1], [], []>} : vector<64x16xf32>, vector<16x32xf32>, vector<64x32xf32> -> vector<64x32xf32>
    %6 = arith.addf %2, %5 : vector<64x32xf32>
    %c0_8 = arith.constant 0 : index
    %c0_9 = arith.constant 0 : index
    %7 = vector.load %arg6[%c0_8, %c0_9] : memref<1x32xf32, #tpu.memory_space<vmem>>, vector<1x32xf32>
    %8 = vector.broadcast %7 : vector<1x32xf32> to vector<64x32xf32>
    %9 = arith.addf %6, %8 : vector<64x32xf32>
    %cst_10 = arith.constant 0.000000e+00 : f32
    %10 = vector.broadcast %cst_10 : f32 to vector<64x32xf32>
    %11 = arith.maximumf %9, %10 : vector<64x32xf32>
    %12 = tpu.iota {dimensions = array<i32: 1>} : vector<64x64xi32>
    %13 = tpu.iota {dimensions = array<i32: 0>} : vector<64x64xi32>
    %c3_i32 = arith.constant 3 : i32
    %14 = vector.broadcast %c3_i32 : i32 to vector<64x64xi32>
    %15 = arith.shrsi %13, %14 : vector<64x64xi32>
    %c3_i32_11 = arith.constant 3 : i32
    %16 = vector.broadcast %c3_i32_11 : i32 to vector<64x64xi32>
    %17 = arith.shrsi %12, %16 : vector<64x64xi32>
    %18 = arith.cmpi eq, %15, %17 : vector<64x64xi32>
    %cst_12 = arith.constant 0.000000e+00 : f32
    %cst_13 = arith.constant -1.000000e+30 : f32
    %19 = vector.broadcast %cst_12 : f32 to vector<64x64xf32>
    %20 = vector.broadcast %cst_13 : f32 to vector<64x64xf32>
    %21 = arith.select %18, %19, %20 : vector<64x64xi1>, vector<64x64xf32>
    %c0_14 = arith.constant 0 : index
    %c0_15 = arith.constant 0 : index
    %c0_16 = arith.constant 0 : index
    %22 = vector.load %arg7[%c0_14, %c0_15, %c0_16] : memref<2x32x32xf32, #tpu.memory_space<vmem>>, vector<1x32x32xf32>
    %23 = vector.shape_cast %22 : vector<1x32x32xf32> to vector<32x32xf32>
    %cst_17 = arith.constant dense<0.000000e+00> : vector<64x32xf32>
    %24 = tpu.matmul %11, %23, %cst_17 {dimension_numbers = #tpu.dot_dimension_numbers<[1], [0], [0], [1], [0, 0, 1, 1], [], []>} : vector<64x32xf32>, vector<32x32xf32>, vector<64x32xf32> -> vector<64x32xf32>
    %c0_18 = arith.constant 0 : index
    %c0_19 = arith.constant 0 : index
    %c0_20 = arith.constant 0 : index
    %25 = vector.load %arg8[%c0_18, %c0_19, %c0_20] : memref<2x1x32xf32, #tpu.memory_space<vmem>>, vector<1x1x32xf32>
    %26 = vector.shape_cast %25 : vector<1x1x32xf32> to vector<1x32xf32>
    %27 = vector.broadcast %26 : vector<1x32xf32> to vector<64x32xf32>
    %28 = arith.addf %24, %27 : vector<64x32xf32>
    %29 = vector.shape_cast %28 : vector<64x32xf32> to vector<1x64x32xf32>
    %c0_21 = arith.constant 0 : index
    %c0_22 = arith.constant 0 : index
    %c0_23 = arith.constant 0 : index
    %30 = vector.load %arg9[%c0_21, %c0_22, %c0_23] : memref<2x32x32xf32, #tpu.memory_space<vmem>>, vector<1x32x32xf32>
    %31 = vector.shape_cast %30 : vector<1x32x32xf32> to vector<32x32xf32>
    %cst_24 = arith.constant dense<0.000000e+00> : vector<64x32xf32>
    %32 = tpu.matmul %11, %31, %cst_24 {dimension_numbers = #tpu.dot_dimension_numbers<[1], [0], [0], [1], [0, 0, 1, 1], [], []>} : vector<64x32xf32>, vector<32x32xf32>, vector<64x32xf32> -> vector<64x32xf32>
    %c0_25 = arith.constant 0 : index
    %c0_26 = arith.constant 0 : index
    %c0_27 = arith.constant 0 : index
    %33 = vector.load %arg10[%c0_25, %c0_26, %c0_27] : memref<2x1x32xf32, #tpu.memory_space<vmem>>, vector<1x1x32xf32>
    %34 = vector.shape_cast %33 : vector<1x1x32xf32> to vector<1x32xf32>
    %35 = vector.broadcast %34 : vector<1x32xf32> to vector<64x32xf32>
    %36 = arith.addf %32, %35 : vector<64x32xf32>
    %37 = vector.shape_cast %36 : vector<64x32xf32> to vector<1x64x32xf32>
    %c0_28 = arith.constant 0 : index
    %c0_29 = arith.constant 0 : index
    %c0_30 = arith.constant 0 : index
    %38 = vector.load %arg11[%c0_28, %c0_29, %c0_30] : memref<2x32x32xf32, #tpu.memory_space<vmem>>, vector<1x32x32xf32>
    %39 = vector.shape_cast %38 : vector<1x32x32xf32> to vector<32x32xf32>
    %cst_31 = arith.constant dense<0.000000e+00> : vector<64x32xf32>
    %40 = tpu.matmul %11, %39, %cst_31 {dimension_numbers = #tpu.dot_dimension_numbers<[1], [0], [0], [1], [0, 0, 1, 1], [], []>} : vector<64x32xf32>, vector<32x32xf32>, vector<64x32xf32> -> vector<64x32xf32>
    %c0_32 = arith.constant 0 : index
    %c0_33 = arith.constant 0 : index
    %c0_34 = arith.constant 0 : index
    %41 = vector.load %arg12[%c0_32, %c0_33, %c0_34] : memref<2x1x32xf32, #tpu.memory_space<vmem>>, vector<1x1x32xf32>
    %42 = vector.shape_cast %41 : vector<1x1x32xf32> to vector<1x32xf32>
    %43 = vector.broadcast %42 : vector<1x32xf32> to vector<64x32xf32>
    %44 = arith.addf %40, %43 : vector<64x32xf32>
    %45 = vector.shape_cast %44 : vector<64x32xf32> to vector<1x64x32xf32>
    "tpu.trace_start"() <{level = 10 : i32, message = "gqd,gkd->gqk"}> : () -> ()
    %cst_35 = arith.constant dense<0.000000e+00> : vector<1x64x64xf32>
    %46 = tpu.matmul %29, %37, %cst_35 {dimension_numbers = #tpu.dot_dimension_numbers<[2], [2], [1], [1], [0, 0, 0, 1, 1, 1], [0], [0]>} : vector<1x64x32xf32>, vector<1x64x32xf32>, vector<1x64x64xf32> -> vector<1x64x64xf32>
    "tpu.trace_stop"() : () -> ()
    %47 = vector.shape_cast %21 : vector<64x64xf32> to vector<1x64x64xf32>
    %48 = arith.addf %46, %47 : vector<1x64x64xf32>
    %cst_36 = arith.constant dense<0xFF800000> : vector<1x64xf32>
    %49 = vector.multi_reduction <maximumf>, %48, %cst_36 [2] : vector<1x64x64xf32> to vector<1x64xf32>
    %50 = vector.shape_cast %49 : vector<1x64xf32> to vector<1x64x1xf32>
    %51 = vector.broadcast %50 : vector<1x64x1xf32> to vector<1x64x64xf32>
    %52 = arith.subf %48, %51 : vector<1x64x64xf32>
    %53 = math.exp %52 : vector<1x64x64xf32>
    %cst_37 = arith.constant dense<0.000000e+00> : vector<1x64xf32>
    %54 = vector.multi_reduction <add>, %53, %cst_37 [2] : vector<1x64x64xf32> to vector<1x64xf32>
    %55 = vector.shape_cast %54 : vector<1x64xf32> to vector<1x64x1xf32>
    %56 = tpu.reciprocal %55 : vector<1x64x1xf32> -> vector<1x64x1xf32>
    %57 = vector.broadcast %56 : vector<1x64x1xf32> to vector<1x64x64xf32>
    %58 = arith.mulf %53, %57 : vector<1x64x64xf32>
    "tpu.trace_start"() <{level = 10 : i32, message = "gqk,gkd->gqd"}> : () -> ()
    %cst_38 = arith.constant dense<0.000000e+00> : vector<1x64x32xf32>
    %59 = tpu.matmul %58, %45, %cst_38 {dimension_numbers = #tpu.dot_dimension_numbers<[2], [1], [1], [2], [0, 0, 0, 1, 1, 2], [0], [0]>} : vector<1x64x64xf32>, vector<1x64x32xf32>, vector<1x64x32xf32> -> vector<1x64x32xf32>
    "tpu.trace_stop"() : () -> ()
    %60 = vector.shape_cast %59 : vector<1x64x32xf32> to vector<64x32xf32>
    %c0_39 = arith.constant 0 : index
    %c0_40 = arith.constant 0 : index
    %c0_41 = arith.constant 0 : index
    %61 = vector.load %arg13[%c0_39, %c0_40, %c0_41] : memref<2x32x32xf32, #tpu.memory_space<vmem>>, vector<1x32x32xf32>
    %62 = vector.shape_cast %61 : vector<1x32x32xf32> to vector<32x32xf32>
    %cst_42 = arith.constant dense<0.000000e+00> : vector<64x32xf32>
    %63 = tpu.matmul %60, %62, %cst_42 {dimension_numbers = #tpu.dot_dimension_numbers<[1], [0], [0], [1], [0, 0, 1, 1], [], []>} : vector<64x32xf32>, vector<32x32xf32>, vector<64x32xf32> -> vector<64x32xf32>
    %c0_43 = arith.constant 0 : index
    %c0_44 = arith.constant 0 : index
    %c0_45 = arith.constant 0 : index
    %64 = vector.load %arg14[%c0_43, %c0_44, %c0_45] : memref<2x1x32xf32, #tpu.memory_space<vmem>>, vector<1x1x32xf32>
    %65 = vector.shape_cast %64 : vector<1x1x32xf32> to vector<1x32xf32>
    %66 = vector.broadcast %65 : vector<1x32xf32> to vector<64x32xf32>
    %67 = arith.addf %63, %66 : vector<64x32xf32>
    %68 = arith.addf %11, %67 : vector<64x32xf32>
    %c0_46 = arith.constant 0 : index
    %c0_47 = arith.constant 0 : index
    %c0_48 = arith.constant 0 : index
    %69 = vector.load %arg15[%c0_46, %c0_47, %c0_48] : memref<2x1x32xf32, #tpu.memory_space<vmem>>, vector<1x1x32xf32>
    %70 = vector.shape_cast %69 : vector<1x1x32xf32> to vector<1x32xf32>
    %c0_49 = arith.constant 0 : index
    %c0_50 = arith.constant 0 : index
    %c0_51 = arith.constant 0 : index
    %71 = vector.load %arg16[%c0_49, %c0_50, %c0_51] : memref<2x1x32xf32, #tpu.memory_space<vmem>>, vector<1x1x32xf32>
    %72 = vector.shape_cast %71 : vector<1x1x32xf32> to vector<1x32xf32>
    %cst_52 = arith.constant dense<0.000000e+00> : vector<64xf32>
    %73 = vector.multi_reduction <add>, %68, %cst_52 [1] : vector<64x32xf32> to vector<64xf32>
    %74 = vector.shape_cast %73 : vector<64xf32> to vector<64x1xf32>
    %cst_53 = arith.constant 3.200000e+01 : f32
    %75 = vector.broadcast %cst_53 : f32 to vector<64x1xf32>
    %76 = arith.divf %74, %75 : vector<64x1xf32>
    %77 = vector.broadcast %76 : vector<64x1xf32> to vector<64x32xf32>
    %78 = arith.subf %68, %77 : vector<64x32xf32>
    %79 = arith.mulf %78, %78 : vector<64x32xf32>
    %cst_54 = arith.constant dense<0.000000e+00> : vector<64xf32>
    %80 = vector.multi_reduction <add>, %79, %cst_54 [1] : vector<64x32xf32> to vector<64xf32>
    %81 = vector.shape_cast %80 : vector<64xf32> to vector<64x1xf32>
    %cst_55 = arith.constant 3.200000e+01 : f32
    %82 = vector.broadcast %cst_55 : f32 to vector<64x1xf32>
    %83 = arith.divf %81, %82 : vector<64x1xf32>
    %84 = vector.broadcast %76 : vector<64x1xf32> to vector<64x32xf32>
    %85 = arith.subf %68, %84 : vector<64x32xf32>
    %cst_56 = arith.constant 9.99999974E-6 : f32
    %86 = vector.broadcast %cst_56 : f32 to vector<64x1xf32>
    %87 = arith.addf %83, %86 : vector<64x1xf32>
    %88 = math.rsqrt %87 : vector<64x1xf32>
    %89 = vector.broadcast %88 : vector<64x1xf32> to vector<64x32xf32>
    %90 = arith.mulf %85, %89 : vector<64x32xf32>
    %91 = vector.broadcast %70 : vector<1x32xf32> to vector<64x32xf32>
    %92 = arith.mulf %90, %91 : vector<64x32xf32>
    %93 = vector.broadcast %72 : vector<1x32xf32> to vector<64x32xf32>
    %94 = arith.addf %92, %93 : vector<64x32xf32>
    %c0_57 = arith.constant 0 : index
    %c0_58 = arith.constant 0 : index
    %c0_59 = arith.constant 0 : index
    %95 = vector.load %arg17[%c0_57, %c0_58, %c0_59] : memref<2x32x128xf32, #tpu.memory_space<vmem>>, vector<1x32x128xf32>
    %96 = vector.shape_cast %95 : vector<1x32x128xf32> to vector<32x128xf32>
    %cst_60 = arith.constant dense<0.000000e+00> : vector<64x128xf32>
    %97 = tpu.matmul %94, %96, %cst_60 {dimension_numbers = #tpu.dot_dimension_numbers<[1], [0], [0], [1], [0, 0, 1, 1], [], []>} : vector<64x32xf32>, vector<32x128xf32>, vector<64x128xf32> -> vector<64x128xf32>
    %c0_61 = arith.constant 0 : index
    %c0_62 = arith.constant 0 : index
    %c0_63 = arith.constant 0 : index
    %98 = vector.load %arg18[%c0_61, %c0_62, %c0_63] : memref<2x1x128xf32, #tpu.memory_space<vmem>>, vector<1x1x128xf32>
    %99 = vector.shape_cast %98 : vector<1x1x128xf32> to vector<1x128xf32>
    %100 = vector.broadcast %99 : vector<1x128xf32> to vector<64x128xf32>
    %101 = arith.addf %97, %100 : vector<64x128xf32>
    %cst_64 = arith.constant 0.000000e+00 : f32
    %102 = vector.broadcast %cst_64 : f32 to vector<64x128xf32>
    %103 = arith.maximumf %101, %102 : vector<64x128xf32>
    %c0_65 = arith.constant 0 : index
    %c0_66 = arith.constant 0 : index
    %c0_67 = arith.constant 0 : index
    %104 = vector.load %arg19[%c0_65, %c0_66, %c0_67] : memref<2x128x32xf32, #tpu.memory_space<vmem>>, vector<1x128x32xf32>
    %105 = vector.shape_cast %104 : vector<1x128x32xf32> to vector<128x32xf32>
    %cst_68 = arith.constant dense<0.000000e+00> : vector<64x32xf32>
    %106 = tpu.matmul %103, %105, %cst_68 {dimension_numbers = #tpu.dot_dimension_numbers<[1], [0], [0], [1], [0, 0, 1, 1], [], []>} : vector<64x128xf32>, vector<128x32xf32>, vector<64x32xf32> -> vector<64x32xf32>
    %c0_69 = arith.constant 0 : index
    %c0_70 = arith.constant 0 : index
    %c0_71 = arith.constant 0 : index
    %107 = vector.load %arg20[%c0_69, %c0_70, %c0_71] : memref<2x1x32xf32, #tpu.memory_space<vmem>>, vector<1x1x32xf32>
    %108 = vector.shape_cast %107 : vector<1x1x32xf32> to vector<1x32xf32>
    %109 = vector.broadcast %108 : vector<1x32xf32> to vector<64x32xf32>
    %110 = arith.addf %106, %109 : vector<64x32xf32>
    %111 = arith.addf %94, %110 : vector<64x32xf32>
    %c0_72 = arith.constant 0 : index
    %c0_73 = arith.constant 0 : index
    %c0_74 = arith.constant 0 : index
    %112 = vector.load %arg21[%c0_72, %c0_73, %c0_74] : memref<2x1x32xf32, #tpu.memory_space<vmem>>, vector<1x1x32xf32>
    %113 = vector.shape_cast %112 : vector<1x1x32xf32> to vector<1x32xf32>
    %c0_75 = arith.constant 0 : index
    %c0_76 = arith.constant 0 : index
    %c0_77 = arith.constant 0 : index
    %114 = vector.load %arg22[%c0_75, %c0_76, %c0_77] : memref<2x1x32xf32, #tpu.memory_space<vmem>>, vector<1x1x32xf32>
    %115 = vector.shape_cast %114 : vector<1x1x32xf32> to vector<1x32xf32>
    %cst_78 = arith.constant dense<0.000000e+00> : vector<64xf32>
    %116 = vector.multi_reduction <add>, %111, %cst_78 [1] : vector<64x32xf32> to vector<64xf32>
    %117 = vector.shape_cast %116 : vector<64xf32> to vector<64x1xf32>
    %cst_79 = arith.constant 3.200000e+01 : f32
    %118 = vector.broadcast %cst_79 : f32 to vector<64x1xf32>
    %119 = arith.divf %117, %118 : vector<64x1xf32>
    %120 = vector.broadcast %119 : vector<64x1xf32> to vector<64x32xf32>
    %121 = arith.subf %111, %120 : vector<64x32xf32>
    %122 = arith.mulf %121, %121 : vector<64x32xf32>
    %cst_80 = arith.constant dense<0.000000e+00> : vector<64xf32>
    %123 = vector.multi_reduction <add>, %122, %cst_80 [1] : vector<64x32xf32> to vector<64xf32>
    %124 = vector.shape_cast %123 : vector<64xf32> to vector<64x1xf32>
    %cst_81 = arith.constant 3.200000e+01 : f32
    %125 = vector.broadcast %cst_81 : f32 to vector<64x1xf32>
    %126 = arith.divf %124, %125 : vector<64x1xf32>
    %127 = vector.broadcast %119 : vector<64x1xf32> to vector<64x32xf32>
    %128 = arith.subf %111, %127 : vector<64x32xf32>
    %cst_82 = arith.constant 9.99999974E-6 : f32
    %129 = vector.broadcast %cst_82 : f32 to vector<64x1xf32>
    %130 = arith.addf %126, %129 : vector<64x1xf32>
    %131 = math.rsqrt %130 : vector<64x1xf32>
    %132 = vector.broadcast %131 : vector<64x1xf32> to vector<64x32xf32>
    %133 = arith.mulf %128, %132 : vector<64x32xf32>
    %134 = vector.broadcast %113 : vector<1x32xf32> to vector<64x32xf32>
    %135 = arith.mulf %133, %134 : vector<64x32xf32>
    %136 = vector.broadcast %115 : vector<1x32xf32> to vector<64x32xf32>
    %137 = arith.addf %135, %136 : vector<64x32xf32>
    %c1 = arith.constant 1 : index
    %c0_83 = arith.constant 0 : index
    %c0_84 = arith.constant 0 : index
    %138 = vector.load %arg7[%c1, %c0_83, %c0_84] : memref<2x32x32xf32, #tpu.memory_space<vmem>>, vector<1x32x32xf32>
    %139 = vector.shape_cast %138 : vector<1x32x32xf32> to vector<32x32xf32>
    %cst_85 = arith.constant dense<0.000000e+00> : vector<64x32xf32>
    %140 = tpu.matmul %137, %139, %cst_85 {dimension_numbers = #tpu.dot_dimension_numbers<[1], [0], [0], [1], [0, 0, 1, 1], [], []>} : vector<64x32xf32>, vector<32x32xf32>, vector<64x32xf32> -> vector<64x32xf32>
    %c1_86 = arith.constant 1 : index
    %c0_87 = arith.constant 0 : index
    %c0_88 = arith.constant 0 : index
    %141 = vector.load %arg8[%c1_86, %c0_87, %c0_88] : memref<2x1x32xf32, #tpu.memory_space<vmem>>, vector<1x1x32xf32>
    %142 = vector.shape_cast %141 : vector<1x1x32xf32> to vector<1x32xf32>
    %143 = vector.broadcast %142 : vector<1x32xf32> to vector<64x32xf32>
    %144 = arith.addf %140, %143 : vector<64x32xf32>
    %145 = vector.shape_cast %144 : vector<64x32xf32> to vector<1x64x32xf32>
    %c1_89 = arith.constant 1 : index
    %c0_90 = arith.constant 0 : index
    %c0_91 = arith.constant 0 : index
    %146 = vector.load %arg9[%c1_89, %c0_90, %c0_91] : memref<2x32x32xf32, #tpu.memory_space<vmem>>, vector<1x32x32xf32>
    %147 = vector.shape_cast %146 : vector<1x32x32xf32> to vector<32x32xf32>
    %cst_92 = arith.constant dense<0.000000e+00> : vector<64x32xf32>
    %148 = tpu.matmul %137, %147, %cst_92 {dimension_numbers = #tpu.dot_dimension_numbers<[1], [0], [0], [1], [0, 0, 1, 1], [], []>} : vector<64x32xf32>, vector<32x32xf32>, vector<64x32xf32> -> vector<64x32xf32>
    %c1_93 = arith.constant 1 : index
    %c0_94 = arith.constant 0 : index
    %c0_95 = arith.constant 0 : index
    %149 = vector.load %arg10[%c1_93, %c0_94, %c0_95] : memref<2x1x32xf32, #tpu.memory_space<vmem>>, vector<1x1x32xf32>
    %150 = vector.shape_cast %149 : vector<1x1x32xf32> to vector<1x32xf32>
    %151 = vector.broadcast %150 : vector<1x32xf32> to vector<64x32xf32>
    %152 = arith.addf %148, %151 : vector<64x32xf32>
    %153 = vector.shape_cast %152 : vector<64x32xf32> to vector<1x64x32xf32>
    %c1_96 = arith.constant 1 : index
    %c0_97 = arith.constant 0 : index
    %c0_98 = arith.constant 0 : index
    %154 = vector.load %arg11[%c1_96, %c0_97, %c0_98] : memref<2x32x32xf32, #tpu.memory_space<vmem>>, vector<1x32x32xf32>
    %155 = vector.shape_cast %154 : vector<1x32x32xf32> to vector<32x32xf32>
    %cst_99 = arith.constant dense<0.000000e+00> : vector<64x32xf32>
    %156 = tpu.matmul %137, %155, %cst_99 {dimension_numbers = #tpu.dot_dimension_numbers<[1], [0], [0], [1], [0, 0, 1, 1], [], []>} : vector<64x32xf32>, vector<32x32xf32>, vector<64x32xf32> -> vector<64x32xf32>
    %c1_100 = arith.constant 1 : index
    %c0_101 = arith.constant 0 : index
    %c0_102 = arith.constant 0 : index
    %157 = vector.load %arg12[%c1_100, %c0_101, %c0_102] : memref<2x1x32xf32, #tpu.memory_space<vmem>>, vector<1x1x32xf32>
    %158 = vector.shape_cast %157 : vector<1x1x32xf32> to vector<1x32xf32>
    %159 = vector.broadcast %158 : vector<1x32xf32> to vector<64x32xf32>
    %160 = arith.addf %156, %159 : vector<64x32xf32>
    %161 = vector.shape_cast %160 : vector<64x32xf32> to vector<1x64x32xf32>
    "tpu.trace_start"() <{level = 10 : i32, message = "gqd,gkd->gqk"}> : () -> ()
    %cst_103 = arith.constant dense<0.000000e+00> : vector<1x64x64xf32>
    %162 = tpu.matmul %145, %153, %cst_103 {dimension_numbers = #tpu.dot_dimension_numbers<[2], [2], [1], [1], [0, 0, 0, 1, 1, 1], [0], [0]>} : vector<1x64x32xf32>, vector<1x64x32xf32>, vector<1x64x64xf32> -> vector<1x64x64xf32>
    "tpu.trace_stop"() : () -> ()
    %163 = vector.shape_cast %21 : vector<64x64xf32> to vector<1x64x64xf32>
    %164 = arith.addf %162, %163 : vector<1x64x64xf32>
    %cst_104 = arith.constant dense<0xFF800000> : vector<1x64xf32>
    %165 = vector.multi_reduction <maximumf>, %164, %cst_104 [2] : vector<1x64x64xf32> to vector<1x64xf32>
    %166 = vector.shape_cast %165 : vector<1x64xf32> to vector<1x64x1xf32>
    %167 = vector.broadcast %166 : vector<1x64x1xf32> to vector<1x64x64xf32>
    %168 = arith.subf %164, %167 : vector<1x64x64xf32>
    %169 = math.exp %168 : vector<1x64x64xf32>
    %cst_105 = arith.constant dense<0.000000e+00> : vector<1x64xf32>
    %170 = vector.multi_reduction <add>, %169, %cst_105 [2] : vector<1x64x64xf32> to vector<1x64xf32>
    %171 = vector.shape_cast %170 : vector<1x64xf32> to vector<1x64x1xf32>
    %172 = tpu.reciprocal %171 : vector<1x64x1xf32> -> vector<1x64x1xf32>
    %173 = vector.broadcast %172 : vector<1x64x1xf32> to vector<1x64x64xf32>
    %174 = arith.mulf %169, %173 : vector<1x64x64xf32>
    "tpu.trace_start"() <{level = 10 : i32, message = "gqk,gkd->gqd"}> : () -> ()
    %cst_106 = arith.constant dense<0.000000e+00> : vector<1x64x32xf32>
    %175 = tpu.matmul %174, %161, %cst_106 {dimension_numbers = #tpu.dot_dimension_numbers<[2], [1], [1], [2], [0, 0, 0, 1, 1, 2], [0], [0]>} : vector<1x64x64xf32>, vector<1x64x32xf32>, vector<1x64x32xf32> -> vector<1x64x32xf32>
    "tpu.trace_stop"() : () -> ()
    %176 = vector.shape_cast %175 : vector<1x64x32xf32> to vector<64x32xf32>
    %c1_107 = arith.constant 1 : index
    %c0_108 = arith.constant 0 : index
    %c0_109 = arith.constant 0 : index
    %177 = vector.load %arg13[%c1_107, %c0_108, %c0_109] : memref<2x32x32xf32, #tpu.memory_space<vmem>>, vector<1x32x32xf32>
    %178 = vector.shape_cast %177 : vector<1x32x32xf32> to vector<32x32xf32>
    %cst_110 = arith.constant dense<0.000000e+00> : vector<64x32xf32>
    %179 = tpu.matmul %176, %178, %cst_110 {dimension_numbers = #tpu.dot_dimension_numbers<[1], [0], [0], [1], [0, 0, 1, 1], [], []>} : vector<64x32xf32>, vector<32x32xf32>, vector<64x32xf32> -> vector<64x32xf32>
    %c1_111 = arith.constant 1 : index
    %c0_112 = arith.constant 0 : index
    %c0_113 = arith.constant 0 : index
    %180 = vector.load %arg14[%c1_111, %c0_112, %c0_113] : memref<2x1x32xf32, #tpu.memory_space<vmem>>, vector<1x1x32xf32>
    %181 = vector.shape_cast %180 : vector<1x1x32xf32> to vector<1x32xf32>
    %182 = vector.broadcast %181 : vector<1x32xf32> to vector<64x32xf32>
    %183 = arith.addf %179, %182 : vector<64x32xf32>
    %184 = arith.addf %137, %183 : vector<64x32xf32>
    %c1_114 = arith.constant 1 : index
    %c0_115 = arith.constant 0 : index
    %c0_116 = arith.constant 0 : index
    %185 = vector.load %arg15[%c1_114, %c0_115, %c0_116] : memref<2x1x32xf32, #tpu.memory_space<vmem>>, vector<1x1x32xf32>
    %186 = vector.shape_cast %185 : vector<1x1x32xf32> to vector<1x32xf32>
    %c1_117 = arith.constant 1 : index
    %c0_118 = arith.constant 0 : index
    %c0_119 = arith.constant 0 : index
    %187 = vector.load %arg16[%c1_117, %c0_118, %c0_119] : memref<2x1x32xf32, #tpu.memory_space<vmem>>, vector<1x1x32xf32>
    %188 = vector.shape_cast %187 : vector<1x1x32xf32> to vector<1x32xf32>
    %cst_120 = arith.constant dense<0.000000e+00> : vector<64xf32>
    %189 = vector.multi_reduction <add>, %184, %cst_120 [1] : vector<64x32xf32> to vector<64xf32>
    %190 = vector.shape_cast %189 : vector<64xf32> to vector<64x1xf32>
    %cst_121 = arith.constant 3.200000e+01 : f32
    %191 = vector.broadcast %cst_121 : f32 to vector<64x1xf32>
    %192 = arith.divf %190, %191 : vector<64x1xf32>
    %193 = vector.broadcast %192 : vector<64x1xf32> to vector<64x32xf32>
    %194 = arith.subf %184, %193 : vector<64x32xf32>
    %195 = arith.mulf %194, %194 : vector<64x32xf32>
    %cst_122 = arith.constant dense<0.000000e+00> : vector<64xf32>
    %196 = vector.multi_reduction <add>, %195, %cst_122 [1] : vector<64x32xf32> to vector<64xf32>
    %197 = vector.shape_cast %196 : vector<64xf32> to vector<64x1xf32>
    %cst_123 = arith.constant 3.200000e+01 : f32
    %198 = vector.broadcast %cst_123 : f32 to vector<64x1xf32>
    %199 = arith.divf %197, %198 : vector<64x1xf32>
    %200 = vector.broadcast %192 : vector<64x1xf32> to vector<64x32xf32>
    %201 = arith.subf %184, %200 : vector<64x32xf32>
    %cst_124 = arith.constant 9.99999974E-6 : f32
    %202 = vector.broadcast %cst_124 : f32 to vector<64x1xf32>
    %203 = arith.addf %199, %202 : vector<64x1xf32>
    %204 = math.rsqrt %203 : vector<64x1xf32>
    %205 = vector.broadcast %204 : vector<64x1xf32> to vector<64x32xf32>
    %206 = arith.mulf %201, %205 : vector<64x32xf32>
    %207 = vector.broadcast %186 : vector<1x32xf32> to vector<64x32xf32>
    %208 = arith.mulf %206, %207 : vector<64x32xf32>
    %209 = vector.broadcast %188 : vector<1x32xf32> to vector<64x32xf32>
    %210 = arith.addf %208, %209 : vector<64x32xf32>
    %c1_125 = arith.constant 1 : index
    %c0_126 = arith.constant 0 : index
    %c0_127 = arith.constant 0 : index
    %211 = vector.load %arg17[%c1_125, %c0_126, %c0_127] : memref<2x32x128xf32, #tpu.memory_space<vmem>>, vector<1x32x128xf32>
    %212 = vector.shape_cast %211 : vector<1x32x128xf32> to vector<32x128xf32>
    %cst_128 = arith.constant dense<0.000000e+00> : vector<64x128xf32>
    %213 = tpu.matmul %210, %212, %cst_128 {dimension_numbers = #tpu.dot_dimension_numbers<[1], [0], [0], [1], [0, 0, 1, 1], [], []>} : vector<64x32xf32>, vector<32x128xf32>, vector<64x128xf32> -> vector<64x128xf32>
    %c1_129 = arith.constant 1 : index
    %c0_130 = arith.constant 0 : index
    %c0_131 = arith.constant 0 : index
    %214 = vector.load %arg18[%c1_129, %c0_130, %c0_131] : memref<2x1x128xf32, #tpu.memory_space<vmem>>, vector<1x1x128xf32>
    %215 = vector.shape_cast %214 : vector<1x1x128xf32> to vector<1x128xf32>
    %216 = vector.broadcast %215 : vector<1x128xf32> to vector<64x128xf32>
    %217 = arith.addf %213, %216 : vector<64x128xf32>
    %cst_132 = arith.constant 0.000000e+00 : f32
    %218 = vector.broadcast %cst_132 : f32 to vector<64x128xf32>
    %219 = arith.maximumf %217, %218 : vector<64x128xf32>
    %c1_133 = arith.constant 1 : index
    %c0_134 = arith.constant 0 : index
    %c0_135 = arith.constant 0 : index
    %220 = vector.load %arg19[%c1_133, %c0_134, %c0_135] : memref<2x128x32xf32, #tpu.memory_space<vmem>>, vector<1x128x32xf32>
    %221 = vector.shape_cast %220 : vector<1x128x32xf32> to vector<128x32xf32>
    %cst_136 = arith.constant dense<0.000000e+00> : vector<64x32xf32>
    %222 = tpu.matmul %219, %221, %cst_136 {dimension_numbers = #tpu.dot_dimension_numbers<[1], [0], [0], [1], [0, 0, 1, 1], [], []>} : vector<64x128xf32>, vector<128x32xf32>, vector<64x32xf32> -> vector<64x32xf32>
    %c1_137 = arith.constant 1 : index
    %c0_138 = arith.constant 0 : index
    %c0_139 = arith.constant 0 : index
    %223 = vector.load %arg20[%c1_137, %c0_138, %c0_139] : memref<2x1x32xf32, #tpu.memory_space<vmem>>, vector<1x1x32xf32>
    %224 = vector.shape_cast %223 : vector<1x1x32xf32> to vector<1x32xf32>
    %225 = vector.broadcast %224 : vector<1x32xf32> to vector<64x32xf32>
    %226 = arith.addf %222, %225 : vector<64x32xf32>
    %227 = arith.addf %210, %226 : vector<64x32xf32>
    %c1_140 = arith.constant 1 : index
    %c0_141 = arith.constant 0 : index
    %c0_142 = arith.constant 0 : index
    %228 = vector.load %arg21[%c1_140, %c0_141, %c0_142] : memref<2x1x32xf32, #tpu.memory_space<vmem>>, vector<1x1x32xf32>
    %229 = vector.shape_cast %228 : vector<1x1x32xf32> to vector<1x32xf32>
    %c1_143 = arith.constant 1 : index
    %c0_144 = arith.constant 0 : index
    %c0_145 = arith.constant 0 : index
    %230 = vector.load %arg22[%c1_143, %c0_144, %c0_145] : memref<2x1x32xf32, #tpu.memory_space<vmem>>, vector<1x1x32xf32>
    %231 = vector.shape_cast %230 : vector<1x1x32xf32> to vector<1x32xf32>
    %cst_146 = arith.constant dense<0.000000e+00> : vector<64xf32>
    %232 = vector.multi_reduction <add>, %227, %cst_146 [1] : vector<64x32xf32> to vector<64xf32>
    %233 = vector.shape_cast %232 : vector<64xf32> to vector<64x1xf32>
    %cst_147 = arith.constant 3.200000e+01 : f32
    %234 = vector.broadcast %cst_147 : f32 to vector<64x1xf32>
    %235 = arith.divf %233, %234 : vector<64x1xf32>
    %236 = vector.broadcast %235 : vector<64x1xf32> to vector<64x32xf32>
    %237 = arith.subf %227, %236 : vector<64x32xf32>
    %238 = arith.mulf %237, %237 : vector<64x32xf32>
    %cst_148 = arith.constant dense<0.000000e+00> : vector<64xf32>
    %239 = vector.multi_reduction <add>, %238, %cst_148 [1] : vector<64x32xf32> to vector<64xf32>
    %240 = vector.shape_cast %239 : vector<64xf32> to vector<64x1xf32>
    %cst_149 = arith.constant 3.200000e+01 : f32
    %241 = vector.broadcast %cst_149 : f32 to vector<64x1xf32>
    %242 = arith.divf %240, %241 : vector<64x1xf32>
    %243 = vector.broadcast %235 : vector<64x1xf32> to vector<64x32xf32>
    %244 = arith.subf %227, %243 : vector<64x32xf32>
    %cst_150 = arith.constant 9.99999974E-6 : f32
    %245 = vector.broadcast %cst_150 : f32 to vector<64x1xf32>
    %246 = arith.addf %242, %245 : vector<64x1xf32>
    %247 = math.rsqrt %246 : vector<64x1xf32>
    %248 = vector.broadcast %247 : vector<64x1xf32> to vector<64x32xf32>
    %249 = arith.mulf %244, %248 : vector<64x32xf32>
    %250 = vector.broadcast %229 : vector<1x32xf32> to vector<64x32xf32>
    %251 = arith.mulf %249, %250 : vector<64x32xf32>
    %252 = vector.broadcast %231 : vector<1x32xf32> to vector<64x32xf32>
    %253 = arith.addf %251, %252 : vector<64x32xf32>
    %254 = vector.shape_cast %253 : vector<64x32xf32> to vector<8x8x32xf32>
    %255 = tpu.iota {dimensions = array<i32: 1>} : vector<8x8x1xi32>
    %c0_151 = arith.constant 0 : index
    %c0_152 = arith.constant 0 : index
    %256 = vector.load %arg1[%c0_151, %c0_152] : memref<8x1xi32, #tpu.memory_space<vmem>>, vector<8x1xi32>
    %257 = arith.sitofp %256 : vector<8x1xi32> to vector<8x1xf32>
    %258 = tpu.reciprocal %257 : vector<8x1xf32> -> vector<8x1xf32>
    %259 = vector.shape_cast %258 : vector<8x1xf32> to vector<8x1x1xf32>
    %260 = vector.shape_cast %256 : vector<8x1xi32> to vector<8x1x1xi32>
    %261 = vector.broadcast %260 : vector<8x1x1xi32> to vector<8x8x1xi32>
    %262 = arith.cmpi slt, %255, %261 : vector<8x8x1xi32>
    %cst_153 = arith.constant 0.000000e+00 : f32
    %263 = vector.shape_cast %259 : vector<8x1x1xf32> to vector<8x1x1xf32>
    %264 = vector.broadcast %263 : vector<8x1x1xf32> to vector<8x8x1xf32>
    %265 = vector.broadcast %cst_153 : f32 to vector<8x8x1xf32>
    %266 = arith.select %262, %264, %265 : vector<8x8x1xi1>, vector<8x8x1xf32>
    %267 = vector.broadcast %266 : vector<8x8x1xf32> to vector<8x8x32xf32>
    %268 = arith.mulf %254, %267 : vector<8x8x32xf32>
    %cst_154 = arith.constant dense<0.000000e+00> : vector<8x32xf32>
    %269 = vector.multi_reduction <add>, %268, %cst_154 [1] : vector<8x8x32xf32> to vector<8x32xf32>
    %c0_155 = arith.constant 0 : index
    %c0_156 = arith.constant 0 : index
    %270 = vector.load %arg23[%c0_155, %c0_156] : memref<8x32xf32, #tpu.memory_space<vmem>>, vector<8x32xf32>
    tpu.vector_store %arg23[%c0_155, %c0_156], %269 {strides = array<i32>} : memref<8x32xf32, #tpu.memory_space<vmem>>, vector<8x32xf32>,
    return
  }
  func.func @transform_0(%arg0: i32) -> (i32, i32) {
    %c0_i32 = arith.constant 0 : i32
    %c0_i32_0 = arith.constant 0 : i32
    return %arg0, %c0_i32 : i32, i32
  }
  func.func @transform_1(%arg0: i32) -> (i32, i32) {
    %c0_i32 = arith.constant 0 : i32
    %c0_i32_0 = arith.constant 0 : i32
    return %arg0, %c0_i32 : i32, i32
  }
  func.func @transform_2(%arg0: i32) -> (i32, i32) {
    %c0_i32 = arith.constant 0 : i32
    %c0_i32_0 = arith.constant 0 : i32
    return %arg0, %c0_i32 : i32, i32
  }
  func.func @transform_3(%arg0: i32) -> (i32, i32) {
    %c0_i32 = arith.constant 0 : i32
    %c0_i32_0 = arith.constant 0 : i32
    %c0_i32_1 = arith.constant 0 : i32
    return %c0_i32, %c0_i32_0 : i32, i32
  }
  func.func @transform_4(%arg0: i32) -> (i32, i32) {
    %c0_i32 = arith.constant 0 : i32
    %c0_i32_0 = arith.constant 0 : i32
    %c0_i32_1 = arith.constant 0 : i32
    return %c0_i32, %c0_i32_0 : i32, i32
  }
  func.func @transform_5(%arg0: i32) -> (i32, i32) {
    %c0_i32 = arith.constant 0 : i32
    %c0_i32_0 = arith.constant 0 : i32
    %c0_i32_1 = arith.constant 0 : i32
    return %c0_i32, %c0_i32_0 : i32, i32
  }
  func.func @transform_6(%arg0: i32) -> (i32, i32, i32) {
    %c0_i32 = arith.constant 0 : i32
    %c0_i32_0 = arith.constant 0 : i32
    %c0_i32_1 = arith.constant 0 : i32
    %c0_i32_2 = arith.constant 0 : i32
    return %c0_i32, %c0_i32_0, %c0_i32_1 : i32, i32, i32
  }
  func.func @transform_7(%arg0: i32) -> (i32, i32, i32) {
    %c0_i32 = arith.constant 0 : i32
    %c0_i32_0 = arith.constant 0 : i32
    %c0_i32_1 = arith.constant 0 : i32
    %c0_i32_2 = arith.constant 0 : i32
    return %c0_i32, %c0_i32_0, %c0_i32_1 : i32, i32, i32
  }
  func.func @transform_8(%arg0: i32) -> (i32, i32, i32) {
    %c0_i32 = arith.constant 0 : i32
    %c0_i32_0 = arith.constant 0 : i32
    %c0_i32_1 = arith.constant 0 : i32
    %c0_i32_2 = arith.constant 0 : i32
    return %c0_i32, %c0_i32_0, %c0_i32_1 : i32, i32, i32
  }
  func.func @transform_9(%arg0: i32) -> (i32, i32, i32) {
    %c0_i32 = arith.constant 0 : i32
    %c0_i32_0 = arith.constant 0 : i32
    %c0_i32_1 = arith.constant 0 : i32
    %c0_i32_2 = arith.constant 0 : i32
    return %c0_i32, %c0_i32_0, %c0_i32_1 : i32, i32, i32
  }
  func.func @transform_10(%arg0: i32) -> (i32, i32, i32) {
    %c0_i32 = arith.constant 0 : i32
    %c0_i32_0 = arith.constant 0 : i32
    %c0_i32_1 = arith.constant 0 : i32
    %c0_i32_2 = arith.constant 0 : i32
    return %c0_i32, %c0_i32_0, %c0_i32_1 : i32, i32, i32
  }
  func.func @transform_11(%arg0: i32) -> (i32, i32, i32) {
    %c0_i32 = arith.constant 0 : i32
    %c0_i32_0 = arith.constant 0 : i32
    %c0_i32_1 = arith.constant 0 : i32
    %c0_i32_2 = arith.constant 0 : i32
    return %c0_i32, %c0_i32_0, %c0_i32_1 : i32, i32, i32
  }
  func.func @transform_12(%arg0: i32) -> (i32, i32, i32) {
    %c0_i32 = arith.constant 0 : i32
    %c0_i32_0 = arith.constant 0 : i32
    %c0_i32_1 = arith.constant 0 : i32
    %c0_i32_2 = arith.constant 0 : i32
    return %c0_i32, %c0_i32_0, %c0_i32_1 : i32, i32, i32
  }
  func.func @transform_13(%arg0: i32) -> (i32, i32, i32) {
    %c0_i32 = arith.constant 0 : i32
    %c0_i32_0 = arith.constant 0 : i32
    %c0_i32_1 = arith.constant 0 : i32
    %c0_i32_2 = arith.constant 0 : i32
    return %c0_i32, %c0_i32_0, %c0_i32_1 : i32, i32, i32
  }
  func.func @transform_14(%arg0: i32) -> (i32, i32, i32) {
    %c0_i32 = arith.constant 0 : i32
    %c0_i32_0 = arith.constant 0 : i32
    %c0_i32_1 = arith.constant 0 : i32
    %c0_i32_2 = arith.constant 0 : i32
    return %c0_i32, %c0_i32_0, %c0_i32_1 : i32, i32, i32
  }
  func.func @transform_15(%arg0: i32) -> (i32, i32, i32) {
    %c0_i32 = arith.constant 0 : i32
    %c0_i32_0 = arith.constant 0 : i32
    %c0_i32_1 = arith.constant 0 : i32
    %c0_i32_2 = arith.constant 0 : i32
    return %c0_i32, %c0_i32_0, %c0_i32_1 : i32, i32, i32
  }
  func.func @transform_16(%arg0: i32) -> (i32, i32, i32) {
    %c0_i32 = arith.constant 0 : i32
    %c0_i32_0 = arith.constant 0 : i32
    %c0_i32_1 = arith.constant 0 : i32
    %c0_i32_2 = arith.constant 0 : i32
    return %c0_i32, %c0_i32_0, %c0_i32_1 : i32, i32, i32
  }
  func.func @transform_17(%arg0: i32) -> (i32, i32, i32) {
    %c0_i32 = arith.constant 0 : i32
    %c0_i32_0 = arith.constant 0 : i32
    %c0_i32_1 = arith.constant 0 : i32
    %c0_i32_2 = arith.constant 0 : i32
    return %c0_i32, %c0_i32_0, %c0_i32_1 : i32, i32, i32
  }
  func.func @transform_18(%arg0: i32) -> (i32, i32, i32) {
    %c0_i32 = arith.constant 0 : i32
    %c0_i32_0 = arith.constant 0 : i32
    %c0_i32_1 = arith.constant 0 : i32
    %c0_i32_2 = arith.constant 0 : i32
    return %c0_i32, %c0_i32_0, %c0_i32_1 : i32, i32, i32
  }
  func.func @transform_19(%arg0: i32) -> (i32, i32, i32) {
    %c0_i32 = arith.constant 0 : i32
    %c0_i32_0 = arith.constant 0 : i32
    %c0_i32_1 = arith.constant 0 : i32
    %c0_i32_2 = arith.constant 0 : i32
    return %c0_i32, %c0_i32_0, %c0_i32_1 : i32, i32, i32
  }
  func.func @transform_20(%arg0: i32) -> (i32, i32, i32) {
    %c0_i32 = arith.constant 0 : i32
    %c0_i32_0 = arith.constant 0 : i32
    %c0_i32_1 = arith.constant 0 : i32
    %c0_i32_2 = arith.constant 0 : i32
    return %c0_i32, %c0_i32_0, %c0_i32_1 : i32, i32, i32
  }
  func.func @transform_21(%arg0: i32) -> (i32, i32, i32) {
    %c0_i32 = arith.constant 0 : i32
    %c0_i32_0 = arith.constant 0 : i32
    %c0_i32_1 = arith.constant 0 : i32
    %c0_i32_2 = arith.constant 0 : i32
    return %c0_i32, %c0_i32_0, %c0_i32_1 : i32, i32, i32
  }
  func.func @transform_22(%arg0: i32) -> (i32, i32) {
    %c0_i32 = arith.constant 0 : i32
    %c0_i32_0 = arith.constant 0 : i32
    return %arg0, %c0_i32 : i32, i32
  }
}

module attributes {stable_mosaic.version = 11 : i64} {
  func.func @encoder_kernel(%arg0: i32, %arg1: memref<8x1xi32, #tpu.memory_space<vmem>>, %arg2: memref<64x16xf32, #tpu.memory_space<vmem>>, %arg3: memref<64x16xf32, #tpu.memory_space<vmem>>, %arg4: memref<16x32xf32, #tpu.memory_space<vmem>>, %arg5: memref<16x32xf32, #tpu.memory_space<vmem>>, %arg6: memref<1x32xf32, #tpu.memory_space<vmem>>, %arg7: memref<2x32x32xf32, #tpu.memory_space<vmem>>, %arg8: memref<2x1x32xf32, #tpu.memory_space<vmem>>, %arg9: memref<2x32x32xf32, #tpu.memory_space<vmem>>, %arg10: memref<2x1x32xf32, #tpu.memory_space<vmem>>, %arg11: memref<2x32x32xf32, #tpu.memory_space<vmem>>, %arg12: memref<2x1x32xf32, #tpu.memory_space<vmem>>, %arg13: memref<2x32x32xf32, #tpu.memory_space<vmem>>, %arg14: memref<2x1x32xf32, #tpu.memory_space<vmem>>, %arg15: memref<2x1x32xf32, #tpu.memory_space<vmem>>, %arg16: memref<2x1x32xf32, #tpu.memory_space<vmem>>, %arg17: memref<2x32x128xf32, #tpu.memory_space<vmem>>, %arg18: memref<2x1x128xf32, #tpu.memory_space<vmem>>, %arg19: memref<2x128x32xf32, #tpu.memory_space<vmem>>, %arg20: memref<2x1x32xf32, #tpu.memory_space<vmem>>, %arg21: memref<2x1x32xf32, #tpu.memory_space<vmem>>, %arg22: memref<2x1x32xf32, #tpu.memory_space<vmem>>, %arg23: memref<8x32xf32, #tpu.memory_space<vmem>>) attributes {dimension_semantics = [#tpu.dimension_semantics<parallel>], iteration_bounds = array<i64: 1>, scalar_prefetch = 0 : i64, scratch_operands = 0 : i64, tpu.core_type = #tpu.core_type<tc>, window_params = [{transform_indices = @transform_0, window_bounds = array<i64: 8, 1>}, {transform_indices = @transform_1, window_bounds = array<i64: 64, 16>}, {transform_indices = @transform_2, window_bounds = array<i64: 64, 16>}, {pipeline_mode = #tpu.pipeline_mode<synchronous>, transform_indices = @transform_3, window_bounds = array<i64: 16, 32>}, {pipeline_mode = #tpu.pipeline_mode<synchronous>, transform_indices = @transform_4, window_bounds = array<i64: 16, 32>}, {pipeline_mode = #tpu.pipeline_mode<synchronous>, transform_indices = @transform_5, window_bounds = array<i64: 1, 32>}, {pipeline_mode = #tpu.pipeline_mode<synchronous>, transform_indices = @transform_6, window_bounds = array<i64: 2, 32, 32>}, {pipeline_mode = #tpu.pipeline_mode<synchronous>, transform_indices = @transform_7, window_bounds = array<i64: 2, 1, 32>}, {pipeline_mode = #tpu.pipeline_mode<synchronous>, transform_indices = @transform_8, window_bounds = array<i64: 2, 32, 32>}, {pipeline_mode = #tpu.pipeline_mode<synchronous>, transform_indices = @transform_9, window_bounds = array<i64: 2, 1, 32>}, {pipeline_mode = #tpu.pipeline_mode<synchronous>, transform_indices = @transform_10, window_bounds = array<i64: 2, 32, 32>}, {pipeline_mode = #tpu.pipeline_mode<synchronous>, transform_indices = @transform_11, window_bounds = array<i64: 2, 1, 32>}, {pipeline_mode = #tpu.pipeline_mode<synchronous>, transform_indices = @transform_12, window_bounds = array<i64: 2, 32, 32>}, {pipeline_mode = #tpu.pipeline_mode<synchronous>, transform_indices = @transform_13, window_bounds = array<i64: 2, 1, 32>}, {pipeline_mode = #tpu.pipeline_mode<synchronous>, transform_indices = @transform_14, window_bounds = array<i64: 2, 1, 32>}, {pipeline_mode = #tpu.pipeline_mode<synchronous>, transform_indices = @transform_15, window_bounds = array<i64: 2, 1, 32>}, {pipeline_mode = #tpu.pipeline_mode<synchronous>, transform_indices = @transform_16, window_bounds = array<i64: 2, 32, 128>}, {pipeline_mode = #tpu.pipeline_mode<synchronous>, transform_indices = @transform_17, window_bounds = array<i64: 2, 1, 128>}, {pipeline_mode = #tpu.pipeline_mode<synchronous>, transform_indices = @transform_18, window_bounds = array<i64: 2, 128, 32>}, {pipeline_mode = #tpu.pipeline_mode<synchronous>, transform_indices = @transform_19, window_bounds = array<i64: 2, 1, 32>}, {pipeline_mode = #tpu.pipeline_mode<synchronous>, transform_indices = @transform_20, window_bounds = array<i64: 2, 1, 32>}, {pipeline_mode = #tpu.pipeline_mode<synchronous>, transform_indices = @transform_21, window_bounds = array<i64: 2, 1, 32>}, {transform_indices = @transform_22, window_bounds = array<i64: 8, 32>}]} {
    %c0 = arith.constant 0 : index
    %c0_0 = arith.constant 0 : index
    %0 = vector.load %arg2[%c0, %c0_0] : memref<64x16xf32, #tpu.memory_space<vmem>>, vector<64x16xf32>
    %c0_1 = arith.constant 0 : index
    %c0_2 = arith.constant 0 : index
    %1 = vector.load %arg4[%c0_1, %c0_2] : memref<16x32xf32, #tpu.memory_space<vmem>>, vector<16x32xf32>
    %cst = arith.constant dense<0.000000e+00> : vector<64x32xf32>
    %2 = tpu.matmul %0, %1, %cst {dimension_numbers = #tpu.dot_dimension_numbers<[1], [0], [0], [1], [0, 0, 1, 1], [], []>} : vector<64x16xf32>, vector<16x32xf32>, vector<64x32xf32> -> vector<64x32xf32>
    %c0_3 = arith.constant 0 : index
    %c0_4 = arith.constant 0 : index
    %3 = vector.load %arg3[%c0_3, %c0_4] : memref<64x16xf32, #tpu.memory_space<vmem>>, vector<64x16xf32>
    %c0_5 = arith.constant 0 : index
    %c0_6 = arith.constant 0 : index
    %4 = vector.load %arg5[%c0_5, %c0_6] : memref<16x32xf32, #tpu.memory_space<vmem>>, vector<16x32xf32>
    %cst_7 = arith.constant dense<0.000000e+00> : vector<64x32xf32>
    %5 = tpu.matmul %3, %4, %cst_7 {dimension_numbers = #tpu.dot_dimension_numbers<[1], [0], [0], [1], [0, 0, 1, 1], [], []>} : vector<64x16xf32>, vector<16x32xf32>, vector<64x32xf32> -> vector<64x32xf32>
    %6 = arith.addf %2, %5 : vector<64x32xf32>
    %c0_8 = arith.constant 0 : index
    %c0_9 = arith.constant 0 : index
    %7 = vector.load %arg6[%c0_8, %c0_9] : memref<1x32xf32, #tpu.memory_space<vmem>>, vector<1x32xf32>
    %8 = vector.broadcast %7 : vector<1x32xf32> to vector<64x32xf32>
    %9 = arith.addf %6, %8 : vector<64x32xf32>
    %cst_10 = arith.constant 0.000000e+00 : f32
    %10 = vector.broadcast %cst_10 : f32 to vector<64x32xf32>
    %11 = arith.maximumf %9, %10 : vector<64x32xf32>
    %12 = tpu.iota {dimensions = array<i32: 1>} : vector<64x64xi32>
    %13 = tpu.iota {dimensions = array<i32: 0>} : vector<64x64xi32>
    %c3_i32 = arith.constant 3 : i32
    %14 = vector.broadcast %c3_i32 : i32 to vector<64x64xi32>
    %15 = arith.shrsi %13, %14 : vector<64x64xi32>
    %c3_i32_11 = arith.constant 3 : i32
    %16 = vector.broadcast %c3_i32_11 : i32 to vector<64x64xi32>
    %17 = arith.shrsi %12, %16 : vector<64x64xi32>
    %18 = arith.cmpi eq, %15, %17 : vector<64x64xi32>
    %cst_12 = arith.constant 0.000000e+00 : f32
    %cst_13 = arith.constant -1.000000e+30 : f32
    %19 = vector.broadcast %cst_12 : f32 to vector<64x64xf32>
    %20 = vector.broadcast %cst_13 : f32 to vector<64x64xf32>
    %21 = arith.select %18, %19, %20 : vector<64x64xi1>, vector<64x64xf32>
    %c0_14 = arith.constant 0 : index
    %c0_15 = arith.constant 0 : index
    %c0_16 = arith.constant 0 : index
    %22 = vector.load %arg7[%c0_14, %c0_15, %c0_16] : memref<2x32x32xf32, #tpu.memory_space<vmem>>, vector<1x32x32xf32>
    %23 = vector.shape_cast %22 : vector<1x32x32xf32> to vector<32x32xf32>
    %cst_17 = arith.constant dense<0.000000e+00> : vector<64x32xf32>
    %24 = tpu.matmul %11, %23, %cst_17 {dimension_numbers = #tpu.dot_dimension_numbers<[1], [0], [0], [1], [0, 0, 1, 1], [], []>} : vector<64x32xf32>, vector<32x32xf32>, vector<64x32xf32> -> vector<64x32xf32>
    %c0_18 = arith.constant 0 : index
    %c0_19 = arith.constant 0 : index
    %c0_20 = arith.constant 0 : index
    %25 = vector.load %arg8[%c0_18, %c0_19, %c0_20] : memref<2x1x32xf32, #tpu.memory_space<vmem>>, vector<1x1x32xf32>
    %26 = vector.shape_cast %25 : vector<1x1x32xf32> to vector<1x32xf32>
    %27 = vector.broadcast %26 : vector<1x32xf32> to vector<64x32xf32>
    %28 = arith.addf %24, %27 : vector<64x32xf32>
    %29 = vector.shape_cast %28 : vector<64x32xf32> to vector<1x64x32xf32>
    %c0_21 = arith.constant 0 : index
    %c0_22 = arith.constant 0 : index
    %c0_23 = arith.constant 0 : index
    %30 = vector.load %arg9[%c0_21, %c0_22, %c0_23] : memref<2x32x32xf32, #tpu.memory_space<vmem>>, vector<1x32x32xf32>
    %31 = vector.shape_cast %30 : vector<1x32x32xf32> to vector<32x32xf32>
    %cst_24 = arith.constant dense<0.000000e+00> : vector<64x32xf32>
    %32 = tpu.matmul %11, %31, %cst_24 {dimension_numbers = #tpu.dot_dimension_numbers<[1], [0], [0], [1], [0, 0, 1, 1], [], []>} : vector<64x32xf32>, vector<32x32xf32>, vector<64x32xf32> -> vector<64x32xf32>
    %c0_25 = arith.constant 0 : index
    %c0_26 = arith.constant 0 : index
    %c0_27 = arith.constant 0 : index
    %33 = vector.load %arg10[%c0_25, %c0_26, %c0_27] : memref<2x1x32xf32, #tpu.memory_space<vmem>>, vector<1x1x32xf32>
    %34 = vector.shape_cast %33 : vector<1x1x32xf32> to vector<1x32xf32>
    %35 = vector.broadcast %34 : vector<1x32xf32> to vector<64x32xf32>
    %36 = arith.addf %32, %35 : vector<64x32xf32>
    %37 = vector.shape_cast %36 : vector<64x32xf32> to vector<1x64x32xf32>
    %c0_28 = arith.constant 0 : index
    %c0_29 = arith.constant 0 : index
    %c0_30 = arith.constant 0 : index
    %38 = vector.load %arg11[%c0_28, %c0_29, %c0_30] : memref<2x32x32xf32, #tpu.memory_space<vmem>>, vector<1x32x32xf32>
    %39 = vector.shape_cast %38 : vector<1x32x32xf32> to vector<32x32xf32>
    %cst_31 = arith.constant dense<0.000000e+00> : vector<64x32xf32>
    %40 = tpu.matmul %11, %39, %cst_31 {dimension_numbers = #tpu.dot_dimension_numbers<[1], [0], [0], [1], [0, 0, 1, 1], [], []>} : vector<64x32xf32>, vector<32x32xf32>, vector<64x32xf32> -> vector<64x32xf32>
    %c0_32 = arith.constant 0 : index
    %c0_33 = arith.constant 0 : index
    %c0_34 = arith.constant 0 : index
    %41 = vector.load %arg12[%c0_32, %c0_33, %c0_34] : memref<2x1x32xf32, #tpu.memory_space<vmem>>, vector<1x1x32xf32>
    %42 = vector.shape_cast %41 : vector<1x1x32xf32> to vector<1x32xf32>
    %43 = vector.broadcast %42 : vector<1x32xf32> to vector<64x32xf32>
    %44 = arith.addf %40, %43 : vector<64x32xf32>
    %45 = vector.shape_cast %44 : vector<64x32xf32> to vector<1x64x32xf32>
    "tpu.trace_start"() <{level = 10 : i32, message = "gqd,gkd->gqk"}> : () -> ()
    %cst_35 = arith.constant dense<0.000000e+00> : vector<1x64x64xf32>
    %46 = tpu.matmul %29, %37, %cst_35 {dimension_numbers = #tpu.dot_dimension_numbers<[2], [2], [1], [1], [0, 0, 0, 1, 1, 1], [0], [0]>} : vector<1x64x32xf32>, vector<1x64x32xf32>, vector<1x64x64xf32> -> vector<1x64x64xf32>
    "tpu.trace_stop"() : () -> ()
    %47 = vector.shape_cast %21 : vector<64x64xf32> to vector<1x64x64xf32>
    %48 = arith.addf %46, %47 : vector<1x64x64xf32>
    %cst_36 = arith.constant dense<0xFF800000> : vector<1x64xf32>
    %49 = vector.multi_reduction <maximumf>, %48, %cst_36 [2] : vector<1x64x64xf32> to vector<1x64xf32>
    %50 = vector.shape_cast %49 : vector<1x64xf32> to vector<1x64x1xf32>
    %51 = vector.broadcast %50 : vector<1x64x1xf32> to vector<1x64x64xf32>
    %52 = arith.subf %48, %51 : vector<1x64x64xf32>
    %53 = math.exp %52 : vector<1x64x64xf32>
    %cst_37 = arith.constant dense<0.000000e+00> : vector<1x64xf32>
    %54 = vector.multi_reduction <add>, %53, %cst_37 [2] : vector<1x64x64xf32> to vector<1x64xf32>
    %55 = vector.shape_cast %54 : vector<1x64xf32> to vector<1x64x1xf32>
    %56 = tpu.reciprocal %55 : vector<1x64x1xf32> -> vector<1x64x1xf32>
    %57 = vector.broadcast %56 : vector<1x64x1xf32> to vector<1x64x64xf32>
    %58 = arith.mulf %53, %57 : vector<1x64x64xf32>
    "tpu.trace_start"() <{level = 10 : i32, message = "gqk,gkd->gqd"}> : () -> ()
    %cst_38 = arith.constant dense<0.000000e+00> : vector<1x64x32xf32>
    %59 = tpu.matmul %58, %45, %cst_38 {dimension_numbers = #tpu.dot_dimension_numbers<[2], [1], [1], [2], [0, 0, 0, 1, 1, 2], [0], [0]>} : vector<1x64x64xf32>, vector<1x64x32xf32>, vector<1x64x32xf32> -> vector<1x64x32xf32>
    "tpu.trace_stop"() : () -> ()
    %60 = vector.shape_cast %59 : vector<1x64x32xf32> to vector<64x32xf32>
    %c0_39 = arith.constant 0 : index
    %c0_40 = arith.constant 0 : index
    %c0_41 = arith.constant 0 : index
    %61 = vector.load %arg13[%c0_39, %c0_40, %c0_41] : memref<2x32x32xf32, #tpu.memory_space<vmem>>, vector<1x32x32xf32>
    %62 = vector.shape_cast %61 : vector<1x32x32xf32> to vector<32x32xf32>
    %cst_42 = arith.constant dense<0.000000e+00> : vector<64x32xf32>
    %63 = tpu.matmul %60, %62, %cst_42 {dimension_numbers = #tpu.dot_dimension_numbers<[1], [0], [0], [1], [0, 0, 1, 1], [], []>} : vector<64x32xf32>, vector<32x32xf32>, vector<64x32xf32> -> vector<64x32xf32>
    %c0_43 = arith.constant 0 : index
    %c0_44 = arith.constant 0 : index
    %c0_45 = arith.constant 0 : index
    %64 = vector.load %arg14[%c0_43, %c0_44, %c0_45] : memref<2x1x32xf32, #tpu.memory_space<vmem>>, vector<1x1x32xf32>
    %65 = vector.shape_cast %64 : vector<1x1x32xf32> to vector<1x32xf32>
    %66 = vector.broadcast %65 : vector<1x32xf32> to vector<64x32xf32>
    %67 = arith.addf %63, %66 : vector<64x32xf32>
    %68 = arith.addf %11, %67 : vector<64x32xf32>
    %c0_46 = arith.constant 0 : index
    %c0_47 = arith.constant 0 : index
    %c0_48 = arith.constant 0 : index
    %69 = vector.load %arg15[%c0_46, %c0_47, %c0_48] : memref<2x1x32xf32, #tpu.memory_space<vmem>>, vector<1x1x32xf32>
    %70 = vector.shape_cast %69 : vector<1x1x32xf32> to vector<1x32xf32>
    %c0_49 = arith.constant 0 : index
    %c0_50 = arith.constant 0 : index
    %c0_51 = arith.constant 0 : index
    %71 = vector.load %arg16[%c0_49, %c0_50, %c0_51] : memref<2x1x32xf32, #tpu.memory_space<vmem>>, vector<1x1x32xf32>
    %72 = vector.shape_cast %71 : vector<1x1x32xf32> to vector<1x32xf32>
    %cst_52 = arith.constant dense<0.000000e+00> : vector<64xf32>
    %73 = vector.multi_reduction <add>, %68, %cst_52 [1] : vector<64x32xf32> to vector<64xf32>
    %74 = vector.shape_cast %73 : vector<64xf32> to vector<64x1xf32>
    %cst_53 = arith.constant 3.200000e+01 : f32
    %75 = vector.broadcast %cst_53 : f32 to vector<64x1xf32>
    %76 = arith.divf %74, %75 : vector<64x1xf32>
    %77 = vector.broadcast %76 : vector<64x1xf32> to vector<64x32xf32>
    %78 = arith.subf %68, %77 : vector<64x32xf32>
    %79 = arith.mulf %78, %78 : vector<64x32xf32>
    %cst_54 = arith.constant dense<0.000000e+00> : vector<64xf32>
    %80 = vector.multi_reduction <add>, %79, %cst_54 [1] : vector<64x32xf32> to vector<64xf32>
    %81 = vector.shape_cast %80 : vector<64xf32> to vector<64x1xf32>
    %cst_55 = arith.constant 3.200000e+01 : f32
    %82 = vector.broadcast %cst_55 : f32 to vector<64x1xf32>
    %83 = arith.divf %81, %82 : vector<64x1xf32>
    %84 = vector.broadcast %76 : vector<64x1xf32> to vector<64x32xf32>
    %85 = arith.subf %68, %84 : vector<64x32xf32>
    %cst_56 = arith.constant 9.99999974E-6 : f32
    %86 = vector.broadcast %cst_56 : f32 to vector<64x1xf32>
    %87 = arith.addf %83, %86 : vector<64x1xf32>
    %88 = math.rsqrt %87 : vector<64x1xf32>
    %89 = vector.broadcast %88 : vector<64x1xf32> to vector<64x32xf32>
    %90 = arith.mulf %85, %89 : vector<64x32xf32>
    %91 = vector.broadcast %70 : vector<1x32xf32> to vector<64x32xf32>
    %92 = arith.mulf %90, %91 : vector<64x32xf32>
    %93 = vector.broadcast %72 : vector<1x32xf32> to vector<64x32xf32>
    %94 = arith.addf %92, %93 : vector<64x32xf32>
    %c0_57 = arith.constant 0 : index
    %c0_58 = arith.constant 0 : index
    %c0_59 = arith.constant 0 : index
    %95 = vector.load %arg17[%c0_57, %c0_58, %c0_59] : memref<2x32x128xf32, #tpu.memory_space<vmem>>, vector<1x32x128xf32>
    %96 = vector.shape_cast %95 : vector<1x32x128xf32> to vector<32x128xf32>
    %cst_60 = arith.constant dense<0.000000e+00> : vector<64x128xf32>
    %97 = tpu.matmul %94, %96, %cst_60 {dimension_numbers = #tpu.dot_dimension_numbers<[1], [0], [0], [1], [0, 0, 1, 1], [], []>} : vector<64x32xf32>, vector<32x128xf32>, vector<64x128xf32> -> vector<64x128xf32>
    %c0_61 = arith.constant 0 : index
    %c0_62 = arith.constant 0 : index
    %c0_63 = arith.constant 0 : index
    %98 = vector.load %arg18[%c0_61, %c0_62, %c0_63] : memref<2x1x128xf32, #tpu.memory_space<vmem>>, vector<1x1x128xf32>
    %99 = vector.shape_cast %98 : vector<1x1x128xf32> to vector<1x128xf32>
    %100 = vector.broadcast %99 : vector<1x128xf32> to vector<64x128xf32>
    %101 = arith.addf %97, %100 : vector<64x128xf32>
    %cst_64 = arith.constant 0.000000e+00 : f32
    %102 = vector.broadcast %cst_64 : f32 to vector<64x128xf32>
    %103 = arith.maximumf %101, %102 : vector<64x128xf32>
    %c0_65 = arith.constant 0 : index
    %c0_66 = arith.constant 0 : index
    %c0_67 = arith.constant 0 : index
    %104 = vector.load %arg19[%c0_65, %c0_66, %c0_67] : memref<2x128x32xf32, #tpu.memory_space<vmem>>, vector<1x128x32xf32>
    %105 = vector.shape_cast %104 : vector<1x128x32xf32> to vector<128x32xf32>
    %cst_68 = arith.constant dense<0.000000e+00> : vector<64x32xf32>
    %106 = tpu.matmul %103, %105, %cst_68 {dimension_numbers = #tpu.dot_dimension_numbers<[1], [0], [0], [1], [0, 0, 1, 1], [], []>} : vector<64x128xf32>, vector<128x32xf32>, vector<64x32xf32> -> vector<64x32xf32>
    %c0_69 = arith.constant 0 : index
    %c0_70 = arith.constant 0 : index
    %c0_71 = arith.constant 0 : index
    %107 = vector.load %arg20[%c0_69, %c0_70, %c0_71] : memref<2x1x32xf32, #tpu.memory_space<vmem>>, vector<1x1x32xf32>
    %108 = vector.shape_cast %107 : vector<1x1x32xf32> to vector<1x32xf32>
    %109 = vector.broadcast %108 : vector<1x32xf32> to vector<64x32xf32>
    %110 = arith.addf %106, %109 : vector<64x32xf32>
    %111 = arith.addf %94, %110 : vector<64x32xf32>
    %c0_72 = arith.constant 0 : index
    %c0_73 = arith.constant 0 : index
    %c0_74 = arith.constant 0 : index
    %112 = vector.load %arg21[%c0_72, %c0_73, %c0_74] : memref<2x1x32xf32, #tpu.memory_space<vmem>>, vector<1x1x32xf32>
    %113 = vector.shape_cast %112 : vector<1x1x32xf32> to vector<1x32xf32>
    %c0_75 = arith.constant 0 : index
    %c0_76 = arith.constant 0 : index
    %c0_77 = arith.constant 0 : index
    %114 = vector.load %arg22[%c0_75, %c0_76, %c0_77] : memref<2x1x32xf32, #tpu.memory_space<vmem>>, vector<1x1x32xf32>
    %115 = vector.shape_cast %114 : vector<1x1x32xf32> to vector<1x32xf32>
    %cst_78 = arith.constant dense<0.000000e+00> : vector<64xf32>
    %116 = vector.multi_reduction <add>, %111, %cst_78 [1] : vector<64x32xf32> to vector<64xf32>
    %117 = vector.shape_cast %116 : vector<64xf32> to vector<64x1xf32>
    %cst_79 = arith.constant 3.200000e+01 : f32
    %118 = vector.broadcast %cst_79 : f32 to vector<64x1xf32>
    %119 = arith.divf %117, %118 : vector<64x1xf32>
    %120 = vector.broadcast %119 : vector<64x1xf32> to vector<64x32xf32>
    %121 = arith.subf %111, %120 : vector<64x32xf32>
    %122 = arith.mulf %121, %121 : vector<64x32xf32>
    %cst_80 = arith.constant dense<0.000000e+00> : vector<64xf32>
    %123 = vector.multi_reduction <add>, %122, %cst_80 [1] : vector<64x32xf32> to vector<64xf32>
    %124 = vector.shape_cast %123 : vector<64xf32> to vector<64x1xf32>
    %cst_81 = arith.constant 3.200000e+01 : f32
    %125 = vector.broadcast %cst_81 : f32 to vector<64x1xf32>
    %126 = arith.divf %124, %125 : vector<64x1xf32>
    %127 = vector.broadcast %119 : vector<64x1xf32> to vector<64x32xf32>
    %128 = arith.subf %111, %127 : vector<64x32xf32>
    %cst_82 = arith.constant 9.99999974E-6 : f32
    %129 = vector.broadcast %cst_82 : f32 to vector<64x1xf32>
    %130 = arith.addf %126, %129 : vector<64x1xf32>
    %131 = math.rsqrt %130 : vector<64x1xf32>
    %132 = vector.broadcast %131 : vector<64x1xf32> to vector<64x32xf32>
    %133 = arith.mulf %128, %132 : vector<64x32xf32>
    %134 = vector.broadcast %113 : vector<1x32xf32> to vector<64x32xf32>
    %135 = arith.mulf %133, %134 : vector<64x32xf32>
    %136 = vector.broadcast %115 : vector<1x32xf32> to vector<64x32xf32>
    %137 = arith.addf %135, %136 : vector<64x32xf32>
    %c1 = arith.constant 1 : index
    %c0_83 = arith.constant 0 : index
    %c0_84 = arith.constant 0 : index
    %138 = vector.load %arg7[%c1, %c0_83, %c0_84] : memref<2x32x32xf32, #tpu.memory_space<vmem>>, vector<1x32x32xf32>
    %139 = vector.shape_cast %138 : vector<1x32x32xf32> to vector<32x32xf32>
    %cst_85 = arith.constant dense<0.000000e+00> : vector<64x32xf32>
    %140 = tpu.matmul %137, %139, %cst_85 {dimension_numbers = #tpu.dot_dimension_numbers<[1], [0], [0], [1], [0, 0, 1, 1], [], []>} : vector<64x32xf32>, vector<32x32xf32>, vector<64x32xf32> -> vector<64x32xf32>
    %c1_86 = arith.constant 1 : index
    %c0_87 = arith.constant 0 : index
    %c0_88 = arith.constant 0 : index
    %141 = vector.load %arg8[%c1_86, %c0_87, %c0_88] : memref<2x1x32xf32, #tpu.memory_space<vmem>>, vector<1x1x32xf32>
    %142 = vector.shape_cast %141 : vector<1x1x32xf32> to vector<1x32xf32>
    %143 = vector.broadcast %142 : vector<1x32xf32> to vector<64x32xf32>
    %144 = arith.addf %140, %143 : vector<64x32xf32>
    %145 = vector.shape_cast %144 : vector<64x32xf32> to vector<1x64x32xf32>
    %c1_89 = arith.constant 1 : index
    %c0_90 = arith.constant 0 : index
    %c0_91 = arith.constant 0 : index
    %146 = vector.load %arg9[%c1_89, %c0_90, %c0_91] : memref<2x32x32xf32, #tpu.memory_space<vmem>>, vector<1x32x32xf32>
    %147 = vector.shape_cast %146 : vector<1x32x32xf32> to vector<32x32xf32>
    %cst_92 = arith.constant dense<0.000000e+00> : vector<64x32xf32>
    %148 = tpu.matmul %137, %147, %cst_92 {dimension_numbers = #tpu.dot_dimension_numbers<[1], [0], [0], [1], [0, 0, 1, 1], [], []>} : vector<64x32xf32>, vector<32x32xf32>, vector<64x32xf32> -> vector<64x32xf32>
    %c1_93 = arith.constant 1 : index
    %c0_94 = arith.constant 0 : index
    %c0_95 = arith.constant 0 : index
    %149 = vector.load %arg10[%c1_93, %c0_94, %c0_95] : memref<2x1x32xf32, #tpu.memory_space<vmem>>, vector<1x1x32xf32>
    %150 = vector.shape_cast %149 : vector<1x1x32xf32> to vector<1x32xf32>
    %151 = vector.broadcast %150 : vector<1x32xf32> to vector<64x32xf32>
    %152 = arith.addf %148, %151 : vector<64x32xf32>
    %153 = vector.shape_cast %152 : vector<64x32xf32> to vector<1x64x32xf32>
    %c1_96 = arith.constant 1 : index
    %c0_97 = arith.constant 0 : index
    %c0_98 = arith.constant 0 : index
    %154 = vector.load %arg11[%c1_96, %c0_97, %c0_98] : memref<2x32x32xf32, #tpu.memory_space<vmem>>, vector<1x32x32xf32>
    %155 = vector.shape_cast %154 : vector<1x32x32xf32> to vector<32x32xf32>
    %cst_99 = arith.constant dense<0.000000e+00> : vector<64x32xf32>
    %156 = tpu.matmul %137, %155, %cst_99 {dimension_numbers = #tpu.dot_dimension_numbers<[1], [0], [0], [1], [0, 0, 1, 1], [], []>} : vector<64x32xf32>, vector<32x32xf32>, vector<64x32xf32> -> vector<64x32xf32>
    %c1_100 = arith.constant 1 : index
    %c0_101 = arith.constant 0 : index
    %c0_102 = arith.constant 0 : index
    %157 = vector.load %arg12[%c1_100, %c0_101, %c0_102] : memref<2x1x32xf32, #tpu.memory_space<vmem>>, vector<1x1x32xf32>
    %158 = vector.shape_cast %157 : vector<1x1x32xf32> to vector<1x32xf32>
    %159 = vector.broadcast %158 : vector<1x32xf32> to vector<64x32xf32>
    %160 = arith.addf %156, %159 : vector<64x32xf32>
    %161 = vector.shape_cast %160 : vector<64x32xf32> to vector<1x64x32xf32>
    "tpu.trace_start"() <{level = 10 : i32, message = "gqd,gkd->gqk"}> : () -> ()
    %cst_103 = arith.constant dense<0.000000e+00> : vector<1x64x64xf32>
    %162 = tpu.matmul %145, %153, %cst_103 {dimension_numbers = #tpu.dot_dimension_numbers<[2], [2], [1], [1], [0, 0, 0, 1, 1, 1], [0], [0]>} : vector<1x64x32xf32>, vector<1x64x32xf32>, vector<1x64x64xf32> -> vector<1x64x64xf32>
    "tpu.trace_stop"() : () -> ()
    %163 = vector.shape_cast %21 : vector<64x64xf32> to vector<1x64x64xf32>
    %164 = arith.addf %162, %163 : vector<1x64x64xf32>
    %cst_104 = arith.constant dense<0xFF800000> : vector<1x64xf32>
    %165 = vector.multi_reduction <maximumf>, %164, %cst_104 [2] : vector<1x64x64xf32> to vector<1x64xf32>
    %166 = vector.shape_cast %165 : vector<1x64xf32> to vector<1x64x1xf32>
    %167 = vector.broadcast %166 : vector<1x64x1xf32> to vector<1x64x64xf32>
    %168 = arith.subf %164, %167 : vector<1x64x64xf32>
    %169 = math.exp %168 : vector<1x64x64xf32>
    %cst_105 = arith.constant dense<0.000000e+00> : vector<1x64xf32>
    %170 = vector.multi_reduction <add>, %169, %cst_105 [2] : vector<1x64x64xf32> to vector<1x64xf32>
    %171 = vector.shape_cast %170 : vector<1x64xf32> to vector<1x64x1xf32>
    %172 = tpu.reciprocal %171 : vector<1x64x1xf32> -> vector<1x64x1xf32>
    %173 = vector.broadcast %172 : vector<1x64x1xf32> to vector<1x64x64xf32>
    %174 = arith.mulf %169, %173 : vector<1x64x64xf32>
    "tpu.trace_start"() <{level = 10 : i32, message = "gqk,gkd->gqd"}> : () -> ()
    %cst_106 = arith.constant dense<0.000000e+00> : vector<1x64x32xf32>
    %175 = tpu.matmul %174, %161, %cst_106 {dimension_numbers = #tpu.dot_dimension_numbers<[2], [1], [1], [2], [0, 0, 0, 1, 1, 2], [0], [0]>} : vector<1x64x64xf32>, vector<1x64x32xf32>, vector<1x64x32xf32> -> vector<1x64x32xf32>
    "tpu.trace_stop"() : () -> ()
    %176 = vector.shape_cast %175 : vector<1x64x32xf32> to vector<64x32xf32>
    %c1_107 = arith.constant 1 : index
    %c0_108 = arith.constant 0 : index
    %c0_109 = arith.constant 0 : index
    %177 = vector.load %arg13[%c1_107, %c0_108, %c0_109] : memref<2x32x32xf32, #tpu.memory_space<vmem>>, vector<1x32x32xf32>
    %178 = vector.shape_cast %177 : vector<1x32x32xf32> to vector<32x32xf32>
    %cst_110 = arith.constant dense<0.000000e+00> : vector<64x32xf32>
    %179 = tpu.matmul %176, %178, %cst_110 {dimension_numbers = #tpu.dot_dimension_numbers<[1], [0], [0], [1], [0, 0, 1, 1], [], []>} : vector<64x32xf32>, vector<32x32xf32>, vector<64x32xf32> -> vector<64x32xf32>
    %c1_111 = arith.constant 1 : index
    %c0_112 = arith.constant 0 : index
    %c0_113 = arith.constant 0 : index
    %180 = vector.load %arg14[%c1_111, %c0_112, %c0_113] : memref<2x1x32xf32, #tpu.memory_space<vmem>>, vector<1x1x32xf32>
    %181 = vector.shape_cast %180 : vector<1x1x32xf32> to vector<1x32xf32>
    %182 = vector.broadcast %181 : vector<1x32xf32> to vector<64x32xf32>
    %183 = arith.addf %179, %182 : vector<64x32xf32>
    %184 = arith.addf %137, %183 : vector<64x32xf32>
    %c1_114 = arith.constant 1 : index
    %c0_115 = arith.constant 0 : index
    %c0_116 = arith.constant 0 : index
    %185 = vector.load %arg15[%c1_114, %c0_115, %c0_116] : memref<2x1x32xf32, #tpu.memory_space<vmem>>, vector<1x1x32xf32>
    %186 = vector.shape_cast %185 : vector<1x1x32xf32> to vector<1x32xf32>
    %c1_117 = arith.constant 1 : index
    %c0_118 = arith.constant 0 : index
    %c0_119 = arith.constant 0 : index
    %187 = vector.load %arg16[%c1_117, %c0_118, %c0_119] : memref<2x1x32xf32, #tpu.memory_space<vmem>>, vector<1x1x32xf32>
    %188 = vector.shape_cast %187 : vector<1x1x32xf32> to vector<1x32xf32>
    %cst_120 = arith.constant dense<0.000000e+00> : vector<64xf32>
    %189 = vector.multi_reduction <add>, %184, %cst_120 [1] : vector<64x32xf32> to vector<64xf32>
    %190 = vector.shape_cast %189 : vector<64xf32> to vector<64x1xf32>
    %cst_121 = arith.constant 3.200000e+01 : f32
    %191 = vector.broadcast %cst_121 : f32 to vector<64x1xf32>
    %192 = arith.divf %190, %191 : vector<64x1xf32>
    %193 = vector.broadcast %192 : vector<64x1xf32> to vector<64x32xf32>
    %194 = arith.subf %184, %193 : vector<64x32xf32>
    %195 = arith.mulf %194, %194 : vector<64x32xf32>
    %cst_122 = arith.constant dense<0.000000e+00> : vector<64xf32>
    %196 = vector.multi_reduction <add>, %195, %cst_122 [1] : vector<64x32xf32> to vector<64xf32>
    %197 = vector.shape_cast %196 : vector<64xf32> to vector<64x1xf32>
    %cst_123 = arith.constant 3.200000e+01 : f32
    %198 = vector.broadcast %cst_123 : f32 to vector<64x1xf32>
    %199 = arith.divf %197, %198 : vector<64x1xf32>
    %200 = vector.broadcast %192 : vector<64x1xf32> to vector<64x32xf32>
    %201 = arith.subf %184, %200 : vector<64x32xf32>
    %cst_124 = arith.constant 9.99999974E-6 : f32
    %202 = vector.broadcast %cst_124 : f32 to vector<64x1xf32>
    %203 = arith.addf %199, %202 : vector<64x1xf32>
    %204 = math.rsqrt %203 : vector<64x1xf32>
    %205 = vector.broadcast %204 : vector<64x1xf32> to vector<64x32xf32>
    %206 = arith.mulf %201, %205 : vector<64x32xf32>
    %207 = vector.broadcast %186 : vector<1x32xf32> to vector<64x32xf32>
    %208 = arith.mulf %206, %207 : vector<64x32xf32>
    %209 = vector.broadcast %188 : vector<1x32xf32> to vector<64x32xf32>
    %210 = arith.addf %208, %209 : vector<64x32xf32>
    %c1_125 = arith.constant 1 : index
    %c0_126 = arith.constant 0 : index
    %c0_127 = arith.constant 0 : index
    %211 = vector.load %arg17[%c1_125, %c0_126, %c0_127] : memref<2x32x128xf32, #tpu.memory_space<vmem>>, vector<1x32x128xf32>
    %212 = vector.shape_cast %211 : vector<1x32x128xf32> to vector<32x128xf32>
    %cst_128 = arith.constant dense<0.000000e+00> : vector<64x128xf32>
    %213 = tpu.matmul %210, %212, %cst_128 {dimension_numbers = #tpu.dot_dimension_numbers<[1], [0], [0], [1], [0, 0, 1, 1], [], []>} : vector<64x32xf32>, vector<32x128xf32>, vector<64x128xf32> -> vector<64x128xf32>
    %c1_129 = arith.constant 1 : index
    %c0_130 = arith.constant 0 : index
    %c0_131 = arith.constant 0 : index
    %214 = vector.load %arg18[%c1_129, %c0_130, %c0_131] : memref<2x1x128xf32, #tpu.memory_space<vmem>>, vector<1x1x128xf32>
    %215 = vector.shape_cast %214 : vector<1x1x128xf32> to vector<1x128xf32>
    %216 = vector.broadcast %215 : vector<1x128xf32> to vector<64x128xf32>
    %217 = arith.addf %213, %216 : vector<64x128xf32>
    %cst_132 = arith.constant 0.000000e+00 : f32
    %218 = vector.broadcast %cst_132 : f32 to vector<64x128xf32>
    %219 = arith.maximumf %217, %218 : vector<64x128xf32>
    %c1_133 = arith.constant 1 : index
    %c0_134 = arith.constant 0 : index
    %c0_135 = arith.constant 0 : index
    %220 = vector.load %arg19[%c1_133, %c0_134, %c0_135] : memref<2x128x32xf32, #tpu.memory_space<vmem>>, vector<1x128x32xf32>
    %221 = vector.shape_cast %220 : vector<1x128x32xf32> to vector<128x32xf32>
    %cst_136 = arith.constant dense<0.000000e+00> : vector<64x32xf32>
    %222 = tpu.matmul %219, %221, %cst_136 {dimension_numbers = #tpu.dot_dimension_numbers<[1], [0], [0], [1], [0, 0, 1, 1], [], []>} : vector<64x128xf32>, vector<128x32xf32>, vector<64x32xf32> -> vector<64x32xf32>
    %c1_137 = arith.constant 1 : index
    %c0_138 = arith.constant 0 : index
    %c0_139 = arith.constant 0 : index
    %223 = vector.load %arg20[%c1_137, %c0_138, %c0_139] : memref<2x1x32xf32, #tpu.memory_space<vmem>>, vector<1x1x32xf32>
    %224 = vector.shape_cast %223 : vector<1x1x32xf32> to vector<1x32xf32>
    %225 = vector.broadcast %224 : vector<1x32xf32> to vector<64x32xf32>
    %226 = arith.addf %222, %225 : vector<64x32xf32>
    %227 = arith.addf %210, %226 : vector<64x32xf32>
    %c1_140 = arith.constant 1 : index
    %c0_141 = arith.constant 0 : index
    %c0_142 = arith.constant 0 : index
    %228 = vector.load %arg21[%c1_140, %c0_141, %c0_142] : memref<2x1x32xf32, #tpu.memory_space<vmem>>, vector<1x1x32xf32>
    %229 = vector.shape_cast %228 : vector<1x1x32xf32> to vector<1x32xf32>
    %c1_143 = arith.constant 1 : index
    %c0_144 = arith.constant 0 : index
    %c0_145 = arith.constant 0 : index
    %230 = vector.load %arg22[%c1_143, %c0_144, %c0_145] : memref<2x1x32xf32, #tpu.memory_space<vmem>>, vector<1x1x32xf32>
    %231 = vector.shape_cast %230 : vector<1x1x32xf32> to vector<1x32xf32>
    %cst_146 = arith.constant dense<0.000000e+00> : vector<64xf32>
    %232 = vector.multi_reduction <add>, %227, %cst_146 [1] : vector<64x32xf32> to vector<64xf32>
    %233 = vector.shape_cast %232 : vector<64xf32> to vector<64x1xf32>
    %cst_147 = arith.constant 3.200000e+01 : f32
    %234 = vector.broadcast %cst_147 : f32 to vector<64x1xf32>
    %235 = arith.divf %233, %234 : vector<64x1xf32>
    %236 = vector.broadcast %235 : vector<64x1xf32> to vector<64x32xf32>
    %237 = arith.subf %227, %236 : vector<64x32xf32>
    %238 = arith.mulf %237, %237 : vector<64x32xf32>
    %cst_148 = arith.constant dense<0.000000e+00> : vector<64xf32>
    %239 = vector.multi_reduction <add>, %238, %cst_148 [1] : vector<64x32xf32> to vector<64xf32>
    %240 = vector.shape_cast %239 : vector<64xf32> to vector<64x1xf32>
    %cst_149 = arith.constant 3.200000e+01 : f32
    %241 = vector.broadcast %cst_149 : f32 to vector<64x1xf32>
    %242 = arith.divf %240, %241 : vector<64x1xf32>
    %243 = vector.broadcast %235 : vector<64x1xf32> to vector<64x32xf32>
    %244 = arith.subf %227, %243 : vector<64x32xf32>
    %cst_150 = arith.constant 9.99999974E-6 : f32
    %245 = vector.broadcast %cst_150 : f32 to vector<64x1xf32>
    %246 = arith.addf %242, %245 : vector<64x1xf32>
    %247 = math.rsqrt %246 : vector<64x1xf32>
    %248 = vector.broadcast %247 : vector<64x1xf32> to vector<64x32xf32>
    %249 = arith.mulf %244, %248 : vector<64x32xf32>
    %250 = vector.broadcast %229 : vector<1x32xf32> to vector<64x32xf32>
    %251 = arith.mulf %249, %250 : vector<64x32xf32>
    %252 = vector.broadcast %231 : vector<1x32xf32> to vector<64x32xf32>
    %253 = arith.addf %251, %252 : vector<64x32xf32>
    %254 = vector.shape_cast %253 : vector<64x32xf32> to vector<8x8x32xf32>
    %255 = tpu.iota {dimensions = array<i32: 1>} : vector<8x8x1xi32>
    %c0_151 = arith.constant 0 : index
    %c0_152 = arith.constant 0 : index
    %256 = vector.load %arg1[%c0_151, %c0_152] : memref<8x1xi32, #tpu.memory_space<vmem>>, vector<8x1xi32>
    %257 = arith.sitofp %256 : vector<8x1xi32> to vector<8x1xf32>
    %258 = tpu.reciprocal %257 : vector<8x1xf32> -> vector<8x1xf32>
    %259 = vector.shape_cast %258 : vector<8x1xf32> to vector<8x1x1xf32>
    %260 = vector.shape_cast %256 : vector<8x1xi32> to vector<8x1x1xi32>
    %261 = vector.broadcast %260 : vector<8x1x1xi32> to vector<8x8x1xi32>
    %262 = arith.cmpi slt, %255, %261 : vector<8x8x1xi32>
    %cst_153 = arith.constant 0.000000e+00 : f32
    %263 = vector.shape_cast %259 : vector<8x1x1xf32> to vector<8x1x1xf32>
    %264 = vector.broadcast %263 : vector<8x1x1xf32> to vector<8x8x1xf32>
    %265 = vector.broadcast %cst_153 : f32 to vector<8x8x1xf32>
    %266 = arith.select %262, %264, %265 : vector<8x8x1xi1>, vector<8x8x1xf32>
    %267 = vector.broadcast %266 : vector<8x8x1xf32> to vector<8x8x32xf32>
    %268 = arith.mulf %254, %267 : vector<8x8x32xf32>
    %cst_154 = arith.constant dense<0.000000e+00> : vector<8x32xf32>
    %269 = vector.multi_reduction <add>, %268, %cst_154 [1] : vector<8x8x32xf32> to vector<8x32xf32>
    %c0_155 = arith.constant 0 : index
    %c0_156 = arith.constant 0 : index
    %270 = vector.load %arg23[%c0_155, %c0_156] : memref<8x32xf32, #tpu.memory_space<vmem>>, vector<8x32xf32>
    tpu.vector_store %arg23[%c0_155, %c0_156], %269 {strides = array<i32>} : memref<8x32xf32, #tpu.memory_space<vmem>>, vector<8x32xf32>,
    return
  }
  func.func @transform_0(%arg0: i32) -> (i32, i32) {
    %c0_i32 = arith.constant 0 : i32
    %c0_i32_0 = arith.constant 0 : i32
    return %arg0, %c0_i32 : i32, i32
  }
  func.func @transform_1(%arg0: i32) -> (i32, i32) {
    %c0_i32 = arith.constant 0 : i32
    %c0_i32_0 = arith.constant 0 : i32
    return %arg0, %c0_i32 : i32, i32
  }
  func.func @transform_2(%arg0: i32) -> (i32, i32) {
    %c0_i32 = arith.constant 0 : i32
    %c0_i32_0 = arith.constant 0 : i32
    return %arg0, %c0_i32 : i32, i32
  }
  func.func @transform_3(%arg0: i32) -> (i32, i32) {
    %c0_i32 = arith.constant 0 : i32
    %c0_i32_0 = arith.constant 0 : i32
    %c0_i32_1 = arith.constant 0 : i32
    return %c0_i32, %c0_i32_0 : i32, i32
  }
  func.func @transform_4(%arg0: i32) -> (i32, i32) {
    %c0_i32 = arith.constant 0 : i32
    %c0_i32_0 = arith.constant 0 : i32
    %c0_i32_1 = arith.constant 0 : i32
    return %c0_i32, %c0_i32_0 : i32, i32
  }
  func.func @transform_5(%arg0: i32) -> (i32, i32) {
    %c0_i32 = arith.constant 0 : i32
    %c0_i32_0 = arith.constant 0 : i32
    %c0_i32_1 = arith.constant 0 : i32
    return %c0_i32, %c0_i32_0 : i32, i32
  }
  func.func @transform_6(%arg0: i32) -> (i32, i32, i32) {
    %c0_i32 = arith.constant 0 : i32
    %c0_i32_0 = arith.constant 0 : i32
    %c0_i32_1 = arith.constant 0 : i32
    %c0_i32_2 = arith.constant 0 : i32
    return %c0_i32, %c0_i32_0, %c0_i32_1 : i32, i32, i32
  }
  func.func @transform_7(%arg0: i32) -> (i32, i32, i32) {
    %c0_i32 = arith.constant 0 : i32
    %c0_i32_0 = arith.constant 0 : i32
    %c0_i32_1 = arith.constant 0 : i32
    %c0_i32_2 = arith.constant 0 : i32
    return %c0_i32, %c0_i32_0, %c0_i32_1 : i32, i32, i32
  }
  func.func @transform_8(%arg0: i32) -> (i32, i32, i32) {
    %c0_i32 = arith.constant 0 : i32
    %c0_i32_0 = arith.constant 0 : i32
    %c0_i32_1 = arith.constant 0 : i32
    %c0_i32_2 = arith.constant 0 : i32
    return %c0_i32, %c0_i32_0, %c0_i32_1 : i32, i32, i32
  }
  func.func @transform_9(%arg0: i32) -> (i32, i32, i32) {
    %c0_i32 = arith.constant 0 : i32
    %c0_i32_0 = arith.constant 0 : i32
    %c0_i32_1 = arith.constant 0 : i32
    %c0_i32_2 = arith.constant 0 : i32
    return %c0_i32, %c0_i32_0, %c0_i32_1 : i32, i32, i32
  }
  func.func @transform_10(%arg0: i32) -> (i32, i32, i32) {
    %c0_i32 = arith.constant 0 : i32
    %c0_i32_0 = arith.constant 0 : i32
    %c0_i32_1 = arith.constant 0 : i32
    %c0_i32_2 = arith.constant 0 : i32
    return %c0_i32, %c0_i32_0, %c0_i32_1 : i32, i32, i32
  }
  func.func @transform_11(%arg0: i32) -> (i32, i32, i32) {
    %c0_i32 = arith.constant 0 : i32
    %c0_i32_0 = arith.constant 0 : i32
    %c0_i32_1 = arith.constant 0 : i32
    %c0_i32_2 = arith.constant 0 : i32
    return %c0_i32, %c0_i32_0, %c0_i32_1 : i32, i32, i32
  }
  func.func @transform_12(%arg0: i32) -> (i32, i32, i32) {
    %c0_i32 = arith.constant 0 : i32
    %c0_i32_0 = arith.constant 0 : i32
    %c0_i32_1 = arith.constant 0 : i32
    %c0_i32_2 = arith.constant 0 : i32
    return %c0_i32, %c0_i32_0, %c0_i32_1 : i32, i32, i32
  }
  func.func @transform_13(%arg0: i32) -> (i32, i32, i32) {
    %c0_i32 = arith.constant 0 : i32
    %c0_i32_0 = arith.constant 0 : i32
    %c0_i32_1 = arith.constant 0 : i32
    %c0_i32_2 = arith.constant 0 : i32
    return %c0_i32, %c0_i32_0, %c0_i32_1 : i32, i32, i32
  }
  func.func @transform_14(%arg0: i32) -> (i32, i32, i32) {
    %c0_i32 = arith.constant 0 : i32
    %c0_i32_0 = arith.constant 0 : i32
    %c0_i32_1 = arith.constant 0 : i32
    %c0_i32_2 = arith.constant 0 : i32
    return %c0_i32, %c0_i32_0, %c0_i32_1 : i32, i32, i32
  }
  func.func @transform_15(%arg0: i32) -> (i32, i32, i32) {
    %c0_i32 = arith.constant 0 : i32
    %c0_i32_0 = arith.constant 0 : i32
    %c0_i32_1 = arith.constant 0 : i32
    %c0_i32_2 = arith.constant 0 : i32
    return %c0_i32, %c0_i32_0, %c0_i32_1 : i32, i32, i32
  }
  func.func @transform_16(%arg0: i32) -> (i32, i32, i32) {
    %c0_i32 = arith.constant 0 : i32
    %c0_i32_0 = arith.constant 0 : i32
    %c0_i32_1 = arith.constant 0 : i32
    %c0_i32_2 = arith.constant 0 : i32
    return %c0_i32, %c0_i32_0, %c0_i32_1 : i32, i32, i32
  }
  func.func @transform_17(%arg0: i32) -> (i32, i32, i32) {
    %c0_i32 = arith.constant 0 : i32
    %c0_i32_0 = arith.constant 0 : i32
    %c0_i32_1 = arith.constant 0 : i32
    %c0_i32_2 = arith.constant 0 : i32
    return %c0_i32, %c0_i32_0, %c0_i32_1 : i32, i32, i32
  }
  func.func @transform_18(%arg0: i32) -> (i32, i32, i32) {
    %c0_i32 = arith.constant 0 : i32
    %c0_i32_0 = arith.constant 0 : i32
    %c0_i32_1 = arith.constant 0 : i32
    %c0_i32_2 = arith.constant 0 : i32
    return %c0_i32, %c0_i32_0, %c0_i32_1 : i32, i32, i32
  }
  func.func @transform_19(%arg0: i32) -> (i32, i32, i32) {
    %c0_i32 = arith.constant 0 : i32
    %c0_i32_0 = arith.constant 0 : i32
    %c0_i32_1 = arith.constant 0 : i32
    %c0_i32_2 = arith.constant 0 : i32
    return %c0_i32, %c0_i32_0, %c0_i32_1 : i32, i32, i32
  }
  func.func @transform_20(%arg0: i32) -> (i32, i32, i32) {
    %c0_i32 = arith.constant 0 : i32
    %c0_i32_0 = arith.constant 0 : i32
    %c0_i32_1 = arith.constant 0 : i32
    %c0_i32_2 = arith.constant 0 : i32
    return %c0_i32, %c0_i32_0, %c0_i32_1 : i32, i32, i32
  }
  func.func @transform_21(%arg0: i32) -> (i32, i32, i32) {
    %c0_i32 = arith.constant 0 : i32
    %c0_i32_0 = arith.constant 0 : i32
    %c0_i32_1 = arith.constant 0 : i32
    %c0_i32_2 = arith.constant 0 : i32
    return %c0_i32, %c0_i32_0, %c0_i32_1 : i32, i32, i32
  }
  func.func @transform_22(%arg0: i32) -> (i32, i32) {
    %c0_i32 = arith.constant 0 : i32
    %c0_i32_0 = arith.constant 0 : i32
    return %arg0, %c0_i32 : i32, i32
  }
}

</mosaic_0001>

<llo_original>
// kernel: model_forward.1
$region0: #{model_forward.1}
  #allocation0 [shape = 'u32[]', space=smem, size = 0x4, offset = 0x4, fixed_abs, tag = 'smem constant byte address 0x4 - core index']
  #allocation1 [shape = 'u32[72,128]{1,0:T(1,128)}', space=vmem, size = 0x9000, scoped, tag = 'internal scratch']
  %s0 = inlined_call_operand.vmem [shape: s32[8,1], index: 0, kind: input, shape index: {}]
  %s1 = inlined_call_operand.vmem [shape: f32[64,16], index: 1, kind: input, shape index: {}]
  %s2 = inlined_call_operand.vmem [shape: f32[64,16], index: 2, kind: input, shape index: {}]
  %s3 = inlined_call_operand.vmem [shape: f32[16,32], index: 3, kind: input, shape index: {}]
  %s4 = inlined_call_operand.vmem [shape: f32[16,32], index: 4, kind: input, shape index: {}]
  %s5 = inlined_call_operand.vmem [shape: f32[1,32], index: 5, kind: input, shape index: {}]
  %s6 = inlined_call_operand.vmem [shape: f32[2,32,32], index: 6, kind: input, shape index: {}]
  %s7 = inlined_call_operand.vmem [shape: f32[2,1,32], index: 7, kind: input, shape index: {}]
  %s8 = inlined_call_operand.vmem [shape: f32[2,32,32], index: 8, kind: input, shape index: {}]
  %s9 = inlined_call_operand.vmem [shape: f32[2,1,32], index: 9, kind: input, shape index: {}]
  %s10 = inlined_call_operand.vmem [shape: f32[2,32,32], index: 10, kind: input, shape index: {}]
  %s11 = inlined_call_operand.vmem [shape: f32[2,1,32], index: 11, kind: input, shape index: {}]
  %s12 = inlined_call_operand.vmem [shape: f32[2,32,32], index: 12, kind: input, shape index: {}]
  %s13 = inlined_call_operand.vmem [shape: f32[2,1,32], index: 13, kind: input, shape index: {}]
  %s14 = inlined_call_operand.vmem [shape: f32[2,1,32], index: 14, kind: input, shape index: {}]
  %s15 = inlined_call_operand.vmem [shape: f32[2,1,32], index: 15, kind: input, shape index: {}]
  %s16 = inlined_call_operand.vmem [shape: f32[2,32,128], index: 16, kind: input, shape index: {}]
  %s17 = inlined_call_operand.vmem [shape: f32[2,1,128], index: 17, kind: input, shape index: {}]
  %s18 = inlined_call_operand.vmem [shape: f32[2,128,32], index: 18, kind: input, shape index: {}]
  %s19 = inlined_call_operand.vmem [shape: f32[2,1,32], index: 19, kind: input, shape index: {}]
  %s20 = inlined_call_operand.vmem [shape: f32[2,1,32], index: 20, kind: input, shape index: {}]
  %s21 = inlined_call_operand.vmem [shape: f32[2,1,32], index: 21, kind: input, shape index: {}]
  %s22 = inlined_call_operand.vmem [shape: f32[8,32], index: 22, kind: output, shape index: {}]
  %s23 = sld [smem:[#allocation0]]
  $region98: #{model_forward.1} parent=0
    _
  %s25 = ssub.s32 1, %s23
  %s26 = scalar_select 0, %s25, %s23
  // Predicated region
  $region2: #{model_forward.1} parent=0 // pred_check
    _
  $region3: #{model_forward.1} parent=0 // pred_check_branch
    %28 = sbr.rel (0) target = $region5
  $region4: #{model_forward.1} parent=0 // pred_region
    _
  $region5: #{model_forward.1} parent=0 // pred_fallthru
    _
  // Predicated region
  $region6: #{model_forward.1} parent=0 // pred_check
    _
  $region7: #{model_forward.1} parent=0 // pred_check_branch
    %30 = sbr.rel (0) target = $region9
  $region8: #{model_forward.1} parent=0 // pred_region
    _
  $region9: #{model_forward.1} parent=0 // pred_fallthru
    _
  // Predicated region
  $region10: #{model_forward.1} parent=0 // pred_check
    _
  $region11: #{model_forward.1} parent=0 // pred_check_branch
    %32 = sbr.rel (0) target = $region13
  $region12: #{model_forward.1} parent=0 // pred_region
    _
  $region13: #{model_forward.1} parent=0 // pred_fallthru
    _
  // Predicated region
  $region14: #{model_forward.1} parent=0 // pred_check
    _
  $region15: #{model_forward.1} parent=0 // pred_check_branch
    %34 = sbr.rel (0) target = $region17
  $region16: #{model_forward.1} parent=0 // pred_region
    _
  $region17: #{model_forward.1} parent=0 // pred_fallthru
    _
  // Predicated region
  $region18: #{model_forward.1} parent=0 // pred_check
    _
  $region19: #{model_forward.1} parent=0 // pred_check_branch
    %36 = sbr.rel (0) target = $region21
  $region20: #{model_forward.1} parent=0 // pred_region
    _
  $region21: #{model_forward.1} parent=0 // pred_fallthru
    _
  // Predicated region
  $region22: #{model_forward.1} parent=0 // pred_check
    _
  $region23: #{model_forward.1} parent=0 // pred_check_branch
    %38 = sbr.rel (0) target = $region25
  $region24: #{model_forward.1} parent=0 // pred_region
    _
  $region25: #{model_forward.1} parent=0 // pred_fallthru
    _
  // Predicated region
  $region26: #{model_forward.1} parent=0 // pred_check
    _
  $region27: #{model_forward.1} parent=0 // pred_check_branch
    %40 = sbr.rel (0) target = $region29
  $region28: #{model_forward.1} parent=0 // pred_region
    _
  $region29: #{model_forward.1} parent=0 // pred_fallthru
    _
  // Predicated region
  $region30: #{model_forward.1} parent=0 // pred_check
    _
  $region31: #{model_forward.1} parent=0 // pred_check_branch
    %42 = sbr.rel (0) target = $region33
  $region32: #{model_forward.1} parent=0 // pred_region
    _
  $region33: #{model_forward.1} parent=0 // pred_fallthru
    _
  // Predicated region
  $region34: #{model_forward.1} parent=0 // pred_check
    _
  $region35: #{model_forward.1} parent=0 // pred_check_branch
    %44 = sbr.rel (0) target = $region37
  $region36: #{model_forward.1} parent=0 // pred_region
    _
  $region37: #{model_forward.1} parent=0 // pred_fallthru
    _
  // Predicated region
  $region38: #{model_forward.1} parent=0 // pred_check
    _
  $region39: #{model_forward.1} parent=0 // pred_check_branch
    %46 = sbr.rel (0) target = $region41
  $region40: #{model_forward.1} parent=0 // pred_region
    _
  $region41: #{model_forward.1} parent=0 // pred_fallthru
    _
  // Predicated region
  $region42: #{model_forward.1} parent=0 // pred_check
    _
  $region43: #{model_forward.1} parent=0 // pred_check_branch
    %48 = sbr.rel (0) target = $region45
  $region44: #{model_forward.1} parent=0 // pred_region
    _
  $region45: #{model_forward.1} parent=0 // pred_fallthru
    _
  // Predicated region
  $region46: #{model_forward.1} parent=0 // pred_check
    _
  $region47: #{model_forward.1} parent=0 // pred_check_branch
    %50 = sbr.rel (0) target = $region49
  $region48: #{model_forward.1} parent=0 // pred_region
    _
  $region49: #{model_forward.1} parent=0 // pred_fallthru
    _
  // Predicated region
  $region50: #{model_forward.1} parent=0 // pred_check
    _
  $region51: #{model_forward.1} parent=0 // pred_check_branch
    %52 = sbr.rel (0) target = $region53
  $region52: #{model_forward.1} parent=0 // pred_region
    _
  $region53: #{model_forward.1} parent=0 // pred_fallthru
    _
  // Predicated region
  $region54: #{model_forward.1} parent=0 // pred_check
    _
  $region55: #{model_forward.1} parent=0 // pred_check_branch
    %54 = sbr.rel (0) target = $region57
  $region56: #{model_forward.1} parent=0 // pred_region
    _
  $region57: #{model_forward.1} parent=0 // pred_fallthru
    _
  // Predicated region
  $region58: #{model_forward.1} parent=0 // pred_check
    _
  $region59: #{model_forward.1} parent=0 // pred_check_branch
    %56 = sbr.rel (0) target = $region61
  $region60: #{model_forward.1} parent=0 // pred_region
    _
  $region61: #{model_forward.1} parent=0 // pred_fallthru
    _
  // Predicated region
  $region62: #{model_forward.1} parent=0 // pred_check
    _
  $region63: #{model_forward.1} parent=0 // pred_check_branch
    %58 = sbr.rel (0) target = $region65
  $region64: #{model_forward.1} parent=0 // pred_region
    _
  $region65: #{model_forward.1} parent=0 // pred_fallthru
    _
  // Predicated region
  $region66: #{model_forward.1} parent=0 // pred_check
    _
  $region67: #{model_forward.1} parent=0 // pred_check_branch
    %60 = sbr.rel (0) target = $region69
  $region68: #{model_forward.1} parent=0 // pred_region
    _
  $region69: #{model_forward.1} parent=0 // pred_fallthru
    _
  // Predicated region
  $region70: #{model_forward.1} parent=0 // pred_check
    _
  $region71: #{model_forward.1} parent=0 // pred_check_branch
    %62 = sbr.rel (0) target = $region73
  $region72: #{model_forward.1} parent=0 // pred_region
    _
  $region73: #{model_forward.1} parent=0 // pred_fallthru
    _
  // Predicated region
  $region74: #{model_forward.1} parent=0 // pred_check
    _
  $region75: #{model_forward.1} parent=0 // pred_check_branch
    %64 = sbr.rel (0) target = $region77
  $region76: #{model_forward.1} parent=0 // pred_region
    _
  $region77: #{model_forward.1} parent=0 // pred_fallthru
    _
  // Predicated region
  $region78: #{model_forward.1} parent=0 // pred_check
    _
  $region79: #{model_forward.1} parent=0 // pred_check_branch
    %66 = sbr.rel (0) target = $region81
  $region80: #{model_forward.1} parent=0 // pred_region
    _
  $region81: #{model_forward.1} parent=0 // pred_fallthru
    _
  // Predicated region
  $region82: #{model_forward.1} parent=0 // pred_check
    _
  $region83: #{model_forward.1} parent=0 // pred_check_branch
    %68 = sbr.rel (0) target = $region85
  $region84: #{model_forward.1} parent=0 // pred_region
    _
  $region85: #{model_forward.1} parent=0 // pred_fallthru
    _
  // Predicated region
  $region86: #{model_forward.1} parent=0 // pred_check
    _
  $region87: #{model_forward.1} parent=0 // pred_check_branch
    %70 = sbr.rel (0) target = $region89
  $region88: #{model_forward.1} parent=0 // pred_region
    _
  $region89: #{model_forward.1} parent=0 // pred_fallthru
    _
  %v71 = vld [vmem:[%s1] sm:$0xff]
  %v72 = vld [vmem:[%s1 + $0x8] sm:$0xff]
  %v73 = vld [vmem:[%s1 + $0x10] sm:$0xff]
  %v74 = vld [vmem:[%s1 + $0x18] sm:$0xff]
  %v75 = vld [vmem:[%s1 + $0x20] sm:$0xff]
  %v76 = vld [vmem:[%s1 + $0x28] sm:$0xff]
  %v77 = vld [vmem:[%s1 + $0x30] sm:$0xff]
  %v78 = vld [vmem:[%s1 + $0x38] sm:$0xff]
  %v79 = vld [vmem:[%s3] sm:$0xff]
  %v80 = vld [vmem:[%s3 + $0x8] sm:$0xff]
  %v81 = vld [vmem:[%s2] sm:$0xff]
  %v82 = vld [vmem:[%s2 + $0x8] sm:$0xff]
  %v83 = vld [vmem:[%s2 + $0x10] sm:$0xff]
  %v84 = vld [vmem:[%s2 + $0x18] sm:$0xff]
  %v85 = vld [vmem:[%s2 + $0x20] sm:$0xff]
  %v86 = vld [vmem:[%s2 + $0x28] sm:$0xff]
  %v87 = vld [vmem:[%s2 + $0x30] sm:$0xff]
  %v88 = vld [vmem:[%s2 + $0x38] sm:$0xff]
  %v89 = vld [vmem:[%s4] sm:$0xff]
  %v90 = vld [vmem:[%s4 + $0x8] sm:$0xff]
  %vm91 = vcmask 130048
  %v93 = vsel %vm91, %v81, 0
  %v96 = vsel %vm91, %v82, 0
  %v99 = vsel %vm91, %v83, 0
  %v102 = vsel %vm91, %v84, 0
  %v105 = vsel %vm91, %v85, 0
  %v108 = vsel %vm91, %v86, 0
  %v111 = vsel %vm91, %v87, 0
  %v114 = vsel %vm91, %v88, 0
  %116 = vmatpush.msra.mxu0 0.0
  %117 = vmatpush.msra.mxu0 0.0
  %118 = vmatpush.msra.mxu0 0.0
  %119 = vmatpush.msra.mxu0 0.0
  %120 = vmatpush.msra.mxu0 0.0
  %121 = vmatpush.msra.mxu0 0.0
  %122 = vmatpush.msra.mxu0 0.0
  %123 = vmatpush.msra.mxu0 0.0
  %124 = vmatpush.msra.mxu0 0.0
  %125 = vmatpush.msra.mxu0 0.0
  %126 = vmatpush.msra.mxu0 0.0
  %127 = vmatpush.msra.mxu0 0.0
  %128 = vmatpush.msra.mxu0 0.0
  %129 = vmatpush.msra.mxu0 0.0
  %130 = vmatpush.msra.mxu0 %v90
  %131 = vmatpush.msra.mxu0 %v89
  %132 = vmatmul.f32.gmra.mxu0 %v93
  %v133 = vpop.f32.mrf.mxu0
  %v134 = vadd.f32 0.0, %v133
  %135 = vmatmul.f32.gmra.mxu0 %v96
  %v136 = vpop.f32.mrf.mxu0
  %v137 = vadd.f32 0.0, %v136
  %138 = vmatmul.f32.gmra.mxu0 %v99
  %v139 = vpop.f32.mrf.mxu0
  %v140 = vadd.f32 0.0, %v139
  %141 = vmatmul.f32.gmra.mxu0 %v102
  %v142 = vpop.f32.mrf.mxu0
  %v143 = vadd.f32 0.0, %v142
  %144 = vmatmul.f32.gmra.mxu0 %v105
  %v145 = vpop.f32.mrf.mxu0
  %v146 = vadd.f32 0.0, %v145
  %147 = vmatmul.f32.gmra.mxu0 %v108
  %v148 = vpop.f32.mrf.mxu0
  %v149 = vadd.f32 0.0, %v148
  %150 = vmatmul.f32.gmra.mxu0 %v111
  %v151 = vpop.f32.mrf.mxu0
  %v152 = vadd.f32 0.0, %v151
  %153 = vmatmul.f32.gmra.mxu0 %v114
  %v154 = vpop.f32.mrf.mxu0
  %v155 = vadd.f32 0.0, %v154
  %156 = vdwg.mxu0
  %v158 = vsel %vm91, %v71, 0
  %v161 = vsel %vm91, %v72, 0
  %v164 = vsel %vm91, %v73, 0
  %v167 = vsel %vm91, %v74, 0
  %v170 = vsel %vm91, %v75, 0
  %v173 = vsel %vm91, %v76, 0
  %v176 = vsel %vm91, %v77, 0
  %v179 = vsel %vm91, %v78, 0
  %181 = vmatpush.msra.mxu0 0.0
  %182 = vmatpush.msra.mxu0 0.0
  %183 = vmatpush.msra.mxu0 0.0
  %184 = vmatpush.msra.mxu0 0.0
  %185 = vmatpush.msra.mxu0 0.0
  %186 = vmatpush.msra.mxu0 0.0
  %187 = vmatpush.msra.mxu0 0.0
  %188 = vmatpush.msra.mxu0 0.0
  %189 = vmatpush.msra.mxu0 0.0
  %190 = vmatpush.msra.mxu0 0.0
  %191 = vmatpush.msra.mxu0 0.0
  %192 = vmatpush.msra.mxu0 0.0
  %193 = vmatpush.msra.mxu0 0.0
  %194 = vmatpush.msra.mxu0 0.0
  %195 = vmatpush.msra.mxu0 %v80
  %196 = vmatpush.msra.mxu0 %v79
  %197 = vmatmul.f32.gmra.mxu0 %v158
  %v198 = vpop.f32.mrf.mxu0
  %v199 = vadd.f32 %v134, %v198
  %200 = vmatmul.f32.gmra.mxu0 %v161
  %v201 = vpop.f32.mrf.mxu0
  %v202 = vadd.f32 %v137, %v201
  %203 = vmatmul.f32.gmra.mxu0 %v164
  %v204 = vpop.f32.mrf.mxu0
  %v205 = vadd.f32 %v140, %v204
  %206 = vmatmul.f32.gmra.mxu0 %v167
  %v207 = vpop.f32.mrf.mxu0
  %v208 = vadd.f32 %v143, %v207
  %209 = vmatmul.f32.gmra.mxu0 %v170
  %v210 = vpop.f32.mrf.mxu0
  %v211 = vadd.f32 %v146, %v210
  %212 = vmatmul.f32.gmra.mxu0 %v173
  %v213 = vpop.f32.mrf.mxu0
  %v214 = vadd.f32 %v149, %v213
  %215 = vmatmul.f32.gmra.mxu0 %v176
  %v216 = vpop.f32.mrf.mxu0
  %v217 = vadd.f32 %v152, %v216
  %218 = vmatmul.f32.gmra.mxu0 %v179
  %v219 = vpop.f32.mrf.mxu0
  %v220 = vadd.f32 %v155, %v219
  %221 = vdwg.mxu0
  %v222 = vld [vmem:[%s5] sm:$0x1]
  %v224 = vperm.slane %v222, 0
  %v226 = vadd.f32 %v199, %v224
  %v227 = vadd.f32 %v202, %v224
  %v228 = vadd.f32 %v205, %v224
  %v229 = vadd.f32 %v208, %v224
  %v230 = vadd.f32 %v211, %v224
  %v231 = vadd.f32 %v214, %v224
  %v232 = vadd.f32 %v217, %v224
  %v233 = vadd.f32 %v220, %v224
  %v234 = vmax.f32 %v226, 0.0
  %v235 = vmax.f32 %v227, 0.0
  %v236 = vmax.f32 %v228, 0.0
  %v237 = vmax.f32 %v229, 0.0
  %v238 = vmax.f32 %v230, 0.0
  %v239 = vmax.f32 %v231, 0.0
  %v240 = vmax.f32 %v232, 0.0
  %v241 = vmax.f32 %v233, 0.0
  %v242 = vlaneseq
  %v243 = vand.u32 %v242, 127
  %v244 = vlaneseq
  %v245 = vshrl.u32 %v244, 7
  %v246 = vadd.s32 %v245, 8
  %v247 = vadd.s32 %v245, 16
  %v248 = vadd.s32 %v245, 24
  %v249 = vadd.s32 %v245, 32
  %v250 = vadd.s32 %v245, 40
  %v251 = vadd.s32 %v245, 48
  %v252 = vadd.s32 %v245, 56
  %v253 = vshra.s32 %v245, 3
  %v254 = vshra.s32 %v246, 3
  %v255 = vshra.s32 %v247, 3
  %v256 = vshra.s32 %v248, 3
  %v257 = vshra.s32 %v249, 3
  %v258 = vshra.s32 %v250, 3
  %v259 = vshra.s32 %v251, 3
  %v260 = vshra.s32 %v252, 3
  %v261 = vshra.s32 %v243, 3
  %vm262 = vcmp.eq.s32.totalorder %v253, %v261
  %vm263 = vcmp.eq.s32.totalorder %v254, %v261
  %vm264 = vcmp.eq.s32.totalorder %v255, %v261
  %vm265 = vcmp.eq.s32.totalorder %v256, %v261
  %vm266 = vcmp.eq.s32.totalorder %v257, %v261
  %vm267 = vcmp.eq.s32.totalorder %v258, %v261
  %vm268 = vcmp.eq.s32.totalorder %v259, %v261
  %vm269 = vcmp.eq.s32.totalorder %v260, %v261
  %v270 = vsel %vm262, 0.0, -1e+30
  %v271 = vsel %vm263, 0.0, -1e+30
  %v272 = vsel %vm264, 0.0, -1e+30
  %v273 = vsel %vm265, 0.0, -1e+30
  %v274 = vsel %vm266, 0.0, -1e+30
  %v275 = vsel %vm267, 0.0, -1e+30
  %v276 = vsel %vm268, 0.0, -1e+30
  %v277 = vsel %vm269, 0.0, -1e+30
  %v278 = vld [vmem:[%s6] sm:$0xff]
  %v279 = vld [vmem:[%s6 + $0x8] sm:$0xff]
  %v280 = vld [vmem:[%s6 + $0x10] sm:$0xff]
  %v281 = vld [vmem:[%s6 + $0x18] sm:$0xff]
  %v282 = vld [vmem:[%s7] sm:$0x1]
  %v284 = vperm.slane %v282, 0
  %vm286 = vcmask 261120
  %v288 = vsel %vm286, %v234, 0
  %v291 = vsel %vm286, %v235, 0
  %v294 = vsel %vm286, %v236, 0
  %v297 = vsel %vm286, %v237, 0
  %v300 = vsel %vm286, %v238, 0
  %v303 = vsel %vm286, %v239, 0
  %v306 = vsel %vm286, %v240, 0
  %v309 = vsel %vm286, %v241, 0
  %311 = vmatpush.msra.mxu0 0.0
  %312 = vmatpush.msra.mxu0 0.0
  %313 = vmatpush.msra.mxu0 0.0
  %314 = vmatpush.msra.mxu0 0.0
  %315 = vmatpush.msra.mxu0 0.0
  %316 = vmatpush.msra.mxu0 0.0
  %317 = vmatpush.msra.mxu0 0.0
  %318 = vmatpush.msra.mxu0 0.0
  %319 = vmatpush.msra.mxu0 0.0
  %320 = vmatpush.msra.mxu0 0.0
  %321 = vmatpush.msra.mxu0 0.0
  %322 = vmatpush.msra.mxu0 0.0
  %323 = vmatpush.msra.mxu0 %v281
  %324 = vmatpush.msra.mxu0 %v280
  %325 = vmatpush.msra.mxu0 %v279
  %326 = vmatpush.msra.mxu0 %v278
  %327 = vmatmul.f32.gmra.mxu0 %v288
  %v328 = vpop.f32.mrf.mxu0
  %v329 = vadd.f32 %v284, %v328
  %330 = vmatmul.f32.gmra.mxu0 %v291
  %v331 = vpop.f32.mrf.mxu0
  %v332 = vadd.f32 %v284, %v331
  %333 = vmatmul.f32.gmra.mxu0 %v294
  %v334 = vpop.f32.mrf.mxu0
  %v335 = vadd.f32 %v284, %v334
  %336 = vmatmul.f32.gmra.mxu0 %v297
  %v337 = vpop.f32.mrf.mxu0
  %v338 = vadd.f32 %v284, %v337
  %339 = vmatmul.f32.gmra.mxu0 %v300
  %v340 = vpop.f32.mrf.mxu0
  %v341 = vadd.f32 %v284, %v340
  %342 = vmatmul.f32.gmra.mxu0 %v303
  %v343 = vpop.f32.mrf.mxu0
  %v344 = vadd.f32 %v284, %v343
  %345 = vmatmul.f32.gmra.mxu0 %v306
  %v346 = vpop.f32.mrf.mxu0
  %v347 = vadd.f32 %v284, %v346
  %348 = vmatmul.f32.gmra.mxu0 %v309
  %v349 = vpop.f32.mrf.mxu0
  %v350 = vadd.f32 %v284, %v349
  %351 = vdwg.mxu0
  %v352 = vld [vmem:[%s8] sm:$0xff]
  %v353 = vld [vmem:[%s8 + $0x8] sm:$0xff]
  %v354 = vld [vmem:[%s8 + $0x10] sm:$0xff]
  %v355 = vld [vmem:[%s8 + $0x18] sm:$0xff]
  %v356 = vld [vmem:[%s9] sm:$0x1]
  %v358 = vperm.slane %v356, 0
  %360 = vmatpush.msra.mxu0 0.0
  %361 = vmatpush.msra.mxu0 0.0
  %362 = vmatpush.msra.mxu0 0.0
  %363 = vmatpush.msra.mxu0 0.0
  %364 = vmatpush.msra.mxu0 0.0
  %365 = vmatpush.msra.mxu0 0.0
  %366 = vmatpush.msra.mxu0 0.0
  %367 = vmatpush.msra.mxu0 0.0
  %368 = vmatpush.msra.mxu0 0.0
  %369 = vmatpush.msra.mxu0 0.0
  %370 = vmatpush.msra.mxu0 0.0
  %371 = vmatpush.msra.mxu0 0.0
  %372 = vmatpush.msra.mxu0 %v355
  %373 = vmatpush.msra.mxu0 %v354
  %374 = vmatpush.msra.mxu0 %v353
  %375 = vmatpush.msra.mxu0 %v352
  %376 = vmatmul.f32.gmra.mxu0 %v288
  %v377 = vpop.f32.mrf.mxu0
  %v378 = vadd.f32 %v358, %v377
  %379 = vmatmul.f32.gmra.mxu0 %v291
  %v380 = vpop.f32.mrf.mxu0
  %v381 = vadd.f32 %v358, %v380
  %382 = vmatmul.f32.gmra.mxu0 %v294
  %v383 = vpop.f32.mrf.mxu0
  %v384 = vadd.f32 %v358, %v383
  %385 = vmatmul.f32.gmra.mxu0 %v297
  %v386 = vpop.f32.mrf.mxu0
  %v387 = vadd.f32 %v358, %v386
  %388 = vmatmul.f32.gmra.mxu0 %v300
  %v389 = vpop.f32.mrf.mxu0
  %v390 = vadd.f32 %v358, %v389
  %391 = vmatmul.f32.gmra.mxu0 %v303
  %v392 = vpop.f32.mrf.mxu0
  %v393 = vadd.f32 %v358, %v392
  %394 = vmatmul.f32.gmra.mxu0 %v306
  %v395 = vpop.f32.mrf.mxu0
  %v396 = vadd.f32 %v358, %v395
  %397 = vmatmul.f32.gmra.mxu0 %v309
  %v398 = vpop.f32.mrf.mxu0
  %v399 = vadd.f32 %v358, %v398
  %400 = vdwg.mxu0
  %v401 = vld [vmem:[%s10] sm:$0xff]
  %v402 = vld [vmem:[%s10 + $0x8] sm:$0xff]
  %v403 = vld [vmem:[%s10 + $0x10] sm:$0xff]
  %v404 = vld [vmem:[%s10 + $0x18] sm:$0xff]
  %v405 = vld [vmem:[%s11] sm:$0x1]
  %v407 = vperm.slane %v405, 0
  %409 = vmatpush.msra.mxu0 0.0
  %410 = vmatpush.msra.mxu0 0.0
  %411 = vmatpush.msra.mxu0 0.0
  %412 = vmatpush.msra.mxu0 0.0
  %413 = vmatpush.msra.mxu0 0.0
  %414 = vmatpush.msra.mxu0 0.0
  %415 = vmatpush.msra.mxu0 0.0
  %416 = vmatpush.msra.mxu0 0.0
  %417 = vmatpush.msra.mxu0 0.0
  %418 = vmatpush.msra.mxu0 0.0
  %419 = vmatpush.msra.mxu0 0.0
  %420 = vmatpush.msra.mxu0 0.0
  %421 = vmatpush.msra.mxu0 %v404
  %422 = vmatpush.msra.mxu0 %v403
  %423 = vmatpush.msra.mxu0 %v402
  %424 = vmatpush.msra.mxu0 %v401
  %425 = vmatmul.f32.gmra.mxu0 %v288
  %v426 = vpop.f32.mrf.mxu0
  %v427 = vadd.f32 %v407, %v426
  %428 = vmatmul.f32.gmra.mxu0 %v291
  %v429 = vpop.f32.mrf.mxu0
  %v430 = vadd.f32 %v407, %v429
  %431 = vmatmul.f32.gmra.mxu0 %v294
  %v432 = vpop.f32.mrf.mxu0
  %v433 = vadd.f32 %v407, %v432
  %434 = vmatmul.f32.gmra.mxu0 %v297
  %v435 = vpop.f32.mrf.mxu0
  %v436 = vadd.f32 %v407, %v435
  %437 = vmatmul.f32.gmra.mxu0 %v300
  %v438 = vpop.f32.mrf.mxu0
  %v439 = vadd.f32 %v407, %v438
  %440 = vmatmul.f32.gmra.mxu0 %v303
  %v441 = vpop.f32.mrf.mxu0
  %v442 = vadd.f32 %v407, %v441
  %443 = vmatmul.f32.gmra.mxu0 %v306
  %v444 = vpop.f32.mrf.mxu0
  %v445 = vadd.f32 %v407, %v444
  %446 = vmatmul.f32.gmra.mxu0 %v309
  %v447 = vpop.f32.mrf.mxu0
  %v448 = vadd.f32 %v407, %v447
  %449 = vdwg.mxu0
  %v451 = vsel %vm286, %v329, 0
  %v454 = vsel %vm286, %v332, 0
  %v457 = vsel %vm286, %v335, 0
  %v460 = vsel %vm286, %v338, 0
  %v463 = vsel %vm286, %v341, 0
  %v466 = vsel %vm286, %v344, 0
  %v469 = vsel %vm286, %v347, 0
  %v472 = vsel %vm286, %v350, 0
  %v475 = vsel %vm286, %v378, 0
  %v478 = vsel %vm286, %v381, 0
  %v481 = vsel %vm286, %v384, 0
  %v484 = vsel %vm286, %v387, 0
  %v487 = vsel %vm286, %v390, 0
  %v490 = vsel %vm286, %v393, 0
  %v493 = vsel %vm286, %v396, 0
  %v496 = vsel %vm286, %v399, 0
  %498 = vmatpush.xpose.msra.mxu0 0.0
  %499 = vmatpush.xpose.msra.mxu0 0.0
  %500 = vmatpush.xpose.msra.mxu0 0.0
  %501 = vmatpush.xpose.msra.mxu0 0.0
  %502 = vmatpush.xpose.msra.mxu0 0.0
  %503 = vmatpush.xpose.msra.mxu0 0.0
  %504 = vmatpush.xpose.msra.mxu0 0.0
  %505 = vmatpush.xpose.msra.mxu0 0.0
  %506 = vmatpush.xpose.msra.mxu0 %v496
  %507 = vmatpush.xpose.msra.mxu0 %v493
  %508 = vmatpush.xpose.msra.mxu0 %v490
  %509 = vmatpush.xpose.msra.mxu0 %v487
  %510 = vmatpush.xpose.msra.mxu0 %v484
  %511 = vmatpush.xpose.msra.mxu0 %v481
  %512 = vmatpush.xpose.msra.mxu0 %v478
  %513 = vmatpush.xpose.msra.mxu0 %v475
  %514 = vmatmul.f32.gmra.mxu0 %v451
  %v515 = vpop.f32.mrf.mxu0
  %v516 = vadd.f32 %v270, %v515
  %517 = vmatmul.f32.gmra.mxu0 %v454
  %v518 = vpop.f32.mrf.mxu0
  %v519 = vadd.f32 %v271, %v518
  %520 = vmatmul.f32.gmra.mxu0 %v457
  %v521 = vpop.f32.mrf.mxu0
  %v522 = vadd.f32 %v272, %v521
  %523 = vmatmul.f32.gmra.mxu0 %v460
  %v524 = vpop.f32.mrf.mxu0
  %v525 = vadd.f32 %v273, %v524
  %526 = vmatmul.f32.gmra.mxu0 %v463
  %v527 = vpop.f32.mrf.mxu0
  %v528 = vadd.f32 %v274, %v527
  %529 = vmatmul.f32.gmra.mxu0 %v466
  %v530 = vpop.f32.mrf.mxu0
  %v531 = vadd.f32 %v275, %v530
  %532 = vmatmul.f32.gmra.mxu0 %v469
  %v533 = vpop.f32.mrf.mxu0
  %v534 = vadd.f32 %v276, %v533
  %535 = vmatmul.f32.gmra.mxu0 %v472
  %v536 = vpop.f32.mrf.mxu0
  %v537 = vadd.f32 %v277, %v536
  %538 = vdwg.mxu0
  %vm539 = vcmask 523264
  %v540 = vsel %vm539, %v516, -inf
  %541 = vmax.xlane.f32.xlu0 %v540
  %v542 = vpop.xlane.xlu0 %541
  %v543 = vsel %vm539, %v519, -inf
  %544 = vmax.xlane.f32.xlu0 %v543
  %v545 = vpop.xlane.xlu0 %544
  %v546 = vsel %vm539, %v522, -inf
  %547 = vmax.xlane.f32.xlu0 %v546
  %v548 = vpop.xlane.xlu0 %547
  %v549 = vsel %vm539, %v525, -inf
  %550 = vmax.xlane.f32.xlu0 %v549
  %v551 = vpop.xlane.xlu0 %550
  %v552 = vsel %vm539, %v528, -inf
  %553 = vmax.xlane.f32.xlu0 %v552
  %v554 = vpop.xlane.xlu0 %553
  %v555 = vsel %vm539, %v531, -inf
  %556 = vmax.xlane.f32.xlu0 %v555
  %v557 = vpop.xlane.xlu0 %556
  %v558 = vsel %vm539, %v534, -inf
  %559 = vmax.xlane.f32.xlu0 %v558
  %v560 = vpop.xlane.xlu0 %559
  %v561 = vsel %vm539, %v537, -inf
  %562 = vmax.xlane.f32.xlu0 %v561
  %v563 = vpop.xlane.xlu0 %562
  %v564 = vsub.f32 %v516, %v542
  %v565 = vsub.f32 %v519, %v545
  %v566 = vsub.f32 %v522, %v548
  %v567 = vsub.f32 %v525, %v551
  %v568 = vsub.f32 %v528, %v554
  %v569 = vsub.f32 %v531, %v557
  %v570 = vsub.f32 %v534, %v560
  %v571 = vsub.f32 %v537, %v563
  %v572 = vmul.f32 %v564, 1.442695
  %v573 = vpow.pop %v572
  %v574 = vmul.f32 %v565, 1.442695
  %v575 = vpow.pop %v574
  %v576 = vmul.f32 %v566, 1.442695
  %v577 = vpow.pop %v576
  %v578 = vmul.f32 %v567, 1.442695
  %v579 = vpow.pop %v578
  %v580 = vmul.f32 %v568, 1.442695
  %v581 = vpow.pop %v580
  %v582 = vmul.f32 %v569, 1.442695
  %v583 = vpow.pop %v582
  %v584 = vmul.f32 %v570, 1.442695
  %v585 = vpow.pop %v584
  %v586 = vmul.f32 %v571, 1.442695
  %v587 = vpow.pop %v586
  %v588 = vsel %vm539, %v573, 0.0
  %589 = vadd.xlane.f32.xlu0 %v588
  %v590 = vpop.xlane.xlu0 %589
  %v591 = vsel %vm539, %v575, 0.0
  %592 = vadd.xlane.f32.xlu0 %v591
  %v593 = vpop.xlane.xlu0 %592
  %v594 = vsel %vm539, %v577, 0.0
  %595 = vadd.xlane.f32.xlu0 %v594
  %v596 = vpop.xlane.xlu0 %595
  %v597 = vsel %vm539, %v579, 0.0
  %598 = vadd.xlane.f32.xlu0 %v597
  %v599 = vpop.xlane.xlu0 %598
  %v600 = vsel %vm539, %v581, 0.0
  %601 = vadd.xlane.f32.xlu0 %v600
  %v602 = vpop.xlane.xlu0 %601
  %v603 = vsel %vm539, %v583, 0.0
  %604 = vadd.xlane.f32.xlu0 %v603
  %v605 = vpop.xlane.xlu0 %604
  %v606 = vsel %vm539, %v585, 0.0
  %607 = vadd.xlane.f32.xlu0 %v606
  %v608 = vpop.xlane.xlu0 %607
  %v609 = vsel %vm539, %v587, 0.0
  %610 = vadd.xlane.f32.xlu0 %v609
  %v611 = vpop.xlane.xlu0 %610
  %v612 = vrcp.pop %v590
  %v613 = vmul.f32 %v590, %v612
  %v614 = vsub.f32 1.0, %v613
  %v615 = vmul.f32 %v612, %v614
  %v616 = vadd.f32 %v612, %v615
  %vm617 = vweird.f32 %v590
  %vm618 = vweird.f32 %v612
  %vm619 = vmor %vm617, %vm618
  %v620 = vsel %vm619, %v612, %v616
  %v621 = vand.u32 2147483647, %v590
  %vm622 = vcmp.eq.f32.partialorder %v621, 8.507059e+37
  %v623 = vand.u32 %v590, 2147483648
  %v624 = vor.u32 1.1754944e-38, %v623
  %v625 = vsel %vm622, %v624, %v620
  %v626 = vrcp.pop %v593
  %v627 = vmul.f32 %v593, %v626
  %v628 = vsub.f32 1.0, %v627
  %v629 = vmul.f32 %v626, %v628
  %v630 = vadd.f32 %v626, %v629
  %vm631 = vweird.f32 %v593
  %vm632 = vweird.f32 %v626
  %vm633 = vmor %vm631, %vm632
  %v634 = vsel %vm633, %v626, %v630
  %v635 = vand.u32 2147483647, %v593
  %vm636 = vcmp.eq.f32.partialorder %v635, 8.507059e+37
  %v637 = vand.u32 %v593, 2147483648
  %v638 = vor.u32 1.1754944e-38, %v637
  %v639 = vsel %vm636, %v638, %v634
  %v640 = vrcp.pop %v596
  %v641 = vmul.f32 %v596, %v640
  %v642 = vsub.f32 1.0, %v641
  %v643 = vmul.f32 %v640, %v642
  %v644 = vadd.f32 %v640, %v643
  %vm645 = vweird.f32 %v596
  %vm646 = vweird.f32 %v640
  %vm647 = vmor %vm645, %vm646
  %v648 = vsel %vm647, %v640, %v644
  %v649 = vand.u32 2147483647, %v596
  %vm650 = vcmp.eq.f32.partialorder %v649, 8.507059e+37
  %v651 = vand.u32 %v596, 2147483648
  %v652 = vor.u32 1.1754944e-38, %v651
  %v653 = vsel %vm650, %v652, %v648
  %v654 = vrcp.pop %v599
  %v655 = vmul.f32 %v599, %v654
  %v656 = vsub.f32 1.0, %v655
  %v657 = vmul.f32 %v654, %v656
  %v658 = vadd.f32 %v654, %v657
  %vm659 = vweird.f32 %v599
  %vm660 = vweird.f32 %v654
  %vm661 = vmor %vm659, %vm660
  %v662 = vsel %vm661, %v654, %v658
  %v663 = vand.u32 2147483647, %v599
  %vm664 = vcmp.eq.f32.partialorder %v663, 8.507059e+37
  %v665 = vand.u32 %v599, 2147483648
  %v666 = vor.u32 1.1754944e-38, %v665
  %v667 = vsel %vm664, %v666, %v662
  %v668 = vrcp.pop %v602
  %v669 = vmul.f32 %v602, %v668
  %v670 = vsub.f32 1.0, %v669
  %v671 = vmul.f32 %v668, %v670
  %v672 = vadd.f32 %v668, %v671
  %vm673 = vweird.f32 %v602
  %vm674 = vweird.f32 %v668
  %vm675 = vmor %vm673, %vm674
  %v676 = vsel %vm675, %v668, %v672
  %v677 = vand.u32 2147483647, %v602
  %vm678 = vcmp.eq.f32.partialorder %v677, 8.507059e+37
  %v679 = vand.u32 %v602, 2147483648
  %v680 = vor.u32 1.1754944e-38, %v679
  %v681 = vsel %vm678, %v680, %v676
  %v682 = vrcp.pop %v605
  %v683 = vmul.f32 %v605, %v682
  %v684 = vsub.f32 1.0, %v683
  %v685 = vmul.f32 %v682, %v684
  %v686 = vadd.f32 %v682, %v685
  %vm687 = vweird.f32 %v605
  %vm688 = vweird.f32 %v682
  %vm689 = vmor %vm687, %vm688
  %v690 = vsel %vm689, %v682, %v686
  %v691 = vand.u32 2147483647, %v605
  %vm692 = vcmp.eq.f32.partialorder %v691, 8.507059e+37
  %v693 = vand.u32 %v605, 2147483648
  %v694 = vor.u32 1.1754944e-38, %v693
  %v695 = vsel %vm692, %v694, %v690
  %v696 = vrcp.pop %v608
  %v697 = vmul.f32 %v608, %v696
  %v698 = vsub.f32 1.0, %v697
  %v699 = vmul.f32 %v696, %v698
  %v700 = vadd.f32 %v696, %v699
  %vm701 = vweird.f32 %v608
  %vm702 = vweird.f32 %v696
  %vm703 = vmor %vm701, %vm702
  %v704 = vsel %vm703, %v696, %v700
  %v705 = vand.u32 2147483647, %v608
  %vm706 = vcmp.eq.f32.partialorder %v705, 8.507059e+37
  %v707 = vand.u32 %v608, 2147483648
  %v708 = vor.u32 1.1754944e-38, %v707
  %v709 = vsel %vm706, %v708, %v704
  %v710 = vrcp.pop %v611
  %v711 = vmul.f32 %v611, %v710
  %v712 = vsub.f32 1.0, %v711
  %v713 = vmul.f32 %v710, %v712
  %v714 = vadd.f32 %v710, %v713
  %vm715 = vweird.f32 %v611
  %vm716 = vweird.f32 %v710
  %vm717 = vmor %vm715, %vm716
  %v718 = vsel %vm717, %v710, %v714
  %v719 = vand.u32 2147483647, %v611
  %vm720 = vcmp.eq.f32.partialorder %v719, 8.507059e+37
  %v721 = vand.u32 %v611, 2147483648
  %v722 = vor.u32 1.1754944e-38, %v721
  %v723 = vsel %vm720, %v722, %v718
  %v724 = vmul.f32 %v573, %v625
  %v725 = vmul.f32 %v575, %v639
  %v726 = vmul.f32 %v577, %v653
  %v727 = vmul.f32 %v579, %v667
  %v728 = vmul.f32 %v581, %v681
  %v729 = vmul.f32 %v583, %v695
  %v730 = vmul.f32 %v585, %v709
  %v731 = vmul.f32 %v587, %v723
  %v733 = vsel %vm539, %v724, 0
  %v736 = vsel %vm539, %v725, 0
  %v739 = vsel %vm539, %v726, 0
  %v742 = vsel %vm539, %v727, 0
  %v745 = vsel %vm539, %v728, 0
  %v748 = vsel %vm539, %v729, 0
  %v751 = vsel %vm539, %v730, 0
  %v754 = vsel %vm539, %v731, 0
  %756 = vmatpush.msra.mxu0 0.0
  %757 = vmatpush.msra.mxu0 0.0
  %758 = vmatpush.msra.mxu0 0.0
  %759 = vmatpush.msra.mxu0 0.0
  %760 = vmatpush.msra.mxu0 0.0
  %761 = vmatpush.msra.mxu0 0.0
  %762 = vmatpush.msra.mxu0 0.0
  %763 = vmatpush.msra.mxu0 0.0
  %764 = vmatpush.msra.mxu0 %v448
  %765 = vmatpush.msra.mxu0 %v445
  %766 = vmatpush.msra.mxu0 %v442
  %767 = vmatpush.msra.mxu0 %v439
  %768 = vmatpush.msra.mxu0 %v436
  %769 = vmatpush.msra.mxu0 %v433
  %770 = vmatpush.msra.mxu0 %v430
  %771 = vmatpush.msra.mxu0 %v427
  %772 = vmatmul.f32.gmra.mxu0 %v733
  %v773 = vpop.f32.mrf.mxu0
  %v774 = vadd.f32 0.0, %v773
  %775 = vmatmul.f32.gmra.mxu0 %v736
  %v776 = vpop.f32.mrf.mxu0
  %v777 = vadd.f32 0.0, %v776
  %778 = vmatmul.f32.gmra.mxu0 %v739
  %v779 = vpop.f32.mrf.mxu0
  %v780 = vadd.f32 0.0, %v779
  %781 = vmatmul.f32.gmra.mxu0 %v742
  %v782 = vpop.f32.mrf.mxu0
  %v783 = vadd.f32 0.0, %v782
  %784 = vmatmul.f32.gmra.mxu0 %v745
  %v785 = vpop.f32.mrf.mxu0
  %v786 = vadd.f32 0.0, %v785
  %787 = vmatmul.f32.gmra.mxu0 %v748
  %v788 = vpop.f32.mrf.mxu0
  %v789 = vadd.f32 0.0, %v788
  %790 = vmatmul.f32.gmra.mxu0 %v751
  %v791 = vpop.f32.mrf.mxu0
  %v792 = vadd.f32 0.0, %v791
  %793 = vmatmul.f32.gmra.mxu0 %v754
  %v794 = vpop.f32.mrf.mxu0
  %v795 = vadd.f32 0.0, %v794
  %796 = vdwg.mxu0
  %v797 = vld [vmem:[%s12] sm:$0xff]
  %v798 = vld [vmem:[%s12 + $0x8] sm:$0xff]
  %v799 = vld [vmem:[%s12 + $0x10] sm:$0xff]
  %v800 = vld [vmem:[%s12 + $0x18] sm:$0xff]
  %v801 = vld [vmem:[%s13] sm:$0x1]
  %v803 = vperm.slane %v801, 0
  %v806 = vsel %vm286, %v774, 0
  %v809 = vsel %vm286, %v777, 0
  %v812 = vsel %vm286, %v780, 0
  %v815 = vsel %vm286, %v783, 0
  %v818 = vsel %vm286, %v786, 0
  %v821 = vsel %vm286, %v789, 0
  %v824 = vsel %vm286, %v792, 0
  %v827 = vsel %vm286, %v795, 0
  %829 = vmatpush.msra.mxu0 0.0
  %830 = vmatpush.msra.mxu0 0.0
  %831 = vmatpush.msra.mxu0 0.0
  %832 = vmatpush.msra.mxu0 0.0
  %833 = vmatpush.msra.mxu0 0.0
  %834 = vmatpush.msra.mxu0 0.0
  %835 = vmatpush.msra.mxu0 0.0
  %836 = vmatpush.msra.mxu0 0.0
  %837 = vmatpush.msra.mxu0 0.0
  %838 = vmatpush.msra.mxu0 0.0
  %839 = vmatpush.msra.mxu0 0.0
  %840 = vmatpush.msra.mxu0 0.0
  %841 = vmatpush.msra.mxu0 %v800
  %842 = vmatpush.msra.mxu0 %v799
  %843 = vmatpush.msra.mxu0 %v798
  %844 = vmatpush.msra.mxu0 %v797
  %845 = vmatmul.f32.gmra.mxu0 %v806
  %v846 = vpop.f32.mrf.mxu0
  %v847 = vadd.f32 %v803, %v846
  %848 = vmatmul.f32.gmra.mxu0 %v809
  %v849 = vpop.f32.mrf.mxu0
  %v850 = vadd.f32 %v803, %v849
  %851 = vmatmul.f32.gmra.mxu0 %v812
  %v852 = vpop.f32.mrf.mxu0
  %v853 = vadd.f32 %v803, %v852
  %854 = vmatmul.f32.gmra.mxu0 %v815
  %v855 = vpop.f32.mrf.mxu0
  %v856 = vadd.f32 %v803, %v855
  %857 = vmatmul.f32.gmra.mxu0 %v818
  %v858 = vpop.f32.mrf.mxu0
  %v859 = vadd.f32 %v803, %v858
  %860 = vmatmul.f32.gmra.mxu0 %v821
  %v861 = vpop.f32.mrf.mxu0
  %v862 = vadd.f32 %v803, %v861
  %863 = vmatmul.f32.gmra.mxu0 %v824
  %v864 = vpop.f32.mrf.mxu0
  %v865 = vadd.f32 %v803, %v864
  %866 = vmatmul.f32.gmra.mxu0 %v827
  %v867 = vpop.f32.mrf.mxu0
  %v868 = vadd.f32 %v803, %v867
  %869 = vdwg.mxu0
  %v870 = vadd.f32 %v234, %v847
  %v871 = vadd.f32 %v235, %v850
  %v872 = vadd.f32 %v236, %v853
  %v873 = vadd.f32 %v237, %v856
  %v874 = vadd.f32 %v238, %v859
  %v875 = vadd.f32 %v239, %v862
  %v876 = vadd.f32 %v240, %v865
  %v877 = vadd.f32 %v241, %v868
  %v878 = vld [vmem:[%s14] sm:$0x1]
  %v879 = vld [vmem:[%s15] sm:$0x1]
  %v880 = vsel %vm286, %v870, 0.0
  %881 = vadd.xlane.f32.xlu0 %v880
  %v882 = vpop.xlane.xlu0 %881
  %v883 = vsel %vm286, %v871, 0.0
  %884 = vadd.xlane.f32.xlu0 %v883
  %v885 = vpop.xlane.xlu0 %884
  %v886 = vsel %vm286, %v872, 0.0
  %887 = vadd.xlane.f32.xlu0 %v886
  %v888 = vpop.xlane.xlu0 %887
  %v889 = vsel %vm286, %v873, 0.0
  %890 = vadd.xlane.f32.xlu0 %v889
  %v891 = vpop.xlane.xlu0 %890
  %v892 = vsel %vm286, %v874, 0.0
  %893 = vadd.xlane.f32.xlu0 %v892
  %v894 = vpop.xlane.xlu0 %893
  %v895 = vsel %vm286, %v875, 0.0
  %896 = vadd.xlane.f32.xlu0 %v895
  %v897 = vpop.xlane.xlu0 %896
  %v898 = vsel %vm286, %v876, 0.0
  %899 = vadd.xlane.f32.xlu0 %v898
  %v900 = vpop.xlane.xlu0 %899
  %v901 = vsel %vm286, %v877, 0.0
  %902 = vadd.xlane.f32.xlu0 %v901
  %v903 = vpop.xlane.xlu0 %902
  %v904 = vrcp.pop 32.0
  %v905 = vmul.f32 32.0, %v904
  %v906 = vsub.f32 1.0, %v905
  %v907 = vmul.f32 %v904, %v906
  %v908 = vadd.f32 %v904, %v907
  %vm909 = vweird.f32 %v904
  %v910 = vsel %vm909, %v904, %v908
  %v911 = vmul.f32 %v882, %v910
  %v912 = vmul.f32 %v885, %v910
  %v913 = vmul.f32 %v888, %v910
  %v914 = vmul.f32 %v891, %v910
  %v915 = vmul.f32 %v894, %v910
  %v916 = vmul.f32 %v897, %v910
  %v917 = vmul.f32 %v900, %v910
  %v918 = vmul.f32 %v903, %v910
  %v919 = vsub.f32 %v870, %v911
  %v920 = vsub.f32 %v871, %v912
  %v921 = vsub.f32 %v872, %v913
  %v922 = vsub.f32 %v873, %v914
  %v923 = vsub.f32 %v874, %v915
  %v924 = vsub.f32 %v875, %v916
  %v925 = vsub.f32 %v876, %v917
  %v926 = vsub.f32 %v877, %v918
  %v927 = vmul.f32 %v919, %v919
  %v928 = vmul.f32 %v920, %v920
  %v929 = vmul.f32 %v921, %v921
  %v930 = vmul.f32 %v922, %v922
  %v931 = vmul.f32 %v923, %v923
  %v932 = vmul.f32 %v924, %v924
  %v933 = vmul.f32 %v925, %v925
  %v934 = vmul.f32 %v926, %v926
  %v935 = vsel %vm286, %v927, 0.0
  %936 = vadd.xlane.f32.xlu0 %v935
  %v937 = vpop.xlane.xlu0 %936
  %v938 = vsel %vm286, %v928, 0.0
  %939 = vadd.xlane.f32.xlu0 %v938
  %v940 = vpop.xlane.xlu0 %939
  %v941 = vsel %vm286, %v929, 0.0
  %942 = vadd.xlane.f32.xlu0 %v941
  %v943 = vpop.xlane.xlu0 %942
  %v944 = vsel %vm286, %v930, 0.0
  %945 = vadd.xlane.f32.xlu0 %v944
  %v946 = vpop.xlane.xlu0 %945
  %v947 = vsel %vm286, %v931, 0.0
  %948 = vadd.xlane.f32.xlu0 %v947
  %v949 = vpop.xlane.xlu0 %948
  %v950 = vsel %vm286, %v932, 0.0
  %951 = vadd.xlane.f32.xlu0 %v950
  %v952 = vpop.xlane.xlu0 %951
  %v953 = vsel %vm286, %v933, 0.0
  %954 = vadd.xlane.f32.xlu0 %v953
  %v955 = vpop.xlane.xlu0 %954
  %v956 = vsel %vm286, %v934, 0.0
  %957 = vadd.xlane.f32.xlu0 %v956
  %v958 = vpop.xlane.xlu0 %957
  %v959 = vmul.f32 %v937, %v910
  %v960 = vmul.f32 %v940, %v910
  %v961 = vmul.f32 %v943, %v910
  %v962 = vmul.f32 %v946, %v910
  %v963 = vmul.f32 %v949, %v910
  %v964 = vmul.f32 %v952, %v910
  %v965 = vmul.f32 %v955, %v910
  %v966 = vmul.f32 %v958, %v910
  %v967 = vadd.f32 %v959, 1e-05
  %v968 = vadd.f32 %v960, 1e-05
  %v969 = vadd.f32 %v961, 1e-05
  %v970 = vadd.f32 %v962, 1e-05
  %v971 = vadd.f32 %v963, 1e-05
  %v972 = vadd.f32 %v964, 1e-05
  %v973 = vadd.f32 %v965, 1e-05
  %v974 = vadd.f32 %v966, 1e-05
  %v975 = vrsqrt.pop %v967
  %v976 = vmul.f32 %v975, %v967
  %v977 = vmul.f32 %v976, %v975
  %v978 = vmul.f32 0.5, %v977
  %v979 = vsub.f32 1.5, %v978
  %v980 = vmul.f32 %v975, %v979
  %vm981 = vweird.f32 %v967
  %vm982 = vweird.f32 %v975
  %vm983 = vmor %vm981, %vm982
  %v984 = vsel %vm983, %v975, %v980
  %v985 = vrsqrt.pop %v968
  %v986 = vmul.f32 %v985, %v968
  %v987 = vmul.f32 %v986, %v985
  %v988 = vmul.f32 0.5, %v987
  %v989 = vsub.f32 1.5, %v988
  %v990 = vmul.f32 %v985, %v989
  %vm991 = vweird.f32 %v968
  %vm992 = vweird.f32 %v985
  %vm993 = vmor %vm991, %vm992
  %v994 = vsel %vm993, %v985, %v990
  %v995 = vrsqrt.pop %v969
  %v996 = vmul.f32 %v995, %v969
  %v997 = vmul.f32 %v996, %v995
  %v998 = vmul.f32 0.5, %v997
  %v999 = vsub.f32 1.5, %v998
  %v1000 = vmul.f32 %v995, %v999
  %vm1001 = vweird.f32 %v969
  %vm1002 = vweird.f32 %v995
  %vm1003 = vmor %vm1001, %vm1002
  %v1004 = vsel %vm1003, %v995, %v1000
  %v1005 = vrsqrt.pop %v970
  %v1006 = vmul.f32 %v1005, %v970
  %v1007 = vmul.f32 %v1006, %v1005
  %v1008 = vmul.f32 0.5, %v1007
  %v1009 = vsub.f32 1.5, %v1008
  %v1010 = vmul.f32 %v1005, %v1009
  %vm1011 = vweird.f32 %v970
  %vm1012 = vweird.f32 %v1005
  %vm1013 = vmor %vm1011, %vm1012
  %v1014 = vsel %vm1013, %v1005, %v1010
  %v1015 = vrsqrt.pop %v971
  %v1016 = vmul.f32 %v1015, %v971
  %v1017 = vmul.f32 %v1016, %v1015
  %v1018 = vmul.f32 0.5, %v1017
  %v1019 = vsub.f32 1.5, %v1018
  %v1020 = vmul.f32 %v1015, %v1019
  %vm1021 = vweird.f32 %v971
  %vm1022 = vweird.f32 %v1015
  %vm1023 = vmor %vm1021, %vm1022
  %v1024 = vsel %vm1023, %v1015, %v1020
  %v1025 = vrsqrt.pop %v972
  %v1026 = vmul.f32 %v1025, %v972
  %v1027 = vmul.f32 %v1026, %v1025
  %v1028 = vmul.f32 0.5, %v1027
  %v1029 = vsub.f32 1.5, %v1028
  %v1030 = vmul.f32 %v1025, %v1029
  %vm1031 = vweird.f32 %v972
  %vm1032 = vweird.f32 %v1025
  %vm1033 = vmor %vm1031, %vm1032
  %v1034 = vsel %vm1033, %v1025, %v1030
  %v1035 = vrsqrt.pop %v973
  %v1036 = vmul.f32 %v1035, %v973
  %v1037 = vmul.f32 %v1036, %v1035
  %v1038 = vmul.f32 0.5, %v1037
  %v1039 = vsub.f32 1.5, %v1038
  %v1040 = vmul.f32 %v1035, %v1039
  %vm1041 = vweird.f32 %v973
  %vm1042 = vweird.f32 %v1035
  %vm1043 = vmor %vm1041, %vm1042
  %v1044 = vsel %vm1043, %v1035, %v1040
  %v1045 = vrsqrt.pop %v974
  %v1046 = vmul.f32 %v1045, %v974
  %v1047 = vmul.f32 %v1046, %v1045
  %v1048 = vmul.f32 0.5, %v1047
  %v1049 = vsub.f32 1.5, %v1048
  %v1050 = vmul.f32 %v1045, %v1049
  %vm1051 = vweird.f32 %v974
  %vm1052 = vweird.f32 %v1045
  %vm1053 = vmor %vm1051, %vm1052
  %v1054 = vsel %vm1053, %v1045, %v1050
  %v1055 = vmul.f32 %v919, %v984
  %v1056 = vmul.f32 %v920, %v994
  %v1057 = vmul.f32 %v921, %v1004
  %v1058 = vmul.f32 %v922, %v1014
  %v1059 = vmul.f32 %v923, %v1024
  %v1060 = vmul.f32 %v924, %v1034
  %v1061 = vmul.f32 %v925, %v1044
  %v1062 = vmul.f32 %v926, %v1054
  %v1064 = vperm.slane %v878, 0
  %v1066 = vmul.f32 %v1055, %v1064
  %v1067 = vmul.f32 %v1056, %v1064
  %v1068 = vmul.f32 %v1057, %v1064
  %v1069 = vmul.f32 %v1058, %v1064
  %v1070 = vmul.f32 %v1059, %v1064
  %v1071 = vmul.f32 %v1060, %v1064
  %v1072 = vmul.f32 %v1061, %v1064
  %v1073 = vmul.f32 %v1062, %v1064
  %v1075 = vperm.slane %v879, 0
  %v1077 = vadd.f32 %v1066, %v1075
  %v1078 = vadd.f32 %v1067, %v1075
  %v1079 = vadd.f32 %v1068, %v1075
  %v1080 = vadd.f32 %v1069, %v1075
  %v1081 = vadd.f32 %v1070, %v1075
  %v1082 = vadd.f32 %v1071, %v1075
  %v1083 = vadd.f32 %v1072, %v1075
  %v1084 = vadd.f32 %v1073, %v1075
  %v1085 = vld [vmem:[%s16] sm:$0xff]
  %v1086 = vld [vmem:[%s16 + $0x8] sm:$0xff]
  %v1087 = vld [vmem:[%s16 + $0x10] sm:$0xff]
  %v1088 = vld [vmem:[%s16 + $0x18] sm:$0xff]
  %v1089 = vld [vmem:[%s17] sm:$0x1]
  %v1091 = vperm.slane %v1089, 0
  %v1094 = vsel %vm286, %v1077, 0
  %v1097 = vsel %vm286, %v1078, 0
  %v1100 = vsel %vm286, %v1079, 0
  %v1103 = vsel %vm286, %v1080, 0
  %v1106 = vsel %vm286, %v1081, 0
  %v1109 = vsel %vm286, %v1082, 0
  %v1112 = vsel %vm286, %v1083, 0
  %v1115 = vsel %vm286, %v1084, 0
  %1117 = vmatpush.msra.mxu0 0.0
  %1118 = vmatpush.msra.mxu0 0.0
  %1119 = vmatpush.msra.mxu0 0.0
  %1120 = vmatpush.msra.mxu0 0.0
  %1121 = vmatpush.msra.mxu0 0.0
  %1122 = vmatpush.msra.mxu0 0.0
  %1123 = vmatpush.msra.mxu0 0.0
  %1124 = vmatpush.msra.mxu0 0.0
  %1125 = vmatpush.msra.mxu0 0.0
  %1126 = vmatpush.msra.mxu0 0.0
  %1127 = vmatpush.msra.mxu0 0.0
  %1128 = vmatpush.msra.mxu0 0.0
  %1129 = vmatpush.msra.mxu0 %v1088
  %1130 = vmatpush.msra.mxu0 %v1087
  %1131 = vmatpush.msra.mxu0 %v1086
  %1132 = vmatpush.msra.mxu0 %v1085
  %1133 = vmatmul.f32.gmra.mxu0 %v1094
  %v1134 = vpop.f32.mrf.mxu0
  %v1135 = vadd.f32 %v1091, %v1134
  %1136 = vmatmul.f32.gmra.mxu0 %v1097
  %v1137 = vpop.f32.mrf.mxu0
  %v1138 = vadd.f32 %v1091, %v1137
  %1139 = vmatmul.f32.gmra.mxu0 %v1100
  %v1140 = vpop.f32.mrf.mxu0
  %v1141 = vadd.f32 %v1091, %v1140
  %1142 = vmatmul.f32.gmra.mxu0 %v1103
  %v1143 = vpop.f32.mrf.mxu0
  %v1144 = vadd.f32 %v1091, %v1143
  %1145 = vmatmul.f32.gmra.mxu0 %v1106
  %v1146 = vpop.f32.mrf.mxu0
  %v1147 = vadd.f32 %v1091, %v1146
  %1148 = vmatmul.f32.gmra.mxu0 %v1109
  %v1149 = vpop.f32.mrf.mxu0
  %v1150 = vadd.f32 %v1091, %v1149
  %1151 = vmatmul.f32.gmra.mxu0 %v1112
  %v1152 = vpop.f32.mrf.mxu0
  %v1153 = vadd.f32 %v1091, %v1152
  %1154 = vmatmul.f32.gmra.mxu0 %v1115
  %v1155 = vpop.f32.mrf.mxu0
  %v1156 = vadd.f32 %v1091, %v1155
  %1157 = vdwg.mxu0
  %v1158 = vmax.f32 %v1135, 0.0
  %v1159 = vmax.f32 %v1138, 0.0
  %v1160 = vmax.f32 %v1141, 0.0
  %v1161 = vmax.f32 %v1144, 0.0
  %v1162 = vmax.f32 %v1147, 0.0
  %v1163 = vmax.f32 %v1150, 0.0
  %v1164 = vmax.f32 %v1153, 0.0
  %v1165 = vmax.f32 %v1156, 0.0
  %v1166 = vld [vmem:[%s18] sm:$0xff]
  %v1167 = vld [vmem:[%s18 + $0x8] sm:$0xff]
  %v1168 = vld [vmem:[%s18 + $0x10] sm:$0xff]
  %v1169 = vld [vmem:[%s18 + $0x18] sm:$0xff]
  %v1170 = vld [vmem:[%s18 + $0x20] sm:$0xff]
  %v1171 = vld [vmem:[%s18 + $0x28] sm:$0xff]
  %v1172 = vld [vmem:[%s18 + $0x30] sm:$0xff]
  %v1173 = vld [vmem:[%s18 + $0x38] sm:$0xff]
  %v1174 = vld [vmem:[%s18 + $0x40] sm:$0xff]
  %v1175 = vld [vmem:[%s18 + $0x48] sm:$0xff]
  %v1176 = vld [vmem:[%s18 + $0x50] sm:$0xff]
  %v1177 = vld [vmem:[%s18 + $0x58] sm:$0xff]
  %v1178 = vld [vmem:[%s18 + $0x60] sm:$0xff]
  %v1179 = vld [vmem:[%s18 + $0x68] sm:$0xff]
  %v1180 = vld [vmem:[%s18 + $0x70] sm:$0xff]
  %v1181 = vld [vmem:[%s18 + $0x78] sm:$0xff]
  %v1182 = vld [vmem:[%s19] sm:$0x1]
  %v1184 = vperm.slane %v1182, 0
  %1186 = vmatpush.msra.mxu0 %v1181
  %1187 = vmatpush.msra.mxu0 %v1180
  %1188 = vmatpush.msra.mxu0 %v1179
  %1189 = vmatpush.msra.mxu0 %v1178
  %1190 = vmatpush.msra.mxu0 %v1177
  %1191 = vmatpush.msra.mxu0 %v1176
  %1192 = vmatpush.msra.mxu0 %v1175
  %1193 = vmatpush.msra.mxu0 %v1174
  %1194 = vmatpush.msra.mxu0 %v1173
  %1195 = vmatpush.msra.mxu0 %v1172
  %1196 = vmatpush.msra.mxu0 %v1171
  %1197 = vmatpush.msra.mxu0 %v1170
  %1198 = vmatpush.msra.mxu0 %v1169
  %1199 = vmatpush.msra.mxu0 %v1168
  %1200 = vmatpush.msra.mxu0 %v1167
  %1201 = vmatpush.msra.mxu0 %v1166
  %1202 = vmatmul.f32.gmra.mxu0 %v1158
  %v1203 = vpop.f32.mrf.mxu0
  %v1204 = vadd.f32 %v1184, %v1203
  %1205 = vmatmul.f32.gmra.mxu0 %v1159
  %v1206 = vpop.f32.mrf.mxu0
  %v1207 = vadd.f32 %v1184, %v1206
  %1208 = vmatmul.f32.gmra.mxu0 %v1160
  %v1209 = vpop.f32.mrf.mxu0
  %v1210 = vadd.f32 %v1184, %v1209
  %1211 = vmatmul.f32.gmra.mxu0 %v1161
  %v1212 = vpop.f32.mrf.mxu0
  %v1213 = vadd.f32 %v1184, %v1212
  %1214 = vmatmul.f32.gmra.mxu0 %v1162
  %v1215 = vpop.f32.mrf.mxu0
  %v1216 = vadd.f32 %v1184, %v1215
  %1217 = vmatmul.f32.gmra.mxu0 %v1163
  %v1218 = vpop.f32.mrf.mxu0
  %v1219 = vadd.f32 %v1184, %v1218
  %1220 = vmatmul.f32.gmra.mxu0 %v1164
  %v1221 = vpop.f32.mrf.mxu0
  %v1222 = vadd.f32 %v1184, %v1221
  %1223 = vmatmul.f32.gmra.mxu0 %v1165
  %v1224 = vpop.f32.mrf.mxu0
  %v1225 = vadd.f32 %v1184, %v1224
  %1226 = vdwg.mxu0
  %v1227 = vadd.f32 %v1077, %v1204
  %v1228 = vadd.f32 %v1078, %v1207
  %v1229 = vadd.f32 %v1079, %v1210
  %v1230 = vadd.f32 %v1080, %v1213
  %v1231 = vadd.f32 %v1081, %v1216
  %v1232 = vadd.f32 %v1082, %v1219
  %v1233 = vadd.f32 %v1083, %v1222
  %v1234 = vadd.f32 %v1084, %v1225
  %v1235 = vld [vmem:[%s20] sm:$0x1]
  %v1236 = vld [vmem:[%s21] sm:$0x1]
  %v1237 = vsel %vm286, %v1227, 0.0
  %1238 = vadd.xlane.f32.xlu0 %v1237
  %v1239 = vpop.xlane.xlu0 %1238
  %v1240 = vsel %vm286, %v1228, 0.0
  %1241 = vadd.xlane.f32.xlu0 %v1240
  %v1242 = vpop.xlane.xlu0 %1241
  %v1243 = vsel %vm286, %v1229, 0.0
  %1244 = vadd.xlane.f32.xlu0 %v1243
  %v1245 = vpop.xlane.xlu0 %1244
  %v1246 = vsel %vm286, %v1230, 0.0
  %1247 = vadd.xlane.f32.xlu0 %v1246
  %v1248 = vpop.xlane.xlu0 %1247
  %v1249 = vsel %vm286, %v1231, 0.0
  %1250 = vadd.xlane.f32.xlu0 %v1249
  %v1251 = vpop.xlane.xlu0 %1250
  %v1252 = vsel %vm286, %v1232, 0.0
  %1253 = vadd.xlane.f32.xlu0 %v1252
  %v1254 = vpop.xlane.xlu0 %1253
  %v1255 = vsel %vm286, %v1233, 0.0
  %1256 = vadd.xlane.f32.xlu0 %v1255
  %v1257 = vpop.xlane.xlu0 %1256
  %v1258 = vsel %vm286, %v1234, 0.0
  %1259 = vadd.xlane.f32.xlu0 %v1258
  %v1260 = vpop.xlane.xlu0 %1259
  %v1261 = vmul.f32 %v1239, %v910
  %v1262 = vmul.f32 %v1242, %v910
  %v1263 = vmul.f32 %v1245, %v910
  %v1264 = vmul.f32 %v1248, %v910
  %v1265 = vmul.f32 %v1251, %v910
  %v1266 = vmul.f32 %v1254, %v910
  %v1267 = vmul.f32 %v1257, %v910
  %v1268 = vmul.f32 %v1260, %v910
  %v1269 = vsub.f32 %v1227, %v1261
  %v1270 = vsub.f32 %v1228, %v1262
  %v1271 = vsub.f32 %v1229, %v1263
  %v1272 = vsub.f32 %v1230, %v1264
  %v1273 = vsub.f32 %v1231, %v1265
  %v1274 = vsub.f32 %v1232, %v1266
  %v1275 = vsub.f32 %v1233, %v1267
  %v1276 = vsub.f32 %v1234, %v1268
  %v1277 = vmul.f32 %v1269, %v1269
  %v1278 = vmul.f32 %v1270, %v1270
  %v1279 = vmul.f32 %v1271, %v1271
  %v1280 = vmul.f32 %v1272, %v1272
  %v1281 = vmul.f32 %v1273, %v1273
  %v1282 = vmul.f32 %v1274, %v1274
  %v1283 = vmul.f32 %v1275, %v1275
  %v1284 = vmul.f32 %v1276, %v1276
  %v1285 = vsel %vm286, %v1277, 0.0
  %1286 = vadd.xlane.f32.xlu0 %v1285
  %v1287 = vpop.xlane.xlu0 %1286
  %v1288 = vsel %vm286, %v1278, 0.0
  %1289 = vadd.xlane.f32.xlu0 %v1288
  %v1290 = vpop.xlane.xlu0 %1289
  %v1291 = vsel %vm286, %v1279, 0.0
  %1292 = vadd.xlane.f32.xlu0 %v1291
  %v1293 = vpop.xlane.xlu0 %1292
  %v1294 = vsel %vm286, %v1280, 0.0
  %1295 = vadd.xlane.f32.xlu0 %v1294
  %v1296 = vpop.xlane.xlu0 %1295
  %v1297 = vsel %vm286, %v1281, 0.0
  %1298 = vadd.xlane.f32.xlu0 %v1297
  %v1299 = vpop.xlane.xlu0 %1298
  %v1300 = vsel %vm286, %v1282, 0.0
  %1301 = vadd.xlane.f32.xlu0 %v1300
  %v1302 = vpop.xlane.xlu0 %1301
  %v1303 = vsel %vm286, %v1283, 0.0
  %1304 = vadd.xlane.f32.xlu0 %v1303
  %v1305 = vpop.xlane.xlu0 %1304
  %v1306 = vsel %vm286, %v1284, 0.0
  %1307 = vadd.xlane.f32.xlu0 %v1306
  %v1308 = vpop.xlane.xlu0 %1307
  %v1309 = vmul.f32 %v1287, %v910
  %v1310 = vmul.f32 %v1290, %v910
  %v1311 = vmul.f32 %v1293, %v910
  %v1312 = vmul.f32 %v1296, %v910
  %v1313 = vmul.f32 %v1299, %v910
  %v1314 = vmul.f32 %v1302, %v910
  %v1315 = vmul.f32 %v1305, %v910
  %v1316 = vmul.f32 %v1308, %v910
  %v1317 = vadd.f32 %v1309, 1e-05
  %v1318 = vadd.f32 %v1310, 1e-05
  %v1319 = vadd.f32 %v1311, 1e-05
  %v1320 = vadd.f32 %v1312, 1e-05
  %v1321 = vadd.f32 %v1313, 1e-05
  %v1322 = vadd.f32 %v1314, 1e-05
  %v1323 = vadd.f32 %v1315, 1e-05
  %v1324 = vadd.f32 %v1316, 1e-05
  %v1325 = vrsqrt.pop %v1317
  %v1326 = vmul.f32 %v1325, %v1317
  %v1327 = vmul.f32 %v1326, %v1325
  %v1328 = vmul.f32 0.5, %v1327
  %v1329 = vsub.f32 1.5, %v1328
  %v1330 = vmul.f32 %v1325, %v1329
  %vm1331 = vweird.f32 %v1317
  %vm1332 = vweird.f32 %v1325
  %vm1333 = vmor %vm1331, %vm1332
  %v1334 = vsel %vm1333, %v1325, %v1330
  %v1335 = vrsqrt.pop %v1318
  %v1336 = vmul.f32 %v1335, %v1318
  %v1337 = vmul.f32 %v1336, %v1335
  %v1338 = vmul.f32 0.5, %v1337
  %v1339 = vsub.f32 1.5, %v1338
  %v1340 = vmul.f32 %v1335, %v1339
  %vm1341 = vweird.f32 %v1318
  %vm1342 = vweird.f32 %v1335
  %vm1343 = vmor %vm1341, %vm1342
  %v1344 = vsel %vm1343, %v1335, %v1340
  %v1345 = vrsqrt.pop %v1319
  %v1346 = vmul.f32 %v1345, %v1319
  %v1347 = vmul.f32 %v1346, %v1345
  %v1348 = vmul.f32 0.5, %v1347
  %v1349 = vsub.f32 1.5, %v1348
  %v1350 = vmul.f32 %v1345, %v1349
  %vm1351 = vweird.f32 %v1319
  %vm1352 = vweird.f32 %v1345
  %vm1353 = vmor %vm1351, %vm1352
  %v1354 = vsel %vm1353, %v1345, %v1350
  %v1355 = vrsqrt.pop %v1320
  %v1356 = vmul.f32 %v1355, %v1320
  %v1357 = vmul.f32 %v1356, %v1355
  %v1358 = vmul.f32 0.5, %v1357
  %v1359 = vsub.f32 1.5, %v1358
  %v1360 = vmul.f32 %v1355, %v1359
  %vm1361 = vweird.f32 %v1320
  %vm1362 = vweird.f32 %v1355
  %vm1363 = vmor %vm1361, %vm1362
  %v1364 = vsel %vm1363, %v1355, %v1360
  %v1365 = vrsqrt.pop %v1321
  %v1366 = vmul.f32 %v1365, %v1321
  %v1367 = vmul.f32 %v1366, %v1365
  %v1368 = vmul.f32 0.5, %v1367
  %v1369 = vsub.f32 1.5, %v1368
  %v1370 = vmul.f32 %v1365, %v1369
  %vm1371 = vweird.f32 %v1321
  %vm1372 = vweird.f32 %v1365
  %vm1373 = vmor %vm1371, %vm1372
  %v1374 = vsel %vm1373, %v1365, %v1370
  %v1375 = vrsqrt.pop %v1322
  %v1376 = vmul.f32 %v1375, %v1322
  %v1377 = vmul.f32 %v1376, %v1375
  %v1378 = vmul.f32 0.5, %v1377
  %v1379 = vsub.f32 1.5, %v1378
  %v1380 = vmul.f32 %v1375, %v1379
  %vm1381 = vweird.f32 %v1322
  %vm1382 = vweird.f32 %v1375
  %vm1383 = vmor %vm1381, %vm1382
  %v1384 = vsel %vm1383, %v1375, %v1380
  %v1385 = vrsqrt.pop %v1323
  %v1386 = vmul.f32 %v1385, %v1323
  %v1387 = vmul.f32 %v1386, %v1385
  %v1388 = vmul.f32 0.5, %v1387
  %v1389 = vsub.f32 1.5, %v1388
  %v1390 = vmul.f32 %v1385, %v1389
  %vm1391 = vweird.f32 %v1323
  %vm1392 = vweird.f32 %v1385
  %vm1393 = vmor %vm1391, %vm1392
  %v1394 = vsel %vm1393, %v1385, %v1390
  %v1395 = vrsqrt.pop %v1324
  %v1396 = vmul.f32 %v1395, %v1324
  %v1397 = vmul.f32 %v1396, %v1395
  %v1398 = vmul.f32 0.5, %v1397
  %v1399 = vsub.f32 1.5, %v1398
  %v1400 = vmul.f32 %v1395, %v1399
  %vm1401 = vweird.f32 %v1324
  %vm1402 = vweird.f32 %v1395
  %vm1403 = vmor %vm1401, %vm1402
  %v1404 = vsel %vm1403, %v1395, %v1400
  %v1405 = vmul.f32 %v1269, %v1334
  %v1406 = vmul.f32 %v1270, %v1344
  %v1407 = vmul.f32 %v1271, %v1354
  %v1408 = vmul.f32 %v1272, %v1364
  %v1409 = vmul.f32 %v1273, %v1374
  %v1410 = vmul.f32 %v1274, %v1384
  %v1411 = vmul.f32 %v1275, %v1394
  %v1412 = vmul.f32 %v1276, %v1404
  %v1414 = vperm.slane %v1235, 0
  %v1416 = vmul.f32 %v1405, %v1414
  %v1417 = vmul.f32 %v1406, %v1414
  %v1418 = vmul.f32 %v1407, %v1414
  %v1419 = vmul.f32 %v1408, %v1414
  %v1420 = vmul.f32 %v1409, %v1414
  %v1421 = vmul.f32 %v1410, %v1414
  %v1422 = vmul.f32 %v1411, %v1414
  %v1423 = vmul.f32 %v1412, %v1414
  %v1425 = vperm.slane %v1236, 0
  %v1427 = vadd.f32 %v1416, %v1425
  %v1428 = vadd.f32 %v1417, %v1425
  %v1429 = vadd.f32 %v1418, %v1425
  %v1430 = vadd.f32 %v1419, %v1425
  %v1431 = vadd.f32 %v1420, %v1425
  %v1432 = vadd.f32 %v1421, %v1425
  %v1433 = vadd.f32 %v1422, %v1425
  %v1434 = vadd.f32 %v1423, %v1425
  %s1435 = scalar_lea.vmem %s6, 32
  %v1436 = vld [vmem:[%s1435] sm:$0xff]
  %v1437 = vld [vmem:[%s1435 + $0x8] sm:$0xff]
  %v1438 = vld [vmem:[%s1435 + $0x10] sm:$0xff]
  %v1439 = vld [vmem:[%s1435 + $0x18] sm:$0xff]
  %s1440 = scalar_lea.vmem %s7, 1
  %v1441 = vld [vmem:[%s1440] sm:$0x1]
  %v1443 = vperm.slane %v1441, 0
  %v1446 = vsel %vm286, %v1427, 0
  %v1449 = vsel %vm286, %v1428, 0
  %v1452 = vsel %vm286, %v1429, 0
  %v1455 = vsel %vm286, %v1430, 0
  %v1458 = vsel %vm286, %v1431, 0
  %v1461 = vsel %vm286, %v1432, 0
  %v1464 = vsel %vm286, %v1433, 0
  %v1467 = vsel %vm286, %v1434, 0
  %1469 = vmatpush.msra.mxu0 0.0
  %1470 = vmatpush.msra.mxu0 0.0
  %1471 = vmatpush.msra.mxu0 0.0
  %1472 = vmatpush.msra.mxu0 0.0
  %1473 = vmatpush.msra.mxu0 0.0
  %1474 = vmatpush.msra.mxu0 0.0
  %1475 = vmatpush.msra.mxu0 0.0
  %1476 = vmatpush.msra.mxu0 0.0
  %1477 = vmatpush.msra.mxu0 0.0
  %1478 = vmatpush.msra.mxu0 0.0
  %1479 = vmatpush.msra.mxu0 0.0
  %1480 = vmatpush.msra.mxu0 0.0
  %1481 = vmatpush.msra.mxu0 %v1439
  %1482 = vmatpush.msra.mxu0 %v1438
  %1483 = vmatpush.msra.mxu0 %v1437
  %1484 = vmatpush.msra.mxu0 %v1436
  %1485 = vmatmul.f32.gmra.mxu0 %v1446
  %v1486 = vpop.f32.mrf.mxu0
  %v1487 = vadd.f32 %v1443, %v1486
  %1488 = vmatmul.f32.gmra.mxu0 %v1449
  %v1489 = vpop.f32.mrf.mxu0
  %v1490 = vadd.f32 %v1443, %v1489
  %1491 = vmatmul.f32.gmra.mxu0 %v1452
  %v1492 = vpop.f32.mrf.mxu0
  %v1493 = vadd.f32 %v1443, %v1492
  %1494 = vmatmul.f32.gmra.mxu0 %v1455
  %v1495 = vpop.f32.mrf.mxu0
  %v1496 = vadd.f32 %v1443, %v1495
  %1497 = vmatmul.f32.gmra.mxu0 %v1458
  %v1498 = vpop.f32.mrf.mxu0
  %v1499 = vadd.f32 %v1443, %v1498
  %1500 = vmatmul.f32.gmra.mxu0 %v1461
  %v1501 = vpop.f32.mrf.mxu0
  %v1502 = vadd.f32 %v1443, %v1501
  %1503 = vmatmul.f32.gmra.mxu0 %v1464
  %v1504 = vpop.f32.mrf.mxu0
  %v1505 = vadd.f32 %v1443, %v1504
  %1506 = vmatmul.f32.gmra.mxu0 %v1467
  %v1507 = vpop.f32.mrf.mxu0
  %v1508 = vadd.f32 %v1443, %v1507
  %1509 = vdwg.mxu0
  %s1510 = scalar_lea.vmem %s8, 32
  %v1511 = vld [vmem:[%s1510] sm:$0xff]
  %v1512 = vld [vmem:[%s1510 + $0x8] sm:$0xff]
  %v1513 = vld [vmem:[%s1510 + $0x10] sm:$0xff]
  %v1514 = vld [vmem:[%s1510 + $0x18] sm:$0xff]
  %s1515 = scalar_lea.vmem %s9, 1
  %v1516 = vld [vmem:[%s1515] sm:$0x1]
  %v1518 = vperm.slane %v1516, 0
  %1520 = vmatpush.msra.mxu0 0.0
  %1521 = vmatpush.msra.mxu0 0.0
  %1522 = vmatpush.msra.mxu0 0.0
  %1523 = vmatpush.msra.mxu0 0.0
  %1524 = vmatpush.msra.mxu0 0.0
  %1525 = vmatpush.msra.mxu0 0.0
  %1526 = vmatpush.msra.mxu0 0.0
  %1527 = vmatpush.msra.mxu0 0.0
  %1528 = vmatpush.msra.mxu0 0.0
  %1529 = vmatpush.msra.mxu0 0.0
  %1530 = vmatpush.msra.mxu0 0.0
  %1531 = vmatpush.msra.mxu0 0.0
  %1532 = vmatpush.msra.mxu0 %v1514
  %1533 = vmatpush.msra.mxu0 %v1513
  %1534 = vmatpush.msra.mxu0 %v1512
  %1535 = vmatpush.msra.mxu0 %v1511
  %1536 = vmatmul.f32.gmra.mxu0 %v1446
  %v1537 = vpop.f32.mrf.mxu0
  %v1538 = vadd.f32 %v1518, %v1537
  %1539 = vmatmul.f32.gmra.mxu0 %v1449
  %v1540 = vpop.f32.mrf.mxu0
  %v1541 = vadd.f32 %v1518, %v1540
  %1542 = vmatmul.f32.gmra.mxu0 %v1452
  %v1543 = vpop.f32.mrf.mxu0
  %v1544 = vadd.f32 %v1518, %v1543
  %1545 = vmatmul.f32.gmra.mxu0 %v1455
  %v1546 = vpop.f32.mrf.mxu0
  %v1547 = vadd.f32 %v1518, %v1546
  %1548 = vmatmul.f32.gmra.mxu0 %v1458
  %v1549 = vpop.f32.mrf.mxu0
  %v1550 = vadd.f32 %v1518, %v1549
  %1551 = vmatmul.f32.gmra.mxu0 %v1461
  %v1552 = vpop.f32.mrf.mxu0
  %v1553 = vadd.f32 %v1518, %v1552
  %1554 = vmatmul.f32.gmra.mxu0 %v1464
  %v1555 = vpop.f32.mrf.mxu0
  %v1556 = vadd.f32 %v1518, %v1555
  %1557 = vmatmul.f32.gmra.mxu0 %v1467
  %v1558 = vpop.f32.mrf.mxu0
  %v1559 = vadd.f32 %v1518, %v1558
  %1560 = vdwg.mxu0
  %s1561 = scalar_lea.vmem %s10, 32
  %v1562 = vld [vmem:[%s1561] sm:$0xff]
  %v1563 = vld [vmem:[%s1561 + $0x8] sm:$0xff]
  %v1564 = vld [vmem:[%s1561 + $0x10] sm:$0xff]
  %v1565 = vld [vmem:[%s1561 + $0x18] sm:$0xff]
  %s1566 = scalar_lea.vmem %s11, 1
  %v1567 = vld [vmem:[%s1566] sm:$0x1]
  %v1569 = vperm.slane %v1567, 0
  %1571 = vmatpush.msra.mxu0 0.0
  %1572 = vmatpush.msra.mxu0 0.0
  %1573 = vmatpush.msra.mxu0 0.0
  %1574 = vmatpush.msra.mxu0 0.0
  %1575 = vmatpush.msra.mxu0 0.0
  %1576 = vmatpush.msra.mxu0 0.0
  %1577 = vmatpush.msra.mxu0 0.0
  %1578 = vmatpush.msra.mxu0 0.0
  %1579 = vmatpush.msra.mxu0 0.0
  %1580 = vmatpush.msra.mxu0 0.0
  %1581 = vmatpush.msra.mxu0 0.0
  %1582 = vmatpush.msra.mxu0 0.0
  %1583 = vmatpush.msra.mxu0 %v1565
  %1584 = vmatpush.msra.mxu0 %v1564
  %1585 = vmatpush.msra.mxu0 %v1563
  %1586 = vmatpush.msra.mxu0 %v1562
  %1587 = vmatmul.f32.gmra.mxu0 %v1446
  %v1588 = vpop.f32.mrf.mxu0
  %v1589 = vadd.f32 %v1569, %v1588
  %1590 = vmatmul.f32.gmra.mxu0 %v1449
  %v1591 = vpop.f32.mrf.mxu0
  %v1592 = vadd.f32 %v1569, %v1591
  %1593 = vmatmul.f32.gmra.mxu0 %v1452
  %v1594 = vpop.f32.mrf.mxu0
  %v1595 = vadd.f32 %v1569, %v1594
  %1596 = vmatmul.f32.gmra.mxu0 %v1455
  %v1597 = vpop.f32.mrf.mxu0
  %v1598 = vadd.f32 %v1569, %v1597
  %1599 = vmatmul.f32.gmra.mxu0 %v1458
  %v1600 = vpop.f32.mrf.mxu0
  %v1601 = vadd.f32 %v1569, %v1600
  %1602 = vmatmul.f32.gmra.mxu0 %v1461
  %v1603 = vpop.f32.mrf.mxu0
  %v1604 = vadd.f32 %v1569, %v1603
  %1605 = vmatmul.f32.gmra.mxu0 %v1464
  %v1606 = vpop.f32.mrf.mxu0
  %v1607 = vadd.f32 %v1569, %v1606
  %1608 = vmatmul.f32.gmra.mxu0 %v1467
  %v1609 = vpop.f32.mrf.mxu0
  %v1610 = vadd.f32 %v1569, %v1609
  %1611 = vdwg.mxu0
  %v1613 = vsel %vm286, %v1487, 0
  %v1616 = vsel %vm286, %v1490, 0
  %v1619 = vsel %vm286, %v1493, 0
  %v1622 = vsel %vm286, %v1496, 0
  %v1625 = vsel %vm286, %v1499, 0
  %v1628 = vsel %vm286, %v1502, 0
  %v1631 = vsel %vm286, %v1505, 0
  %v1634 = vsel %vm286, %v1508, 0
  %v1637 = vsel %vm286, %v1538, 0
  %v1640 = vsel %vm286, %v1541, 0
  %v1643 = vsel %vm286, %v1544, 0
  %v1646 = vsel %vm286, %v1547, 0
  %v1649 = vsel %vm286, %v1550, 0
  %v1652 = vsel %vm286, %v1553, 0
  %v1655 = vsel %vm286, %v1556, 0
  %v1658 = vsel %vm286, %v1559, 0
  %1660 = vmatpush.xpose.msra.mxu0 0.0
  %1661 = vmatpush.xpose.msra.mxu0 0.0
  %1662 = vmatpush.xpose.msra.mxu0 0.0
  %1663 = vmatpush.xpose.msra.mxu0 0.0
  %1664 = vmatpush.xpose.msra.mxu0 0.0
  %1665 = vmatpush.xpose.msra.mxu0 0.0
  %1666 = vmatpush.xpose.msra.mxu0 0.0
  %1667 = vmatpush.xpose.msra.mxu0 0.0
  %1668 = vmatpush.xpose.msra.mxu0 %v1658
  %1669 = vmatpush.xpose.msra.mxu0 %v1655
  %1670 = vmatpush.xpose.msra.mxu0 %v1652
  %1671 = vmatpush.xpose.msra.mxu0 %v1649
  %1672 = vmatpush.xpose.msra.mxu0 %v1646
  %1673 = vmatpush.xpose.msra.mxu0 %v1643
  %1674 = vmatpush.xpose.msra.mxu0 %v1640
  %1675 = vmatpush.xpose.msra.mxu0 %v1637
  %1676 = vmatmul.f32.gmra.mxu0 %v1613
  %v1677 = vpop.f32.mrf.mxu0
  %v1678 = vadd.f32 %v270, %v1677
  %1679 = vmatmul.f32.gmra.mxu0 %v1616
  %v1680 = vpop.f32.mrf.mxu0
  %v1681 = vadd.f32 %v271, %v1680
  %1682 = vmatmul.f32.gmra.mxu0 %v1619
  %v1683 = vpop.f32.mrf.mxu0
  %v1684 = vadd.f32 %v272, %v1683
  %1685 = vmatmul.f32.gmra.mxu0 %v1622
  %v1686 = vpop.f32.mrf.mxu0
  %v1687 = vadd.f32 %v273, %v1686
  %1688 = vmatmul.f32.gmra.mxu0 %v1625
  %v1689 = vpop.f32.mrf.mxu0
  %v1690 = vadd.f32 %v274, %v1689
  %1691 = vmatmul.f32.gmra.mxu0 %v1628
  %v1692 = vpop.f32.mrf.mxu0
  %v1693 = vadd.f32 %v275, %v1692
  %1694 = vmatmul.f32.gmra.mxu0 %v1631
  %v1695 = vpop.f32.mrf.mxu0
  %v1696 = vadd.f32 %v276, %v1695
  %1697 = vmatmul.f32.gmra.mxu0 %v1634
  %v1698 = vpop.f32.mrf.mxu0
  %v1699 = vadd.f32 %v277, %v1698
  %1700 = vdwg.mxu0
  %v1701 = vsel %vm539, %v1678, -inf
  %1702 = vmax.xlane.f32.xlu0 %v1701
  %v1703 = vpop.xlane.xlu0 %1702
  %v1704 = vsel %vm539, %v1681, -inf
  %1705 = vmax.xlane.f32.xlu0 %v1704
  %v1706 = vpop.xlane.xlu0 %1705
  %v1707 = vsel %vm539, %v1684, -inf
  %1708 = vmax.xlane.f32.xlu0 %v1707
  %v1709 = vpop.xlane.xlu0 %1708
  %v1710 = vsel %vm539, %v1687, -inf
  %1711 = vmax.xlane.f32.xlu0 %v1710
  %v1712 = vpop.xlane.xlu0 %1711
  %v1713 = vsel %vm539, %v1690, -inf
  %1714 = vmax.xlane.f32.xlu0 %v1713
  %v1715 = vpop.xlane.xlu0 %1714
  %v1716 = vsel %vm539, %v1693, -inf
  %1717 = vmax.xlane.f32.xlu0 %v1716
  %v1718 = vpop.xlane.xlu0 %1717
  %v1719 = vsel %vm539, %v1696, -inf
  %1720 = vmax.xlane.f32.xlu0 %v1719
  %v1721 = vpop.xlane.xlu0 %1720
  %v1722 = vsel %vm539, %v1699, -inf
  %1723 = vmax.xlane.f32.xlu0 %v1722
  %v1724 = vpop.xlane.xlu0 %1723
  %v1725 = vsub.f32 %v1678, %v1703
  %v1726 = vsub.f32 %v1681, %v1706
  %v1727 = vsub.f32 %v1684, %v1709
  %v1728 = vsub.f32 %v1687, %v1712
  %v1729 = vsub.f32 %v1690, %v1715
  %v1730 = vsub.f32 %v1693, %v1718
  %v1731 = vsub.f32 %v1696, %v1721
  %v1732 = vsub.f32 %v1699, %v1724
  %v1733 = vmul.f32 %v1725, 1.442695
  %v1734 = vpow.pop %v1733
  %v1735 = vmul.f32 %v1726, 1.442695
  %v1736 = vpow.pop %v1735
  %v1737 = vmul.f32 %v1727, 1.442695
  %v1738 = vpow.pop %v1737
  %v1739 = vmul.f32 %v1728, 1.442695
  %v1740 = vpow.pop %v1739
  %v1741 = vmul.f32 %v1729, 1.442695
  %v1742 = vpow.pop %v1741
  %v1743 = vmul.f32 %v1730, 1.442695
  %v1744 = vpow.pop %v1743
  %v1745 = vmul.f32 %v1731, 1.442695
  %v1746 = vpow.pop %v1745
  %v1747 = vmul.f32 %v1732, 1.442695
  %v1748 = vpow.pop %v1747
  %v1749 = vsel %vm539, %v1734, 0.0
  %1750 = vadd.xlane.f32.xlu0 %v1749
  %v1751 = vpop.xlane.xlu0 %1750
  %v1752 = vsel %vm539, %v1736, 0.0
  %1753 = vadd.xlane.f32.xlu0 %v1752
  %v1754 = vpop.xlane.xlu0 %1753
  %v1755 = vsel %vm539, %v1738, 0.0
  %1756 = vadd.xlane.f32.xlu0 %v1755
  %v1757 = vpop.xlane.xlu0 %1756
  %v1758 = vsel %vm539, %v1740, 0.0
  %1759 = vadd.xlane.f32.xlu0 %v1758
  %v1760 = vpop.xlane.xlu0 %1759
  %v1761 = vsel %vm539, %v1742, 0.0
  %1762 = vadd.xlane.f32.xlu0 %v1761
  %v1763 = vpop.xlane.xlu0 %1762
  %v1764 = vsel %vm539, %v1744, 0.0
  %1765 = vadd.xlane.f32.xlu0 %v1764
  %v1766 = vpop.xlane.xlu0 %1765
  %v1767 = vsel %vm539, %v1746, 0.0
  %1768 = vadd.xlane.f32.xlu0 %v1767
  %v1769 = vpop.xlane.xlu0 %1768
  %v1770 = vsel %vm539, %v1748, 0.0
  %1771 = vadd.xlane.f32.xlu0 %v1770
  %v1772 = vpop.xlane.xlu0 %1771
  %v1773 = vrcp.pop %v1751
  %v1774 = vmul.f32 %v1751, %v1773
  %v1775 = vsub.f32 1.0, %v1774
  %v1776 = vmul.f32 %v1773, %v1775
  %v1777 = vadd.f32 %v1773, %v1776
  %vm1778 = vweird.f32 %v1751
  %vm1779 = vweird.f32 %v1773
  %vm1780 = vmor %vm1778, %vm1779
  %v1781 = vsel %vm1780, %v1773, %v1777
  %v1782 = vand.u32 2147483647, %v1751
  %vm1783 = vcmp.eq.f32.partialorder %v1782, 8.507059e+37
  %v1784 = vand.u32 %v1751, 2147483648
  %v1785 = vor.u32 1.1754944e-38, %v1784
  %v1786 = vsel %vm1783, %v1785, %v1781
  %v1787 = vrcp.pop %v1754
  %v1788 = vmul.f32 %v1754, %v1787
  %v1789 = vsub.f32 1.0, %v1788
  %v1790 = vmul.f32 %v1787, %v1789
  %v1791 = vadd.f32 %v1787, %v1790
  %vm1792 = vweird.f32 %v1754
  %vm1793 = vweird.f32 %v1787
  %vm1794 = vmor %vm1792, %vm1793
  %v1795 = vsel %vm1794, %v1787, %v1791
  %v1796 = vand.u32 2147483647, %v1754
  %vm1797 = vcmp.eq.f32.partialorder %v1796, 8.507059e+37
  %v1798 = vand.u32 %v1754, 2147483648
  %v1799 = vor.u32 1.1754944e-38, %v1798
  %v1800 = vsel %vm1797, %v1799, %v1795
  %v1801 = vrcp.pop %v1757
  %v1802 = vmul.f32 %v1757, %v1801
  %v1803 = vsub.f32 1.0, %v1802
  %v1804 = vmul.f32 %v1801, %v1803
  %v1805 = vadd.f32 %v1801, %v1804
  %vm1806 = vweird.f32 %v1757
  %vm1807 = vweird.f32 %v1801
  %vm1808 = vmor %vm1806, %vm1807
  %v1809 = vsel %vm1808, %v1801, %v1805
  %v1810 = vand.u32 2147483647, %v1757
  %vm1811 = vcmp.eq.f32.partialorder %v1810, 8.507059e+37
  %v1812 = vand.u32 %v1757, 2147483648
  %v1813 = vor.u32 1.1754944e-38, %v1812
  %v1814 = vsel %vm1811, %v1813, %v1809
  %v1815 = vrcp.pop %v1760
  %v1816 = vmul.f32 %v1760, %v1815
  %v1817 = vsub.f32 1.0, %v1816
  %v1818 = vmul.f32 %v1815, %v1817
  %v1819 = vadd.f32 %v1815, %v1818
  %vm1820 = vweird.f32 %v1760
  %vm1821 = vweird.f32 %v1815
  %vm1822 = vmor %vm1820, %vm1821
  %v1823 = vsel %vm1822, %v1815, %v1819
  %v1824 = vand.u32 2147483647, %v1760
  %vm1825 = vcmp.eq.f32.partialorder %v1824, 8.507059e+37
  %v1826 = vand.u32 %v1760, 2147483648
  %v1827 = vor.u32 1.1754944e-38, %v1826
  %v1828 = vsel %vm1825, %v1827, %v1823
  %v1829 = vrcp.pop %v1763
  %v1830 = vmul.f32 %v1763, %v1829
  %v1831 = vsub.f32 1.0, %v1830
  %v1832 = vmul.f32 %v1829, %v1831
  %v1833 = vadd.f32 %v1829, %v1832
  %vm1834 = vweird.f32 %v1763
  %vm1835 = vweird.f32 %v1829
  %vm1836 = vmor %vm1834, %vm1835
  %v1837 = vsel %vm1836, %v1829, %v1833
  %v1838 = vand.u32 2147483647, %v1763
  %vm1839 = vcmp.eq.f32.partialorder %v1838, 8.507059e+37
  %v1840 = vand.u32 %v1763, 2147483648
  %v1841 = vor.u32 1.1754944e-38, %v1840
  %v1842 = vsel %vm1839, %v1841, %v1837
  %v1843 = vrcp.pop %v1766
  %v1844 = vmul.f32 %v1766, %v1843
  %v1845 = vsub.f32 1.0, %v1844
  %v1846 = vmul.f32 %v1843, %v1845
  %v1847 = vadd.f32 %v1843, %v1846
  %vm1848 = vweird.f32 %v1766
  %vm1849 = vweird.f32 %v1843
  %vm1850 = vmor %vm1848, %vm1849
  %v1851 = vsel %vm1850, %v1843, %v1847
  %v1852 = vand.u32 2147483647, %v1766
  %vm1853 = vcmp.eq.f32.partialorder %v1852, 8.507059e+37
  %v1854 = vand.u32 %v1766, 2147483648
  %v1855 = vor.u32 1.1754944e-38, %v1854
  %v1856 = vsel %vm1853, %v1855, %v1851
  %v1857 = vrcp.pop %v1769
  %v1858 = vmul.f32 %v1769, %v1857
  %v1859 = vsub.f32 1.0, %v1858
  %v1860 = vmul.f32 %v1857, %v1859
  %v1861 = vadd.f32 %v1857, %v1860
  %vm1862 = vweird.f32 %v1769
  %vm1863 = vweird.f32 %v1857
  %vm1864 = vmor %vm1862, %vm1863
  %v1865 = vsel %vm1864, %v1857, %v1861
  %v1866 = vand.u32 2147483647, %v1769
  %vm1867 = vcmp.eq.f32.partialorder %v1866, 8.507059e+37
  %v1868 = vand.u32 %v1769, 2147483648
  %v1869 = vor.u32 1.1754944e-38, %v1868
  %v1870 = vsel %vm1867, %v1869, %v1865
  %v1871 = vrcp.pop %v1772
  %v1872 = vmul.f32 %v1772, %v1871
  %v1873 = vsub.f32 1.0, %v1872
  %v1874 = vmul.f32 %v1871, %v1873
  %v1875 = vadd.f32 %v1871, %v1874
  %vm1876 = vweird.f32 %v1772
  %vm1877 = vweird.f32 %v1871
  %vm1878 = vmor %vm1876, %vm1877
  %v1879 = vsel %vm1878, %v1871, %v1875
  %v1880 = vand.u32 2147483647, %v1772
  %vm1881 = vcmp.eq.f32.partialorder %v1880, 8.507059e+37
  %v1882 = vand.u32 %v1772, 2147483648
  %v1883 = vor.u32 1.1754944e-38, %v1882
  %v1884 = vsel %vm1881, %v1883, %v1879
  %v1885 = vmul.f32 %v1734, %v1786
  %v1886 = vmul.f32 %v1736, %v1800
  %v1887 = vmul.f32 %v1738, %v1814
  %v1888 = vmul.f32 %v1740, %v1828
  %v1889 = vmul.f32 %v1742, %v1842
  %v1890 = vmul.f32 %v1744, %v1856
  %v1891 = vmul.f32 %v1746, %v1870
  %v1892 = vmul.f32 %v1748, %v1884
  %v1894 = vsel %vm539, %v1885, 0
  %v1897 = vsel %vm539, %v1886, 0
  %v1900 = vsel %vm539, %v1887, 0
  %v1903 = vsel %vm539, %v1888, 0
  %v1906 = vsel %vm539, %v1889, 0
  %v1909 = vsel %vm539, %v1890, 0
  %v1912 = vsel %vm539, %v1891, 0
  %v1915 = vsel %vm539, %v1892, 0
  %1917 = vmatpush.msra.mxu0 0.0
  %1918 = vmatpush.msra.mxu0 0.0
  %1919 = vmatpush.msra.mxu0 0.0
  %1920 = vmatpush.msra.mxu0 0.0
  %1921 = vmatpush.msra.mxu0 0.0
  %1922 = vmatpush.msra.mxu0 0.0
  %1923 = vmatpush.msra.mxu0 0.0
  %1924 = vmatpush.msra.mxu0 0.0
  %1925 = vmatpush.msra.mxu0 %v1610
  %1926 = vmatpush.msra.mxu0 %v1607
  %1927 = vmatpush.msra.mxu0 %v1604
  %1928 = vmatpush.msra.mxu0 %v1601
  %1929 = vmatpush.msra.mxu0 %v1598
  %1930 = vmatpush.msra.mxu0 %v1595
  %1931 = vmatpush.msra.mxu0 %v1592
  %1932 = vmatpush.msra.mxu0 %v1589
  %1933 = vmatmul.f32.gmra.mxu0 %v1894
  %v1934 = vpop.f32.mrf.mxu0
  %v1935 = vadd.f32 0.0, %v1934
  %1936 = vmatmul.f32.gmra.mxu0 %v1897
  %v1937 = vpop.f32.mrf.mxu0
  %v1938 = vadd.f32 0.0, %v1937
  %1939 = vmatmul.f32.gmra.mxu0 %v1900
  %v1940 = vpop.f32.mrf.mxu0
  %v1941 = vadd.f32 0.0, %v1940
  %1942 = vmatmul.f32.gmra.mxu0 %v1903
  %v1943 = vpop.f32.mrf.mxu0
  %v1944 = vadd.f32 0.0, %v1943
  %1945 = vmatmul.f32.gmra.mxu0 %v1906
  %v1946 = vpop.f32.mrf.mxu0
  %v1947 = vadd.f32 0.0, %v1946
  %1948 = vmatmul.f32.gmra.mxu0 %v1909
  %v1949 = vpop.f32.mrf.mxu0
  %v1950 = vadd.f32 0.0, %v1949
  %1951 = vmatmul.f32.gmra.mxu0 %v1912
  %v1952 = vpop.f32.mrf.mxu0
  %v1953 = vadd.f32 0.0, %v1952
  %1954 = vmatmul.f32.gmra.mxu0 %v1915
  %v1955 = vpop.f32.mrf.mxu0
  %v1956 = vadd.f32 0.0, %v1955
  %1957 = vdwg.mxu0
  %s1958 = scalar_lea.vmem %s12, 32
  %v1959 = vld [vmem:[%s1958] sm:$0xff]
  %v1960 = vld [vmem:[%s1958 + $0x8] sm:$0xff]
  %v1961 = vld [vmem:[%s1958 + $0x10] sm:$0xff]
  %v1962 = vld [vmem:[%s1958 + $0x18] sm:$0xff]
  %s1963 = scalar_lea.vmem %s13, 1
  %v1964 = vld [vmem:[%s1963] sm:$0x1]
  %v1966 = vperm.slane %v1964, 0
  %v1969 = vsel %vm286, %v1935, 0
  %v1972 = vsel %vm286, %v1938, 0
  %v1975 = vsel %vm286, %v1941, 0
  %v1978 = vsel %vm286, %v1944, 0
  %v1981 = vsel %vm286, %v1947, 0
  %v1984 = vsel %vm286, %v1950, 0
  %v1987 = vsel %vm286, %v1953, 0
  %v1990 = vsel %vm286, %v1956, 0
  %1992 = vmatpush.msra.mxu0 0.0
  %1993 = vmatpush.msra.mxu0 0.0
  %1994 = vmatpush.msra.mxu0 0.0
  %1995 = vmatpush.msra.mxu0 0.0
  %1996 = vmatpush.msra.mxu0 0.0
  %1997 = vmatpush.msra.mxu0 0.0
  %1998 = vmatpush.msra.mxu0 0.0
  %1999 = vmatpush.msra.mxu0 0.0
  %2000 = vmatpush.msra.mxu0 0.0
  %2001 = vmatpush.msra.mxu0 0.0
  %2002 = vmatpush.msra.mxu0 0.0
  %2003 = vmatpush.msra.mxu0 0.0
  %2004 = vmatpush.msra.mxu0 %v1962
  %2005 = vmatpush.msra.mxu0 %v1961
  %2006 = vmatpush.msra.mxu0 %v1960
  %2007 = vmatpush.msra.mxu0 %v1959
  %2008 = vmatmul.f32.gmra.mxu0 %v1969
  %v2009 = vpop.f32.mrf.mxu0
  %v2010 = vadd.f32 %v1966, %v2009
  %2011 = vmatmul.f32.gmra.mxu0 %v1972
  %v2012 = vpop.f32.mrf.mxu0
  %v2013 = vadd.f32 %v1966, %v2012
  %2014 = vmatmul.f32.gmra.mxu0 %v1975
  %v2015 = vpop.f32.mrf.mxu0
  %v2016 = vadd.f32 %v1966, %v2015
  %2017 = vmatmul.f32.gmra.mxu0 %v1978
  %v2018 = vpop.f32.mrf.mxu0
  %v2019 = vadd.f32 %v1966, %v2018
  %2020 = vmatmul.f32.gmra.mxu0 %v1981
  %v2021 = vpop.f32.mrf.mxu0
  %v2022 = vadd.f32 %v1966, %v2021
  %2023 = vmatmul.f32.gmra.mxu0 %v1984
  %v2024 = vpop.f32.mrf.mxu0
  %v2025 = vadd.f32 %v1966, %v2024
  %2026 = vmatmul.f32.gmra.mxu0 %v1987
  %v2027 = vpop.f32.mrf.mxu0
  %v2028 = vadd.f32 %v1966, %v2027
  %2029 = vmatmul.f32.gmra.mxu0 %v1990
  %v2030 = vpop.f32.mrf.mxu0
  %v2031 = vadd.f32 %v1966, %v2030
  %2032 = vdwg.mxu0
  %v2033 = vadd.f32 %v1427, %v2010
  %v2034 = vadd.f32 %v1428, %v2013
  %v2035 = vadd.f32 %v1429, %v2016
  %v2036 = vadd.f32 %v1430, %v2019
  %v2037 = vadd.f32 %v1431, %v2022
  %v2038 = vadd.f32 %v1432, %v2025
  %v2039 = vadd.f32 %v1433, %v2028
  %v2040 = vadd.f32 %v1434, %v2031
  %s2041 = scalar_lea.vmem %s14, 1
  %v2042 = vld [vmem:[%s2041] sm:$0x1]
  %s2043 = scalar_lea.vmem %s15, 1
  %v2044 = vld [vmem:[%s2043] sm:$0x1]
  %v2045 = vsel %vm286, %v2033, 0.0
  %2046 = vadd.xlane.f32.xlu0 %v2045
  %v2047 = vpop.xlane.xlu0 %2046
  %v2048 = vsel %vm286, %v2034, 0.0
  %2049 = vadd.xlane.f32.xlu0 %v2048
  %v2050 = vpop.xlane.xlu0 %2049
  %v2051 = vsel %vm286, %v2035, 0.0
  %2052 = vadd.xlane.f32.xlu0 %v2051
  %v2053 = vpop.xlane.xlu0 %2052
  %v2054 = vsel %vm286, %v2036, 0.0
  %2055 = vadd.xlane.f32.xlu0 %v2054
  %v2056 = vpop.xlane.xlu0 %2055
  %v2057 = vsel %vm286, %v2037, 0.0
  %2058 = vadd.xlane.f32.xlu0 %v2057
  %v2059 = vpop.xlane.xlu0 %2058
  %v2060 = vsel %vm286, %v2038, 0.0
  %2061 = vadd.xlane.f32.xlu0 %v2060
  %v2062 = vpop.xlane.xlu0 %2061
  %v2063 = vsel %vm286, %v2039, 0.0
  %2064 = vadd.xlane.f32.xlu0 %v2063
  %v2065 = vpop.xlane.xlu0 %2064
  %v2066 = vsel %vm286, %v2040, 0.0
  %2067 = vadd.xlane.f32.xlu0 %v2066
  %v2068 = vpop.xlane.xlu0 %2067
  %v2069 = vmul.f32 %v2047, %v910
  %v2070 = vmul.f32 %v2050, %v910
  %v2071 = vmul.f32 %v2053, %v910
  %v2072 = vmul.f32 %v2056, %v910
  %v2073 = vmul.f32 %v2059, %v910
  %v2074 = vmul.f32 %v2062, %v910
  %v2075 = vmul.f32 %v2065, %v910
  %v2076 = vmul.f32 %v2068, %v910
  %v2077 = vsub.f32 %v2033, %v2069
  %v2078 = vsub.f32 %v2034, %v2070
  %v2079 = vsub.f32 %v2035, %v2071
  %v2080 = vsub.f32 %v2036, %v2072
  %v2081 = vsub.f32 %v2037, %v2073
  %v2082 = vsub.f32 %v2038, %v2074
  %v2083 = vsub.f32 %v2039, %v2075
  %v2084 = vsub.f32 %v2040, %v2076
  %v2085 = vmul.f32 %v2077, %v2077
  %v2086 = vmul.f32 %v2078, %v2078
  %v2087 = vmul.f32 %v2079, %v2079
  %v2088 = vmul.f32 %v2080, %v2080
  %v2089 = vmul.f32 %v2081, %v2081
  %v2090 = vmul.f32 %v2082, %v2082
  %v2091 = vmul.f32 %v2083, %v2083
  %v2092 = vmul.f32 %v2084, %v2084
  %v2093 = vsel %vm286, %v2085, 0.0
  %2094 = vadd.xlane.f32.xlu0 %v2093
  %v2095 = vpop.xlane.xlu0 %2094
  %v2096 = vsel %vm286, %v2086, 0.0
  %2097 = vadd.xlane.f32.xlu0 %v2096
  %v2098 = vpop.xlane.xlu0 %2097
  %v2099 = vsel %vm286, %v2087, 0.0
  %2100 = vadd.xlane.f32.xlu0 %v2099
  %v2101 = vpop.xlane.xlu0 %2100
  %v2102 = vsel %vm286, %v2088, 0.0
  %2103 = vadd.xlane.f32.xlu0 %v2102
  %v2104 = vpop.xlane.xlu0 %2103
  %v2105 = vsel %vm286, %v2089, 0.0
  %2106 = vadd.xlane.f32.xlu0 %v2105
  %v2107 = vpop.xlane.xlu0 %2106
  %v2108 = vsel %vm286, %v2090, 0.0
  %2109 = vadd.xlane.f32.xlu0 %v2108
  %v2110 = vpop.xlane.xlu0 %2109
  %v2111 = vsel %vm286, %v2091, 0.0
  %2112 = vadd.xlane.f32.xlu0 %v2111
  %v2113 = vpop.xlane.xlu0 %2112
  %v2114 = vsel %vm286, %v2092, 0.0
  %2115 = vadd.xlane.f32.xlu0 %v2114
  %v2116 = vpop.xlane.xlu0 %2115
  %v2117 = vmul.f32 %v2095, %v910
  %v2118 = vmul.f32 %v2098, %v910
  %v2119 = vmul.f32 %v2101, %v910
  %v2120 = vmul.f32 %v2104, %v910
  %v2121 = vmul.f32 %v2107, %v910
  %v2122 = vmul.f32 %v2110, %v910
  %v2123 = vmul.f32 %v2113, %v910
  %v2124 = vmul.f32 %v2116, %v910
  %v2125 = vadd.f32 %v2117, 1e-05
  %v2126 = vadd.f32 %v2118, 1e-05
  %v2127 = vadd.f32 %v2119, 1e-05
  %v2128 = vadd.f32 %v2120, 1e-05
  %v2129 = vadd.f32 %v2121, 1e-05
  %v2130 = vadd.f32 %v2122, 1e-05
  %v2131 = vadd.f32 %v2123, 1e-05
  %v2132 = vadd.f32 %v2124, 1e-05
  %v2133 = vrsqrt.pop %v2125
  %v2134 = vmul.f32 %v2133, %v2125
  %v2135 = vmul.f32 %v2134, %v2133
  %v2136 = vmul.f32 0.5, %v2135
  %v2137 = vsub.f32 1.5, %v2136
  %v2138 = vmul.f32 %v2133, %v2137
  %vm2139 = vweird.f32 %v2125
  %vm2140 = vweird.f32 %v2133
  %vm2141 = vmor %vm2139, %vm2140
  %v2142 = vsel %vm2141, %v2133, %v2138
  %v2143 = vrsqrt.pop %v2126
  %v2144 = vmul.f32 %v2143, %v2126
  %v2145 = vmul.f32 %v2144, %v2143
  %v2146 = vmul.f32 0.5, %v2145
  %v2147 = vsub.f32 1.5, %v2146
  %v2148 = vmul.f32 %v2143, %v2147
  %vm2149 = vweird.f32 %v2126
  %vm2150 = vweird.f32 %v2143
  %vm2151 = vmor %vm2149, %vm2150
  %v2152 = vsel %vm2151, %v2143, %v2148
  %v2153 = vrsqrt.pop %v2127
  %v2154 = vmul.f32 %v2153, %v2127
  %v2155 = vmul.f32 %v2154, %v2153
  %v2156 = vmul.f32 0.5, %v2155
  %v2157 = vsub.f32 1.5, %v2156
  %v2158 = vmul.f32 %v2153, %v2157
  %vm2159 = vweird.f32 %v2127
  %vm2160 = vweird.f32 %v2153
  %vm2161 = vmor %vm2159, %vm2160
  %v2162 = vsel %vm2161, %v2153, %v2158
  %v2163 = vrsqrt.pop %v2128
  %v2164 = vmul.f32 %v2163, %v2128
  %v2165 = vmul.f32 %v2164, %v2163
  %v2166 = vmul.f32 0.5, %v2165
  %v2167 = vsub.f32 1.5, %v2166
  %v2168 = vmul.f32 %v2163, %v2167
  %vm2169 = vweird.f32 %v2128
  %vm2170 = vweird.f32 %v2163
  %vm2171 = vmor %vm2169, %vm2170
  %v2172 = vsel %vm2171, %v2163, %v2168
  %v2173 = vrsqrt.pop %v2129
  %v2174 = vmul.f32 %v2173, %v2129
  %v2175 = vmul.f32 %v2174, %v2173
  %v2176 = vmul.f32 0.5, %v2175
  %v2177 = vsub.f32 1.5, %v2176
  %v2178 = vmul.f32 %v2173, %v2177
  %vm2179 = vweird.f32 %v2129
  %vm2180 = vweird.f32 %v2173
  %vm2181 = vmor %vm2179, %vm2180
  %v2182 = vsel %vm2181, %v2173, %v2178
  %v2183 = vrsqrt.pop %v2130
  %v2184 = vmul.f32 %v2183, %v2130
  %v2185 = vmul.f32 %v2184, %v2183
  %v2186 = vmul.f32 0.5, %v2185
  %v2187 = vsub.f32 1.5, %v2186
  %v2188 = vmul.f32 %v2183, %v2187
  %vm2189 = vweird.f32 %v2130
  %vm2190 = vweird.f32 %v2183
  %vm2191 = vmor %vm2189, %vm2190
  %v2192 = vsel %vm2191, %v2183, %v2188
  %v2193 = vrsqrt.pop %v2131
  %v2194 = vmul.f32 %v2193, %v2131
  %v2195 = vmul.f32 %v2194, %v2193
  %v2196 = vmul.f32 0.5, %v2195
  %v2197 = vsub.f32 1.5, %v2196
  %v2198 = vmul.f32 %v2193, %v2197
  %vm2199 = vweird.f32 %v2131
  %vm2200 = vweird.f32 %v2193
  %vm2201 = vmor %vm2199, %vm2200
  %v2202 = vsel %vm2201, %v2193, %v2198
  %v2203 = vrsqrt.pop %v2132
  %v2204 = vmul.f32 %v2203, %v2132
  %v2205 = vmul.f32 %v2204, %v2203
  %v2206 = vmul.f32 0.5, %v2205
  %v2207 = vsub.f32 1.5, %v2206
  %v2208 = vmul.f32 %v2203, %v2207
  %vm2209 = vweird.f32 %v2132
  %vm2210 = vweird.f32 %v2203
  %vm2211 = vmor %vm2209, %vm2210
  %v2212 = vsel %vm2211, %v2203, %v2208
  %v2213 = vmul.f32 %v2077, %v2142
  %v2214 = vmul.f32 %v2078, %v2152
  %v2215 = vmul.f32 %v2079, %v2162
  %v2216 = vmul.f32 %v2080, %v2172
  %v2217 = vmul.f32 %v2081, %v2182
  %v2218 = vmul.f32 %v2082, %v2192
  %v2219 = vmul.f32 %v2083, %v2202
  %v2220 = vmul.f32 %v2084, %v2212
  %v2222 = vperm.slane %v2042, 0
  %v2224 = vmul.f32 %v2213, %v2222
  %v2225 = vmul.f32 %v2214, %v2222
  %v2226 = vmul.f32 %v2215, %v2222
  %v2227 = vmul.f32 %v2216, %v2222
  %v2228 = vmul.f32 %v2217, %v2222
  %v2229 = vmul.f32 %v2218, %v2222
  %v2230 = vmul.f32 %v2219, %v2222
  %v2231 = vmul.f32 %v2220, %v2222
  %v2233 = vperm.slane %v2044, 0
  %v2235 = vadd.f32 %v2224, %v2233
  %v2236 = vadd.f32 %v2225, %v2233
  %v2237 = vadd.f32 %v2226, %v2233
  %v2238 = vadd.f32 %v2227, %v2233
  %v2239 = vadd.f32 %v2228, %v2233
  %v2240 = vadd.f32 %v2229, %v2233
  %v2241 = vadd.f32 %v2230, %v2233
  %v2242 = vadd.f32 %v2231, %v2233
  %s2243 = scalar_lea.vmem %s16, 32
  %v2244 = vld [vmem:[%s2243] sm:$0xff]
  %v2245 = vld [vmem:[%s2243 + $0x8] sm:$0xff]
  %v2246 = vld [vmem:[%s2243 + $0x10] sm:$0xff]
  %v2247 = vld [vmem:[%s2243 + $0x18] sm:$0xff]
  %s2248 = scalar_lea.vmem %s17, 1
  %v2249 = vld [vmem:[%s2248] sm:$0x1]
  %v2251 = vperm.slane %v2249, 0
  %v2254 = vsel %vm286, %v2235, 0
  %v2257 = vsel %vm286, %v2236, 0
  %v2260 = vsel %vm286, %v2237, 0
  %v2263 = vsel %vm286, %v2238, 0
  %v2266 = vsel %vm286, %v2239, 0
  %v2269 = vsel %vm286, %v2240, 0
  %v2272 = vsel %vm286, %v2241, 0
  %v2275 = vsel %vm286, %v2242, 0
  %2277 = vmatpush.msra.mxu0 0.0
  %2278 = vmatpush.msra.mxu0 0.0
  %2279 = vmatpush.msra.mxu0 0.0
  %2280 = vmatpush.msra.mxu0 0.0
  %2281 = vmatpush.msra.mxu0 0.0
  %2282 = vmatpush.msra.mxu0 0.0
  %2283 = vmatpush.msra.mxu0 0.0
  %2284 = vmatpush.msra.mxu0 0.0
  %2285 = vmatpush.msra.mxu0 0.0
  %2286 = vmatpush.msra.mxu0 0.0
  %2287 = vmatpush.msra.mxu0 0.0
  %2288 = vmatpush.msra.mxu0 0.0
  %2289 = vmatpush.msra.mxu0 %v2247
  %2290 = vmatpush.msra.mxu0 %v2246
  %2291 = vmatpush.msra.mxu0 %v2245
  %2292 = vmatpush.msra.mxu0 %v2244
  %2293 = vmatmul.f32.gmra.mxu0 %v2254
  %v2294 = vpop.f32.mrf.mxu0
  %v2295 = vadd.f32 %v2251, %v2294
  %2296 = vmatmul.f32.gmra.mxu0 %v2257
  %v2297 = vpop.f32.mrf.mxu0
  %v2298 = vadd.f32 %v2251, %v2297
  %2299 = vmatmul.f32.gmra.mxu0 %v2260
  %v2300 = vpop.f32.mrf.mxu0
  %v2301 = vadd.f32 %v2251, %v2300
  %2302 = vmatmul.f32.gmra.mxu0 %v2263
  %v2303 = vpop.f32.mrf.mxu0
  %v2304 = vadd.f32 %v2251, %v2303
  %2305 = vmatmul.f32.gmra.mxu0 %v2266
  %v2306 = vpop.f32.mrf.mxu0
  %v2307 = vadd.f32 %v2251, %v2306
  %2308 = vmatmul.f32.gmra.mxu0 %v2269
  %v2309 = vpop.f32.mrf.mxu0
  %v2310 = vadd.f32 %v2251, %v2309
  %2311 = vmatmul.f32.gmra.mxu0 %v2272
  %v2312 = vpop.f32.mrf.mxu0
  %v2313 = vadd.f32 %v2251, %v2312
  %2314 = vmatmul.f32.gmra.mxu0 %v2275
  %v2315 = vpop.f32.mrf.mxu0
  %v2316 = vadd.f32 %v2251, %v2315
  %2317 = vdwg.mxu0
  %v2318 = vmax.f32 %v2295, 0.0
  %v2319 = vmax.f32 %v2298, 0.0
  %v2320 = vmax.f32 %v2301, 0.0
  %v2321 = vmax.f32 %v2304, 0.0
  %v2322 = vmax.f32 %v2307, 0.0
  %v2323 = vmax.f32 %v2310, 0.0
  %v2324 = vmax.f32 %v2313, 0.0
  %v2325 = vmax.f32 %v2316, 0.0
  %s2326 = scalar_lea.vmem %s18, 128
  %v2327 = vld [vmem:[%s2326] sm:$0xff]
  %v2328 = vld [vmem:[%s2326 + $0x8] sm:$0xff]
  %v2329 = vld [vmem:[%s2326 + $0x10] sm:$0xff]
  %v2330 = vld [vmem:[%s2326 + $0x18] sm:$0xff]
  %v2331 = vld [vmem:[%s2326 + $0x20] sm:$0xff]
  %v2332 = vld [vmem:[%s2326 + $0x28] sm:$0xff]
  %v2333 = vld [vmem:[%s2326 + $0x30] sm:$0xff]
  %v2334 = vld [vmem:[%s2326 + $0x38] sm:$0xff]
  %v2335 = vld [vmem:[%s2326 + $0x40] sm:$0xff]
  %v2336 = vld [vmem:[%s2326 + $0x48] sm:$0xff]
  %v2337 = vld [vmem:[%s2326 + $0x50] sm:$0xff]
  %v2338 = vld [vmem:[%s2326 + $0x58] sm:$0xff]
  %v2339 = vld [vmem:[%s2326 + $0x60] sm:$0xff]
  %v2340 = vld [vmem:[%s2326 + $0x68] sm:$0xff]
  %v2341 = vld [vmem:[%s2326 + $0x70] sm:$0xff]
  %v2342 = vld [vmem:[%s2326 + $0x78] sm:$0xff]
  %s2343 = scalar_lea.vmem %s19, 1
  %v2344 = vld [vmem:[%s2343] sm:$0x1]
  %v2346 = vperm.slane %v2344, 0
  %2348 = vmatpush.msra.mxu0 %v2342
  %2349 = vmatpush.msra.mxu0 %v2341
  %2350 = vmatpush.msra.mxu0 %v2340
  %2351 = vmatpush.msra.mxu0 %v2339
  %2352 = vmatpush.msra.mxu0 %v2338
  %2353 = vmatpush.msra.mxu0 %v2337
  %2354 = vmatpush.msra.mxu0 %v2336
  %2355 = vmatpush.msra.mxu0 %v2335
  %2356 = vmatpush.msra.mxu0 %v2334
  %2357 = vmatpush.msra.mxu0 %v2333
  %2358 = vmatpush.msra.mxu0 %v2332
  %2359 = vmatpush.msra.mxu0 %v2331
  %2360 = vmatpush.msra.mxu0 %v2330
  %2361 = vmatpush.msra.mxu0 %v2329
  %2362 = vmatpush.msra.mxu0 %v2328
  %2363 = vmatpush.msra.mxu0 %v2327
  %2364 = vmatmul.f32.gmra.mxu0 %v2318
  %v2365 = vpop.f32.mrf.mxu0
  %v2366 = vadd.f32 %v2346, %v2365
  %2367 = vmatmul.f32.gmra.mxu0 %v2319
  %v2368 = vpop.f32.mrf.mxu0
  %v2369 = vadd.f32 %v2346, %v2368
  %2370 = vmatmul.f32.gmra.mxu0 %v2320
  %v2371 = vpop.f32.mrf.mxu0
  %v2372 = vadd.f32 %v2346, %v2371
  %2373 = vmatmul.f32.gmra.mxu0 %v2321
  %v2374 = vpop.f32.mrf.mxu0
  %v2375 = vadd.f32 %v2346, %v2374
  %2376 = vmatmul.f32.gmra.mxu0 %v2322
  %v2377 = vpop.f32.mrf.mxu0
  %v2378 = vadd.f32 %v2346, %v2377
  %2379 = vmatmul.f32.gmra.mxu0 %v2323
  %v2380 = vpop.f32.mrf.mxu0
  %v2381 = vadd.f32 %v2346, %v2380
  %2382 = vmatmul.f32.gmra.mxu0 %v2324
  %v2383 = vpop.f32.mrf.mxu0
  %v2384 = vadd.f32 %v2346, %v2383
  %2385 = vmatmul.f32.gmra.mxu0 %v2325
  %v2386 = vpop.f32.mrf.mxu0
  %v2387 = vadd.f32 %v2346, %v2386
  %2388 = vdwg.mxu0
  %v2389 = vadd.f32 %v2235, %v2366
  %v2390 = vadd.f32 %v2236, %v2369
  %v2391 = vadd.f32 %v2237, %v2372
  %v2392 = vadd.f32 %v2238, %v2375
  %v2393 = vadd.f32 %v2239, %v2378
  %v2394 = vadd.f32 %v2240, %v2381
  %v2395 = vadd.f32 %v2241, %v2384
  %v2396 = vadd.f32 %v2242, %v2387
  %s2397 = scalar_lea.vmem %s20, 1
  %v2398 = vld [vmem:[%s2397] sm:$0x1]
  %s2399 = scalar_lea.vmem %s21, 1
  %v2400 = vld [vmem:[%s2399] sm:$0x1]
  %v2401 = vsel %vm286, %v2389, 0.0
  %2402 = vadd.xlane.f32.xlu0 %v2401
  %v2403 = vpop.xlane.xlu0 %2402
  %v2404 = vsel %vm286, %v2390, 0.0
  %2405 = vadd.xlane.f32.xlu0 %v2404
  %v2406 = vpop.xlane.xlu0 %2405
  %v2407 = vsel %vm286, %v2391, 0.0
  %2408 = vadd.xlane.f32.xlu0 %v2407
  %v2409 = vpop.xlane.xlu0 %2408
  %v2410 = vsel %vm286, %v2392, 0.0
  %2411 = vadd.xlane.f32.xlu0 %v2410
  %v2412 = vpop.xlane.xlu0 %2411
  %v2413 = vsel %vm286, %v2393, 0.0
  %2414 = vadd.xlane.f32.xlu0 %v2413
  %v2415 = vpop.xlane.xlu0 %2414
  %v2416 = vsel %vm286, %v2394, 0.0
  %2417 = vadd.xlane.f32.xlu0 %v2416
  %v2418 = vpop.xlane.xlu0 %2417
  %v2419 = vsel %vm286, %v2395, 0.0
  %2420 = vadd.xlane.f32.xlu0 %v2419
  %v2421 = vpop.xlane.xlu0 %2420
  %v2422 = vsel %vm286, %v2396, 0.0
  %2423 = vadd.xlane.f32.xlu0 %v2422
  %v2424 = vpop.xlane.xlu0 %2423
  %v2425 = vmul.f32 %v2403, %v910
  %v2426 = vmul.f32 %v2406, %v910
  %v2427 = vmul.f32 %v2409, %v910
  %v2428 = vmul.f32 %v2412, %v910
  %v2429 = vmul.f32 %v2415, %v910
  %v2430 = vmul.f32 %v2418, %v910
  %v2431 = vmul.f32 %v2421, %v910
  %v2432 = vmul.f32 %v2424, %v910
  %v2433 = vsub.f32 %v2389, %v2425
  %v2434 = vsub.f32 %v2390, %v2426
  %v2435 = vsub.f32 %v2391, %v2427
  %v2436 = vsub.f32 %v2392, %v2428
  %v2437 = vsub.f32 %v2393, %v2429
  %v2438 = vsub.f32 %v2394, %v2430
  %v2439 = vsub.f32 %v2395, %v2431
  %v2440 = vsub.f32 %v2396, %v2432
  %v2441 = vmul.f32 %v2433, %v2433
  %v2442 = vmul.f32 %v2434, %v2434
  %v2443 = vmul.f32 %v2435, %v2435
  %v2444 = vmul.f32 %v2436, %v2436
  %v2445 = vmul.f32 %v2437, %v2437
  %v2446 = vmul.f32 %v2438, %v2438
  %v2447 = vmul.f32 %v2439, %v2439
  %v2448 = vmul.f32 %v2440, %v2440
  %v2449 = vsel %vm286, %v2441, 0.0
  %2450 = vadd.xlane.f32.xlu0 %v2449
  %v2451 = vpop.xlane.xlu0 %2450
  %v2452 = vsel %vm286, %v2442, 0.0
  %2453 = vadd.xlane.f32.xlu0 %v2452
  %v2454 = vpop.xlane.xlu0 %2453
  %v2455 = vsel %vm286, %v2443, 0.0
  %2456 = vadd.xlane.f32.xlu0 %v2455
  %v2457 = vpop.xlane.xlu0 %2456
  %v2458 = vsel %vm286, %v2444, 0.0
  %2459 = vadd.xlane.f32.xlu0 %v2458
  %v2460 = vpop.xlane.xlu0 %2459
  %v2461 = vsel %vm286, %v2445, 0.0
  %2462 = vadd.xlane.f32.xlu0 %v2461
  %v2463 = vpop.xlane.xlu0 %2462
  %v2464 = vsel %vm286, %v2446, 0.0
  %2465 = vadd.xlane.f32.xlu0 %v2464
  %v2466 = vpop.xlane.xlu0 %2465
  %v2467 = vsel %vm286, %v2447, 0.0
  %2468 = vadd.xlane.f32.xlu0 %v2467
  %v2469 = vpop.xlane.xlu0 %2468
  %v2470 = vsel %vm286, %v2448, 0.0
  %2471 = vadd.xlane.f32.xlu0 %v2470
  %v2472 = vpop.xlane.xlu0 %2471
  %v2473 = vmul.f32 %v2451, %v910
  %v2474 = vmul.f32 %v2454, %v910
  %v2475 = vmul.f32 %v2457, %v910
  %v2476 = vmul.f32 %v2460, %v910
  %v2477 = vmul.f32 %v2463, %v910
  %v2478 = vmul.f32 %v2466, %v910
  %v2479 = vmul.f32 %v2469, %v910
  %v2480 = vmul.f32 %v2472, %v910
  %v2481 = vadd.f32 %v2473, 1e-05
  %v2482 = vadd.f32 %v2474, 1e-05
  %v2483 = vadd.f32 %v2475, 1e-05
  %v2484 = vadd.f32 %v2476, 1e-05
  %v2485 = vadd.f32 %v2477, 1e-05
  %v2486 = vadd.f32 %v2478, 1e-05
  %v2487 = vadd.f32 %v2479, 1e-05
  %v2488 = vadd.f32 %v2480, 1e-05
  %v2489 = vrsqrt.pop %v2481
  %v2490 = vmul.f32 %v2489, %v2481
  %v2491 = vmul.f32 %v2490, %v2489
  %v2492 = vmul.f32 0.5, %v2491
  %v2493 = vsub.f32 1.5, %v2492
  %v2494 = vmul.f32 %v2489, %v2493
  %vm2495 = vweird.f32 %v2481
  %vm2496 = vweird.f32 %v2489
  %vm2497 = vmor %vm2495, %vm2496
  %v2498 = vsel %vm2497, %v2489, %v2494
  %v2499 = vrsqrt.pop %v2482
  %v2500 = vmul.f32 %v2499, %v2482
  %v2501 = vmul.f32 %v2500, %v2499
  %v2502 = vmul.f32 0.5, %v2501
  %v2503 = vsub.f32 1.5, %v2502
  %v2504 = vmul.f32 %v2499, %v2503
  %vm2505 = vweird.f32 %v2482
  %vm2506 = vweird.f32 %v2499
  %vm2507 = vmor %vm2505, %vm2506
  %v2508 = vsel %vm2507, %v2499, %v2504
  %v2509 = vrsqrt.pop %v2483
  %v2510 = vmul.f32 %v2509, %v2483
  %v2511 = vmul.f32 %v2510, %v2509
  %v2512 = vmul.f32 0.5, %v2511
  %v2513 = vsub.f32 1.5, %v2512
  %v2514 = vmul.f32 %v2509, %v2513
  %vm2515 = vweird.f32 %v2483
  %vm2516 = vweird.f32 %v2509
  %vm2517 = vmor %vm2515, %vm2516
  %v2518 = vsel %vm2517, %v2509, %v2514
  %v2519 = vrsqrt.pop %v2484
  %v2520 = vmul.f32 %v2519, %v2484
  %v2521 = vmul.f32 %v2520, %v2519
  %v2522 = vmul.f32 0.5, %v2521
  %v2523 = vsub.f32 1.5, %v2522
  %v2524 = vmul.f32 %v2519, %v2523
  %vm2525 = vweird.f32 %v2484
  %vm2526 = vweird.f32 %v2519
  %vm2527 = vmor %vm2525, %vm2526
  %v2528 = vsel %vm2527, %v2519, %v2524
  %v2529 = vrsqrt.pop %v2485
  %v2530 = vmul.f32 %v2529, %v2485
  %v2531 = vmul.f32 %v2530, %v2529
  %v2532 = vmul.f32 0.5, %v2531
  %v2533 = vsub.f32 1.5, %v2532
  %v2534 = vmul.f32 %v2529, %v2533
  %vm2535 = vweird.f32 %v2485
  %vm2536 = vweird.f32 %v2529
  %vm2537 = vmor %vm2535, %vm2536
  %v2538 = vsel %vm2537, %v2529, %v2534
  %v2539 = vrsqrt.pop %v2486
  %v2540 = vmul.f32 %v2539, %v2486
  %v2541 = vmul.f32 %v2540, %v2539
  %v2542 = vmul.f32 0.5, %v2541
  %v2543 = vsub.f32 1.5, %v2542
  %v2544 = vmul.f32 %v2539, %v2543
  %vm2545 = vweird.f32 %v2486
  %vm2546 = vweird.f32 %v2539
  %vm2547 = vmor %vm2545, %vm2546
  %v2548 = vsel %vm2547, %v2539, %v2544
  %v2549 = vrsqrt.pop %v2487
  %v2550 = vmul.f32 %v2549, %v2487
  %v2551 = vmul.f32 %v2550, %v2549
  %v2552 = vmul.f32 0.5, %v2551
  %v2553 = vsub.f32 1.5, %v2552
  %v2554 = vmul.f32 %v2549, %v2553
  %vm2555 = vweird.f32 %v2487
  %vm2556 = vweird.f32 %v2549
  %vm2557 = vmor %vm2555, %vm2556
  %v2558 = vsel %vm2557, %v2549, %v2554
  %v2559 = vrsqrt.pop %v2488
  %v2560 = vmul.f32 %v2559, %v2488
  %v2561 = vmul.f32 %v2560, %v2559
  %v2562 = vmul.f32 0.5, %v2561
  %v2563 = vsub.f32 1.5, %v2562
  %v2564 = vmul.f32 %v2559, %v2563
  %vm2565 = vweird.f32 %v2488
  %vm2566 = vweird.f32 %v2559
  %vm2567 = vmor %vm2565, %vm2566
  %v2568 = vsel %vm2567, %v2559, %v2564
  %v2569 = vmul.f32 %v2433, %v2498
  %v2570 = vmul.f32 %v2434, %v2508
  %v2571 = vmul.f32 %v2435, %v2518
  %v2572 = vmul.f32 %v2436, %v2528
  %v2573 = vmul.f32 %v2437, %v2538
  %v2574 = vmul.f32 %v2438, %v2548
  %v2575 = vmul.f32 %v2439, %v2558
  %v2576 = vmul.f32 %v2440, %v2568
  %v2578 = vperm.slane %v2398, 0
  %v2580 = vmul.f32 %v2569, %v2578
  %v2581 = vmul.f32 %v2570, %v2578
  %v2582 = vmul.f32 %v2571, %v2578
  %v2583 = vmul.f32 %v2572, %v2578
  %v2584 = vmul.f32 %v2573, %v2578
  %v2585 = vmul.f32 %v2574, %v2578
  %v2586 = vmul.f32 %v2575, %v2578
  %v2587 = vmul.f32 %v2576, %v2578
  %v2589 = vperm.slane %v2400, 0
  %v2591 = vadd.f32 %v2580, %v2589
  %v2592 = vadd.f32 %v2581, %v2589
  %v2593 = vadd.f32 %v2582, %v2589
  %v2594 = vadd.f32 %v2583, %v2589
  %v2595 = vadd.f32 %v2584, %v2589
  %v2596 = vadd.f32 %v2585, %v2589
  %v2597 = vadd.f32 %v2586, %v2589
  %v2598 = vadd.f32 %v2587, %v2589
  %v2599 = vld [vmem:[%s0] sm:$0xff]
  %v2600 = vcvt.s32.f32 %v2599
  %v2601 = vrcp.pop %v2600
  %v2602 = vmul.f32 %v2600, %v2601
  %v2603 = vsub.f32 1.0, %v2602
  %v2604 = vmul.f32 %v2601, %v2603
  %v2605 = vadd.f32 %v2601, %v2604
  %vm2606 = vweird.f32 %v2600
  %vm2607 = vweird.f32 %v2601
  %vm2608 = vmor %vm2606, %vm2607
  %v2609 = vsel %vm2608, %v2601, %v2605
  %v2610 = vand.u32 2147483647, %v2600
  %vm2611 = vcmp.eq.f32.partialorder %v2610, 8.507059e+37
  %v2612 = vand.u32 %v2600, 2147483648
  %v2613 = vor.u32 1.1754944e-38, %v2612
  %v2614 = vsel %vm2611, %v2613, %v2609
  %v2616 = vrot.slane %v2614, 1
  %v2617 = vrot.slane %v2614, 2
  %v2618 = vrot.slane %v2614, 3
  %v2619 = vrot.slane %v2614, 4
  %v2620 = vrot.slane %v2614, 5
  %v2621 = vrot.slane %v2614, 6
  %v2622 = vrot.slane %v2614, 7
  %v2623 = vrot.slane %v2599, 1
  %v2624 = vrot.slane %v2599, 2
  %v2625 = vrot.slane %v2599, 3
  %v2626 = vrot.slane %v2599, 4
  %v2627 = vrot.slane %v2599, 5
  %v2628 = vrot.slane %v2599, 6
  %v2629 = vrot.slane %v2599, 7
  %v2630 = vperm.slane %v2599, 0
  %v2631 = vperm.slane %v2623, 0
  %v2632 = vperm.slane %v2624, 0
  %v2633 = vperm.slane %v2625, 0
  %v2634 = vperm.slane %v2626, 0
  %v2635 = vperm.slane %v2627, 0
  %v2636 = vperm.slane %v2628, 0
  %v2637 = vperm.slane %v2629, 0
  %vm2638 = vcmp.lt.s32.totalorder %v245, %v2630
  %vm2639 = vcmp.lt.s32.totalorder %v245, %v2631
  %vm2640 = vcmp.lt.s32.totalorder %v245, %v2632
  %vm2641 = vcmp.lt.s32.totalorder %v245, %v2633
  %vm2642 = vcmp.lt.s32.totalorder %v245, %v2634
  %vm2643 = vcmp.lt.s32.totalorder %v245, %v2635
  %vm2644 = vcmp.lt.s32.totalorder %v245, %v2636
  %vm2645 = vcmp.lt.s32.totalorder %v245, %v2637
  %v2646 = vperm.slane %v2614, 0
  %v2647 = vperm.slane %v2616, 0
  %v2648 = vperm.slane %v2617, 0
  %v2649 = vperm.slane %v2618, 0
  %v2650 = vperm.slane %v2619, 0
  %v2651 = vperm.slane %v2620, 0
  %v2652 = vperm.slane %v2621, 0
  %v2653 = vperm.slane %v2622, 0
  %v2662 = vsel %vm2638, %v2646, 0.0
  %v2663 = vsel %vm2639, %v2647, 0.0
  %v2664 = vsel %vm2640, %v2648, 0.0
  %v2665 = vsel %vm2641, %v2649, 0.0
  %v2666 = vsel %vm2642, %v2650, 0.0
  %v2667 = vsel %vm2643, %v2651, 0.0
  %v2668 = vsel %vm2644, %v2652, 0.0
  %v2669 = vsel %vm2645, %v2653, 0.0
  %2671 = vset.pattern.permute.xlu0 0
  %2672 = vperm.xlu0 %2671, %v2662
  %v2673 = vpop.permute.xlu0 %2672
  %2676 = vset.pattern.permute.xlu0 0
  %2677 = vperm.xlu0 %2676, %v2663
  %v2678 = vpop.permute.xlu0 %2677
  %2681 = vset.pattern.permute.xlu0 0
  %2682 = vperm.xlu0 %2681, %v2664
  %v2683 = vpop.permute.xlu0 %2682
  %2686 = vset.pattern.permute.xlu0 0
  %2687 = vperm.xlu0 %2686, %v2665
  %v2688 = vpop.permute.xlu0 %2687
  %2691 = vset.pattern.permute.xlu0 0
  %2692 = vperm.xlu0 %2691, %v2666
  %v2693 = vpop.permute.xlu0 %2692
  %2696 = vset.pattern.permute.xlu0 0
  %2697 = vperm.xlu0 %2696, %v2667
  %v2698 = vpop.permute.xlu0 %2697
  %2701 = vset.pattern.permute.xlu0 0
  %2702 = vperm.xlu0 %2701, %v2668
  %v2703 = vpop.permute.xlu0 %2702
  %2706 = vset.pattern.permute.xlu0 0
  %2707 = vperm.xlu0 %2706, %v2669
  %v2708 = vpop.permute.xlu0 %2707
  %v2710 = vmul.f32 %v2591, %v2673
  %v2711 = vmul.f32 %v2592, %v2678
  %v2712 = vmul.f32 %v2593, %v2683
  %v2713 = vmul.f32 %v2594, %v2688
  %v2714 = vmul.f32 %v2595, %v2693
  %v2715 = vmul.f32 %v2596, %v2698
  %v2716 = vmul.f32 %v2597, %v2703
  %v2717 = vmul.f32 %v2598, %v2708
  %v2718 = vsel %vm286, %v2710, 0.0
  %v2719 = vrot.slane %v2718, 4
  %v2720 = vadd.f32 %v2718, %v2719
  %v2721 = vrot.slane %v2720, 2
  %v2722 = vadd.f32 %v2720, %v2721
  %v2723 = vrot.slane %v2722, 1
  %v2724 = vadd.f32 %v2722, %v2723
  %v2725 = vsel %vm286, %v2711, 0.0
  %v2726 = vrot.slane %v2725, 4
  %v2727 = vadd.f32 %v2725, %v2726
  %v2728 = vrot.slane %v2727, 2
  %v2729 = vadd.f32 %v2727, %v2728
  %v2730 = vrot.slane %v2729, 1
  %v2731 = vadd.f32 %v2729, %v2730
  %v2732 = vsel %vm286, %v2712, 0.0
  %v2733 = vrot.slane %v2732, 4
  %v2734 = vadd.f32 %v2732, %v2733
  %v2735 = vrot.slane %v2734, 2
  %v2736 = vadd.f32 %v2734, %v2735
  %v2737 = vrot.slane %v2736, 1
  %v2738 = vadd.f32 %v2736, %v2737
  %v2739 = vsel %vm286, %v2713, 0.0
  %v2740 = vrot.slane %v2739, 4
  %v2741 = vadd.f32 %v2739, %v2740
  %v2742 = vrot.slane %v2741, 2
  %v2743 = vadd.f32 %v2741, %v2742
  %v2744 = vrot.slane %v2743, 1
  %v2745 = vadd.f32 %v2743, %v2744
  %v2746 = vsel %vm286, %v2714, 0.0
  %v2747 = vrot.slane %v2746, 4
  %v2748 = vadd.f32 %v2746, %v2747
  %v2749 = vrot.slane %v2748, 2
  %v2750 = vadd.f32 %v2748, %v2749
  %v2751 = vrot.slane %v2750, 1
  %v2752 = vadd.f32 %v2750, %v2751
  %v2753 = vsel %vm286, %v2715, 0.0
  %v2754 = vrot.slane %v2753, 4
  %v2755 = vadd.f32 %v2753, %v2754
  %v2756 = vrot.slane %v2755, 2
  %v2757 = vadd.f32 %v2755, %v2756
  %v2758 = vrot.slane %v2757, 1
  %v2759 = vadd.f32 %v2757, %v2758
  %v2760 = vsel %vm286, %v2716, 0.0
  %v2761 = vrot.slane %v2760, 4
  %v2762 = vadd.f32 %v2760, %v2761
  %v2763 = vrot.slane %v2762, 2
  %v2764 = vadd.f32 %v2762, %v2763
  %v2765 = vrot.slane %v2764, 1
  %v2766 = vadd.f32 %v2764, %v2765
  %v2767 = vsel %vm286, %v2717, 0.0
  %v2768 = vrot.slane %v2767, 4
  %v2769 = vadd.f32 %v2767, %v2768
  %v2770 = vrot.slane %v2769, 2
  %v2771 = vadd.f32 %v2769, %v2770
  %v2772 = vrot.slane %v2771, 1
  %v2773 = vadd.f32 %v2771, %v2772
  %vm2782 = vcmask 1041409
  %v2783 = vsel %vm2782, %v2731, %v2724
  %vm2784 = vcmask 1042434
  %v2785 = vsel %vm2784, %v2738, %v2783
  %vm2786 = vcmask 1043459
  %v2787 = vsel %vm2786, %v2745, %v2785
  %vm2788 = vcmask 1044484
  %v2789 = vsel %vm2788, %v2752, %v2787
  %vm2790 = vcmask 1045509
  %v2791 = vsel %vm2790, %v2759, %v2789
  %vm2792 = vcmask 1046534
  %v2793 = vsel %vm2792, %v2766, %v2791
  %vm2794 = vcmask 1047559
  %v2795 = vsel %vm2794, %v2773, %v2793
  %2797 = vst.msk [vmem:[%s22] sm:$0xff] %vm286, %v2795
  // Predicated region
  $region90: #{model_forward.1} parent=0 // pred_check
    _
  $region91: #{model_forward.1} parent=0 // pred_check_branch
    %2799 = sbr.rel (0) target = $region93
  $region92: #{model_forward.1} parent=0 // pred_region
    _
  $region93: #{model_forward.1} parent=0 // pred_fallthru
    _
  // Predicated region
  $region94: #{model_forward.1} parent=0 // pred_check
    _
  $region95: #{model_forward.1} parent=0 // pred_check_branch
    %2801 = sbr.rel (0) target = $region97
  $region96: #{model_forward.1} parent=0 // pred_region
    _
  $region97: #{model_forward.1} parent=0 // pred_fallthru
    _

// kernel: model_forward.1
$region0: #{model_forward.1}
  #allocation0 [shape = 'u32[]', space=smem, size = 0x4, offset = 0x4, fixed_abs, tag = 'smem constant byte address 0x4 - core index']
  #allocation1 [shape = 'u32[72,128]{1,0:T(1,128)}', space=vmem, size = 0x9000, scoped, tag = 'internal scratch']
  %s0 = inlined_call_operand.vmem [shape: s32[8,1], index: 0, kind: input, shape index: {}]
  %s1 = inlined_call_operand.vmem [shape: f32[64,16], index: 1, kind: input, shape index: {}]
  %s2 = inlined_call_operand.vmem [shape: f32[64,16], index: 2, kind: input, shape index: {}]
  %s3 = inlined_call_operand.vmem [shape: f32[16,32], index: 3, kind: input, shape index: {}]
  %s4 = inlined_call_operand.vmem [shape: f32[16,32], index: 4, kind: input, shape index: {}]
  %s5 = inlined_call_operand.vmem [shape: f32[1,32], index: 5, kind: input, shape index: {}]
  %s6 = inlined_call_operand.vmem [shape: f32[2,32,32], index: 6, kind: input, shape index: {}]
  %s7 = inlined_call_operand.vmem [shape: f32[2,1,32], index: 7, kind: input, shape index: {}]
  %s8 = inlined_call_operand.vmem [shape: f32[2,32,32], index: 8, kind: input, shape index: {}]
  %s9 = inlined_call_operand.vmem [shape: f32[2,1,32], index: 9, kind: input, shape index: {}]
  %s10 = inlined_call_operand.vmem [shape: f32[2,32,32], index: 10, kind: input, shape index: {}]
  %s11 = inlined_call_operand.vmem [shape: f32[2,1,32], index: 11, kind: input, shape index: {}]
  %s12 = inlined_call_operand.vmem [shape: f32[2,32,32], index: 12, kind: input, shape index: {}]
  %s13 = inlined_call_operand.vmem [shape: f32[2,1,32], index: 13, kind: input, shape index: {}]
  %s14 = inlined_call_operand.vmem [shape: f32[2,1,32], index: 14, kind: input, shape index: {}]
  %s15 = inlined_call_operand.vmem [shape: f32[2,1,32], index: 15, kind: input, shape index: {}]
  %s16 = inlined_call_operand.vmem [shape: f32[2,32,128], index: 16, kind: input, shape index: {}]
  %s17 = inlined_call_operand.vmem [shape: f32[2,1,128], index: 17, kind: input, shape index: {}]
  %s18 = inlined_call_operand.vmem [shape: f32[2,128,32], index: 18, kind: input, shape index: {}]
  %s19 = inlined_call_operand.vmem [shape: f32[2,1,32], index: 19, kind: input, shape index: {}]
  %s20 = inlined_call_operand.vmem [shape: f32[2,1,32], index: 20, kind: input, shape index: {}]
  %s21 = inlined_call_operand.vmem [shape: f32[2,1,32], index: 21, kind: input, shape index: {}]
  %s22 = inlined_call_operand.vmem [shape: f32[8,32], index: 22, kind: output, shape index: {}]
  %s23 = sld [smem:[#allocation0]]
  $region98: #{model_forward.1} parent=0
    _
  %s25 = ssub.s32 1, %s23
  %s26 = scalar_select 0, %s25, %s23
  // Predicated region
  $region2: #{model_forward.1} parent=0 // pred_check
    _
  $region3: #{model_forward.1} parent=0 // pred_check_branch
    %28 = sbr.rel (0) target = $region5
  $region4: #{model_forward.1} parent=0 // pred_region
    _
  $region5: #{model_forward.1} parent=0 // pred_fallthru
    _
  // Predicated region
  $region6: #{model_forward.1} parent=0 // pred_check
    _
  $region7: #{model_forward.1} parent=0 // pred_check_branch
    %30 = sbr.rel (0) target = $region9
  $region8: #{model_forward.1} parent=0 // pred_region
    _
  $region9: #{model_forward.1} parent=0 // pred_fallthru
    _
  // Predicated region
  $region10: #{model_forward.1} parent=0 // pred_check
    _
  $region11: #{model_forward.1} parent=0 // pred_check_branch
    %32 = sbr.rel (0) target = $region13
  $region12: #{model_forward.1} parent=0 // pred_region
    _
  $region13: #{model_forward.1} parent=0 // pred_fallthru
    _
  // Predicated region
  $region14: #{model_forward.1} parent=0 // pred_check
    _
  $region15: #{model_forward.1} parent=0 // pred_check_branch
    %34 = sbr.rel (0) target = $region17
  $region16: #{model_forward.1} parent=0 // pred_region
    _
  $region17: #{model_forward.1} parent=0 // pred_fallthru
    _
  // Predicated region
  $region18: #{model_forward.1} parent=0 // pred_check
    _
  $region19: #{model_forward.1} parent=0 // pred_check_branch
    %36 = sbr.rel (0) target = $region21
  $region20: #{model_forward.1} parent=0 // pred_region
    _
  $region21: #{model_forward.1} parent=0 // pred_fallthru
    _
  // Predicated region
  $region22: #{model_forward.1} parent=0 // pred_check
    _
  $region23: #{model_forward.1} parent=0 // pred_check_branch
    %38 = sbr.rel (0) target = $region25
  $region24: #{model_forward.1} parent=0 // pred_region
    _
  $region25: #{model_forward.1} parent=0 // pred_fallthru
    _
  // Predicated region
  $region26: #{model_forward.1} parent=0 // pred_check
    _
  $region27: #{model_forward.1} parent=0 // pred_check_branch
    %40 = sbr.rel (0) target = $region29
  $region28: #{model_forward.1} parent=0 // pred_region
    _
  $region29: #{model_forward.1} parent=0 // pred_fallthru
    _
  // Predicated region
  $region30: #{model_forward.1} parent=0 // pred_check
    _
  $region31: #{model_forward.1} parent=0 // pred_check_branch
    %42 = sbr.rel (0) target = $region33
  $region32: #{model_forward.1} parent=0 // pred_region
    _
  $region33: #{model_forward.1} parent=0 // pred_fallthru
    _
  // Predicated region
  $region34: #{model_forward.1} parent=0 // pred_check
    _
  $region35: #{model_forward.1} parent=0 // pred_check_branch
    %44 = sbr.rel (0) target = $region37
  $region36: #{model_forward.1} parent=0 // pred_region
    _
  $region37: #{model_forward.1} parent=0 // pred_fallthru
    _
  // Predicated region
  $region38: #{model_forward.1} parent=0 // pred_check
    _
  $region39: #{model_forward.1} parent=0 // pred_check_branch
    %46 = sbr.rel (0) target = $region41
  $region40: #{model_forward.1} parent=0 // pred_region
    _
  $region41: #{model_forward.1} parent=0 // pred_fallthru
    _
  // Predicated region
  $region42: #{model_forward.1} parent=0 // pred_check
    _
  $region43: #{model_forward.1} parent=0 // pred_check_branch
    %48 = sbr.rel (0) target = $region45
  $region44: #{model_forward.1} parent=0 // pred_region
    _
  $region45: #{model_forward.1} parent=0 // pred_fallthru
    _
  // Predicated region
  $region46: #{model_forward.1} parent=0 // pred_check
    _
  $region47: #{model_forward.1} parent=0 // pred_check_branch
    %50 = sbr.rel (0) target = $region49
  $region48: #{model_forward.1} parent=0 // pred_region
    _
  $region49: #{model_forward.1} parent=0 // pred_fallthru
    _
  // Predicated region
  $region50: #{model_forward.1} parent=0 // pred_check
    _
  $region51: #{model_forward.1} parent=0 // pred_check_branch
    %52 = sbr.rel (0) target = $region53
  $region52: #{model_forward.1} parent=0 // pred_region
    _
  $region53: #{model_forward.1} parent=0 // pred_fallthru
    _
  // Predicated region
  $region54: #{model_forward.1} parent=0 // pred_check
    _
  $region55: #{model_forward.1} parent=0 // pred_check_branch
    %54 = sbr.rel (0) target = $region57
  $region56: #{model_forward.1} parent=0 // pred_region
    _
  $region57: #{model_forward.1} parent=0 // pred_fallthru
    _
  // Predicated region
  $region58: #{model_forward.1} parent=0 // pred_check
    _
  $region59: #{model_forward.1} parent=0 // pred_check_branch
    %56 = sbr.rel (0) target = $region61
  $region60: #{model_forward.1} parent=0 // pred_region
    _
  $region61: #{model_forward.1} parent=0 // pred_fallthru
    _
  // Predicated region
  $region62: #{model_forward.1} parent=0 // pred_check
    _
  $region63: #{model_forward.1} parent=0 // pred_check_branch
    %58 = sbr.rel (0) target = $region65
  $region64: #{model_forward.1} parent=0 // pred_region
    _
  $region65: #{model_forward.1} parent=0 // pred_fallthru
    _
  // Predicated region
  $region66: #{model_forward.1} parent=0 // pred_check
    _
  $region67: #{model_forward.1} parent=0 // pred_check_branch
    %60 = sbr.rel (0) target = $region69
  $region68: #{model_forward.1} parent=0 // pred_region
    _
  $region69: #{model_forward.1} parent=0 // pred_fallthru
    _
  // Predicated region
  $region70: #{model_forward.1} parent=0 // pred_check
    _
  $region71: #{model_forward.1} parent=0 // pred_check_branch
    %62 = sbr.rel (0) target = $region73
  $region72: #{model_forward.1} parent=0 // pred_region
    _
  $region73: #{model_forward.1} parent=0 // pred_fallthru
    _
  // Predicated region
  $region74: #{model_forward.1} parent=0 // pred_check
    _
  $region75: #{model_forward.1} parent=0 // pred_check_branch
    %64 = sbr.rel (0) target = $region77
  $region76: #{model_forward.1} parent=0 // pred_region
    _
  $region77: #{model_forward.1} parent=0 // pred_fallthru
    _
  // Predicated region
  $region78: #{model_forward.1} parent=0 // pred_check
    _
  $region79: #{model_forward.1} parent=0 // pred_check_branch
    %66 = sbr.rel (0) target = $region81
  $region80: #{model_forward.1} parent=0 // pred_region
    _
  $region81: #{model_forward.1} parent=0 // pred_fallthru
    _
  // Predicated region
  $region82: #{model_forward.1} parent=0 // pred_check
    _
  $region83: #{model_forward.1} parent=0 // pred_check_branch
    %68 = sbr.rel (0) target = $region85
  $region84: #{model_forward.1} parent=0 // pred_region
    _
  $region85: #{model_forward.1} parent=0 // pred_fallthru
    _
  // Predicated region
  $region86: #{model_forward.1} parent=0 // pred_check
    _
  $region87: #{model_forward.1} parent=0 // pred_check_branch
    %70 = sbr.rel (0) target = $region89
  $region88: #{model_forward.1} parent=0 // pred_region
    _
  $region89: #{model_forward.1} parent=0 // pred_fallthru
    _
  %v71 = vld [vmem:[%s1] sm:$0xff]
  %v72 = vld [vmem:[%s1 + $0x8] sm:$0xff]
  %v73 = vld [vmem:[%s1 + $0x10] sm:$0xff]
  %v74 = vld [vmem:[%s1 + $0x18] sm:$0xff]
  %v75 = vld [vmem:[%s1 + $0x20] sm:$0xff]
  %v76 = vld [vmem:[%s1 + $0x28] sm:$0xff]
  %v77 = vld [vmem:[%s1 + $0x30] sm:$0xff]
  %v78 = vld [vmem:[%s1 + $0x38] sm:$0xff]
  %v79 = vld [vmem:[%s3] sm:$0xff]
  %v80 = vld [vmem:[%s3 + $0x8] sm:$0xff]
  %v81 = vld [vmem:[%s2] sm:$0xff]
  %v82 = vld [vmem:[%s2 + $0x8] sm:$0xff]
  %v83 = vld [vmem:[%s2 + $0x10] sm:$0xff]
  %v84 = vld [vmem:[%s2 + $0x18] sm:$0xff]
  %v85 = vld [vmem:[%s2 + $0x20] sm:$0xff]
  %v86 = vld [vmem:[%s2 + $0x28] sm:$0xff]
  %v87 = vld [vmem:[%s2 + $0x30] sm:$0xff]
  %v88 = vld [vmem:[%s2 + $0x38] sm:$0xff]
  %v89 = vld [vmem:[%s4] sm:$0xff]
  %v90 = vld [vmem:[%s4 + $0x8] sm:$0xff]
  %vm91 = vcmask 130048
  %v93 = vsel %vm91, %v81, 0
  %v96 = vsel %vm91, %v82, 0
  %v99 = vsel %vm91, %v83, 0
  %v102 = vsel %vm91, %v84, 0
  %v105 = vsel %vm91, %v85, 0
  %v108 = vsel %vm91, %v86, 0
  %v111 = vsel %vm91, %v87, 0
  %v114 = vsel %vm91, %v88, 0
  %116 = vmatpush.msra.mxu0 0.0
  %117 = vmatpush.msra.mxu0 0.0
  %118 = vmatpush.msra.mxu0 0.0
  %119 = vmatpush.msra.mxu0 0.0
  %120 = vmatpush.msra.mxu0 0.0
  %121 = vmatpush.msra.mxu0 0.0
  %122 = vmatpush.msra.mxu0 0.0
  %123 = vmatpush.msra.mxu0 0.0
  %124 = vmatpush.msra.mxu0 0.0
  %125 = vmatpush.msra.mxu0 0.0
  %126 = vmatpush.msra.mxu0 0.0
  %127 = vmatpush.msra.mxu0 0.0
  %128 = vmatpush.msra.mxu0 0.0
  %129 = vmatpush.msra.mxu0 0.0
  %130 = vmatpush.msra.mxu0 %v90
  %131 = vmatpush.msra.mxu0 %v89
  %132 = vmatmul.f32.gmra.mxu0 %v93
  %v133 = vpop.f32.mrf.mxu0
  %v134 = vadd.f32 0.0, %v133
  %135 = vmatmul.f32.gmra.mxu0 %v96
  %v136 = vpop.f32.mrf.mxu0
  %v137 = vadd.f32 0.0, %v136
  %138 = vmatmul.f32.gmra.mxu0 %v99
  %v139 = vpop.f32.mrf.mxu0
  %v140 = vadd.f32 0.0, %v139
  %141 = vmatmul.f32.gmra.mxu0 %v102
  %v142 = vpop.f32.mrf.mxu0
  %v143 = vadd.f32 0.0, %v142
  %144 = vmatmul.f32.gmra.mxu0 %v105
  %v145 = vpop.f32.mrf.mxu0
  %v146 = vadd.f32 0.0, %v145
  %147 = vmatmul.f32.gmra.mxu0 %v108
  %v148 = vpop.f32.mrf.mxu0
  %v149 = vadd.f32 0.0, %v148
  %150 = vmatmul.f32.gmra.mxu0 %v111
  %v151 = vpop.f32.mrf.mxu0
  %v152 = vadd.f32 0.0, %v151
  %153 = vmatmul.f32.gmra.mxu0 %v114
  %v154 = vpop.f32.mrf.mxu0
  %v155 = vadd.f32 0.0, %v154
  %156 = vdwg.mxu0
  %v158 = vsel %vm91, %v71, 0
  %v161 = vsel %vm91, %v72, 0
  %v164 = vsel %vm91, %v73, 0
  %v167 = vsel %vm91, %v74, 0
  %v170 = vsel %vm91, %v75, 0
  %v173 = vsel %vm91, %v76, 0
  %v176 = vsel %vm91, %v77, 0
  %v179 = vsel %vm91, %v78, 0
  %181 = vmatpush.msra.mxu0 0.0
  %182 = vmatpush.msra.mxu0 0.0
  %183 = vmatpush.msra.mxu0 0.0
  %184 = vmatpush.msra.mxu0 0.0
  %185 = vmatpush.msra.mxu0 0.0
  %186 = vmatpush.msra.mxu0 0.0
  %187 = vmatpush.msra.mxu0 0.0
  %188 = vmatpush.msra.mxu0 0.0
  %189 = vmatpush.msra.mxu0 0.0
  %190 = vmatpush.msra.mxu0 0.0
  %191 = vmatpush.msra.mxu0 0.0
  %192 = vmatpush.msra.mxu0 0.0
  %193 = vmatpush.msra.mxu0 0.0
  %194 = vmatpush.msra.mxu0 0.0
  %195 = vmatpush.msra.mxu0 %v80
  %196 = vmatpush.msra.mxu0 %v79
  %197 = vmatmul.f32.gmra.mxu0 %v158
  %v198 = vpop.f32.mrf.mxu0
  %v199 = vadd.f32 %v134, %v198
  %200 = vmatmul.f32.gmra.mxu0 %v161
  %v201 = vpop.f32.mrf.mxu0
  %v202 = vadd.f32 %v137, %v201
  %203 = vmatmul.f32.gmra.mxu0 %v164
  %v204 = vpop.f32.mrf.mxu0
  %v205 = vadd.f32 %v140, %v204
  %206 = vmatmul.f32.gmra.mxu0 %v167
  %v207 = vpop.f32.mrf.mxu0
  %v208 = vadd.f32 %v143, %v207
  %209 = vmatmul.f32.gmra.mxu0 %v170
  %v210 = vpop.f32.mrf.mxu0
  %v211 = vadd.f32 %v146, %v210
  %212 = vmatmul.f32.gmra.mxu0 %v173
  %v213 = vpop.f32.mrf.mxu0
  %v214 = vadd.f32 %v149, %v213
  %215 = vmatmul.f32.gmra.mxu0 %v176
  %v216 = vpop.f32.mrf.mxu0
  %v217 = vadd.f32 %v152, %v216
  %218 = vmatmul.f32.gmra.mxu0 %v179
  %v219 = vpop.f32.mrf.mxu0
  %v220 = vadd.f32 %v155, %v219
  %221 = vdwg.mxu0
  %v222 = vld [vmem:[%s5] sm:$0x1]
  %v224 = vperm.slane %v222, 0
  %v226 = vadd.f32 %v199, %v224
  %v227 = vadd.f32 %v202, %v224
  %v228 = vadd.f32 %v205, %v224
  %v229 = vadd.f32 %v208, %v224
  %v230 = vadd.f32 %v211, %v224
  %v231 = vadd.f32 %v214, %v224
  %v232 = vadd.f32 %v217, %v224
  %v233 = vadd.f32 %v220, %v224
  %v234 = vmax.f32 %v226, 0.0
  %v235 = vmax.f32 %v227, 0.0
  %v236 = vmax.f32 %v228, 0.0
  %v237 = vmax.f32 %v229, 0.0
  %v238 = vmax.f32 %v230, 0.0
  %v239 = vmax.f32 %v231, 0.0
  %v240 = vmax.f32 %v232, 0.0
  %v241 = vmax.f32 %v233, 0.0
  %v242 = vlaneseq
  %v243 = vand.u32 %v242, 127
  %v244 = vlaneseq
  %v245 = vshrl.u32 %v244, 7
  %v246 = vadd.s32 %v245, 8
  %v247 = vadd.s32 %v245, 16
  %v248 = vadd.s32 %v245, 24
  %v249 = vadd.s32 %v245, 32
  %v250 = vadd.s32 %v245, 40
  %v251 = vadd.s32 %v245, 48
  %v252 = vadd.s32 %v245, 56
  %v253 = vshra.s32 %v245, 3
  %v254 = vshra.s32 %v246, 3
  %v255 = vshra.s32 %v247, 3
  %v256 = vshra.s32 %v248, 3
  %v257 = vshra.s32 %v249, 3
  %v258 = vshra.s32 %v250, 3
  %v259 = vshra.s32 %v251, 3
  %v260 = vshra.s32 %v252, 3
  %v261 = vshra.s32 %v243, 3
  %vm262 = vcmp.eq.s32.totalorder %v253, %v261
  %vm263 = vcmp.eq.s32.totalorder %v254, %v261
  %vm264 = vcmp.eq.s32.totalorder %v255, %v261
  %vm265 = vcmp.eq.s32.totalorder %v256, %v261
  %vm266 = vcmp.eq.s32.totalorder %v257, %v261
  %vm267 = vcmp.eq.s32.totalorder %v258, %v261
  %vm268 = vcmp.eq.s32.totalorder %v259, %v261
  %vm269 = vcmp.eq.s32.totalorder %v260, %v261
  %v270 = vsel %vm262, 0.0, -1e+30
  %v271 = vsel %vm263, 0.0, -1e+30
  %v272 = vsel %vm264, 0.0, -1e+30
  %v273 = vsel %vm265, 0.0, -1e+30
  %v274 = vsel %vm266, 0.0, -1e+30
  %v275 = vsel %vm267, 0.0, -1e+30
  %v276 = vsel %vm268, 0.0, -1e+30
  %v277 = vsel %vm269, 0.0, -1e+30
  %v278 = vld [vmem:[%s6] sm:$0xff]
  %v279 = vld [vmem:[%s6 + $0x8] sm:$0xff]
  %v280 = vld [vmem:[%s6 + $0x10] sm:$0xff]
  %v281 = vld [vmem:[%s6 + $0x18] sm:$0xff]
  %v282 = vld [vmem:[%s7] sm:$0x1]
  %v284 = vperm.slane %v282, 0
  %vm286 = vcmask 261120
  %v288 = vsel %vm286, %v234, 0
  %v291 = vsel %vm286, %v235, 0
  %v294 = vsel %vm286, %v236, 0
  %v297 = vsel %vm286, %v237, 0
  %v300 = vsel %vm286, %v238, 0
  %v303 = vsel %vm286, %v239, 0
  %v306 = vsel %vm286, %v240, 0
  %v309 = vsel %vm286, %v241, 0
  %311 = vmatpush.msra.mxu0 0.0
  %312 = vmatpush.msra.mxu0 0.0
  %313 = vmatpush.msra.mxu0 0.0
  %314 = vmatpush.msra.mxu0 0.0
  %315 = vmatpush.msra.mxu0 0.0
  %316 = vmatpush.msra.mxu0 0.0
  %317 = vmatpush.msra.mxu0 0.0
  %318 = vmatpush.msra.mxu0 0.0
  %319 = vmatpush.msra.mxu0 0.0
  %320 = vmatpush.msra.mxu0 0.0
  %321 = vmatpush.msra.mxu0 0.0
  %322 = vmatpush.msra.mxu0 0.0
  %323 = vmatpush.msra.mxu0 %v281
  %324 = vmatpush.msra.mxu0 %v280
  %325 = vmatpush.msra.mxu0 %v279
  %326 = vmatpush.msra.mxu0 %v278
  %327 = vmatmul.f32.gmra.mxu0 %v288
  %v328 = vpop.f32.mrf.mxu0
  %v329 = vadd.f32 %v284, %v328
  %330 = vmatmul.f32.gmra.mxu0 %v291
  %v331 = vpop.f32.mrf.mxu0
  %v332 = vadd.f32 %v284, %v331
  %333 = vmatmul.f32.gmra.mxu0 %v294
  %v334 = vpop.f32.mrf.mxu0
  %v335 = vadd.f32 %v284, %v334
  %336 = vmatmul.f32.gmra.mxu0 %v297
  %v337 = vpop.f32.mrf.mxu0
  %v338 = vadd.f32 %v284, %v337
  %339 = vmatmul.f32.gmra.mxu0 %v300
  %v340 = vpop.f32.mrf.mxu0
  %v341 = vadd.f32 %v284, %v340
  %342 = vmatmul.f32.gmra.mxu0 %v303
  %v343 = vpop.f32.mrf.mxu0
  %v344 = vadd.f32 %v284, %v343
  %345 = vmatmul.f32.gmra.mxu0 %v306
  %v346 = vpop.f32.mrf.mxu0
  %v347 = vadd.f32 %v284, %v346
  %348 = vmatmul.f32.gmra.mxu0 %v309
  %v349 = vpop.f32.mrf.mxu0
  %v350 = vadd.f32 %v284, %v349
  %351 = vdwg.mxu0
  %v352 = vld [vmem:[%s8] sm:$0xff]
  %v353 = vld [vmem:[%s8 + $0x8] sm:$0xff]
  %v354 = vld [vmem:[%s8 + $0x10] sm:$0xff]
  %v355 = vld [vmem:[%s8 + $0x18] sm:$0xff]
  %v356 = vld [vmem:[%s9] sm:$0x1]
  %v358 = vperm.slane %v356, 0
  %360 = vmatpush.msra.mxu0 0.0
  %361 = vmatpush.msra.mxu0 0.0
  %362 = vmatpush.msra.mxu0 0.0
  %363 = vmatpush.msra.mxu0 0.0
  %364 = vmatpush.msra.mxu0 0.0
  %365 = vmatpush.msra.mxu0 0.0
  %366 = vmatpush.msra.mxu0 0.0
  %367 = vmatpush.msra.mxu0 0.0
  %368 = vmatpush.msra.mxu0 0.0
  %369 = vmatpush.msra.mxu0 0.0
  %370 = vmatpush.msra.mxu0 0.0
  %371 = vmatpush.msra.mxu0 0.0
  %372 = vmatpush.msra.mxu0 %v355
  %373 = vmatpush.msra.mxu0 %v354
  %374 = vmatpush.msra.mxu0 %v353
  %375 = vmatpush.msra.mxu0 %v352
  %376 = vmatmul.f32.gmra.mxu0 %v288
  %v377 = vpop.f32.mrf.mxu0
  %v378 = vadd.f32 %v358, %v377
  %379 = vmatmul.f32.gmra.mxu0 %v291
  %v380 = vpop.f32.mrf.mxu0
  %v381 = vadd.f32 %v358, %v380
  %382 = vmatmul.f32.gmra.mxu0 %v294
  %v383 = vpop.f32.mrf.mxu0
  %v384 = vadd.f32 %v358, %v383
  %385 = vmatmul.f32.gmra.mxu0 %v297
  %v386 = vpop.f32.mrf.mxu0
  %v387 = vadd.f32 %v358, %v386
  %388 = vmatmul.f32.gmra.mxu0 %v300
  %v389 = vpop.f32.mrf.mxu0
  %v390 = vadd.f32 %v358, %v389
  %391 = vmatmul.f32.gmra.mxu0 %v303
  %v392 = vpop.f32.mrf.mxu0
  %v393 = vadd.f32 %v358, %v392
  %394 = vmatmul.f32.gmra.mxu0 %v306
  %v395 = vpop.f32.mrf.mxu0
  %v396 = vadd.f32 %v358, %v395
  %397 = vmatmul.f32.gmra.mxu0 %v309
  %v398 = vpop.f32.mrf.mxu0
  %v399 = vadd.f32 %v358, %v398
  %400 = vdwg.mxu0
  %v401 = vld [vmem:[%s10] sm:$0xff]
  %v402 = vld [vmem:[%s10 + $0x8] sm:$0xff]
  %v403 = vld [vmem:[%s10 + $0x10] sm:$0xff]
  %v404 = vld [vmem:[%s10 + $0x18] sm:$0xff]
  %v405 = vld [vmem:[%s11] sm:$0x1]
  %v407 = vperm.slane %v405, 0
  %409 = vmatpush.msra.mxu0 0.0
  %410 = vmatpush.msra.mxu0 0.0
  %411 = vmatpush.msra.mxu0 0.0
  %412 = vmatpush.msra.mxu0 0.0
  %413 = vmatpush.msra.mxu0 0.0
  %414 = vmatpush.msra.mxu0 0.0
  %415 = vmatpush.msra.mxu0 0.0
  %416 = vmatpush.msra.mxu0 0.0
  %417 = vmatpush.msra.mxu0 0.0
  %418 = vmatpush.msra.mxu0 0.0
  %419 = vmatpush.msra.mxu0 0.0
  %420 = vmatpush.msra.mxu0 0.0
  %421 = vmatpush.msra.mxu0 %v404
  %422 = vmatpush.msra.mxu0 %v403
  %423 = vmatpush.msra.mxu0 %v402
  %424 = vmatpush.msra.mxu0 %v401
  %425 = vmatmul.f32.gmra.mxu0 %v288
  %v426 = vpop.f32.mrf.mxu0
  %v427 = vadd.f32 %v407, %v426
  %428 = vmatmul.f32.gmra.mxu0 %v291
  %v429 = vpop.f32.mrf.mxu0
  %v430 = vadd.f32 %v407, %v429
  %431 = vmatmul.f32.gmra.mxu0 %v294
  %v432 = vpop.f32.mrf.mxu0
  %v433 = vadd.f32 %v407, %v432
  %434 = vmatmul.f32.gmra.mxu0 %v297
  %v435 = vpop.f32.mrf.mxu0
  %v436 = vadd.f32 %v407, %v435
  %437 = vmatmul.f32.gmra.mxu0 %v300
  %v438 = vpop.f32.mrf.mxu0
  %v439 = vadd.f32 %v407, %v438
  %440 = vmatmul.f32.gmra.mxu0 %v303
  %v441 = vpop.f32.mrf.mxu0
  %v442 = vadd.f32 %v407, %v441
  %443 = vmatmul.f32.gmra.mxu0 %v306
  %v444 = vpop.f32.mrf.mxu0
  %v445 = vadd.f32 %v407, %v444
  %446 = vmatmul.f32.gmra.mxu0 %v309
  %v447 = vpop.f32.mrf.mxu0
  %v448 = vadd.f32 %v407, %v447
  %449 = vdwg.mxu0
  %v451 = vsel %vm286, %v329, 0
  %v454 = vsel %vm286, %v332, 0
  %v457 = vsel %vm286, %v335, 0
  %v460 = vsel %vm286, %v338, 0
  %v463 = vsel %vm286, %v341, 0
  %v466 = vsel %vm286, %v344, 0
  %v469 = vsel %vm286, %v347, 0
  %v472 = vsel %vm286, %v350, 0
  %v475 = vsel %vm286, %v378, 0
  %v478 = vsel %vm286, %v381, 0
  %v481 = vsel %vm286, %v384, 0
  %v484 = vsel %vm286, %v387, 0
  %v487 = vsel %vm286, %v390, 0
  %v490 = vsel %vm286, %v393, 0
  %v493 = vsel %vm286, %v396, 0
  %v496 = vsel %vm286, %v399, 0
  %498 = vmatpush.xpose.msra.mxu0 0.0
  %499 = vmatpush.xpose.msra.mxu0 0.0
  %500 = vmatpush.xpose.msra.mxu0 0.0
  %501 = vmatpush.xpose.msra.mxu0 0.0
  %502 = vmatpush.xpose.msra.mxu0 0.0
  %503 = vmatpush.xpose.msra.mxu0 0.0
  %504 = vmatpush.xpose.msra.mxu0 0.0
  %505 = vmatpush.xpose.msra.mxu0 0.0
  %506 = vmatpush.xpose.msra.mxu0 %v496
  %507 = vmatpush.xpose.msra.mxu0 %v493
  %508 = vmatpush.xpose.msra.mxu0 %v490
  %509 = vmatpush.xpose.msra.mxu0 %v487
  %510 = vmatpush.xpose.msra.mxu0 %v484
  %511 = vmatpush.xpose.msra.mxu0 %v481
  %512 = vmatpush.xpose.msra.mxu0 %v478
  %513 = vmatpush.xpose.msra.mxu0 %v475
  %514 = vmatmul.f32.gmra.mxu0 %v451
  %v515 = vpop.f32.mrf.mxu0
  %v516 = vadd.f32 %v270, %v515
  %517 = vmatmul.f32.gmra.mxu0 %v454
  %v518 = vpop.f32.mrf.mxu0
  %v519 = vadd.f32 %v271, %v518
  %520 = vmatmul.f32.gmra.mxu0 %v457
  %v521 = vpop.f32.mrf.mxu0
  %v522 = vadd.f32 %v272, %v521
  %523 = vmatmul.f32.gmra.mxu0 %v460
  %v524 = vpop.f32.mrf.mxu0
  %v525 = vadd.f32 %v273, %v524
  %526 = vmatmul.f32.gmra.mxu0 %v463
  %v527 = vpop.f32.mrf.mxu0
  %v528 = vadd.f32 %v274, %v527
  %529 = vmatmul.f32.gmra.mxu0 %v466
  %v530 = vpop.f32.mrf.mxu0
  %v531 = vadd.f32 %v275, %v530
  %532 = vmatmul.f32.gmra.mxu0 %v469
  %v533 = vpop.f32.mrf.mxu0
  %v534 = vadd.f32 %v276, %v533
  %535 = vmatmul.f32.gmra.mxu0 %v472
  %v536 = vpop.f32.mrf.mxu0
  %v537 = vadd.f32 %v277, %v536
  %538 = vdwg.mxu0
  %vm539 = vcmask 523264
  %v540 = vsel %vm539, %v516, -inf
  %541 = vmax.xlane.f32.xlu0 %v540
  %v542 = vpop.xlane.xlu0 %541
  %v543 = vsel %vm539, %v519, -inf
  %544 = vmax.xlane.f32.xlu0 %v543
  %v545 = vpop.xlane.xlu0 %544
  %v546 = vsel %vm539, %v522, -inf
  %547 = vmax.xlane.f32.xlu0 %v546
  %v548 = vpop.xlane.xlu0 %547
  %v549 = vsel %vm539, %v525, -inf
  %550 = vmax.xlane.f32.xlu0 %v549
  %v551 = vpop.xlane.xlu0 %550
  %v552 = vsel %vm539, %v528, -inf
  %553 = vmax.xlane.f32.xlu0 %v552
  %v554 = vpop.xlane.xlu0 %553
  %v555 = vsel %vm539, %v531, -inf
  %556 = vmax.xlane.f32.xlu0 %v555
  %v557 = vpop.xlane.xlu0 %556
  %v558 = vsel %vm539, %v534, -inf
  %559 = vmax.xlane.f32.xlu0 %v558
  %v560 = vpop.xlane.xlu0 %559
  %v561 = vsel %vm539, %v537, -inf
  %562 = vmax.xlane.f32.xlu0 %v561
  %v563 = vpop.xlane.xlu0 %562
  %v564 = vsub.f32 %v516, %v542
  %v565 = vsub.f32 %v519, %v545
  %v566 = vsub.f32 %v522, %v548
  %v567 = vsub.f32 %v525, %v551
  %v568 = vsub.f32 %v528, %v554
  %v569 = vsub.f32 %v531, %v557
  %v570 = vsub.f32 %v534, %v560
  %v571 = vsub.f32 %v537, %v563
  %v572 = vmul.f32 %v564, 1.442695
  %v573 = vpow.pop %v572
  %v574 = vmul.f32 %v565, 1.442695
  %v575 = vpow.pop %v574
  %v576 = vmul.f32 %v566, 1.442695
  %v577 = vpow.pop %v576
  %v578 = vmul.f32 %v567, 1.442695
  %v579 = vpow.pop %v578
  %v580 = vmul.f32 %v568, 1.442695
  %v581 = vpow.pop %v580
  %v582 = vmul.f32 %v569, 1.442695
  %v583 = vpow.pop %v582
  %v584 = vmul.f32 %v570, 1.442695
  %v585 = vpow.pop %v584
  %v586 = vmul.f32 %v571, 1.442695
  %v587 = vpow.pop %v586
  %v588 = vsel %vm539, %v573, 0.0
  %589 = vadd.xlane.f32.xlu0 %v588
  %v590 = vpop.xlane.xlu0 %589
  %v591 = vsel %vm539, %v575, 0.0
  %592 = vadd.xlane.f32.xlu0 %v591
  %v593 = vpop.xlane.xlu0 %592
  %v594 = vsel %vm539, %v577, 0.0
  %595 = vadd.xlane.f32.xlu0 %v594
  %v596 = vpop.xlane.xlu0 %595
  %v597 = vsel %vm539, %v579, 0.0
  %598 = vadd.xlane.f32.xlu0 %v597
  %v599 = vpop.xlane.xlu0 %598
  %v600 = vsel %vm539, %v581, 0.0
  %601 = vadd.xlane.f32.xlu0 %v600
  %v602 = vpop.xlane.xlu0 %601
  %v603 = vsel %vm539, %v583, 0.0
  %604 = vadd.xlane.f32.xlu0 %v603
  %v605 = vpop.xlane.xlu0 %604
  %v606 = vsel %vm539, %v585, 0.0
  %607 = vadd.xlane.f32.xlu0 %v606
  %v608 = vpop.xlane.xlu0 %607
  %v609 = vsel %vm539, %v587, 0.0
  %610 = vadd.xlane.f32.xlu0 %v609
  %v611 = vpop.xlane.xlu0 %610
  %v612 = vrcp.pop %v590
  %v613 = vmul.f32 %v590, %v612
  %v614 = vsub.f32 1.0, %v613
  %v615 = vmul.f32 %v612, %v614
  %v616 = vadd.f32 %v612, %v615
  %vm617 = vweird.f32 %v590
  %vm618 = vweird.f32 %v612
  %vm619 = vmor %vm617, %vm618
  %v620 = vsel %vm619, %v612, %v616
  %v621 = vand.u32 2147483647, %v590
  %vm622 = vcmp.eq.f32.partialorder %v621, 8.507059e+37
  %v623 = vand.u32 %v590, 2147483648
  %v624 = vor.u32 1.1754944e-38, %v623
  %v625 = vsel %vm622, %v624, %v620
  %v626 = vrcp.pop %v593
  %v627 = vmul.f32 %v593, %v626
  %v628 = vsub.f32 1.0, %v627
  %v629 = vmul.f32 %v626, %v628
  %v630 = vadd.f32 %v626, %v629
  %vm631 = vweird.f32 %v593
  %vm632 = vweird.f32 %v626
  %vm633 = vmor %vm631, %vm632
  %v634 = vsel %vm633, %v626, %v630
  %v635 = vand.u32 2147483647, %v593
  %vm636 = vcmp.eq.f32.partialorder %v635, 8.507059e+37
  %v637 = vand.u32 %v593, 2147483648
  %v638 = vor.u32 1.1754944e-38, %v637
  %v639 = vsel %vm636, %v638, %v634
  %v640 = vrcp.pop %v596
  %v641 = vmul.f32 %v596, %v640
  %v642 = vsub.f32 1.0, %v641
  %v643 = vmul.f32 %v640, %v642
  %v644 = vadd.f32 %v640, %v643
  %vm645 = vweird.f32 %v596
  %vm646 = vweird.f32 %v640
  %vm647 = vmor %vm645, %vm646
  %v648 = vsel %vm647, %v640, %v644
  %v649 = vand.u32 2147483647, %v596
  %vm650 = vcmp.eq.f32.partialorder %v649, 8.507059e+37
  %v651 = vand.u32 %v596, 2147483648
  %v652 = vor.u32 1.1754944e-38, %v651
  %v653 = vsel %vm650, %v652, %v648
  %v654 = vrcp.pop %v599
  %v655 = vmul.f32 %v599, %v654
  %v656 = vsub.f32 1.0, %v655
  %v657 = vmul.f32 %v654, %v656
  %v658 = vadd.f32 %v654, %v657
  %vm659 = vweird.f32 %v599
  %vm660 = vweird.f32 %v654
  %vm661 = vmor %vm659, %vm660
  %v662 = vsel %vm661, %v654, %v658
  %v663 = vand.u32 2147483647, %v599
  %vm664 = vcmp.eq.f32.partialorder %v663, 8.507059e+37
  %v665 = vand.u32 %v599, 2147483648
  %v666 = vor.u32 1.1754944e-38, %v665
  %v667 = vsel %vm664, %v666, %v662
  %v668 = vrcp.pop %v602
  %v669 = vmul.f32 %v602, %v668
  %v670 = vsub.f32 1.0, %v669
  %v671 = vmul.f32 %v668, %v670
  %v672 = vadd.f32 %v668, %v671
  %vm673 = vweird.f32 %v602
  %vm674 = vweird.f32 %v668
  %vm675 = vmor %vm673, %vm674
  %v676 = vsel %vm675, %v668, %v672
  %v677 = vand.u32 2147483647, %v602
  %vm678 = vcmp.eq.f32.partialorder %v677, 8.507059e+37
  %v679 = vand.u32 %v602, 2147483648
  %v680 = vor.u32 1.1754944e-38, %v679
  %v681 = vsel %vm678, %v680, %v676
  %v682 = vrcp.pop %v605
  %v683 = vmul.f32 %v605, %v682
  %v684 = vsub.f32 1.0, %v683
  %v685 = vmul.f32 %v682, %v684
  %v686 = vadd.f32 %v682, %v685
  %vm687 = vweird.f32 %v605
  %vm688 = vweird.f32 %v682
  %vm689 = vmor %vm687, %vm688
  %v690 = vsel %vm689, %v682, %v686
  %v691 = vand.u32 2147483647, %v605
  %vm692 = vcmp.eq.f32.partialorder %v691, 8.507059e+37
  %v693 = vand.u32 %v605, 2147483648
  %v694 = vor.u32 1.1754944e-38, %v693
  %v695 = vsel %vm692, %v694, %v690
  %v696 = vrcp.pop %v608
  %v697 = vmul.f32 %v608, %v696
  %v698 = vsub.f32 1.0, %v697
  %v699 = vmul.f32 %v696, %v698
  %v700 = vadd.f32 %v696, %v699
  %vm701 = vweird.f32 %v608
  %vm702 = vweird.f32 %v696
  %vm703 = vmor %vm701, %vm702
  %v704 = vsel %vm703, %v696, %v700
  %v705 = vand.u32 2147483647, %v608
  %vm706 = vcmp.eq.f32.partialorder %v705, 8.507059e+37
  %v707 = vand.u32 %v608, 2147483648
  %v708 = vor.u32 1.1754944e-38, %v707
  %v709 = vsel %vm706, %v708, %v704
  %v710 = vrcp.pop %v611
  %v711 = vmul.f32 %v611, %v710
  %v712 = vsub.f32 1.0, %v711
  %v713 = vmul.f32 %v710, %v712
  %v714 = vadd.f32 %v710, %v713
  %vm715 = vweird.f32 %v611
  %vm716 = vweird.f32 %v710
  %vm717 = vmor %vm715, %vm716
  %v718 = vsel %vm717, %v710, %v714
  %v719 = vand.u32 2147483647, %v611
  %vm720 = vcmp.eq.f32.partialorder %v719, 8.507059e+37
  %v721 = vand.u32 %v611, 2147483648
  %v722 = vor.u32 1.1754944e-38, %v721
  %v723 = vsel %vm720, %v722, %v718
  %v724 = vmul.f32 %v573, %v625
  %v725 = vmul.f32 %v575, %v639
  %v726 = vmul.f32 %v577, %v653
  %v727 = vmul.f32 %v579, %v667
  %v728 = vmul.f32 %v581, %v681
  %v729 = vmul.f32 %v583, %v695
  %v730 = vmul.f32 %v585, %v709
  %v731 = vmul.f32 %v587, %v723
  %v733 = vsel %vm539, %v724, 0
  %v736 = vsel %vm539, %v725, 0
  %v739 = vsel %vm539, %v726, 0
  %v742 = vsel %vm539, %v727, 0
  %v745 = vsel %vm539, %v728, 0
  %v748 = vsel %vm539, %v729, 0
  %v751 = vsel %vm539, %v730, 0
  %v754 = vsel %vm539, %v731, 0
  %756 = vmatpush.msra.mxu0 0.0
  %757 = vmatpush.msra.mxu0 0.0
  %758 = vmatpush.msra.mxu0 0.0
  %759 = vmatpush.msra.mxu0 0.0
  %760 = vmatpush.msra.mxu0 0.0
  %761 = vmatpush.msra.mxu0 0.0
  %762 = vmatpush.msra.mxu0 0.0
  %763 = vmatpush.msra.mxu0 0.0
  %764 = vmatpush.msra.mxu0 %v448
  %765 = vmatpush.msra.mxu0 %v445
  %766 = vmatpush.msra.mxu0 %v442
  %767 = vmatpush.msra.mxu0 %v439
  %768 = vmatpush.msra.mxu0 %v436
  %769 = vmatpush.msra.mxu0 %v433
  %770 = vmatpush.msra.mxu0 %v430
  %771 = vmatpush.msra.mxu0 %v427
  %772 = vmatmul.f32.gmra.mxu0 %v733
  %v773 = vpop.f32.mrf.mxu0
  %v774 = vadd.f32 0.0, %v773
  %775 = vmatmul.f32.gmra.mxu0 %v736
  %v776 = vpop.f32.mrf.mxu0
  %v777 = vadd.f32 0.0, %v776
  %778 = vmatmul.f32.gmra.mxu0 %v739
  %v779 = vpop.f32.mrf.mxu0
  %v780 = vadd.f32 0.0, %v779
  %781 = vmatmul.f32.gmra.mxu0 %v742
  %v782 = vpop.f32.mrf.mxu0
  %v783 = vadd.f32 0.0, %v782
  %784 = vmatmul.f32.gmra.mxu0 %v745
  %v785 = vpop.f32.mrf.mxu0
  %v786 = vadd.f32 0.0, %v785
  %787 = vmatmul.f32.gmra.mxu0 %v748
  %v788 = vpop.f32.mrf.mxu0
  %v789 = vadd.f32 0.0, %v788
  %790 = vmatmul.f32.gmra.mxu0 %v751
  %v791 = vpop.f32.mrf.mxu0
  %v792 = vadd.f32 0.0, %v791
  %793 = vmatmul.f32.gmra.mxu0 %v754
  %v794 = vpop.f32.mrf.mxu0
  %v795 = vadd.f32 0.0, %v794
  %796 = vdwg.mxu0
  %v797 = vld [vmem:[%s12] sm:$0xff]
  %v798 = vld [vmem:[%s12 + $0x8] sm:$0xff]
  %v799 = vld [vmem:[%s12 + $0x10] sm:$0xff]
  %v800 = vld [vmem:[%s12 + $0x18] sm:$0xff]
  %v801 = vld [vmem:[%s13] sm:$0x1]
  %v803 = vperm.slane %v801, 0
  %v806 = vsel %vm286, %v774, 0
  %v809 = vsel %vm286, %v777, 0
  %v812 = vsel %vm286, %v780, 0
  %v815 = vsel %vm286, %v783, 0
  %v818 = vsel %vm286, %v786, 0
  %v821 = vsel %vm286, %v789, 0
  %v824 = vsel %vm286, %v792, 0
  %v827 = vsel %vm286, %v795, 0
  %829 = vmatpush.msra.mxu0 0.0
  %830 = vmatpush.msra.mxu0 0.0
  %831 = vmatpush.msra.mxu0 0.0
  %832 = vmatpush.msra.mxu0 0.0
  %833 = vmatpush.msra.mxu0 0.0
  %834 = vmatpush.msra.mxu0 0.0
  %835 = vmatpush.msra.mxu0 0.0
  %836 = vmatpush.msra.mxu0 0.0
  %837 = vmatpush.msra.mxu0 0.0
  %838 = vmatpush.msra.mxu0 0.0
  %839 = vmatpush.msra.mxu0 0.0
  %840 = vmatpush.msra.mxu0 0.0
  %841 = vmatpush.msra.mxu0 %v800
  %842 = vmatpush.msra.mxu0 %v799
  %843 = vmatpush.msra.mxu0 %v798
  %844 = vmatpush.msra.mxu0 %v797
  %845 = vmatmul.f32.gmra.mxu0 %v806
  %v846 = vpop.f32.mrf.mxu0
  %v847 = vadd.f32 %v803, %v846
  %848 = vmatmul.f32.gmra.mxu0 %v809
  %v849 = vpop.f32.mrf.mxu0
  %v850 = vadd.f32 %v803, %v849
  %851 = vmatmul.f32.gmra.mxu0 %v812
  %v852 = vpop.f32.mrf.mxu0
  %v853 = vadd.f32 %v803, %v852
  %854 = vmatmul.f32.gmra.mxu0 %v815
  %v855 = vpop.f32.mrf.mxu0
  %v856 = vadd.f32 %v803, %v855
  %857 = vmatmul.f32.gmra.mxu0 %v818
  %v858 = vpop.f32.mrf.mxu0
  %v859 = vadd.f32 %v803, %v858
  %860 = vmatmul.f32.gmra.mxu0 %v821
  %v861 = vpop.f32.mrf.mxu0
  %v862 = vadd.f32 %v803, %v861
  %863 = vmatmul.f32.gmra.mxu0 %v824
  %v864 = vpop.f32.mrf.mxu0
  %v865 = vadd.f32 %v803, %v864
  %866 = vmatmul.f32.gmra.mxu0 %v827
  %v867 = vpop.f32.mrf.mxu0
  %v868 = vadd.f32 %v803, %v867
  %869 = vdwg.mxu0
  %v870 = vadd.f32 %v234, %v847
  %v871 = vadd.f32 %v235, %v850
  %v872 = vadd.f32 %v236, %v853
  %v873 = vadd.f32 %v237, %v856
  %v874 = vadd.f32 %v238, %v859
  %v875 = vadd.f32 %v239, %v862
  %v876 = vadd.f32 %v240, %v865
  %v877 = vadd.f32 %v241, %v868
  %v878 = vld [vmem:[%s14] sm:$0x1]
  %v879 = vld [vmem:[%s15] sm:$0x1]
  %v880 = vsel %vm286, %v870, 0.0
  %881 = vadd.xlane.f32.xlu0 %v880
  %v882 = vpop.xlane.xlu0 %881
  %v883 = vsel %vm286, %v871, 0.0
  %884 = vadd.xlane.f32.xlu0 %v883
  %v885 = vpop.xlane.xlu0 %884
  %v886 = vsel %vm286, %v872, 0.0
  %887 = vadd.xlane.f32.xlu0 %v886
  %v888 = vpop.xlane.xlu0 %887
  %v889 = vsel %vm286, %v873, 0.0
  %890 = vadd.xlane.f32.xlu0 %v889
  %v891 = vpop.xlane.xlu0 %890
  %v892 = vsel %vm286, %v874, 0.0
  %893 = vadd.xlane.f32.xlu0 %v892
  %v894 = vpop.xlane.xlu0 %893
  %v895 = vsel %vm286, %v875, 0.0
  %896 = vadd.xlane.f32.xlu0 %v895
  %v897 = vpop.xlane.xlu0 %896
  %v898 = vsel %vm286, %v876, 0.0
  %899 = vadd.xlane.f32.xlu0 %v898
  %v900 = vpop.xlane.xlu0 %899
  %v901 = vsel %vm286, %v877, 0.0
  %902 = vadd.xlane.f32.xlu0 %v901
  %v903 = vpop.xlane.xlu0 %902
  %v904 = vrcp.pop 32.0
  %v905 = vmul.f32 32.0, %v904
  %v906 = vsub.f32 1.0, %v905
  %v907 = vmul.f32 %v904, %v906
  %v908 = vadd.f32 %v904, %v907
  %vm909 = vweird.f32 %v904
  %v910 = vsel %vm909, %v904, %v908
  %v911 = vmul.f32 %v882, %v910
  %v912 = vmul.f32 %v885, %v910
  %v913 = vmul.f32 %v888, %v910
  %v914 = vmul.f32 %v891, %v910
  %v915 = vmul.f32 %v894, %v910
  %v916 = vmul.f32 %v897, %v910
  %v917 = vmul.f32 %v900, %v910
  %v918 = vmul.f32 %v903, %v910
  %v919 = vsub.f32 %v870, %v911
  %v920 = vsub.f32 %v871, %v912
  %v921 = vsub.f32 %v872, %v913
  %v922 = vsub.f32 %v873, %v914
  %v923 = vsub.f32 %v874, %v915
  %v924 = vsub.f32 %v875, %v916
  %v925 = vsub.f32 %v876, %v917
  %v926 = vsub.f32 %v877, %v918
  %v927 = vmul.f32 %v919, %v919
  %v928 = vmul.f32 %v920, %v920
  %v929 = vmul.f32 %v921, %v921
  %v930 = vmul.f32 %v922, %v922
  %v931 = vmul.f32 %v923, %v923
  %v932 = vmul.f32 %v924, %v924
  %v933 = vmul.f32 %v925, %v925
  %v934 = vmul.f32 %v926, %v926
  %v935 = vsel %vm286, %v927, 0.0
  %936 = vadd.xlane.f32.xlu0 %v935
  %v937 = vpop.xlane.xlu0 %936
  %v938 = vsel %vm286, %v928, 0.0
  %939 = vadd.xlane.f32.xlu0 %v938
  %v940 = vpop.xlane.xlu0 %939
  %v941 = vsel %vm286, %v929, 0.0
  %942 = vadd.xlane.f32.xlu0 %v941
  %v943 = vpop.xlane.xlu0 %942
  %v944 = vsel %vm286, %v930, 0.0
  %945 = vadd.xlane.f32.xlu0 %v944
  %v946 = vpop.xlane.xlu0 %945
  %v947 = vsel %vm286, %v931, 0.0
  %948 = vadd.xlane.f32.xlu0 %v947
  %v949 = vpop.xlane.xlu0 %948
  %v950 = vsel %vm286, %v932, 0.0
  %951 = vadd.xlane.f32.xlu0 %v950
  %v952 = vpop.xlane.xlu0 %951
  %v953 = vsel %vm286, %v933, 0.0
  %954 = vadd.xlane.f32.xlu0 %v953
  %v955 = vpop.xlane.xlu0 %954
  %v956 = vsel %vm286, %v934, 0.0
  %957 = vadd.xlane.f32.xlu0 %v956
  %v958 = vpop.xlane.xlu0 %957
  %v959 = vmul.f32 %v937, %v910
  %v960 = vmul.f32 %v940, %v910
  %v961 = vmul.f32 %v943, %v910
  %v962 = vmul.f32 %v946, %v910
  %v963 = vmul.f32 %v949, %v910
  %v964 = vmul.f32 %v952, %v910
  %v965 = vmul.f32 %v955, %v910
  %v966 = vmul.f32 %v958, %v910
  %v967 = vadd.f32 %v959, 1e-05
  %v968 = vadd.f32 %v960, 1e-05
  %v969 = vadd.f32 %v961, 1e-05
  %v970 = vadd.f32 %v962, 1e-05
  %v971 = vadd.f32 %v963, 1e-05
  %v972 = vadd.f32 %v964, 1e-05
  %v973 = vadd.f32 %v965, 1e-05
  %v974 = vadd.f32 %v966, 1e-05
  %v975 = vrsqrt.pop %v967
  %v976 = vmul.f32 %v975, %v967
  %v977 = vmul.f32 %v976, %v975
  %v978 = vmul.f32 0.5, %v977
  %v979 = vsub.f32 1.5, %v978
  %v980 = vmul.f32 %v975, %v979
  %vm981 = vweird.f32 %v967
  %vm982 = vweird.f32 %v975
  %vm983 = vmor %vm981, %vm982
  %v984 = vsel %vm983, %v975, %v980
  %v985 = vrsqrt.pop %v968
  %v986 = vmul.f32 %v985, %v968
  %v987 = vmul.f32 %v986, %v985
  %v988 = vmul.f32 0.5, %v987
  %v989 = vsub.f32 1.5, %v988
  %v990 = vmul.f32 %v985, %v989
  %vm991 = vweird.f32 %v968
  %vm992 = vweird.f32 %v985
  %vm993 = vmor %vm991, %vm992
  %v994 = vsel %vm993, %v985, %v990
  %v995 = vrsqrt.pop %v969
  %v996 = vmul.f32 %v995, %v969
  %v997 = vmul.f32 %v996, %v995
  %v998 = vmul.f32 0.5, %v997
  %v999 = vsub.f32 1.5, %v998
  %v1000 = vmul.f32 %v995, %v999
  %vm1001 = vweird.f32 %v969
  %vm1002 = vweird.f32 %v995
  %vm1003 = vmor %vm1001, %vm1002
  %v1004 = vsel %vm1003, %v995, %v1000
  %v1005 = vrsqrt.pop %v970
  %v1006 = vmul.f32 %v1005, %v970
  %v1007 = vmul.f32 %v1006, %v1005
  %v1008 = vmul.f32 0.5, %v1007
  %v1009 = vsub.f32 1.5, %v1008
  %v1010 = vmul.f32 %v1005, %v1009
  %vm1011 = vweird.f32 %v970
  %vm1012 = vweird.f32 %v1005
  %vm1013 = vmor %vm1011, %vm1012
  %v1014 = vsel %vm1013, %v1005, %v1010
  %v1015 = vrsqrt.pop %v971
  %v1016 = vmul.f32 %v1015, %v971
  %v1017 = vmul.f32 %v1016, %v1015
  %v1018 = vmul.f32 0.5, %v1017
  %v1019 = vsub.f32 1.5, %v1018
  %v1020 = vmul.f32 %v1015, %v1019
  %vm1021 = vweird.f32 %v971
  %vm1022 = vweird.f32 %v1015
  %vm1023 = vmor %vm1021, %vm1022
  %v1024 = vsel %vm1023, %v1015, %v1020
  %v1025 = vrsqrt.pop %v972
  %v1026 = vmul.f32 %v1025, %v972
  %v1027 = vmul.f32 %v1026, %v1025
  %v1028 = vmul.f32 0.5, %v1027
  %v1029 = vsub.f32 1.5, %v1028
  %v1030 = vmul.f32 %v1025, %v1029
  %vm1031 = vweird.f32 %v972
  %vm1032 = vweird.f32 %v1025
  %vm1033 = vmor %vm1031, %vm1032
  %v1034 = vsel %vm1033, %v1025, %v1030
  %v1035 = vrsqrt.pop %v973
  %v1036 = vmul.f32 %v1035, %v973
  %v1037 = vmul.f32 %v1036, %v1035
  %v1038 = vmul.f32 0.5, %v1037
  %v1039 = vsub.f32 1.5, %v1038
  %v1040 = vmul.f32 %v1035, %v1039
  %vm1041 = vweird.f32 %v973
  %vm1042 = vweird.f32 %v1035
  %vm1043 = vmor %vm1041, %vm1042
  %v1044 = vsel %vm1043, %v1035, %v1040
  %v1045 = vrsqrt.pop %v974
  %v1046 = vmul.f32 %v1045, %v974
  %v1047 = vmul.f32 %v1046, %v1045
  %v1048 = vmul.f32 0.5, %v1047
  %v1049 = vsub.f32 1.5, %v1048
  %v1050 = vmul.f32 %v1045, %v1049
  %vm1051 = vweird.f32 %v974
  %vm1052 = vweird.f32 %v1045
  %vm1053 = vmor %vm1051, %vm1052
  %v1054 = vsel %vm1053, %v1045, %v1050
  %v1055 = vmul.f32 %v919, %v984
  %v1056 = vmul.f32 %v920, %v994
  %v1057 = vmul.f32 %v921, %v1004
  %v1058 = vmul.f32 %v922, %v1014
  %v1059 = vmul.f32 %v923, %v1024
  %v1060 = vmul.f32 %v924, %v1034
  %v1061 = vmul.f32 %v925, %v1044
  %v1062 = vmul.f32 %v926, %v1054
  %v1064 = vperm.slane %v878, 0
  %v1066 = vmul.f32 %v1055, %v1064
  %v1067 = vmul.f32 %v1056, %v1064
  %v1068 = vmul.f32 %v1057, %v1064
  %v1069 = vmul.f32 %v1058, %v1064
  %v1070 = vmul.f32 %v1059, %v1064
  %v1071 = vmul.f32 %v1060, %v1064
  %v1072 = vmul.f32 %v1061, %v1064
  %v1073 = vmul.f32 %v1062, %v1064
  %v1075 = vperm.slane %v879, 0
  %v1077 = vadd.f32 %v1066, %v1075
  %v1078 = vadd.f32 %v1067, %v1075
  %v1079 = vadd.f32 %v1068, %v1075
  %v1080 = vadd.f32 %v1069, %v1075
  %v1081 = vadd.f32 %v1070, %v1075
  %v1082 = vadd.f32 %v1071, %v1075
  %v1083 = vadd.f32 %v1072, %v1075
  %v1084 = vadd.f32 %v1073, %v1075
  %v1085 = vld [vmem:[%s16] sm:$0xff]
  %v1086 = vld [vmem:[%s16 + $0x8] sm:$0xff]
  %v1087 = vld [vmem:[%s16 + $0x10] sm:$0xff]
  %v1088 = vld [vmem:[%s16 + $0x18] sm:$0xff]
  %v1089 = vld [vmem:[%s17] sm:$0x1]
  %v1091 = vperm.slane %v1089, 0
  %v1094 = vsel %vm286, %v1077, 0
  %v1097 = vsel %vm286, %v1078, 0
  %v1100 = vsel %vm286, %v1079, 0
  %v1103 = vsel %vm286, %v1080, 0
  %v1106 = vsel %vm286, %v1081, 0
  %v1109 = vsel %vm286, %v1082, 0
  %v1112 = vsel %vm286, %v1083, 0
  %v1115 = vsel %vm286, %v1084, 0
  %1117 = vmatpush.msra.mxu0 0.0
  %1118 = vmatpush.msra.mxu0 0.0
  %1119 = vmatpush.msra.mxu0 0.0
  %1120 = vmatpush.msra.mxu0 0.0
  %1121 = vmatpush.msra.mxu0 0.0
  %1122 = vmatpush.msra.mxu0 0.0
  %1123 = vmatpush.msra.mxu0 0.0
  %1124 = vmatpush.msra.mxu0 0.0
  %1125 = vmatpush.msra.mxu0 0.0
  %1126 = vmatpush.msra.mxu0 0.0
  %1127 = vmatpush.msra.mxu0 0.0
  %1128 = vmatpush.msra.mxu0 0.0
  %1129 = vmatpush.msra.mxu0 %v1088
  %1130 = vmatpush.msra.mxu0 %v1087
  %1131 = vmatpush.msra.mxu0 %v1086
  %1132 = vmatpush.msra.mxu0 %v1085
  %1133 = vmatmul.f32.gmra.mxu0 %v1094
  %v1134 = vpop.f32.mrf.mxu0
  %v1135 = vadd.f32 %v1091, %v1134
  %1136 = vmatmul.f32.gmra.mxu0 %v1097
  %v1137 = vpop.f32.mrf.mxu0
  %v1138 = vadd.f32 %v1091, %v1137
  %1139 = vmatmul.f32.gmra.mxu0 %v1100
  %v1140 = vpop.f32.mrf.mxu0
  %v1141 = vadd.f32 %v1091, %v1140
  %1142 = vmatmul.f32.gmra.mxu0 %v1103
  %v1143 = vpop.f32.mrf.mxu0
  %v1144 = vadd.f32 %v1091, %v1143
  %1145 = vmatmul.f32.gmra.mxu0 %v1106
  %v1146 = vpop.f32.mrf.mxu0
  %v1147 = vadd.f32 %v1091, %v1146
  %1148 = vmatmul.f32.gmra.mxu0 %v1109
  %v1149 = vpop.f32.mrf.mxu0
  %v1150 = vadd.f32 %v1091, %v1149
  %1151 = vmatmul.f32.gmra.mxu0 %v1112
  %v1152 = vpop.f32.mrf.mxu0
  %v1153 = vadd.f32 %v1091, %v1152
  %1154 = vmatmul.f32.gmra.mxu0 %v1115
  %v1155 = vpop.f32.mrf.mxu0
  %v1156 = vadd.f32 %v1091, %v1155
  %1157 = vdwg.mxu0
  %v1158 = vmax.f32 %v1135, 0.0
  %v1159 = vmax.f32 %v1138, 0.0
  %v1160 = vmax.f32 %v1141, 0.0
  %v1161 = vmax.f32 %v1144, 0.0
  %v1162 = vmax.f32 %v1147, 0.0
  %v1163 = vmax.f32 %v1150, 0.0
  %v1164 = vmax.f32 %v1153, 0.0
  %v1165 = vmax.f32 %v1156, 0.0
  %v1166 = vld [vmem:[%s18] sm:$0xff]
  %v1167 = vld [vmem:[%s18 + $0x8] sm:$0xff]
  %v1168 = vld [vmem:[%s18 + $0x10] sm:$0xff]
  %v1169 = vld [vmem:[%s18 + $0x18] sm:$0xff]
  %v1170 = vld [vmem:[%s18 + $0x20] sm:$0xff]
  %v1171 = vld [vmem:[%s18 + $0x28] sm:$0xff]
  %v1172 = vld [vmem:[%s18 + $0x30] sm:$0xff]
  %v1173 = vld [vmem:[%s18 + $0x38] sm:$0xff]
  %v1174 = vld [vmem:[%s18 + $0x40] sm:$0xff]
  %v1175 = vld [vmem:[%s18 + $0x48] sm:$0xff]
  %v1176 = vld [vmem:[%s18 + $0x50] sm:$0xff]
  %v1177 = vld [vmem:[%s18 + $0x58] sm:$0xff]
  %v1178 = vld [vmem:[%s18 + $0x60] sm:$0xff]
  %v1179 = vld [vmem:[%s18 + $0x68] sm:$0xff]
  %v1180 = vld [vmem:[%s18 + $0x70] sm:$0xff]
  %v1181 = vld [vmem:[%s18 + $0x78] sm:$0xff]
  %v1182 = vld [vmem:[%s19] sm:$0x1]
  %v1184 = vperm.slane %v1182, 0
  %1186 = vmatpush.msra.mxu0 %v1181
  %1187 = vmatpush.msra.mxu0 %v1180
  %1188 = vmatpush.msra.mxu0 %v1179
  %1189 = vmatpush.msra.mxu0 %v1178
  %1190 = vmatpush.msra.mxu0 %v1177
  %1191 = vmatpush.msra.mxu0 %v1176
  %1192 = vmatpush.msra.mxu0 %v1175
  %1193 = vmatpush.msra.mxu0 %v1174
  %1194 = vmatpush.msra.mxu0 %v1173
  %1195 = vmatpush.msra.mxu0 %v1172
  %1196 = vmatpush.msra.mxu0 %v1171
  %1197 = vmatpush.msra.mxu0 %v1170
  %1198 = vmatpush.msra.mxu0 %v1169
  %1199 = vmatpush.msra.mxu0 %v1168
  %1200 = vmatpush.msra.mxu0 %v1167
  %1201 = vmatpush.msra.mxu0 %v1166
  %1202 = vmatmul.f32.gmra.mxu0 %v1158
  %v1203 = vpop.f32.mrf.mxu0
  %v1204 = vadd.f32 %v1184, %v1203
  %1205 = vmatmul.f32.gmra.mxu0 %v1159
  %v1206 = vpop.f32.mrf.mxu0
  %v1207 = vadd.f32 %v1184, %v1206
  %1208 = vmatmul.f32.gmra.mxu0 %v1160
  %v1209 = vpop.f32.mrf.mxu0
  %v1210 = vadd.f32 %v1184, %v1209
  %1211 = vmatmul.f32.gmra.mxu0 %v1161
  %v1212 = vpop.f32.mrf.mxu0
  %v1213 = vadd.f32 %v1184, %v1212
  %1214 = vmatmul.f32.gmra.mxu0 %v1162
  %v1215 = vpop.f32.mrf.mxu0
  %v1216 = vadd.f32 %v1184, %v1215
  %1217 = vmatmul.f32.gmra.mxu0 %v1163
  %v1218 = vpop.f32.mrf.mxu0
  %v1219 = vadd.f32 %v1184, %v1218
  %1220 = vmatmul.f32.gmra.mxu0 %v1164
  %v1221 = vpop.f32.mrf.mxu0
  %v1222 = vadd.f32 %v1184, %v1221
  %1223 = vmatmul.f32.gmra.mxu0 %v1165
  %v1224 = vpop.f32.mrf.mxu0
  %v1225 = vadd.f32 %v1184, %v1224
  %1226 = vdwg.mxu0
  %v1227 = vadd.f32 %v1077, %v1204
  %v1228 = vadd.f32 %v1078, %v1207
  %v1229 = vadd.f32 %v1079, %v1210
  %v1230 = vadd.f32 %v1080, %v1213
  %v1231 = vadd.f32 %v1081, %v1216
  %v1232 = vadd.f32 %v1082, %v1219
  %v1233 = vadd.f32 %v1083, %v1222
  %v1234 = vadd.f32 %v1084, %v1225
  %v1235 = vld [vmem:[%s20] sm:$0x1]
  %v1236 = vld [vmem:[%s21] sm:$0x1]
  %v1237 = vsel %vm286, %v1227, 0.0
  %1238 = vadd.xlane.f32.xlu0 %v1237
  %v1239 = vpop.xlane.xlu0 %1238
  %v1240 = vsel %vm286, %v1228, 0.0
  %1241 = vadd.xlane.f32.xlu0 %v1240
  %v1242 = vpop.xlane.xlu0 %1241
  %v1243 = vsel %vm286, %v1229, 0.0
  %1244 = vadd.xlane.f32.xlu0 %v1243
  %v1245 = vpop.xlane.xlu0 %1244
  %v1246 = vsel %vm286, %v1230, 0.0
  %1247 = vadd.xlane.f32.xlu0 %v1246
  %v1248 = vpop.xlane.xlu0 %1247
  %v1249 = vsel %vm286, %v1231, 0.0
  %1250 = vadd.xlane.f32.xlu0 %v1249
  %v1251 = vpop.xlane.xlu0 %1250
  %v1252 = vsel %vm286, %v1232, 0.0
  %1253 = vadd.xlane.f32.xlu0 %v1252
  %v1254 = vpop.xlane.xlu0 %1253
  %v1255 = vsel %vm286, %v1233, 0.0
  %1256 = vadd.xlane.f32.xlu0 %v1255
  %v1257 = vpop.xlane.xlu0 %1256
  %v1258 = vsel %vm286, %v1234, 0.0
  %1259 = vadd.xlane.f32.xlu0 %v1258
  %v1260 = vpop.xlane.xlu0 %1259
  %v1261 = vmul.f32 %v1239, %v910
  %v1262 = vmul.f32 %v1242, %v910
  %v1263 = vmul.f32 %v1245, %v910
  %v1264 = vmul.f32 %v1248, %v910
  %v1265 = vmul.f32 %v1251, %v910
  %v1266 = vmul.f32 %v1254, %v910
  %v1267 = vmul.f32 %v1257, %v910
  %v1268 = vmul.f32 %v1260, %v910
  %v1269 = vsub.f32 %v1227, %v1261
  %v1270 = vsub.f32 %v1228, %v1262
  %v1271 = vsub.f32 %v1229, %v1263
  %v1272 = vsub.f32 %v1230, %v1264
  %v1273 = vsub.f32 %v1231, %v1265
  %v1274 = vsub.f32 %v1232, %v1266
  %v1275 = vsub.f32 %v1233, %v1267
  %v1276 = vsub.f32 %v1234, %v1268
  %v1277 = vmul.f32 %v1269, %v1269
  %v1278 = vmul.f32 %v1270, %v1270
  %v1279 = vmul.f32 %v1271, %v1271
  %v1280 = vmul.f32 %v1272, %v1272
  %v1281 = vmul.f32 %v1273, %v1273
  %v1282 = vmul.f32 %v1274, %v1274
  %v1283 = vmul.f32 %v1275, %v1275
  %v1284 = vmul.f32 %v1276, %v1276
  %v1285 = vsel %vm286, %v1277, 0.0
  %1286 = vadd.xlane.f32.xlu0 %v1285
  %v1287 = vpop.xlane.xlu0 %1286
  %v1288 = vsel %vm286, %v1278, 0.0
  %1289 = vadd.xlane.f32.xlu0 %v1288
  %v1290 = vpop.xlane.xlu0 %1289
  %v1291 = vsel %vm286, %v1279, 0.0
  %1292 = vadd.xlane.f32.xlu0 %v1291
  %v1293 = vpop.xlane.xlu0 %1292
  %v1294 = vsel %vm286, %v1280, 0.0
  %1295 = vadd.xlane.f32.xlu0 %v1294
  %v1296 = vpop.xlane.xlu0 %1295
  %v1297 = vsel %vm286, %v1281, 0.0
  %1298 = vadd.xlane.f32.xlu0 %v1297
  %v1299 = vpop.xlane.xlu0 %1298
  %v1300 = vsel %vm286, %v1282, 0.0
  %1301 = vadd.xlane.f32.xlu0 %v1300
  %v1302 = vpop.xlane.xlu0 %1301
  %v1303 = vsel %vm286, %v1283, 0.0
  %1304 = vadd.xlane.f32.xlu0 %v1303
  %v1305 = vpop.xlane.xlu0 %1304
  %v1306 = vsel %vm286, %v1284, 0.0
  %1307 = vadd.xlane.f32.xlu0 %v1306
  %v1308 = vpop.xlane.xlu0 %1307
  %v1309 = vmul.f32 %v1287, %v910
  %v1310 = vmul.f32 %v1290, %v910
  %v1311 = vmul.f32 %v1293, %v910
  %v1312 = vmul.f32 %v1296, %v910
  %v1313 = vmul.f32 %v1299, %v910
  %v1314 = vmul.f32 %v1302, %v910
  %v1315 = vmul.f32 %v1305, %v910
  %v1316 = vmul.f32 %v1308, %v910
  %v1317 = vadd.f32 %v1309, 1e-05
  %v1318 = vadd.f32 %v1310, 1e-05
  %v1319 = vadd.f32 %v1311, 1e-05
  %v1320 = vadd.f32 %v1312, 1e-05
  %v1321 = vadd.f32 %v1313, 1e-05
  %v1322 = vadd.f32 %v1314, 1e-05
  %v1323 = vadd.f32 %v1315, 1e-05
  %v1324 = vadd.f32 %v1316, 1e-05
  %v1325 = vrsqrt.pop %v1317
  %v1326 = vmul.f32 %v1325, %v1317
  %v1327 = vmul.f32 %v1326, %v1325
  %v1328 = vmul.f32 0.5, %v1327
  %v1329 = vsub.f32 1.5, %v1328
  %v1330 = vmul.f32 %v1325, %v1329
  %vm1331 = vweird.f32 %v1317
  %vm1332 = vweird.f32 %v1325
  %vm1333 = vmor %vm1331, %vm1332
  %v1334 = vsel %vm1333, %v1325, %v1330
  %v1335 = vrsqrt.pop %v1318
  %v1336 = vmul.f32 %v1335, %v1318
  %v1337 = vmul.f32 %v1336, %v1335
  %v1338 = vmul.f32 0.5, %v1337
  %v1339 = vsub.f32 1.5, %v1338
  %v1340 = vmul.f32 %v1335, %v1339
  %vm1341 = vweird.f32 %v1318
  %vm1342 = vweird.f32 %v1335
  %vm1343 = vmor %vm1341, %vm1342
  %v1344 = vsel %vm1343, %v1335, %v1340
  %v1345 = vrsqrt.pop %v1319
  %v1346 = vmul.f32 %v1345, %v1319
  %v1347 = vmul.f32 %v1346, %v1345
  %v1348 = vmul.f32 0.5, %v1347
  %v1349 = vsub.f32 1.5, %v1348
  %v1350 = vmul.f32 %v1345, %v1349
  %vm1351 = vweird.f32 %v1319
  %vm1352 = vweird.f32 %v1345
  %vm1353 = vmor %vm1351, %vm1352
  %v1354 = vsel %vm1353, %v1345, %v1350
  %v1355 = vrsqrt.pop %v1320
  %v1356 = vmul.f32 %v1355, %v1320
  %v1357 = vmul.f32 %v1356, %v1355
  %v1358 = vmul.f32 0.5, %v1357
  %v1359 = vsub.f32 1.5, %v1358
  %v1360 = vmul.f32 %v1355, %v1359
  %vm1361 = vweird.f32 %v1320
  %vm1362 = vweird.f32 %v1355
  %vm1363 = vmor %vm1361, %vm1362
  %v1364 = vsel %vm1363, %v1355, %v1360
  %v1365 = vrsqrt.pop %v1321
  %v1366 = vmul.f32 %v1365, %v1321
  %v1367 = vmul.f32 %v1366, %v1365
  %v1368 = vmul.f32 0.5, %v1367
  %v1369 = vsub.f32 1.5, %v1368
  %v1370 = vmul.f32 %v1365, %v1369
  %vm1371 = vweird.f32 %v1321
  %vm1372 = vweird.f32 %v1365
  %vm1373 = vmor %vm1371, %vm1372
  %v1374 = vsel %vm1373, %v1365, %v1370
  %v1375 = vrsqrt.pop %v1322
  %v1376 = vmul.f32 %v1375, %v1322
  %v1377 = vmul.f32 %v1376, %v1375
  %v1378 = vmul.f32 0.5, %v1377
  %v1379 = vsub.f32 1.5, %v1378
  %v1380 = vmul.f32 %v1375, %v1379
  %vm1381 = vweird.f32 %v1322
  %vm1382 = vweird.f32 %v1375
  %vm1383 = vmor %vm1381, %vm1382
  %v1384 = vsel %vm1383, %v1375, %v1380
  %v1385 = vrsqrt.pop %v1323
  %v1386 = vmul.f32 %v1385, %v1323
  %v1387 = vmul.f32 %v1386, %v1385
  %v1388 = vmul.f32 0.5, %v1387
  %v1389 = vsub.f32 1.5, %v1388
  %v1390 = vmul.f32 %v1385, %v1389
  %vm1391 = vweird.f32 %v1323
  %vm1392 = vweird.f32 %v1385
  %vm1393 = vmor %vm1391, %vm1392
  %v1394 = vsel %vm1393, %v1385, %v1390
  %v1395 = vrsqrt.pop %v1324
  %v1396 = vmul.f32 %v1395, %v1324
  %v1397 = vmul.f32 %v1396, %v1395
  %v1398 = vmul.f32 0.5, %v1397
  %v1399 = vsub.f32 1.5, %v1398
  %v1400 = vmul.f32 %v1395, %v1399
  %vm1401 = vweird.f32 %v1324
  %vm1402 = vweird.f32 %v1395
  %vm1403 = vmor %vm1401, %vm1402
  %v1404 = vsel %vm1403, %v1395, %v1400
  %v1405 = vmul.f32 %v1269, %v1334
  %v1406 = vmul.f32 %v1270, %v1344
  %v1407 = vmul.f32 %v1271, %v1354
  %v1408 = vmul.f32 %v1272, %v1364
  %v1409 = vmul.f32 %v1273, %v1374
  %v1410 = vmul.f32 %v1274, %v1384
  %v1411 = vmul.f32 %v1275, %v1394
  %v1412 = vmul.f32 %v1276, %v1404
  %v1414 = vperm.slane %v1235, 0
  %v1416 = vmul.f32 %v1405, %v1414
  %v1417 = vmul.f32 %v1406, %v1414
  %v1418 = vmul.f32 %v1407, %v1414
  %v1419 = vmul.f32 %v1408, %v1414
  %v1420 = vmul.f32 %v1409, %v1414
  %v1421 = vmul.f32 %v1410, %v1414
  %v1422 = vmul.f32 %v1411, %v1414
  %v1423 = vmul.f32 %v1412, %v1414
  %v1425 = vperm.slane %v1236, 0
  %v1427 = vadd.f32 %v1416, %v1425
  %v1428 = vadd.f32 %v1417, %v1425
  %v1429 = vadd.f32 %v1418, %v1425
  %v1430 = vadd.f32 %v1419, %v1425
  %v1431 = vadd.f32 %v1420, %v1425
  %v1432 = vadd.f32 %v1421, %v1425
  %v1433 = vadd.f32 %v1422, %v1425
  %v1434 = vadd.f32 %v1423, %v1425
  %s1435 = scalar_lea.vmem %s6, 32
  %v1436 = vld [vmem:[%s1435] sm:$0xff]
  %v1437 = vld [vmem:[%s1435 + $0x8] sm:$0xff]
  %v1438 = vld [vmem:[%s1435 + $0x10] sm:$0xff]
  %v1439 = vld [vmem:[%s1435 + $0x18] sm:$0xff]
  %s1440 = scalar_lea.vmem %s7, 1
  %v1441 = vld [vmem:[%s1440] sm:$0x1]
  %v1443 = vperm.slane %v1441, 0
  %v1446 = vsel %vm286, %v1427, 0
  %v1449 = vsel %vm286, %v1428, 0
  %v1452 = vsel %vm286, %v1429, 0
  %v1455 = vsel %vm286, %v1430, 0
  %v1458 = vsel %vm286, %v1431, 0
  %v1461 = vsel %vm286, %v1432, 0
  %v1464 = vsel %vm286, %v1433, 0
  %v1467 = vsel %vm286, %v1434, 0
  %1469 = vmatpush.msra.mxu0 0.0
  %1470 = vmatpush.msra.mxu0 0.0
  %1471 = vmatpush.msra.mxu0 0.0
  %1472 = vmatpush.msra.mxu0 0.0
  %1473 = vmatpush.msra.mxu0 0.0
  %1474 = vmatpush.msra.mxu0 0.0
  %1475 = vmatpush.msra.mxu0 0.0
  %1476 = vmatpush.msra.mxu0 0.0
  %1477 = vmatpush.msra.mxu0 0.0
  %1478 = vmatpush.msra.mxu0 0.0
  %1479 = vmatpush.msra.mxu0 0.0
  %1480 = vmatpush.msra.mxu0 0.0
  %1481 = vmatpush.msra.mxu0 %v1439
  %1482 = vmatpush.msra.mxu0 %v1438
  %1483 = vmatpush.msra.mxu0 %v1437
  %1484 = vmatpush.msra.mxu0 %v1436
  %1485 = vmatmul.f32.gmra.mxu0 %v1446
  %v1486 = vpop.f32.mrf.mxu0
  %v1487 = vadd.f32 %v1443, %v1486
  %1488 = vmatmul.f32.gmra.mxu0 %v1449
  %v1489 = vpop.f32.mrf.mxu0
  %v1490 = vadd.f32 %v1443, %v1489
  %1491 = vmatmul.f32.gmra.mxu0 %v1452
  %v1492 = vpop.f32.mrf.mxu0
  %v1493 = vadd.f32 %v1443, %v1492
  %1494 = vmatmul.f32.gmra.mxu0 %v1455
  %v1495 = vpop.f32.mrf.mxu0
  %v1496 = vadd.f32 %v1443, %v1495
  %1497 = vmatmul.f32.gmra.mxu0 %v1458
  %v1498 = vpop.f32.mrf.mxu0
  %v1499 = vadd.f32 %v1443, %v1498
  %1500 = vmatmul.f32.gmra.mxu0 %v1461
  %v1501 = vpop.f32.mrf.mxu0
  %v1502 = vadd.f32 %v1443, %v1501
  %1503 = vmatmul.f32.gmra.mxu0 %v1464
  %v1504 = vpop.f32.mrf.mxu0
  %v1505 = vadd.f32 %v1443, %v1504
  %1506 = vmatmul.f32.gmra.mxu0 %v1467
  %v1507 = vpop.f32.mrf.mxu0
  %v1508 = vadd.f32 %v1443, %v1507
  %1509 = vdwg.mxu0
  %s1510 = scalar_lea.vmem %s8, 32
  %v1511 = vld [vmem:[%s1510] sm:$0xff]
  %v1512 = vld [vmem:[%s1510 + $0x8] sm:$0xff]
  %v1513 = vld [vmem:[%s1510 + $0x10] sm:$0xff]
  %v1514 = vld [vmem:[%s1510 + $0x18] sm:$0xff]
  %s1515 = scalar_lea.vmem %s9, 1
  %v1516 = vld [vmem:[%s1515] sm:$0x1]
  %v1518 = vperm.slane %v1516, 0
  %1520 = vmatpush.msra.mxu0 0.0
  %1521 = vmatpush.msra.mxu0 0.0
  %1522 = vmatpush.msra.mxu0 0.0
  %1523 = vmatpush.msra.mxu0 0.0
  %1524 = vmatpush.msra.mxu0 0.0
  %1525 = vmatpush.msra.mxu0 0.0
  %1526 = vmatpush.msra.mxu0 0.0
  %1527 = vmatpush.msra.mxu0 0.0
  %1528 = vmatpush.msra.mxu0 0.0
  %1529 = vmatpush.msra.mxu0 0.0
  %1530 = vmatpush.msra.mxu0 0.0
  %1531 = vmatpush.msra.mxu0 0.0
  %1532 = vmatpush.msra.mxu0 %v1514
  %1533 = vmatpush.msra.mxu0 %v1513
  %1534 = vmatpush.msra.mxu0 %v1512
  %1535 = vmatpush.msra.mxu0 %v1511
  %1536 = vmatmul.f32.gmra.mxu0 %v1446
  %v1537 = vpop.f32.mrf.mxu0
  %v1538 = vadd.f32 %v1518, %v1537
  %1539 = vmatmul.f32.gmra.mxu0 %v1449
  %v1540 = vpop.f32.mrf.mxu0
  %v1541 = vadd.f32 %v1518, %v1540
  %1542 = vmatmul.f32.gmra.mxu0 %v1452
  %v1543 = vpop.f32.mrf.mxu0
  %v1544 = vadd.f32 %v1518, %v1543
  %1545 = vmatmul.f32.gmra.mxu0 %v1455
  %v1546 = vpop.f32.mrf.mxu0
  %v1547 = vadd.f32 %v1518, %v1546
  %1548 = vmatmul.f32.gmra.mxu0 %v1458
  %v1549 = vpop.f32.mrf.mxu0
  %v1550 = vadd.f32 %v1518, %v1549
  %1551 = vmatmul.f32.gmra.mxu0 %v1461
  %v1552 = vpop.f32.mrf.mxu0
  %v1553 = vadd.f32 %v1518, %v1552
  %1554 = vmatmul.f32.gmra.mxu0 %v1464
  %v1555 = vpop.f32.mrf.mxu0
  %v1556 = vadd.f32 %v1518, %v1555
  %1557 = vmatmul.f32.gmra.mxu0 %v1467
  %v1558 = vpop.f32.mrf.mxu0
  %v1559 = vadd.f32 %v1518, %v1558
  %1560 = vdwg.mxu0
  %s1561 = scalar_lea.vmem %s10, 32
  %v1562 = vld [vmem:[%s1561] sm:$0xff]
  %v1563 = vld [vmem:[%s1561 + $0x8] sm:$0xff]
  %v1564 = vld [vmem:[%s1561 + $0x10] sm:$0xff]
  %v1565 = vld [vmem:[%s1561 + $0x18] sm:$0xff]
  %s1566 = scalar_lea.vmem %s11, 1
  %v1567 = vld [vmem:[%s1566] sm:$0x1]
  %v1569 = vperm.slane %v1567, 0
  %1571 = vmatpush.msra.mxu0 0.0
  %1572 = vmatpush.msra.mxu0 0.0
  %1573 = vmatpush.msra.mxu0 0.0
  %1574 = vmatpush.msra.mxu0 0.0
  %1575 = vmatpush.msra.mxu0 0.0
  %1576 = vmatpush.msra.mxu0 0.0
  %1577 = vmatpush.msra.mxu0 0.0
  %1578 = vmatpush.msra.mxu0 0.0
  %1579 = vmatpush.msra.mxu0 0.0
  %1580 = vmatpush.msra.mxu0 0.0
  %1581 = vmatpush.msra.mxu0 0.0
  %1582 = vmatpush.msra.mxu0 0.0
  %1583 = vmatpush.msra.mxu0 %v1565
  %1584 = vmatpush.msra.mxu0 %v1564
  %1585 = vmatpush.msra.mxu0 %v1563
  %1586 = vmatpush.msra.mxu0 %v1562
  %1587 = vmatmul.f32.gmra.mxu0 %v1446
  %v1588 = vpop.f32.mrf.mxu0
  %v1589 = vadd.f32 %v1569, %v1588
  %1590 = vmatmul.f32.gmra.mxu0 %v1449
  %v1591 = vpop.f32.mrf.mxu0
  %v1592 = vadd.f32 %v1569, %v1591
  %1593 = vmatmul.f32.gmra.mxu0 %v1452
  %v1594 = vpop.f32.mrf.mxu0
  %v1595 = vadd.f32 %v1569, %v1594
  %1596 = vmatmul.f32.gmra.mxu0 %v1455
  %v1597 = vpop.f32.mrf.mxu0
  %v1598 = vadd.f32 %v1569, %v1597
  %1599 = vmatmul.f32.gmra.mxu0 %v1458
  %v1600 = vpop.f32.mrf.mxu0
  %v1601 = vadd.f32 %v1569, %v1600
  %1602 = vmatmul.f32.gmra.mxu0 %v1461
  %v1603 = vpop.f32.mrf.mxu0
  %v1604 = vadd.f32 %v1569, %v1603
  %1605 = vmatmul.f32.gmra.mxu0 %v1464
  %v1606 = vpop.f32.mrf.mxu0
  %v1607 = vadd.f32 %v1569, %v1606
  %1608 = vmatmul.f32.gmra.mxu0 %v1467
  %v1609 = vpop.f32.mrf.mxu0
  %v1610 = vadd.f32 %v1569, %v1609
  %1611 = vdwg.mxu0
  %v1613 = vsel %vm286, %v1487, 0
  %v1616 = vsel %vm286, %v1490, 0
  %v1619 = vsel %vm286, %v1493, 0
  %v1622 = vsel %vm286, %v1496, 0
  %v1625 = vsel %vm286, %v1499, 0
  %v1628 = vsel %vm286, %v1502, 0
  %v1631 = vsel %vm286, %v1505, 0
  %v1634 = vsel %vm286, %v1508, 0
  %v1637 = vsel %vm286, %v1538, 0
  %v1640 = vsel %vm286, %v1541, 0
  %v1643 = vsel %vm286, %v1544, 0
  %v1646 = vsel %vm286, %v1547, 0
  %v1649 = vsel %vm286, %v1550, 0
  %v1652 = vsel %vm286, %v1553, 0
  %v1655 = vsel %vm286, %v1556, 0
  %v1658 = vsel %vm286, %v1559, 0
  %1660 = vmatpush.xpose.msra.mxu0 0.0
  %1661 = vmatpush.xpose.msra.mxu0 0.0
  %1662 = vmatpush.xpose.msra.mxu0 0.0
  %1663 = vmatpush.xpose.msra.mxu0 0.0
  %1664 = vmatpush.xpose.msra.mxu0 0.0
  %1665 = vmatpush.xpose.msra.mxu0 0.0
  %1666 = vmatpush.xpose.msra.mxu0 0.0
  %1667 = vmatpush.xpose.msra.mxu0 0.0
  %1668 = vmatpush.xpose.msra.mxu0 %v1658
  %1669 = vmatpush.xpose.msra.mxu0 %v1655
  %1670 = vmatpush.xpose.msra.mxu0 %v1652
  %1671 = vmatpush.xpose.msra.mxu0 %v1649
  %1672 = vmatpush.xpose.msra.mxu0 %v1646
  %1673 = vmatpush.xpose.msra.mxu0 %v1643
  %1674 = vmatpush.xpose.msra.mxu0 %v1640
  %1675 = vmatpush.xpose.msra.mxu0 %v1637
  %1676 = vmatmul.f32.gmra.mxu0 %v1613
  %v1677 = vpop.f32.mrf.mxu0
  %v1678 = vadd.f32 %v270, %v1677
  %1679 = vmatmul.f32.gmra.mxu0 %v1616
  %v1680 = vpop.f32.mrf.mxu0
  %v1681 = vadd.f32 %v271, %v1680
  %1682 = vmatmul.f32.gmra.mxu0 %v1619
  %v1683 = vpop.f32.mrf.mxu0
  %v1684 = vadd.f32 %v272, %v1683
  %1685 = vmatmul.f32.gmra.mxu0 %v1622
  %v1686 = vpop.f32.mrf.mxu0
  %v1687 = vadd.f32 %v273, %v1686
  %1688 = vmatmul.f32.gmra.mxu0 %v1625
  %v1689 = vpop.f32.mrf.mxu0
  %v1690 = vadd.f32 %v274, %v1689
  %1691 = vmatmul.f32.gmra.mxu0 %v1628
  %v1692 = vpop.f32.mrf.mxu0
  %v1693 = vadd.f32 %v275, %v1692
  %1694 = vmatmul.f32.gmra.mxu0 %v1631
  %v1695 = vpop.f32.mrf.mxu0
  %v1696 = vadd.f32 %v276, %v1695
  %1697 = vmatmul.f32.gmra.mxu0 %v1634
  %v1698 = vpop.f32.mrf.mxu0
  %v1699 = vadd.f32 %v277, %v1698
  %1700 = vdwg.mxu0
  %v1701 = vsel %vm539, %v1678, -inf
  %1702 = vmax.xlane.f32.xlu0 %v1701
  %v1703 = vpop.xlane.xlu0 %1702
  %v1704 = vsel %vm539, %v1681, -inf
  %1705 = vmax.xlane.f32.xlu0 %v1704
  %v1706 = vpop.xlane.xlu0 %1705
  %v1707 = vsel %vm539, %v1684, -inf
  %1708 = vmax.xlane.f32.xlu0 %v1707
  %v1709 = vpop.xlane.xlu0 %1708
  %v1710 = vsel %vm539, %v1687, -inf
  %1711 = vmax.xlane.f32.xlu0 %v1710
  %v1712 = vpop.xlane.xlu0 %1711
  %v1713 = vsel %vm539, %v1690, -inf
  %1714 = vmax.xlane.f32.xlu0 %v1713
  %v1715 = vpop.xlane.xlu0 %1714
  %v1716 = vsel %vm539, %v1693, -inf
  %1717 = vmax.xlane.f32.xlu0 %v1716
  %v1718 = vpop.xlane.xlu0 %1717
  %v1719 = vsel %vm539, %v1696, -inf
  %1720 = vmax.xlane.f32.xlu0 %v1719
  %v1721 = vpop.xlane.xlu0 %1720
  %v1722 = vsel %vm539, %v1699, -inf
  %1723 = vmax.xlane.f32.xlu0 %v1722
  %v1724 = vpop.xlane.xlu0 %1723
  %v1725 = vsub.f32 %v1678, %v1703
  %v1726 = vsub.f32 %v1681, %v1706
  %v1727 = vsub.f32 %v1684, %v1709
  %v1728 = vsub.f32 %v1687, %v1712
  %v1729 = vsub.f32 %v1690, %v1715
  %v1730 = vsub.f32 %v1693, %v1718
  %v1731 = vsub.f32 %v1696, %v1721
  %v1732 = vsub.f32 %v1699, %v1724
  %v1733 = vmul.f32 %v1725, 1.442695
  %v1734 = vpow.pop %v1733
  %v1735 = vmul.f32 %v1726, 1.442695
  %v1736 = vpow.pop %v1735
  %v1737 = vmul.f32 %v1727, 1.442695
  %v1738 = vpow.pop %v1737
  %v1739 = vmul.f32 %v1728, 1.442695
  %v1740 = vpow.pop %v1739
  %v1741 = vmul.f32 %v1729, 1.442695
  %v1742 = vpow.pop %v1741
  %v1743 = vmul.f32 %v1730, 1.442695
  %v1744 = vpow.pop %v1743
  %v1745 = vmul.f32 %v1731, 1.442695
  %v1746 = vpow.pop %v1745
  %v1747 = vmul.f32 %v1732, 1.442695
  %v1748 = vpow.pop %v1747
  %v1749 = vsel %vm539, %v1734, 0.0
  %1750 = vadd.xlane.f32.xlu0 %v1749
  %v1751 = vpop.xlane.xlu0 %1750
  %v1752 = vsel %vm539, %v1736, 0.0
  %1753 = vadd.xlane.f32.xlu0 %v1752
  %v1754 = vpop.xlane.xlu0 %1753
  %v1755 = vsel %vm539, %v1738, 0.0
  %1756 = vadd.xlane.f32.xlu0 %v1755
  %v1757 = vpop.xlane.xlu0 %1756
  %v1758 = vsel %vm539, %v1740, 0.0
  %1759 = vadd.xlane.f32.xlu0 %v1758
  %v1760 = vpop.xlane.xlu0 %1759
  %v1761 = vsel %vm539, %v1742, 0.0
  %1762 = vadd.xlane.f32.xlu0 %v1761
  %v1763 = vpop.xlane.xlu0 %1762
  %v1764 = vsel %vm539, %v1744, 0.0
  %1765 = vadd.xlane.f32.xlu0 %v1764
  %v1766 = vpop.xlane.xlu0 %1765
  %v1767 = vsel %vm539, %v1746, 0.0
  %1768 = vadd.xlane.f32.xlu0 %v1767
  %v1769 = vpop.xlane.xlu0 %1768
  %v1770 = vsel %vm539, %v1748, 0.0
  %1771 = vadd.xlane.f32.xlu0 %v1770
  %v1772 = vpop.xlane.xlu0 %1771
  %v1773 = vrcp.pop %v1751
  %v1774 = vmul.f32 %v1751, %v1773
  %v1775 = vsub.f32 1.0, %v1774
  %v1776 = vmul.f32 %v1773, %v1775
  %v1777 = vadd.f32 %v1773, %v1776
  %vm1778 = vweird.f32 %v1751
  %vm1779 = vweird.f32 %v1773
  %vm1780 = vmor %vm1778, %vm1779
  %v1781 = vsel %vm1780, %v1773, %v1777
  %v1782 = vand.u32 2147483647, %v1751
  %vm1783 = vcmp.eq.f32.partialorder %v1782, 8.507059e+37
  %v1784 = vand.u32 %v1751, 2147483648
  %v1785 = vor.u32 1.1754944e-38, %v1784
  %v1786 = vsel %vm1783, %v1785, %v1781
  %v1787 = vrcp.pop %v1754
  %v1788 = vmul.f32 %v1754, %v1787
  %v1789 = vsub.f32 1.0, %v1788
  %v1790 = vmul.f32 %v1787, %v1789
  %v1791 = vadd.f32 %v1787, %v1790
  %vm1792 = vweird.f32 %v1754
  %vm1793 = vweird.f32 %v1787
  %vm1794 = vmor %vm1792, %vm1793
  %v1795 = vsel %vm1794, %v1787, %v1791
  %v1796 = vand.u32 2147483647, %v1754
  %vm1797 = vcmp.eq.f32.partialorder %v1796, 8.507059e+37
  %v1798 = vand.u32 %v1754, 2147483648
  %v1799 = vor.u32 1.1754944e-38, %v1798
  %v1800 = vsel %vm1797, %v1799, %v1795
  %v1801 = vrcp.pop %v1757
  %v1802 = vmul.f32 %v1757, %v1801
  %v1803 = vsub.f32 1.0, %v1802
  %v1804 = vmul.f32 %v1801, %v1803
  %v1805 = vadd.f32 %v1801, %v1804
  %vm1806 = vweird.f32 %v1757
  %vm1807 = vweird.f32 %v1801
  %vm1808 = vmor %vm1806, %vm1807
  %v1809 = vsel %vm1808, %v1801, %v1805
  %v1810 = vand.u32 2147483647, %v1757
  %vm1811 = vcmp.eq.f32.partialorder %v1810, 8.507059e+37
  %v1812 = vand.u32 %v1757, 2147483648
  %v1813 = vor.u32 1.1754944e-38, %v1812
  %v1814 = vsel %vm1811, %v1813, %v1809
  %v1815 = vrcp.pop %v1760
  %v1816 = vmul.f32 %v1760, %v1815
  %v1817 = vsub.f32 1.0, %v1816
  %v1818 = vmul.f32 %v1815, %v1817
  %v1819 = vadd.f32 %v1815, %v1818
  %vm1820 = vweird.f32 %v1760
  %vm1821 = vweird.f32 %v1815
  %vm1822 = vmor %vm1820, %vm1821
  %v1823 = vsel %vm1822, %v1815, %v1819
  %v1824 = vand.u32 2147483647, %v1760
  %vm1825 = vcmp.eq.f32.partialorder %v1824, 8.507059e+37
  %v1826 = vand.u32 %v1760, 2147483648
  %v1827 = vor.u32 1.1754944e-38, %v1826
  %v1828 = vsel %vm1825, %v1827, %v1823
  %v1829 = vrcp.pop %v1763
  %v1830 = vmul.f32 %v1763, %v1829
  %v1831 = vsub.f32 1.0, %v1830
  %v1832 = vmul.f32 %v1829, %v1831
  %v1833 = vadd.f32 %v1829, %v1832
  %vm1834 = vweird.f32 %v1763
  %vm1835 = vweird.f32 %v1829
  %vm1836 = vmor %vm1834, %vm1835
  %v1837 = vsel %vm1836, %v1829, %v1833
  %v1838 = vand.u32 2147483647, %v1763
  %vm1839 = vcmp.eq.f32.partialorder %v1838, 8.507059e+37
  %v1840 = vand.u32 %v1763, 2147483648
  %v1841 = vor.u32 1.1754944e-38, %v1840
  %v1842 = vsel %vm1839, %v1841, %v1837
  %v1843 = vrcp.pop %v1766
  %v1844 = vmul.f32 %v1766, %v1843
  %v1845 = vsub.f32 1.0, %v1844
  %v1846 = vmul.f32 %v1843, %v1845
  %v1847 = vadd.f32 %v1843, %v1846
  %vm1848 = vweird.f32 %v1766
  %vm1849 = vweird.f32 %v1843
  %vm1850 = vmor %vm1848, %vm1849
  %v1851 = vsel %vm1850, %v1843, %v1847
  %v1852 = vand.u32 2147483647, %v1766
  %vm1853 = vcmp.eq.f32.partialorder %v1852, 8.507059e+37
  %v1854 = vand.u32 %v1766, 2147483648
  %v1855 = vor.u32 1.1754944e-38, %v1854
  %v1856 = vsel %vm1853, %v1855, %v1851
  %v1857 = vrcp.pop %v1769
  %v1858 = vmul.f32 %v1769, %v1857
  %v1859 = vsub.f32 1.0, %v1858
  %v1860 = vmul.f32 %v1857, %v1859
  %v1861 = vadd.f32 %v1857, %v1860
  %vm1862 = vweird.f32 %v1769
  %vm1863 = vweird.f32 %v1857
  %vm1864 = vmor %vm1862, %vm1863
  %v1865 = vsel %vm1864, %v1857, %v1861
  %v1866 = vand.u32 2147483647, %v1769
  %vm1867 = vcmp.eq.f32.partialorder %v1866, 8.507059e+37
  %v1868 = vand.u32 %v1769, 2147483648
  %v1869 = vor.u32 1.1754944e-38, %v1868
  %v1870 = vsel %vm1867, %v1869, %v1865
  %v1871 = vrcp.pop %v1772
  %v1872 = vmul.f32 %v1772, %v1871
  %v1873 = vsub.f32 1.0, %v1872
  %v1874 = vmul.f32 %v1871, %v1873
  %v1875 = vadd.f32 %v1871, %v1874
  %vm1876 = vweird.f32 %v1772
  %vm1877 = vweird.f32 %v1871
  %vm1878 = vmor %vm1876, %vm1877
  %v1879 = vsel %vm1878, %v1871, %v1875
  %v1880 = vand.u32 2147483647, %v1772
  %vm1881 = vcmp.eq.f32.partialorder %v1880, 8.507059e+37
  %v1882 = vand.u32 %v1772, 2147483648
  %v1883 = vor.u32 1.1754944e-38, %v1882
  %v1884 = vsel %vm1881, %v1883, %v1879
  %v1885 = vmul.f32 %v1734, %v1786
  %v1886 = vmul.f32 %v1736, %v1800
  %v1887 = vmul.f32 %v1738, %v1814
  %v1888 = vmul.f32 %v1740, %v1828
  %v1889 = vmul.f32 %v1742, %v1842
  %v1890 = vmul.f32 %v1744, %v1856
  %v1891 = vmul.f32 %v1746, %v1870
  %v1892 = vmul.f32 %v1748, %v1884
  %v1894 = vsel %vm539, %v1885, 0
  %v1897 = vsel %vm539, %v1886, 0
  %v1900 = vsel %vm539, %v1887, 0
  %v1903 = vsel %vm539, %v1888, 0
  %v1906 = vsel %vm539, %v1889, 0
  %v1909 = vsel %vm539, %v1890, 0
  %v1912 = vsel %vm539, %v1891, 0
  %v1915 = vsel %vm539, %v1892, 0
  %1917 = vmatpush.msra.mxu0 0.0
  %1918 = vmatpush.msra.mxu0 0.0
  %1919 = vmatpush.msra.mxu0 0.0
  %1920 = vmatpush.msra.mxu0 0.0
  %1921 = vmatpush.msra.mxu0 0.0
  %1922 = vmatpush.msra.mxu0 0.0
  %1923 = vmatpush.msra.mxu0 0.0
  %1924 = vmatpush.msra.mxu0 0.0
  %1925 = vmatpush.msra.mxu0 %v1610
  %1926 = vmatpush.msra.mxu0 %v1607
  %1927 = vmatpush.msra.mxu0 %v1604
  %1928 = vmatpush.msra.mxu0 %v1601
  %1929 = vmatpush.msra.mxu0 %v1598
  %1930 = vmatpush.msra.mxu0 %v1595
  %1931 = vmatpush.msra.mxu0 %v1592
  %1932 = vmatpush.msra.mxu0 %v1589
  %1933 = vmatmul.f32.gmra.mxu0 %v1894
  %v1934 = vpop.f32.mrf.mxu0
  %v1935 = vadd.f32 0.0, %v1934
  %1936 = vmatmul.f32.gmra.mxu0 %v1897
  %v1937 = vpop.f32.mrf.mxu0
  %v1938 = vadd.f32 0.0, %v1937
  %1939 = vmatmul.f32.gmra.mxu0 %v1900
  %v1940 = vpop.f32.mrf.mxu0
  %v1941 = vadd.f32 0.0, %v1940
  %1942 = vmatmul.f32.gmra.mxu0 %v1903
  %v1943 = vpop.f32.mrf.mxu0
  %v1944 = vadd.f32 0.0, %v1943
  %1945 = vmatmul.f32.gmra.mxu0 %v1906
  %v1946 = vpop.f32.mrf.mxu0
  %v1947 = vadd.f32 0.0, %v1946
  %1948 = vmatmul.f32.gmra.mxu0 %v1909
  %v1949 = vpop.f32.mrf.mxu0
  %v1950 = vadd.f32 0.0, %v1949
  %1951 = vmatmul.f32.gmra.mxu0 %v1912
  %v1952 = vpop.f32.mrf.mxu0
  %v1953 = vadd.f32 0.0, %v1952
  %1954 = vmatmul.f32.gmra.mxu0 %v1915
  %v1955 = vpop.f32.mrf.mxu0
  %v1956 = vadd.f32 0.0, %v1955
  %1957 = vdwg.mxu0
  %s1958 = scalar_lea.vmem %s12, 32
  %v1959 = vld [vmem:[%s1958] sm:$0xff]
  %v1960 = vld [vmem:[%s1958 + $0x8] sm:$0xff]
  %v1961 = vld [vmem:[%s1958 + $0x10] sm:$0xff]
  %v1962 = vld [vmem:[%s1958 + $0x18] sm:$0xff]
  %s1963 = scalar_lea.vmem %s13, 1
  %v1964 = vld [vmem:[%s1963] sm:$0x1]
  %v1966 = vperm.slane %v1964, 0
  %v1969 = vsel %vm286, %v1935, 0
  %v1972 = vsel %vm286, %v1938, 0
  %v1975 = vsel %vm286, %v1941, 0
  %v1978 = vsel %vm286, %v1944, 0
  %v1981 = vsel %vm286, %v1947, 0
  %v1984 = vsel %vm286, %v1950, 0
  %v1987 = vsel %vm286, %v1953, 0
  %v1990 = vsel %vm286, %v1956, 0
  %1992 = vmatpush.msra.mxu0 0.0
  %1993 = vmatpush.msra.mxu0 0.0
  %1994 = vmatpush.msra.mxu0 0.0
  %1995 = vmatpush.msra.mxu0 0.0
  %1996 = vmatpush.msra.mxu0 0.0
  %1997 = vmatpush.msra.mxu0 0.0
  %1998 = vmatpush.msra.mxu0 0.0
  %1999 = vmatpush.msra.mxu0 0.0
  %2000 = vmatpush.msra.mxu0 0.0
  %2001 = vmatpush.msra.mxu0 0.0
  %2002 = vmatpush.msra.mxu0 0.0
  %2003 = vmatpush.msra.mxu0 0.0
  %2004 = vmatpush.msra.mxu0 %v1962
  %2005 = vmatpush.msra.mxu0 %v1961
  %2006 = vmatpush.msra.mxu0 %v1960
  %2007 = vmatpush.msra.mxu0 %v1959
  %2008 = vmatmul.f32.gmra.mxu0 %v1969
  %v2009 = vpop.f32.mrf.mxu0
  %v2010 = vadd.f32 %v1966, %v2009
  %2011 = vmatmul.f32.gmra.mxu0 %v1972
  %v2012 = vpop.f32.mrf.mxu0
  %v2013 = vadd.f32 %v1966, %v2012
  %2014 = vmatmul.f32.gmra.mxu0 %v1975
  %v2015 = vpop.f32.mrf.mxu0
  %v2016 = vadd.f32 %v1966, %v2015
  %2017 = vmatmul.f32.gmra.mxu0 %v1978
  %v2018 = vpop.f32.mrf.mxu0
  %v2019 = vadd.f32 %v1966, %v2018
  %2020 = vmatmul.f32.gmra.mxu0 %v1981
  %v2021 = vpop.f32.mrf.mxu0
  %v2022 = vadd.f32 %v1966, %v2021
  %2023 = vmatmul.f32.gmra.mxu0 %v1984
  %v2024 = vpop.f32.mrf.mxu0
  %v2025 = vadd.f32 %v1966, %v2024
  %2026 = vmatmul.f32.gmra.mxu0 %v1987
  %v2027 = vpop.f32.mrf.mxu0
  %v2028 = vadd.f32 %v1966, %v2027
  %2029 = vmatmul.f32.gmra.mxu0 %v1990
  %v2030 = vpop.f32.mrf.mxu0
  %v2031 = vadd.f32 %v1966, %v2030
  %2032 = vdwg.mxu0
  %v2033 = vadd.f32 %v1427, %v2010
  %v2034 = vadd.f32 %v1428, %v2013
  %v2035 = vadd.f32 %v1429, %v2016
  %v2036 = vadd.f32 %v1430, %v2019
  %v2037 = vadd.f32 %v1431, %v2022
  %v2038 = vadd.f32 %v1432, %v2025
  %v2039 = vadd.f32 %v1433, %v2028
  %v2040 = vadd.f32 %v1434, %v2031
  %s2041 = scalar_lea.vmem %s14, 1
  %v2042 = vld [vmem:[%s2041] sm:$0x1]
  %s2043 = scalar_lea.vmem %s15, 1
  %v2044 = vld [vmem:[%s2043] sm:$0x1]
  %v2045 = vsel %vm286, %v2033, 0.0
  %2046 = vadd.xlane.f32.xlu0 %v2045
  %v2047 = vpop.xlane.xlu0 %2046
  %v2048 = vsel %vm286, %v2034, 0.0
  %2049 = vadd.xlane.f32.xlu0 %v2048
  %v2050 = vpop.xlane.xlu0 %2049
  %v2051 = vsel %vm286, %v2035, 0.0
  %2052 = vadd.xlane.f32.xlu0 %v2051
  %v2053 = vpop.xlane.xlu0 %2052
  %v2054 = vsel %vm286, %v2036, 0.0
  %2055 = vadd.xlane.f32.xlu0 %v2054
  %v2056 = vpop.xlane.xlu0 %2055
  %v2057 = vsel %vm286, %v2037, 0.0
  %2058 = vadd.xlane.f32.xlu0 %v2057
  %v2059 = vpop.xlane.xlu0 %2058
  %v2060 = vsel %vm286, %v2038, 0.0
  %2061 = vadd.xlane.f32.xlu0 %v2060
  %v2062 = vpop.xlane.xlu0 %2061
  %v2063 = vsel %vm286, %v2039, 0.0
  %2064 = vadd.xlane.f32.xlu0 %v2063
  %v2065 = vpop.xlane.xlu0 %2064
  %v2066 = vsel %vm286, %v2040, 0.0
  %2067 = vadd.xlane.f32.xlu0 %v2066
  %v2068 = vpop.xlane.xlu0 %2067
  %v2069 = vmul.f32 %v2047, %v910
  %v2070 = vmul.f32 %v2050, %v910
  %v2071 = vmul.f32 %v2053, %v910
  %v2072 = vmul.f32 %v2056, %v910
  %v2073 = vmul.f32 %v2059, %v910
  %v2074 = vmul.f32 %v2062, %v910
  %v2075 = vmul.f32 %v2065, %v910
  %v2076 = vmul.f32 %v2068, %v910
  %v2077 = vsub.f32 %v2033, %v2069
  %v2078 = vsub.f32 %v2034, %v2070
  %v2079 = vsub.f32 %v2035, %v2071
  %v2080 = vsub.f32 %v2036, %v2072
  %v2081 = vsub.f32 %v2037, %v2073
  %v2082 = vsub.f32 %v2038, %v2074
  %v2083 = vsub.f32 %v2039, %v2075
  %v2084 = vsub.f32 %v2040, %v2076
  %v2085 = vmul.f32 %v2077, %v2077
  %v2086 = vmul.f32 %v2078, %v2078
  %v2087 = vmul.f32 %v2079, %v2079
  %v2088 = vmul.f32 %v2080, %v2080
  %v2089 = vmul.f32 %v2081, %v2081
  %v2090 = vmul.f32 %v2082, %v2082
  %v2091 = vmul.f32 %v2083, %v2083
  %v2092 = vmul.f32 %v2084, %v2084
  %v2093 = vsel %vm286, %v2085, 0.0
  %2094 = vadd.xlane.f32.xlu0 %v2093
  %v2095 = vpop.xlane.xlu0 %2094
  %v2096 = vsel %vm286, %v2086, 0.0
  %2097 = vadd.xlane.f32.xlu0 %v2096
  %v2098 = vpop.xlane.xlu0 %2097
  %v2099 = vsel %vm286, %v2087, 0.0
  %2100 = vadd.xlane.f32.xlu0 %v2099
  %v2101 = vpop.xlane.xlu0 %2100
  %v2102 = vsel %vm286, %v2088, 0.0
  %2103 = vadd.xlane.f32.xlu0 %v2102
  %v2104 = vpop.xlane.xlu0 %2103
  %v2105 = vsel %vm286, %v2089, 0.0
  %2106 = vadd.xlane.f32.xlu0 %v2105
  %v2107 = vpop.xlane.xlu0 %2106
  %v2108 = vsel %vm286, %v2090, 0.0
  %2109 = vadd.xlane.f32.xlu0 %v2108
  %v2110 = vpop.xlane.xlu0 %2109
  %v2111 = vsel %vm286, %v2091, 0.0
  %2112 = vadd.xlane.f32.xlu0 %v2111
  %v2113 = vpop.xlane.xlu0 %2112
  %v2114 = vsel %vm286, %v2092, 0.0
  %2115 = vadd.xlane.f32.xlu0 %v2114
  %v2116 = vpop.xlane.xlu0 %2115
  %v2117 = vmul.f32 %v2095, %v910
  %v2118 = vmul.f32 %v2098, %v910
  %v2119 = vmul.f32 %v2101, %v910
  %v2120 = vmul.f32 %v2104, %v910
  %v2121 = vmul.f32 %v2107, %v910
  %v2122 = vmul.f32 %v2110, %v910
  %v2123 = vmul.f32 %v2113, %v910
  %v2124 = vmul.f32 %v2116, %v910
  %v2125 = vadd.f32 %v2117, 1e-05
  %v2126 = vadd.f32 %v2118, 1e-05
  %v2127 = vadd.f32 %v2119, 1e-05
  %v2128 = vadd.f32 %v2120, 1e-05
  %v2129 = vadd.f32 %v2121, 1e-05
  %v2130 = vadd.f32 %v2122, 1e-05
  %v2131 = vadd.f32 %v2123, 1e-05
  %v2132 = vadd.f32 %v2124, 1e-05
  %v2133 = vrsqrt.pop %v2125
  %v2134 = vmul.f32 %v2133, %v2125
  %v2135 = vmul.f32 %v2134, %v2133
  %v2136 = vmul.f32 0.5, %v2135
  %v2137 = vsub.f32 1.5, %v2136
  %v2138 = vmul.f32 %v2133, %v2137
  %vm2139 = vweird.f32 %v2125
  %vm2140 = vweird.f32 %v2133
  %vm2141 = vmor %vm2139, %vm2140
  %v2142 = vsel %vm2141, %v2133, %v2138
  %v2143 = vrsqrt.pop %v2126
  %v2144 = vmul.f32 %v2143, %v2126
  %v2145 = vmul.f32 %v2144, %v2143
  %v2146 = vmul.f32 0.5, %v2145
  %v2147 = vsub.f32 1.5, %v2146
  %v2148 = vmul.f32 %v2143, %v2147
  %vm2149 = vweird.f32 %v2126
  %vm2150 = vweird.f32 %v2143
  %vm2151 = vmor %vm2149, %vm2150
  %v2152 = vsel %vm2151, %v2143, %v2148
  %v2153 = vrsqrt.pop %v2127
  %v2154 = vmul.f32 %v2153, %v2127
  %v2155 = vmul.f32 %v2154, %v2153
  %v2156 = vmul.f32 0.5, %v2155
  %v2157 = vsub.f32 1.5, %v2156
  %v2158 = vmul.f32 %v2153, %v2157
  %vm2159 = vweird.f32 %v2127
  %vm2160 = vweird.f32 %v2153
  %vm2161 = vmor %vm2159, %vm2160
  %v2162 = vsel %vm2161, %v2153, %v2158
  %v2163 = vrsqrt.pop %v2128
  %v2164 = vmul.f32 %v2163, %v2128
  %v2165 = vmul.f32 %v2164, %v2163
  %v2166 = vmul.f32 0.5, %v2165
  %v2167 = vsub.f32 1.5, %v2166
  %v2168 = vmul.f32 %v2163, %v2167
  %vm2169 = vweird.f32 %v2128
  %vm2170 = vweird.f32 %v2163
  %vm2171 = vmor %vm2169, %vm2170
  %v2172 = vsel %vm2171, %v2163, %v2168
  %v2173 = vrsqrt.pop %v2129
  %v2174 = vmul.f32 %v2173, %v2129
  %v2175 = vmul.f32 %v2174, %v2173
  %v2176 = vmul.f32 0.5, %v2175
  %v2177 = vsub.f32 1.5, %v2176
  %v2178 = vmul.f32 %v2173, %v2177
  %vm2179 = vweird.f32 %v2129
  %vm2180 = vweird.f32 %v2173
  %vm2181 = vmor %vm2179, %vm2180
  %v2182 = vsel %vm2181, %v2173, %v2178
  %v2183 = vrsqrt.pop %v2130
  %v2184 = vmul.f32 %v2183, %v2130
  %v2185 = vmul.f32 %v2184, %v2183
  %v2186 = vmul.f32 0.5, %v2185
  %v2187 = vsub.f32 1.5, %v2186
  %v2188 = vmul.f32 %v2183, %v2187
  %vm2189 = vweird.f32 %v2130
  %vm2190 = vweird.f32 %v2183
  %vm2191 = vmor %vm2189, %vm2190
  %v2192 = vsel %vm2191, %v2183, %v2188
  %v2193 = vrsqrt.pop %v2131
  %v2194 = vmul.f32 %v2193, %v2131
  %v2195 = vmul.f32 %v2194, %v2193
  %v2196 = vmul.f32 0.5, %v2195
  %v2197 = vsub.f32 1.5, %v2196
  %v2198 = vmul.f32 %v2193, %v2197
  %vm2199 = vweird.f32 %v2131
  %vm2200 = vweird.f32 %v2193
  %vm2201 = vmor %vm2199, %vm2200
  %v2202 = vsel %vm2201, %v2193, %v2198
  %v2203 = vrsqrt.pop %v2132
  %v2204 = vmul.f32 %v2203, %v2132
  %v2205 = vmul.f32 %v2204, %v2203
  %v2206 = vmul.f32 0.5, %v2205
  %v2207 = vsub.f32 1.5, %v2206
  %v2208 = vmul.f32 %v2203, %v2207
  %vm2209 = vweird.f32 %v2132
  %vm2210 = vweird.f32 %v2203
  %vm2211 = vmor %vm2209, %vm2210
  %v2212 = vsel %vm2211, %v2203, %v2208
  %v2213 = vmul.f32 %v2077, %v2142
  %v2214 = vmul.f32 %v2078, %v2152
  %v2215 = vmul.f32 %v2079, %v2162
  %v2216 = vmul.f32 %v2080, %v2172
  %v2217 = vmul.f32 %v2081, %v2182
  %v2218 = vmul.f32 %v2082, %v2192
  %v2219 = vmul.f32 %v2083, %v2202
  %v2220 = vmul.f32 %v2084, %v2212
  %v2222 = vperm.slane %v2042, 0
  %v2224 = vmul.f32 %v2213, %v2222
  %v2225 = vmul.f32 %v2214, %v2222
  %v2226 = vmul.f32 %v2215, %v2222
  %v2227 = vmul.f32 %v2216, %v2222
  %v2228 = vmul.f32 %v2217, %v2222
  %v2229 = vmul.f32 %v2218, %v2222
  %v2230 = vmul.f32 %v2219, %v2222
  %v2231 = vmul.f32 %v2220, %v2222
  %v2233 = vperm.slane %v2044, 0
  %v2235 = vadd.f32 %v2224, %v2233
  %v2236 = vadd.f32 %v2225, %v2233
  %v2237 = vadd.f32 %v2226, %v2233
  %v2238 = vadd.f32 %v2227, %v2233
  %v2239 = vadd.f32 %v2228, %v2233
  %v2240 = vadd.f32 %v2229, %v2233
  %v2241 = vadd.f32 %v2230, %v2233
  %v2242 = vadd.f32 %v2231, %v2233
  %s2243 = scalar_lea.vmem %s16, 32
  %v2244 = vld [vmem:[%s2243] sm:$0xff]
  %v2245 = vld [vmem:[%s2243 + $0x8] sm:$0xff]
  %v2246 = vld [vmem:[%s2243 + $0x10] sm:$0xff]
  %v2247 = vld [vmem:[%s2243 + $0x18] sm:$0xff]
  %s2248 = scalar_lea.vmem %s17, 1
  %v2249 = vld [vmem:[%s2248] sm:$0x1]
  %v2251 = vperm.slane %v2249, 0
  %v2254 = vsel %vm286, %v2235, 0
  %v2257 = vsel %vm286, %v2236, 0
  %v2260 = vsel %vm286, %v2237, 0
  %v2263 = vsel %vm286, %v2238, 0
  %v2266 = vsel %vm286, %v2239, 0
  %v2269 = vsel %vm286, %v2240, 0
  %v2272 = vsel %vm286, %v2241, 0
  %v2275 = vsel %vm286, %v2242, 0
  %2277 = vmatpush.msra.mxu0 0.0
  %2278 = vmatpush.msra.mxu0 0.0
  %2279 = vmatpush.msra.mxu0 0.0
  %2280 = vmatpush.msra.mxu0 0.0
  %2281 = vmatpush.msra.mxu0 0.0
  %2282 = vmatpush.msra.mxu0 0.0
  %2283 = vmatpush.msra.mxu0 0.0
  %2284 = vmatpush.msra.mxu0 0.0
  %2285 = vmatpush.msra.mxu0 0.0
  %2286 = vmatpush.msra.mxu0 0.0
  %2287 = vmatpush.msra.mxu0 0.0
  %2288 = vmatpush.msra.mxu0 0.0
  %2289 = vmatpush.msra.mxu0 %v2247
  %2290 = vmatpush.msra.mxu0 %v2246
  %2291 = vmatpush.msra.mxu0 %v2245
  %2292 = vmatpush.msra.mxu0 %v2244
  %2293 = vmatmul.f32.gmra.mxu0 %v2254
  %v2294 = vpop.f32.mrf.mxu0
  %v2295 = vadd.f32 %v2251, %v2294
  %2296 = vmatmul.f32.gmra.mxu0 %v2257
  %v2297 = vpop.f32.mrf.mxu0
  %v2298 = vadd.f32 %v2251, %v2297
  %2299 = vmatmul.f32.gmra.mxu0 %v2260
  %v2300 = vpop.f32.mrf.mxu0
  %v2301 = vadd.f32 %v2251, %v2300
  %2302 = vmatmul.f32.gmra.mxu0 %v2263
  %v2303 = vpop.f32.mrf.mxu0
  %v2304 = vadd.f32 %v2251, %v2303
  %2305 = vmatmul.f32.gmra.mxu0 %v2266
  %v2306 = vpop.f32.mrf.mxu0
  %v2307 = vadd.f32 %v2251, %v2306
  %2308 = vmatmul.f32.gmra.mxu0 %v2269
  %v2309 = vpop.f32.mrf.mxu0
  %v2310 = vadd.f32 %v2251, %v2309
  %2311 = vmatmul.f32.gmra.mxu0 %v2272
  %v2312 = vpop.f32.mrf.mxu0
  %v2313 = vadd.f32 %v2251, %v2312
  %2314 = vmatmul.f32.gmra.mxu0 %v2275
  %v2315 = vpop.f32.mrf.mxu0
  %v2316 = vadd.f32 %v2251, %v2315
  %2317 = vdwg.mxu0
  %v2318 = vmax.f32 %v2295, 0.0
  %v2319 = vmax.f32 %v2298, 0.0
  %v2320 = vmax.f32 %v2301, 0.0
  %v2321 = vmax.f32 %v2304, 0.0
  %v2322 = vmax.f32 %v2307, 0.0
  %v2323 = vmax.f32 %v2310, 0.0
  %v2324 = vmax.f32 %v2313, 0.0
  %v2325 = vmax.f32 %v2316, 0.0
  %s2326 = scalar_lea.vmem %s18, 128
  %v2327 = vld [vmem:[%s2326] sm:$0xff]
  %v2328 = vld [vmem:[%s2326 + $0x8] sm:$0xff]
  %v2329 = vld [vmem:[%s2326 + $0x10] sm:$0xff]
  %v2330 = vld [vmem:[%s2326 + $0x18] sm:$0xff]
  %v2331 = vld [vmem:[%s2326 + $0x20] sm:$0xff]
  %v2332 = vld [vmem:[%s2326 + $0x28] sm:$0xff]
  %v2333 = vld [vmem:[%s2326 + $0x30] sm:$0xff]
  %v2334 = vld [vmem:[%s2326 + $0x38] sm:$0xff]
  %v2335 = vld [vmem:[%s2326 + $0x40] sm:$0xff]
  %v2336 = vld [vmem:[%s2326 + $0x48] sm:$0xff]
  %v2337 = vld [vmem:[%s2326 + $0x50] sm:$0xff]
  %v2338 = vld [vmem:[%s2326 + $0x58] sm:$0xff]
  %v2339 = vld [vmem:[%s2326 + $0x60] sm:$0xff]
  %v2340 = vld [vmem:[%s2326 + $0x68] sm:$0xff]
  %v2341 = vld [vmem:[%s2326 + $0x70] sm:$0xff]
  %v2342 = vld [vmem:[%s2326 + $0x78] sm:$0xff]
  %s2343 = scalar_lea.vmem %s19, 1
  %v2344 = vld [vmem:[%s2343] sm:$0x1]
  %v2346 = vperm.slane %v2344, 0
  %2348 = vmatpush.msra.mxu0 %v2342
  %2349 = vmatpush.msra.mxu0 %v2341
  %2350 = vmatpush.msra.mxu0 %v2340
  %2351 = vmatpush.msra.mxu0 %v2339
  %2352 = vmatpush.msra.mxu0 %v2338
  %2353 = vmatpush.msra.mxu0 %v2337
  %2354 = vmatpush.msra.mxu0 %v2336
  %2355 = vmatpush.msra.mxu0 %v2335
  %2356 = vmatpush.msra.mxu0 %v2334
  %2357 = vmatpush.msra.mxu0 %v2333
  %2358 = vmatpush.msra.mxu0 %v2332
  %2359 = vmatpush.msra.mxu0 %v2331
  %2360 = vmatpush.msra.mxu0 %v2330
  %2361 = vmatpush.msra.mxu0 %v2329
  %2362 = vmatpush.msra.mxu0 %v2328
  %2363 = vmatpush.msra.mxu0 %v2327
  %2364 = vmatmul.f32.gmra.mxu0 %v2318
  %v2365 = vpop.f32.mrf.mxu0
  %v2366 = vadd.f32 %v2346, %v2365
  %2367 = vmatmul.f32.gmra.mxu0 %v2319
  %v2368 = vpop.f32.mrf.mxu0
  %v2369 = vadd.f32 %v2346, %v2368
  %2370 = vmatmul.f32.gmra.mxu0 %v2320
  %v2371 = vpop.f32.mrf.mxu0
  %v2372 = vadd.f32 %v2346, %v2371
  %2373 = vmatmul.f32.gmra.mxu0 %v2321
  %v2374 = vpop.f32.mrf.mxu0
  %v2375 = vadd.f32 %v2346, %v2374
  %2376 = vmatmul.f32.gmra.mxu0 %v2322
  %v2377 = vpop.f32.mrf.mxu0
  %v2378 = vadd.f32 %v2346, %v2377
  %2379 = vmatmul.f32.gmra.mxu0 %v2323
  %v2380 = vpop.f32.mrf.mxu0
  %v2381 = vadd.f32 %v2346, %v2380
  %2382 = vmatmul.f32.gmra.mxu0 %v2324
  %v2383 = vpop.f32.mrf.mxu0
  %v2384 = vadd.f32 %v2346, %v2383
  %2385 = vmatmul.f32.gmra.mxu0 %v2325
  %v2386 = vpop.f32.mrf.mxu0
  %v2387 = vadd.f32 %v2346, %v2386
  %2388 = vdwg.mxu0
  %v2389 = vadd.f32 %v2235, %v2366
  %v2390 = vadd.f32 %v2236, %v2369
  %v2391 = vadd.f32 %v2237, %v2372
  %v2392 = vadd.f32 %v2238, %v2375
  %v2393 = vadd.f32 %v2239, %v2378
  %v2394 = vadd.f32 %v2240, %v2381
  %v2395 = vadd.f32 %v2241, %v2384
  %v2396 = vadd.f32 %v2242, %v2387
  %s2397 = scalar_lea.vmem %s20, 1
  %v2398 = vld [vmem:[%s2397] sm:$0x1]
  %s2399 = scalar_lea.vmem %s21, 1
  %v2400 = vld [vmem:[%s2399] sm:$0x1]
  %v2401 = vsel %vm286, %v2389, 0.0
  %2402 = vadd.xlane.f32.xlu0 %v2401
  %v2403 = vpop.xlane.xlu0 %2402
  %v2404 = vsel %vm286, %v2390, 0.0
  %2405 = vadd.xlane.f32.xlu0 %v2404
  %v2406 = vpop.xlane.xlu0 %2405
  %v2407 = vsel %vm286, %v2391, 0.0
  %2408 = vadd.xlane.f32.xlu0 %v2407
  %v2409 = vpop.xlane.xlu0 %2408
  %v2410 = vsel %vm286, %v2392, 0.0
  %2411 = vadd.xlane.f32.xlu0 %v2410
  %v2412 = vpop.xlane.xlu0 %2411
  %v2413 = vsel %vm286, %v2393, 0.0
  %2414 = vadd.xlane.f32.xlu0 %v2413
  %v2415 = vpop.xlane.xlu0 %2414
  %v2416 = vsel %vm286, %v2394, 0.0
  %2417 = vadd.xlane.f32.xlu0 %v2416
  %v2418 = vpop.xlane.xlu0 %2417
  %v2419 = vsel %vm286, %v2395, 0.0
  %2420 = vadd.xlane.f32.xlu0 %v2419
  %v2421 = vpop.xlane.xlu0 %2420
  %v2422 = vsel %vm286, %v2396, 0.0
  %2423 = vadd.xlane.f32.xlu0 %v2422
  %v2424 = vpop.xlane.xlu0 %2423
  %v2425 = vmul.f32 %v2403, %v910
  %v2426 = vmul.f32 %v2406, %v910
  %v2427 = vmul.f32 %v2409, %v910
  %v2428 = vmul.f32 %v2412, %v910
  %v2429 = vmul.f32 %v2415, %v910
  %v2430 = vmul.f32 %v2418, %v910
  %v2431 = vmul.f32 %v2421, %v910
  %v2432 = vmul.f32 %v2424, %v910
  %v2433 = vsub.f32 %v2389, %v2425
  %v2434 = vsub.f32 %v2390, %v2426
  %v2435 = vsub.f32 %v2391, %v2427
  %v2436 = vsub.f32 %v2392, %v2428
  %v2437 = vsub.f32 %v2393, %v2429
  %v2438 = vsub.f32 %v2394, %v2430
  %v2439 = vsub.f32 %v2395, %v2431
  %v2440 = vsub.f32 %v2396, %v2432
  %v2441 = vmul.f32 %v2433, %v2433
  %v2442 = vmul.f32 %v2434, %v2434
  %v2443 = vmul.f32 %v2435, %v2435
  %v2444 = vmul.f32 %v2436, %v2436
  %v2445 = vmul.f32 %v2437, %v2437
  %v2446 = vmul.f32 %v2438, %v2438
  %v2447 = vmul.f32 %v2439, %v2439
  %v2448 = vmul.f32 %v2440, %v2440
  %v2449 = vsel %vm286, %v2441, 0.0
  %2450 = vadd.xlane.f32.xlu0 %v2449
  %v2451 = vpop.xlane.xlu0 %2450
  %v2452 = vsel %vm286, %v2442, 0.0
  %2453 = vadd.xlane.f32.xlu0 %v2452
  %v2454 = vpop.xlane.xlu0 %2453
  %v2455 = vsel %vm286, %v2443, 0.0
  %2456 = vadd.xlane.f32.xlu0 %v2455
  %v2457 = vpop.xlane.xlu0 %2456
  %v2458 = vsel %vm286, %v2444, 0.0
  %2459 = vadd.xlane.f32.xlu0 %v2458
  %v2460 = vpop.xlane.xlu0 %2459
  %v2461 = vsel %vm286, %v2445, 0.0
  %2462 = vadd.xlane.f32.xlu0 %v2461
  %v2463 = vpop.xlane.xlu0 %2462
  %v2464 = vsel %vm286, %v2446, 0.0
  %2465 = vadd.xlane.f32.xlu0 %v2464
  %v2466 = vpop.xlane.xlu0 %2465
  %v2467 = vsel %vm286, %v2447, 0.0
  %2468 = vadd.xlane.f32.xlu0 %v2467
  %v2469 = vpop.xlane.xlu0 %2468
  %v2470 = vsel %vm286, %v2448, 0.0
  %2471 = vadd.xlane.f32.xlu0 %v2470
  %v2472 = vpop.xlane.xlu0 %2471
  %v2473 = vmul.f32 %v2451, %v910
  %v2474 = vmul.f32 %v2454, %v910
  %v2475 = vmul.f32 %v2457, %v910
  %v2476 = vmul.f32 %v2460, %v910
  %v2477 = vmul.f32 %v2463, %v910
  %v2478 = vmul.f32 %v2466, %v910
  %v2479 = vmul.f32 %v2469, %v910
  %v2480 = vmul.f32 %v2472, %v910
  %v2481 = vadd.f32 %v2473, 1e-05
  %v2482 = vadd.f32 %v2474, 1e-05
  %v2483 = vadd.f32 %v2475, 1e-05
  %v2484 = vadd.f32 %v2476, 1e-05
  %v2485 = vadd.f32 %v2477, 1e-05
  %v2486 = vadd.f32 %v2478, 1e-05
  %v2487 = vadd.f32 %v2479, 1e-05
  %v2488 = vadd.f32 %v2480, 1e-05
  %v2489 = vrsqrt.pop %v2481
  %v2490 = vmul.f32 %v2489, %v2481
  %v2491 = vmul.f32 %v2490, %v2489
  %v2492 = vmul.f32 0.5, %v2491
  %v2493 = vsub.f32 1.5, %v2492
  %v2494 = vmul.f32 %v2489, %v2493
  %vm2495 = vweird.f32 %v2481
  %vm2496 = vweird.f32 %v2489
  %vm2497 = vmor %vm2495, %vm2496
  %v2498 = vsel %vm2497, %v2489, %v2494
  %v2499 = vrsqrt.pop %v2482
  %v2500 = vmul.f32 %v2499, %v2482
  %v2501 = vmul.f32 %v2500, %v2499
  %v2502 = vmul.f32 0.5, %v2501
  %v2503 = vsub.f32 1.5, %v2502
  %v2504 = vmul.f32 %v2499, %v2503
  %vm2505 = vweird.f32 %v2482
  %vm2506 = vweird.f32 %v2499
  %vm2507 = vmor %vm2505, %vm2506
  %v2508 = vsel %vm2507, %v2499, %v2504
  %v2509 = vrsqrt.pop %v2483
  %v2510 = vmul.f32 %v2509, %v2483
  %v2511 = vmul.f32 %v2510, %v2509
  %v2512 = vmul.f32 0.5, %v2511
  %v2513 = vsub.f32 1.5, %v2512
  %v2514 = vmul.f32 %v2509, %v2513
  %vm2515 = vweird.f32 %v2483
  %vm2516 = vweird.f32 %v2509
  %vm2517 = vmor %vm2515, %vm2516
  %v2518 = vsel %vm2517, %v2509, %v2514
  %v2519 = vrsqrt.pop %v2484
  %v2520 = vmul.f32 %v2519, %v2484
  %v2521 = vmul.f32 %v2520, %v2519
  %v2522 = vmul.f32 0.5, %v2521
  %v2523 = vsub.f32 1.5, %v2522
  %v2524 = vmul.f32 %v2519, %v2523
  %vm2525 = vweird.f32 %v2484
  %vm2526 = vweird.f32 %v2519
  %vm2527 = vmor %vm2525, %vm2526
  %v2528 = vsel %vm2527, %v2519, %v2524
  %v2529 = vrsqrt.pop %v2485
  %v2530 = vmul.f32 %v2529, %v2485
  %v2531 = vmul.f32 %v2530, %v2529
  %v2532 = vmul.f32 0.5, %v2531
  %v2533 = vsub.f32 1.5, %v2532
  %v2534 = vmul.f32 %v2529, %v2533
  %vm2535 = vweird.f32 %v2485
  %vm2536 = vweird.f32 %v2529
  %vm2537 = vmor %vm2535, %vm2536
  %v2538 = vsel %vm2537, %v2529, %v2534
  %v2539 = vrsqrt.pop %v2486
  %v2540 = vmul.f32 %v2539, %v2486
  %v2541 = vmul.f32 %v2540, %v2539
  %v2542 = vmul.f32 0.5, %v2541
  %v2543 = vsub.f32 1.5, %v2542
  %v2544 = vmul.f32 %v2539, %v2543
  %vm2545 = vweird.f32 %v2486
  %vm2546 = vweird.f32 %v2539
  %vm2547 = vmor %vm2545, %vm2546
  %v2548 = vsel %vm2547, %v2539, %v2544
  %v2549 = vrsqrt.pop %v2487
  %v2550 = vmul.f32 %v2549, %v2487
  %v2551 = vmul.f32 %v2550, %v2549
  %v2552 = vmul.f32 0.5, %v2551
  %v2553 = vsub.f32 1.5, %v2552
  %v2554 = vmul.f32 %v2549, %v2553
  %vm2555 = vweird.f32 %v2487
  %vm2556 = vweird.f32 %v2549
  %vm2557 = vmor %vm2555, %vm2556
  %v2558 = vsel %vm2557, %v2549, %v2554
  %v2559 = vrsqrt.pop %v2488
  %v2560 = vmul.f32 %v2559, %v2488
  %v2561 = vmul.f32 %v2560, %v2559
  %v2562 = vmul.f32 0.5, %v2561
  %v2563 = vsub.f32 1.5, %v2562
  %v2564 = vmul.f32 %v2559, %v2563
  %vm2565 = vweird.f32 %v2488
  %vm2566 = vweird.f32 %v2559
  %vm2567 = vmor %vm2565, %vm2566
  %v2568 = vsel %vm2567, %v2559, %v2564
  %v2569 = vmul.f32 %v2433, %v2498
  %v2570 = vmul.f32 %v2434, %v2508
  %v2571 = vmul.f32 %v2435, %v2518
  %v2572 = vmul.f32 %v2436, %v2528
  %v2573 = vmul.f32 %v2437, %v2538
  %v2574 = vmul.f32 %v2438, %v2548
  %v2575 = vmul.f32 %v2439, %v2558
  %v2576 = vmul.f32 %v2440, %v2568
  %v2578 = vperm.slane %v2398, 0
  %v2580 = vmul.f32 %v2569, %v2578
  %v2581 = vmul.f32 %v2570, %v2578
  %v2582 = vmul.f32 %v2571, %v2578
  %v2583 = vmul.f32 %v2572, %v2578
  %v2584 = vmul.f32 %v2573, %v2578
  %v2585 = vmul.f32 %v2574, %v2578
  %v2586 = vmul.f32 %v2575, %v2578
  %v2587 = vmul.f32 %v2576, %v2578
  %v2589 = vperm.slane %v2400, 0
  %v2591 = vadd.f32 %v2580, %v2589
  %v2592 = vadd.f32 %v2581, %v2589
  %v2593 = vadd.f32 %v2582, %v2589
  %v2594 = vadd.f32 %v2583, %v2589
  %v2595 = vadd.f32 %v2584, %v2589
  %v2596 = vadd.f32 %v2585, %v2589
  %v2597 = vadd.f32 %v2586, %v2589
  %v2598 = vadd.f32 %v2587, %v2589
  %v2599 = vld [vmem:[%s0] sm:$0xff]
  %v2600 = vcvt.s32.f32 %v2599
  %v2601 = vrcp.pop %v2600
  %v2602 = vmul.f32 %v2600, %v2601
  %v2603 = vsub.f32 1.0, %v2602
  %v2604 = vmul.f32 %v2601, %v2603
  %v2605 = vadd.f32 %v2601, %v2604
  %vm2606 = vweird.f32 %v2600
  %vm2607 = vweird.f32 %v2601
  %vm2608 = vmor %vm2606, %vm2607
  %v2609 = vsel %vm2608, %v2601, %v2605
  %v2610 = vand.u32 2147483647, %v2600
  %vm2611 = vcmp.eq.f32.partialorder %v2610, 8.507059e+37
  %v2612 = vand.u32 %v2600, 2147483648
  %v2613 = vor.u32 1.1754944e-38, %v2612
  %v2614 = vsel %vm2611, %v2613, %v2609
  %v2616 = vrot.slane %v2614, 1
  %v2617 = vrot.slane %v2614, 2
  %v2618 = vrot.slane %v2614, 3
  %v2619 = vrot.slane %v2614, 4
  %v2620 = vrot.slane %v2614, 5
  %v2621 = vrot.slane %v2614, 6
  %v2622 = vrot.slane %v2614, 7
  %v2623 = vrot.slane %v2599, 1
  %v2624 = vrot.slane %v2599, 2
  %v2625 = vrot.slane %v2599, 3
  %v2626 = vrot.slane %v2599, 4
  %v2627 = vrot.slane %v2599, 5
  %v2628 = vrot.slane %v2599, 6
  %v2629 = vrot.slane %v2599, 7
  %v2630 = vperm.slane %v2599, 0
  %v2631 = vperm.slane %v2623, 0
  %v2632 = vperm.slane %v2624, 0
  %v2633 = vperm.slane %v2625, 0
  %v2634 = vperm.slane %v2626, 0
  %v2635 = vperm.slane %v2627, 0
  %v2636 = vperm.slane %v2628, 0
  %v2637 = vperm.slane %v2629, 0
  %vm2638 = vcmp.lt.s32.totalorder %v245, %v2630
  %vm2639 = vcmp.lt.s32.totalorder %v245, %v2631
  %vm2640 = vcmp.lt.s32.totalorder %v245, %v2632
  %vm2641 = vcmp.lt.s32.totalorder %v245, %v2633
  %vm2642 = vcmp.lt.s32.totalorder %v245, %v2634
  %vm2643 = vcmp.lt.s32.totalorder %v245, %v2635
  %vm2644 = vcmp.lt.s32.totalorder %v245, %v2636
  %vm2645 = vcmp.lt.s32.totalorder %v245, %v2637
  %v2646 = vperm.slane %v2614, 0
  %v2647 = vperm.slane %v2616, 0
  %v2648 = vperm.slane %v2617, 0
  %v2649 = vperm.slane %v2618, 0
  %v2650 = vperm.slane %v2619, 0
  %v2651 = vperm.slane %v2620, 0
  %v2652 = vperm.slane %v2621, 0
  %v2653 = vperm.slane %v2622, 0
  %v2662 = vsel %vm2638, %v2646, 0.0
  %v2663 = vsel %vm2639, %v2647, 0.0
  %v2664 = vsel %vm2640, %v2648, 0.0
  %v2665 = vsel %vm2641, %v2649, 0.0
  %v2666 = vsel %vm2642, %v2650, 0.0
  %v2667 = vsel %vm2643, %v2651, 0.0
  %v2668 = vsel %vm2644, %v2652, 0.0
  %v2669 = vsel %vm2645, %v2653, 0.0
  %2671 = vset.pattern.permute.xlu0 0
  %2672 = vperm.xlu0 %2671, %v2662
  %v2673 = vpop.permute.xlu0 %2672
  %2676 = vset.pattern.permute.xlu0 0
  %2677 = vperm.xlu0 %2676, %v2663
  %v2678 = vpop.permute.xlu0 %2677
  %2681 = vset.pattern.permute.xlu0 0
  %2682 = vperm.xlu0 %2681, %v2664
  %v2683 = vpop.permute.xlu0 %2682
  %2686 = vset.pattern.permute.xlu0 0
  %2687 = vperm.xlu0 %2686, %v2665
  %v2688 = vpop.permute.xlu0 %2687
  %2691 = vset.pattern.permute.xlu0 0
  %2692 = vperm.xlu0 %2691, %v2666
  %v2693 = vpop.permute.xlu0 %2692
  %2696 = vset.pattern.permute.xlu0 0
  %2697 = vperm.xlu0 %2696, %v2667
  %v2698 = vpop.permute.xlu0 %2697
  %2701 = vset.pattern.permute.xlu0 0
  %2702 = vperm.xlu0 %2701, %v2668
  %v2703 = vpop.permute.xlu0 %2702
  %2706 = vset.pattern.permute.xlu0 0
  %2707 = vperm.xlu0 %2706, %v2669
  %v2708 = vpop.permute.xlu0 %2707
  %v2710 = vmul.f32 %v2591, %v2673
  %v2711 = vmul.f32 %v2592, %v2678
  %v2712 = vmul.f32 %v2593, %v2683
  %v2713 = vmul.f32 %v2594, %v2688
  %v2714 = vmul.f32 %v2595, %v2693
  %v2715 = vmul.f32 %v2596, %v2698
  %v2716 = vmul.f32 %v2597, %v2703
  %v2717 = vmul.f32 %v2598, %v2708
  %v2718 = vsel %vm286, %v2710, 0.0
  %v2719 = vrot.slane %v2718, 4
  %v2720 = vadd.f32 %v2718, %v2719
  %v2721 = vrot.slane %v2720, 2
  %v2722 = vadd.f32 %v2720, %v2721
  %v2723 = vrot.slane %v2722, 1
  %v2724 = vadd.f32 %v2722, %v2723
  %v2725 = vsel %vm286, %v2711, 0.0
  %v2726 = vrot.slane %v2725, 4
  %v2727 = vadd.f32 %v2725, %v2726
  %v2728 = vrot.slane %v2727, 2
  %v2729 = vadd.f32 %v2727, %v2728
  %v2730 = vrot.slane %v2729, 1
  %v2731 = vadd.f32 %v2729, %v2730
  %v2732 = vsel %vm286, %v2712, 0.0
  %v2733 = vrot.slane %v2732, 4
  %v2734 = vadd.f32 %v2732, %v2733
  %v2735 = vrot.slane %v2734, 2
  %v2736 = vadd.f32 %v2734, %v2735
  %v2737 = vrot.slane %v2736, 1
  %v2738 = vadd.f32 %v2736, %v2737
  %v2739 = vsel %vm286, %v2713, 0.0
  %v2740 = vrot.slane %v2739, 4
  %v2741 = vadd.f32 %v2739, %v2740
  %v2742 = vrot.slane %v2741, 2
  %v2743 = vadd.f32 %v2741, %v2742
  %v2744 = vrot.slane %v2743, 1
  %v2745 = vadd.f32 %v2743, %v2744
  %v2746 = vsel %vm286, %v2714, 0.0
  %v2747 = vrot.slane %v2746, 4
  %v2748 = vadd.f32 %v2746, %v2747
  %v2749 = vrot.slane %v2748, 2
  %v2750 = vadd.f32 %v2748, %v2749
  %v2751 = vrot.slane %v2750, 1
  %v2752 = vadd.f32 %v2750, %v2751
  %v2753 = vsel %vm286, %v2715, 0.0
  %v2754 = vrot.slane %v2753, 4
  %v2755 = vadd.f32 %v2753, %v2754
  %v2756 = vrot.slane %v2755, 2
  %v2757 = vadd.f32 %v2755, %v2756
  %v2758 = vrot.slane %v2757, 1
  %v2759 = vadd.f32 %v2757, %v2758
  %v2760 = vsel %vm286, %v2716, 0.0
  %v2761 = vrot.slane %v2760, 4
  %v2762 = vadd.f32 %v2760, %v2761
  %v2763 = vrot.slane %v2762, 2
  %v2764 = vadd.f32 %v2762, %v2763
  %v2765 = vrot.slane %v2764, 1
  %v2766 = vadd.f32 %v2764, %v2765
  %v2767 = vsel %vm286, %v2717, 0.0
  %v2768 = vrot.slane %v2767, 4
  %v2769 = vadd.f32 %v2767, %v2768
  %v2770 = vrot.slane %v2769, 2
  %v2771 = vadd.f32 %v2769, %v2770
  %v2772 = vrot.slane %v2771, 1
  %v2773 = vadd.f32 %v2771, %v2772
  %vm2782 = vcmask 1041409
  %v2783 = vsel %vm2782, %v2731, %v2724
  %vm2784 = vcmask 1042434
  %v2785 = vsel %vm2784, %v2738, %v2783
  %vm2786 = vcmask 1043459
  %v2787 = vsel %vm2786, %v2745, %v2785
  %vm2788 = vcmask 1044484
  %v2789 = vsel %vm2788, %v2752, %v2787
  %vm2790 = vcmask 1045509
  %v2791 = vsel %vm2790, %v2759, %v2789
  %vm2792 = vcmask 1046534
  %v2793 = vsel %vm2792, %v2766, %v2791
  %vm2794 = vcmask 1047559
  %v2795 = vsel %vm2794, %v2773, %v2793
  %2797 = vst.msk [vmem:[%s22] sm:$0xff] %vm286, %v2795
  // Predicated region
  $region90: #{model_forward.1} parent=0 // pred_check
    _
  $region91: #{model_forward.1} parent=0 // pred_check_branch
    %2799 = sbr.rel (0) target = $region93
  $region92: #{model_forward.1} parent=0 // pred_region
    _
  $region93: #{model_forward.1} parent=0 // pred_fallthru
    _
  // Predicated region
  $region94: #{model_forward.1} parent=0 // pred_check
    _
  $region95: #{model_forward.1} parent=0 // pred_check_branch
    %2801 = sbr.rel (0) target = $region97
  $region96: #{model_forward.1} parent=0 // pred_region
    _
  $region97: #{model_forward.1} parent=0 // pred_fallthru
    _

</llo_original>
